<compile_context>
chip_gen: v5e
topology: v5e:2x2
jax: 0.10.0
libtpu: 0.0.40
codegen_flags: <defaults>
</compile_context>

<pallas_src>
import functools
import math

import jax
import jax.numpy as jnp
from jax.experimental import pallas as pl
from jax.experimental.pallas import tpu as pltpu

NUM_HEADS = 8                        # ChannelAttention default
COMPUTE_DTYPE = jnp.bfloat16


def _phys_vmem_bytes():
    try:
        return int(getattr(pltpu.get_tpu_info(), "vmem_capacity_bytes",
                           128 * 1024 * 1024))
    except Exception:                # pragma: no cover - defensive fallback
        return 128 * 1024 * 1024


_PHYS_VMEM = _phys_vmem_bytes()
if _PHYS_VMEM >= 96 * 1024 * 1024:   # v5e / v6e class: 128 MiB physical VMEM
    VMEM_LIMIT = 100 * 1024 * 1024
    ROW_TILE_TARGET = 512
else:                                 # v7x class: 64 MiB physical VMEM per TC
    VMEM_LIMIT = 48 * 1024 * 1024
    ROW_TILE_TARGET = 256


def _cparams():
    return pltpu.CompilerParams(
        dimension_semantics=("parallel",),
        vmem_limit_bytes=VMEM_LIMIT)


def _row_tiling(m, target):
    """(row_tile, padded_rows): sublane-aligned tiles, no whole-M fallback."""
    if m <= target:
        m_pad = ((m + 7) // 8) * 8
        return m_pad, m_pad
    m_pad = ((m + target - 1) // target) * target
    return target, m_pad


# ------------------ fused [LayerNorm] + linear (+ bias) (+ residual) ----------
def linear_pallas(x, w, b=None, residual=None, ln=None, ln_eps=1e-5):
    """y = [LayerNorm](x) @ w (+ b) (+ residual).   x: [..., K], w: [K, N].

    The optional LayerNorm prologue (gamma, beta) is fused into the matmul: the
    kernel already holds a full-K row tile, so per-row mean/var are free and
    the normalized activation never round-trips HBM.
    """
    lead = x.shape[:-1]
    K = x.shape[-1]
    N = w.shape[-1]
    M = int(math.prod(lead))
    TM, M_pad = _row_tiling(M, ROW_TILE_TARGET)

    x2 = x.reshape(M, K)
    res2 = residual.reshape(M, N) if residual is not None else None
    if M_pad != M:
        x2 = jnp.pad(x2, ((0, M_pad - M), (0, 0)))
        if res2 is not None:
            res2 = jnp.pad(res2, ((0, M_pad - M), (0, 0)))

    # NOTE: constant-index-map operands (w, b, gamma/beta) could be single
    # buffered via pipeline_mode=pl.Buffered(1) to halve their VMEM footprint;
    # kept at the default here for maximum portability.
    inputs = [x2, w]
    in_specs = [pl.BlockSpec((TM, K), lambda i: (i, 0)),
                pl.BlockSpec((K, N), lambda i: (0, 0))]
    if ln is not None:
        inputs += [ln[0].reshape(1, K), ln[1].reshape(1, K)]
        in_specs += [pl.BlockSpec((1, K), lambda i: (0, 0)),
                     pl.BlockSpec((1, K), lambda i: (0, 0))]
    if b is not None:
        inputs.append(b.reshape(1, N))
        in_specs.append(pl.BlockSpec((1, N), lambda i: (0, 0)))
    if res2 is not None:
        inputs.append(res2)
        in_specs.append(pl.BlockSpec((TM, N), lambda i: (i, 0)))

    have_ln, have_b, have_res = ln is not None, b is not None, residual is not None

    def kernel(*refs):
        x_ref, w_ref, o_ref = refs[0], refs[1], refs[-1]
        pos = 2
        xv = x_ref[...]
        if have_ln:
            g_ref, be_ref = refs[pos], refs[pos + 1]
            pos += 2
            xf = xv.astype(jnp.float32)
            mean = jnp.mean(xf, axis=-1, keepdims=True)
            xc = xf - mean
            var = jnp.mean(xc * xc, axis=-1, keepdims=True)
            xf = xc * jax.lax.rsqrt(var + ln_eps)
            xf = xf * g_ref[...].astype(jnp.float32) + be_ref[...].astype(jnp.float32)
            xv = xf.astype(COMPUTE_DTYPE)
        acc = jnp.dot(xv, w_ref[...], preferred_element_type=jnp.float32)
        if have_b:
            acc = acc + refs[pos][...].astype(jnp.float32)
            pos += 1
        if have_res:
            acc = acc + refs[pos][...].astype(jnp.float32)
            pos += 1
        o_ref[...] = acc.astype(o_ref.dtype)

    out = pl.pallas_call(
        kernel,
        out_shape=jax.ShapeDtypeStruct((M_pad, N), x.dtype),
        grid=(M_pad // TM,),
        in_specs=in_specs,
        out_specs=pl.BlockSpec((TM, N), lambda i: (i, 0)),
        compiler_params=_cparams(),
    )(*inputs)
    if M_pad != M:
        out = out[:M]
    return out.reshape(lead + (N,))


# --------------------------- ChannelAttention core ----------------------------
def channel_attention_core_pallas(qkv, temp_row, num_heads):
    """Packed qkv [B, N, 3C] -> ChannelAttention output [B, N, C].

    Equivalent to the reference: per-head (head-major channels), l2-normalise
    q/k over the token axis, attn = softmax((q @ k^T) * temperature), out =
    attn @ v.  The per-head structure is a block-diagonal mask over the dense
    (C, C) score matrix (built in-kernel from iota, no HBM operand) so every op
    stays 128-lane dense; the per-head temperature is folded into q.
    """
    # NOTE: for large dims (C/num_heads >= 128) true per-head matmuls would
    # avoid the 8x extra MXU work of the dense mask; at C=128 (hd=16) the dense
    # form is the right choice.
    B, N, C3 = qkv.shape
    C = C3 // 3
    hd = C // num_heads

    def kernel(qkv_ref, t_ref, o_ref):
        qkv_v = qkv_ref[0]                                   # (N, 3C) bf16
        q = qkv_v[:, 0:C].astype(jnp.float32)
        k = qkv_v[:, C:2 * C].astype(jnp.float32)
        v = qkv_v[:, 2 * C:3 * C]                            # bf16 for the MXU
        # F.normalize(dim=-1) in the (head, hd, N) layout == l2 over tokens:
        # x * rsqrt(max(sum(x^2), eps^2)) == x / max(||x||, eps).
        qn = q * jax.lax.rsqrt(jnp.maximum(jnp.sum(q * q, axis=0, keepdims=True), 1e-24))
        kn = k * jax.lax.rsqrt(jnp.maximum(jnp.sum(k * k, axis=0, keepdims=True), 1e-24))
        qn = qn * t_ref[...].astype(jnp.float32)             # fold per-head temperature
        # s[c1, c2] = sum_n qn[n, c1] * kn[n, c2]  -- no explicit transpose.
        s = jax.lax.dot_general(
            qn.astype(COMPUTE_DTYPE), kn.astype(COMPUTE_DTYPE),
            dimension_numbers=(((0,), (0,)), ((), ())),
            preferred_element_type=jnp.float32)              # (C, C)
        # Block-diagonal per-head mask, generated in-kernel.
        ri = jax.lax.broadcasted_iota(jnp.int32, (C, C), 0)
        ci = jax.lax.broadcasted_iota(jnp.int32, (C, C), 1)
        if hd & (hd - 1) == 0:                               # power-of-two head width
            same_head = (ri ^ ci) < hd
        else:
            same_head = (ri // hd) == (ci // hd)
        s = jnp.where(same_head, s, -1e30)
        s = s - jnp.max(s, axis=-1, keepdims=True)
        p = jnp.exp(s)
        p = p * pl.reciprocal(jnp.sum(p, axis=-1, keepdims=True), approx=True)
        # o[n, c1] = sum_c2 v[n, c2] * p[c1, c2]  -- no explicit transpose.
        o = jax.lax.dot_general(
            v, p.astype(COMPUTE_DTYPE),
            dimension_numbers=(((1,), (1,)), ((), ())),
            preferred_element_type=jnp.float32)              # (N, C)
        o_ref[0] = o.astype(o_ref.dtype)

    return pl.pallas_call(
        kernel,
        out_shape=jax.ShapeDtypeStruct((B, N, C), qkv.dtype),
        grid=(B,),                 # "parallel" -> megacore shards batches on v7x
        in_specs=[pl.BlockSpec((1, N, C3), lambda b: (b, 0, 0)),
                  pl.BlockSpec((1, C), lambda b: (0, 0))],
        out_specs=pl.BlockSpec((1, N, C), lambda b: (b, 0, 0)),
        compiler_params=_cparams(),
    )(qkv, temp_row)


# ------------- Cross_Attention (norm3 + dual softmax + reproj + LN + concat) --
def cross_attention_fused_pallas(c1, c2, n3_g, n3_b, w, b, gamma, beta, eps=1e-5):
    """One kernel per batch:  tx = cat([c1, c2], -1)
                                 + LN( attended(LN3(c1), LN3(c2)) @ w + b ).

    LN3(c1) supplies the values and LN3(c2) the keys/queries (head_count=1),
    exactly as in the reference forward; folding norm3 in-kernel removes two
    standalone LN kernels and halves this kernel's per-batch input DMA.
    """
    # TODO(synk): for production N, tile the token axis (flash-style
    # accumulation) so the per-batch block fits v7x's 64 MiB VMEM.
    B, N, D = c1.shape
    D2 = w.shape[-1]

    def kernel(c1_ref, c2_ref, g3_ref, b3_ref, w_ref, b_ref, g_ref, be_ref, o_ref):
        def ln(xv, g, be):
            mean = jnp.mean(xv, axis=-1, keepdims=True)
            xc = xv - mean
            var = jnp.mean(xc * xc, axis=-1, keepdims=True)
            return xc * jax.lax.rsqrt(var + eps) * g + be

        c1v = c1_ref[0].astype(jnp.float32)                  # (N, D) residual half 1
        c2v = c2_ref[0].astype(jnp.float32)                  # (N, D) residual half 2
        g3 = g3_ref[...].astype(jnp.float32)
        b3 = b3_ref[...].astype(jnp.float32)
        vals = ln(c1v, g3, b3)                               # norm3(channel1) -> values
        kq = ln(c2v, g3, b3)                                 # norm3(channel2) -> keys/queries
        # key softmax: over tokens (rows), per channel
        kk = jnp.exp(kq - jnp.max(kq, axis=0, keepdims=True))
        kk = kk * pl.reciprocal(jnp.sum(kk, axis=0, keepdims=True), approx=True)
        # query softmax: over channels (lanes), per token
        qq = jnp.exp(kq - jnp.max(kq, axis=1, keepdims=True))
        qq = qq * pl.reciprocal(jnp.sum(qq, axis=1, keepdims=True), approx=True)
        # ctx[d1, d2] = sum_n kk[n, d1] * vals[n, d2]  -- no explicit transpose.
        ctx = jax.lax.dot_general(
            kk.astype(COMPUTE_DTYPE), vals.astype(COMPUTE_DTYPE),
            dimension_numbers=(((0,), (0,)), ((), ())),
            preferred_element_type=jnp.float32)              # (D, D)
        att = jnp.dot(qq.astype(COMPUTE_DTYPE), ctx.astype(COMPUTE_DTYPE),
                      preferred_element_type=jnp.float32)    # (N, D)
        y = jnp.dot(att.astype(COMPUTE_DTYPE), w_ref[...],
                    preferred_element_type=jnp.float32)
        y = y + b_ref[...].astype(jnp.float32)               # 1x1 reprojection conv
        y = ln(y, g_ref[...].astype(jnp.float32), be_ref[...].astype(jnp.float32))
        # tx = cat([channel1, channel2], -1) + attn, written as two lane-aligned
        # halves (no in-kernel lane concatenate).
        o_ref[0, :, 0:D] = (y[:, 0:D] + c1v).astype(o_ref.dtype)
        o_ref[0, :, D:D2] = (y[:, D:D2] + c2v).astype(o_ref.dtype)

    row = pl.BlockSpec((1, N, D), lambda b_: (b_, 0, 0))
    vd = pl.BlockSpec((1, D), lambda b_: (0, 0))
    vd2 = pl.BlockSpec((1, D2), lambda b_: (0, 0))
    return pl.pallas_call(
        kernel,
        out_shape=jax.ShapeDtypeStruct((B, N, D2), c1.dtype),
        grid=(B,),
        in_specs=[row, row, vd, vd,
                  pl.BlockSpec((D, D2), lambda b_: (0, 0)),
                  vd2, vd2, vd2],
        out_specs=pl.BlockSpec((1, N, D2), lambda b_: (b_, 0, 0)),
        compiler_params=_cparams(),
    )(c1, c2, n3_g.reshape(1, D), n3_b.reshape(1, D), w,
      b.reshape(1, D2), gamma.reshape(1, D2), beta.reshape(1, D2))


# --------------------------- depthwise 3x3 conv + bias + GELU -----------------
def dwconv3x3_gelu_pallas(x, w, b, height):
    """Depthwise 3x3, stride 1, pad 1 (cross-correlation) + bias + GELU.

    x: [B*H, W, C//128, 128]  (channels pre-split so the spatial shifts stay on
    untiled leading dims).  Zero padding is a VMEM scratch: the 1-pixel halo is
    zeroed and the interior stored once per image, then the 9 shift-MACs read
    the scratch directly (no jnp.concatenate copies of the full f32 image).
    w: [3, 3, C//128, 128], b: [C//128, 128].
    """
    BH, W, Cg, L = x.shape
    H = height
    B = BH // H

    def kernel(x_ref, w_ref, b_ref, o_ref, pad_ref):
        # Zero the halo (2 rows + 2 cols) every step -> safe under megacore
        # grid sharding; the interior overwrites the rest.
        pad_ref[0:1] = jnp.zeros((1, W + 2, Cg, L), jnp.float32)
        pad_ref[H + 1:H + 2] = jnp.zeros((1, W + 2, Cg, L), jnp.float32)
        pad_ref[:, 0:1] = jnp.zeros((H + 2, 1, Cg, L), jnp.float32)
        pad_ref[:, W + 1:W + 2] = jnp.zeros((H + 2, 1, Cg, L), jnp.float32)
        pad_ref[1:H + 1, 1:W + 1] = x_ref[...].astype(jnp.float32)
        wv = w_ref[...].astype(jnp.float32)                  # (3, 3, Cg, L)
        acc = jnp.zeros((H, W, Cg, L), jnp.float32)
        for dy in range(3):
            for dx in range(3):
                acc = acc + pad_ref[dy:dy + H, dx:dx + W] * wv[dy, dx]
        acc = acc + b_ref[...].astype(jnp.float32)
        # TODO(synk): tanh-approx GELU (PyTorch nn.GELU() uses the exact erf form).
        o_ref[...] = jax.nn.gelu(acc, approximate=True).astype(o_ref.dtype)

    return pl.pallas_call(
        kernel,
        out_shape=jax.ShapeDtypeStruct(x.shape, x.dtype),
        grid=(B,),
        in_specs=[pl.BlockSpec((H, W, Cg, L), lambda i: (i, 0, 0, 0)),
                  pl.BlockSpec((3, 3, Cg, L), lambda i: (0, 0, 0, 0)),
                  pl.BlockSpec((Cg, L), lambda i: (0, 0))],
        out_specs=pl.BlockSpec((H, W, Cg, L), lambda i: (i, 0, 0, 0)),
        scratch_shapes=[pltpu.VMEM((H + 2, W + 2, Cg, L), jnp.float32)],
        compiler_params=_cparams(),
    )(x, w, b)


# --------------------------- CrossAttentionBlock forward ----------------------
def cross_attention_block_forward(x1, x2, params, height, width):
    """x1, x2: [B, N, D] with N = height*width.  Returns [B, N, 2D]."""
    B, N, D = x1.shape
    x1 = x1.astype(COMPUTE_DTYPE)
    x2 = x2.astype(COMPUTE_DTYPE)

    def channel_branch(x):
        # x + ChannelAttention(LayerNorm(x)); norm1 and channel_attn1 are shared
        # between the two inputs, exactly as in the reference forward().
        # norm1 is fused into the qkv matmul prologue (no standalone LN kernel).
        qkv = linear_pallas(x, params['attn_w_qkv'],
                            ln=(params['norm1_g'], params['norm1_b']))  # qkv_bias=False
        a = channel_attention_core_pallas(qkv, params['attn_temp_row'], NUM_HEADS)
        return linear_pallas(a, params['attn_w_proj'], params['attn_b_proj'],
                             residual=x)                                # proj + residual

    channel1 = channel_branch(x1)
    channel2 = channel_branch(x2)

    # tx = cat([channel1, channel2], -1)
    #      + Cross_Attention(norm3(channel1), norm3(channel2))
    # (norm3, the 1x1 reprojection, its LayerNorm and the residual concat are
    #  all inside one fused kernel.)
    tx = cross_attention_fused_pallas(
        channel1, channel2,
        params['norm3_g'], params['norm3_b'],
        params['repro_w'], params['repro_b'],
        params['xnorm_g'], params['xnorm_b'])                           # [B, N, 2D]

    # MixFFN: norm2 (fused) -> fc1 -> depthwise 3x3 + GELU -> fc2 (+ tx residual)
    h = linear_pallas(tx, params['fc1_w'], params['fc1_b'],
                      ln=(params['norm2_g'], params['norm2_b']))        # [B, N, 4D]
    hid = h.shape[-1]
    assert hid % 128 == 0
    h4 = h.reshape(B * height, width, hid // 128, 128)                  # free reshape
    h4 = dwconv3x3_gelu_pallas(h4, params['dw_w'], params['dw_b'], height)
    h = h4.reshape(B, N, hid)
    mx = linear_pallas(h, params['fc2_w'], params['fc2_b'], residual=tx)
    return mx


# --------------------------- deterministic parameter init ---------------------
def init_params(key, dim, num_heads=NUM_HEADS):
    assert dim % num_heads == 0 and (4 * dim) % 128 == 0
    keys = iter(jax.random.split(key, 16))

    def nrm(shape, scale=0.05):
        return (jax.random.normal(next(keys), shape, jnp.float32) * scale
                ).astype(COMPUTE_DTYPE)

    hd = dim // num_heads
    d2 = 2 * dim                      # Cross_Attention output / MixFFN c1
    hid = 4 * dim                     # MixFFN hidden
    cg = hid // 128
    temperature = jnp.ones((num_heads,), jnp.float32)     # nn.Parameter(ones(h,1,1))
    return dict(
        norm1_g=jnp.ones((dim,), jnp.float32), norm1_b=jnp.zeros((dim,), jnp.float32),
        norm3_g=jnp.ones((dim,), jnp.float32), norm3_b=jnp.zeros((dim,), jnp.float32),
        norm2_g=jnp.ones((d2,), jnp.float32), norm2_b=jnp.zeros((d2,), jnp.float32),
        # ChannelAttention (shared by both branches, as in the reference forward)
        attn_w_qkv=nrm((dim, 3 * dim)),
        attn_w_proj=nrm((dim, dim)),
        attn_b_proj=nrm((dim,), 0.01),
        attn_temp_row=jnp.repeat(temperature, hd).reshape(1, dim),  # (1, dim) f32
        # Cross_Attention: 1x1 reprojection conv (stored as [D, 2D]) + its LayerNorm
        repro_w=nrm((dim, d2)),
        repro_b=nrm((d2,), 0.01),
        xnorm_g=jnp.ones((d2,), jnp.float32), xnorm_b=jnp.zeros((d2,), jnp.float32),
        # MixFFN
        fc1_w=nrm((d2, hid)), fc1_b=nrm((hid,), 0.01),
        dw_w=nrm((3, 3, cg, 128)), dw_b=nrm((cg, 128), 0.01),
        fc2_w=nrm((hid, d2)), fc2_b=nrm((d2,), 0.01),
    )


# --------------------------- demo ---------------------------------------------
if __name__ == "__main__":
    key = jax.random.PRNGKey(0)
    B = 2
    H = W = 8
    N = H * W                          # 64
    D = 128                            # in_dim = key_dim = value_dim (lane-dense)

    k1, k2, kp = jax.random.split(key, 3)
    x1 = jax.random.normal(k1, (B, N, D), jnp.float32)
    x2 = jax.random.normal(k2, (B, N, D), jnp.float32)
    params = init_params(kp, D)

    fwd = jax.jit(functools.partial(cross_attention_block_forward, height=H, width=W))
    out = fwd(x1, x2, params)
    out = jax.block_until_ready(out)

    assert out.shape == (B, N, 2 * D), out.shape
    assert bool(jnp.all(jnp.isfinite(out.astype(jnp.float32)))), "non-finite output"
    print("KERNEL_OK")
</pallas_src>

<mosaic_0001>
module attributes {stable_mosaic.version = 11 : i64} {
  func.func @kernel(%arg0: i32, %arg1: memref<1x64x384xbf16, #tpu.memory_space<vmem>>, %arg2: memref<1x128xf32, #tpu.memory_space<vmem>>, %arg3: memref<1x64x128xbf16, #tpu.memory_space<vmem>>) attributes {dimension_semantics = [#tpu.dimension_semantics<parallel>], iteration_bounds = array<i64: 2>, scalar_prefetch = 0 : i64, scratch_operands = 0 : i64, tpu.core_type = #tpu.core_type<tc>, window_params = [{transform_indices = @transform_0, window_bounds = array<i64: 1, 64, 384>}, {pipeline_mode = #tpu.pipeline_mode<synchronous>, transform_indices = @transform_1, window_bounds = array<i64: 1, 128>}, {transform_indices = @transform_2, window_bounds = array<i64: 1, 64, 128>}]} {
    %c0 = arith.constant 0 : index
    %c0_0 = arith.constant 0 : index
    %c0_1 = arith.constant 0 : index
    %0 = vector.load %arg1[%c0, %c0_0, %c0_1] : memref<1x64x384xbf16, #tpu.memory_space<vmem>>, vector<1x64x384xbf16>
    %1 = vector.shape_cast %0 : vector<1x64x384xbf16> to vector<64x384xbf16>
    %2 = vector.extract_strided_slice %1 {offsets = [0, 0], sizes = [64, 128], strides = [1, 1]} : vector<64x384xbf16> to vector<64x128xbf16>
    %3 = arith.extf %2 : vector<64x128xbf16> to vector<64x128xf32>
    %4 = vector.extract_strided_slice %1 {offsets = [0, 128], sizes = [64, 128], strides = [1, 1]} : vector<64x384xbf16> to vector<64x128xbf16>
    %5 = arith.extf %4 : vector<64x128xbf16> to vector<64x128xf32>
    %6 = vector.extract_strided_slice %1 {offsets = [0, 256], sizes = [64, 128], strides = [1, 1]} : vector<64x384xbf16> to vector<64x128xbf16>
    %7 = arith.mulf %3, %3 : vector<64x128xf32>
    %cst = arith.constant dense<0.000000e+00> : vector<128xf32>
    %8 = vector.multi_reduction <add>, %7, %cst [0] : vector<64x128xf32> to vector<128xf32>
    %9 = vector.shape_cast %8 : vector<128xf32> to vector<1x128xf32>
    %cst_2 = arith.constant 1.000000e-24 : f32
    %10 = vector.broadcast %cst_2 : f32 to vector<1x128xf32>
    %11 = arith.maximumf %9, %10 : vector<1x128xf32>
    %12 = math.rsqrt %11 : vector<1x128xf32>
    %13 = vector.broadcast %12 : vector<1x128xf32> to vector<64x128xf32>
    %14 = arith.mulf %3, %13 : vector<64x128xf32>
    %15 = arith.mulf %5, %5 : vector<64x128xf32>
    %cst_3 = arith.constant dense<0.000000e+00> : vector<128xf32>
    %16 = vector.multi_reduction <add>, %15, %cst_3 [0] : vector<64x128xf32> to vector<128xf32>
    %17 = vector.shape_cast %16 : vector<128xf32> to vector<1x128xf32>
    %cst_4 = arith.constant 1.000000e-24 : f32
    %18 = vector.broadcast %cst_4 : f32 to vector<1x128xf32>
    %19 = arith.maximumf %17, %18 : vector<1x128xf32>
    %20 = math.rsqrt %19 : vector<1x128xf32>
    %21 = vector.broadcast %20 : vector<1x128xf32> to vector<64x128xf32>
    %22 = arith.mulf %5, %21 : vector<64x128xf32>
    %c0_5 = arith.constant 0 : index
    %c0_6 = arith.constant 0 : index
    %23 = vector.load %arg2[%c0_5, %c0_6] : memref<1x128xf32, #tpu.memory_space<vmem>>, vector<1x128xf32>
    %24 = vector.broadcast %23 : vector<1x128xf32> to vector<64x128xf32>
    %25 = arith.mulf %14, %24 : vector<64x128xf32>
    %26 = arith.truncf %25 : vector<64x128xf32> to vector<64x128xbf16>
    %27 = arith.truncf %22 : vector<64x128xf32> to vector<64x128xbf16>
    %cst_7 = arith.constant dense<0.000000e+00> : vector<128x128xf32>
    %28 = tpu.matmul %26, %27, %cst_7 {dimension_numbers = #tpu.dot_dimension_numbers<[0], [0], [1], [1], [0, 1, 1, 1], [], []>} : vector<64x128xbf16>, vector<64x128xbf16>, vector<128x128xf32> -> vector<128x128xf32>
    %29 = tpu.iota {dimensions = array<i32: 0>} : vector<128x128xi32>
    %30 = tpu.iota {dimensions = array<i32: 1>} : vector<128x128xi32>
    %31 = arith.xori %29, %30 : vector<128x128xi32>
    %c16_i32 = arith.constant 16 : i32
    %32 = vector.broadcast %c16_i32 : i32 to vector<128x128xi32>
    %33 = arith.cmpi slt, %31, %32 : vector<128x128xi32>
    %cst_8 = arith.constant -1.000000e+30 : f32
    %34 = vector.broadcast %cst_8 : f32 to vector<128x128xf32>
    %35 = arith.select %33, %28, %34 : vector<128x128xi1>, vector<128x128xf32>
    %cst_9 = arith.constant dense<0xFF800000> : vector<128xf32>
    %36 = vector.multi_reduction <maximumf>, %35, %cst_9 [1] : vector<128x128xf32> to vector<128xf32>
    %37 = vector.shape_cast %36 : vector<128xf32> to vector<128x1xf32>
    %38 = vector.broadcast %37 : vector<128x1xf32> to vector<128x128xf32>
    %39 = arith.subf %35, %38 : vector<128x128xf32>
    %40 = math.exp %39 : vector<128x128xf32>
    %cst_10 = arith.constant dense<0.000000e+00> : vector<128xf32>
    %41 = vector.multi_reduction <add>, %40, %cst_10 [1] : vector<128x128xf32> to vector<128xf32>
    %42 = vector.shape_cast %41 : vector<128xf32> to vector<128x1xf32>
    %43 = tpu.reciprocal %42 {approx = true} : vector<128x1xf32> -> vector<128x1xf32>
    %44 = vector.broadcast %43 : vector<128x1xf32> to vector<128x128xf32>
    %45 = arith.mulf %40, %44 : vector<128x128xf32>
    %46 = arith.truncf %45 : vector<128x128xf32> to vector<128x128xbf16>
    %cst_11 = arith.constant dense<0.000000e+00> : vector<64x128xf32>
    %47 = tpu.matmul %6, %46, %cst_11 {dimension_numbers = #tpu.dot_dimension_numbers<[1], [1], [0], [0], [0, 0, 1, 0], [], []>} : vector<64x128xbf16>, vector<128x128xbf16>, vector<64x128xf32> -> vector<64x128xf32>
    %48 = arith.truncf %47 : vector<64x128xf32> to vector<64x128xbf16>
    %c0_12 = arith.constant 0 : index
    %c0_13 = arith.constant 0 : index
    %c0_14 = arith.constant 0 : index
    %49 = vector.load %arg3[%c0_12, %c0_13, %c0_14] : memref<1x64x128xbf16, #tpu.memory_space<vmem>>, vector<1x64x128xbf16>
    %50 = vector.shape_cast %49 : vector<1x64x128xbf16> to vector<64x128xbf16>
    %51 = vector.shape_cast %48 : vector<64x128xbf16> to vector<1x64x128xbf16>
    tpu.vector_store %arg3[%c0_12, %c0_13, %c0_14], %51 {strides = array<i32>} : memref<1x64x128xbf16, #tpu.memory_space<vmem>>, vector<1x64x128xbf16>,
    return
  }
  func.func @transform_0(%arg0: i32) -> (i32, i32, i32) {
    %c0_i32 = arith.constant 0 : i32
    %c0_i32_0 = arith.constant 0 : i32
    %c0_i32_1 = arith.constant 0 : i32
    return %arg0, %c0_i32, %c0_i32_0 : i32, i32, i32
  }
  func.func @transform_1(%arg0: i32) -> (i32, i32) {
    %c0_i32 = arith.constant 0 : i32
    %c0_i32_0 = arith.constant 0 : i32
    %c0_i32_1 = arith.constant 0 : i32
    return %c0_i32, %c0_i32_0 : i32, i32
  }
  func.func @transform_2(%arg0: i32) -> (i32, i32, i32) {
    %c0_i32 = arith.constant 0 : i32
    %c0_i32_0 = arith.constant 0 : i32
    %c0_i32_1 = arith.constant 0 : i32
    return %arg0, %c0_i32, %c0_i32_0 : i32, i32, i32
  }
}

module attributes {stable_mosaic.version = 11 : i64} {
  func.func @kernel(%arg0: i32, %arg1: memref<128x128xbf16, #tpu.memory_space<vmem>>, %arg2: memref<128x128xbf16, #tpu.memory_space<vmem>>, %arg3: memref<1x128xbf16, #tpu.memory_space<vmem>>, %arg4: memref<128x128xbf16, #tpu.memory_space<vmem>>, %arg5: memref<128x128xbf16, #tpu.memory_space<vmem>>) attributes {dimension_semantics = [#tpu.dimension_semantics<parallel>], iteration_bounds = array<i64: 1>, scalar_prefetch = 0 : i64, scratch_operands = 0 : i64, tpu.core_type = #tpu.core_type<tc>, window_params = [{transform_indices = @transform_0, window_bounds = array<i64: 128, 128>}, {pipeline_mode = #tpu.pipeline_mode<synchronous>, transform_indices = @transform_1, window_bounds = array<i64: 128, 128>}, {pipeline_mode = #tpu.pipeline_mode<synchronous>, transform_indices = @transform_2, window_bounds = array<i64: 1, 128>}, {transform_indices = @transform_3, window_bounds = array<i64: 128, 128>}, {transform_indices = @transform_4, window_bounds = array<i64: 128, 128>}]} {
    %c0 = arith.constant 0 : index
    %c0_0 = arith.constant 0 : index
    %0 = vector.load %arg1[%c0, %c0_0] : memref<128x128xbf16, #tpu.memory_space<vmem>>, vector<128x128xbf16>
    %c0_1 = arith.constant 0 : index
    %c0_2 = arith.constant 0 : index
    %1 = vector.load %arg2[%c0_1, %c0_2] : memref<128x128xbf16, #tpu.memory_space<vmem>>, vector<128x128xbf16>
    %cst = arith.constant dense<0.000000e+00> : vector<128x128xf32>
    %2 = tpu.matmul %0, %1, %cst {dimension_numbers = #tpu.dot_dimension_numbers<[1], [0], [0], [1], [0, 0, 1, 1], [], []>} : vector<128x128xbf16>, vector<128x128xbf16>, vector<128x128xf32> -> vector<128x128xf32>
    %c0_3 = arith.constant 0 : index
    %c0_4 = arith.constant 0 : index
    %3 = vector.load %arg3[%c0_3, %c0_4] : memref<1x128xbf16, #tpu.memory_space<vmem>>, vector<1x128xbf16>
    %4 = arith.extf %3 : vector<1x128xbf16> to vector<1x128xf32>
    %5 = vector.broadcast %4 : vector<1x128xf32> to vector<128x128xf32>
    %6 = arith.addf %2, %5 : vector<128x128xf32>
    %c0_5 = arith.constant 0 : index
    %c0_6 = arith.constant 0 : index
    %7 = vector.load %arg4[%c0_5, %c0_6] : memref<128x128xbf16, #tpu.memory_space<vmem>>, vector<128x128xbf16>
    %8 = arith.extf %7 : vector<128x128xbf16> to vector<128x128xf32>
    %9 = arith.addf %6, %8 : vector<128x128xf32>
    %10 = arith.truncf %9 : vector<128x128xf32> to vector<128x128xbf16>
    %c0_7 = arith.constant 0 : index
    %c0_8 = arith.constant 0 : index
    %11 = vector.load %arg5[%c0_7, %c0_8] : memref<128x128xbf16, #tpu.memory_space<vmem>>, vector<128x128xbf16>
    tpu.vector_store %arg5[%c0_7, %c0_8], %10 {strides = array<i32>} : memref<128x128xbf16, #tpu.memory_space<vmem>>, vector<128x128xbf16>,
    return
  }
  func.func @transform_0(%arg0: i32) -> (i32, i32) {
    %c0_i32 = arith.constant 0 : i32
    %c0_i32_0 = arith.constant 0 : i32
    return %arg0, %c0_i32 : i32, i32
  }
  func.func @transform_1(%arg0: i32) -> (i32, i32) {
    %c0_i32 = arith.constant 0 : i32
    %c0_i32_0 = arith.constant 0 : i32
    %c0_i32_1 = arith.constant 0 : i32
    return %c0_i32, %c0_i32_0 : i32, i32
  }
  func.func @transform_2(%arg0: i32) -> (i32, i32) {
    %c0_i32 = arith.constant 0 : i32
    %c0_i32_0 = arith.constant 0 : i32
    %c0_i32_1 = arith.constant 0 : i32
    return %c0_i32, %c0_i32_0 : i32, i32
  }
  func.func @transform_3(%arg0: i32) -> (i32, i32) {
    %c0_i32 = arith.constant 0 : i32
    %c0_i32_0 = arith.constant 0 : i32
    return %arg0, %c0_i32 : i32, i32
  }
  func.func @transform_4(%arg0: i32) -> (i32, i32) {
    %c0_i32 = arith.constant 0 : i32
    %c0_i32_0 = arith.constant 0 : i32
    return %arg0, %c0_i32 : i32, i32
  }
}

module attributes {stable_mosaic.version = 11 : i64} {
  func.func @kernel(%arg0: i32, %arg1: memref<128x128xbf16, #tpu.memory_space<vmem>>, %arg2: memref<128x384xbf16, #tpu.memory_space<vmem>>, %arg3: memref<1x128xf32, #tpu.memory_space<vmem>>, %arg4: memref<1x128xf32, #tpu.memory_space<vmem>>, %arg5: memref<128x384xbf16, #tpu.memory_space<vmem>>) attributes {dimension_semantics = [#tpu.dimension_semantics<parallel>], iteration_bounds = array<i64: 1>, scalar_prefetch = 0 : i64, scratch_operands = 0 : i64, tpu.core_type = #tpu.core_type<tc>, window_params = [{transform_indices = @transform_0, window_bounds = array<i64: 128, 128>}, {pipeline_mode = #tpu.pipeline_mode<synchronous>, transform_indices = @transform_1, window_bounds = array<i64: 128, 384>}, {pipeline_mode = #tpu.pipeline_mode<synchronous>, transform_indices = @transform_2, window_bounds = array<i64: 1, 128>}, {pipeline_mode = #tpu.pipeline_mode<synchronous>, transform_indices = @transform_3, window_bounds = array<i64: 1, 128>}, {transform_indices = @transform_4, window_bounds = array<i64: 128, 384>}]} {
    %c0 = arith.constant 0 : index
    %c0_0 = arith.constant 0 : index
    %0 = vector.load %arg1[%c0, %c0_0] : memref<128x128xbf16, #tpu.memory_space<vmem>>, vector<128x128xbf16>
    %1 = arith.extf %0 : vector<128x128xbf16> to vector<128x128xf32>
    %cst = arith.constant dense<0.000000e+00> : vector<128xf32>
    %2 = vector.multi_reduction <add>, %1, %cst [1] : vector<128x128xf32> to vector<128xf32>
    %3 = vector.shape_cast %2 : vector<128xf32> to vector<128x1xf32>
    %cst_1 = arith.constant 1.280000e+02 : f32
    %4 = vector.broadcast %cst_1 : f32 to vector<128x1xf32>
    %5 = arith.divf %3, %4 : vector<128x1xf32>
    %6 = vector.broadcast %5 : vector<128x1xf32> to vector<128x128xf32>
    %7 = arith.subf %1, %6 : vector<128x128xf32>
    %8 = arith.mulf %7, %7 : vector<128x128xf32>
    %cst_2 = arith.constant dense<0.000000e+00> : vector<128xf32>
    %9 = vector.multi_reduction <add>, %8, %cst_2 [1] : vector<128x128xf32> to vector<128xf32>
    %10 = vector.shape_cast %9 : vector<128xf32> to vector<128x1xf32>
    %cst_3 = arith.constant 1.280000e+02 : f32
    %11 = vector.broadcast %cst_3 : f32 to vector<128x1xf32>
    %12 = arith.divf %10, %11 : vector<128x1xf32>
    %cst_4 = arith.constant 9.99999974E-6 : f32
    %13 = vector.broadcast %cst_4 : f32 to vector<128x1xf32>
    %14 = arith.addf %12, %13 : vector<128x1xf32>
    %15 = math.rsqrt %14 : vector<128x1xf32>
    %16 = vector.broadcast %15 : vector<128x1xf32> to vector<128x128xf32>
    %17 = arith.mulf %7, %16 : vector<128x128xf32>
    %c0_5 = arith.constant 0 : index
    %c0_6 = arith.constant 0 : index
    %18 = vector.load %arg3[%c0_5, %c0_6] : memref<1x128xf32, #tpu.memory_space<vmem>>, vector<1x128xf32>
    %19 = vector.broadcast %18 : vector<1x128xf32> to vector<128x128xf32>
    %20 = arith.mulf %17, %19 : vector<128x128xf32>
    %c0_7 = arith.constant 0 : index
    %c0_8 = arith.constant 0 : index
    %21 = vector.load %arg4[%c0_7, %c0_8] : memref<1x128xf32, #tpu.memory_space<vmem>>, vector<1x128xf32>
    %22 = vector.broadcast %21 : vector<1x128xf32> to vector<128x128xf32>
    %23 = arith.addf %20, %22 : vector<128x128xf32>
    %24 = arith.truncf %23 : vector<128x128xf32> to vector<128x128xbf16>
    %c0_9 = arith.constant 0 : index
    %c0_10 = arith.constant 0 : index
    %25 = vector.load %arg2[%c0_9, %c0_10] : memref<128x384xbf16, #tpu.memory_space<vmem>>, vector<128x384xbf16>
    %cst_11 = arith.constant dense<0.000000e+00> : vector<128x384xf32>
    %26 = tpu.matmul %24, %25, %cst_11 {dimension_numbers = #tpu.dot_dimension_numbers<[1], [0], [0], [1], [0, 0, 1, 1], [], []>} : vector<128x128xbf16>, vector<128x384xbf16>, vector<128x384xf32> -> vector<128x384xf32>
    %27 = arith.truncf %26 : vector<128x384xf32> to vector<128x384xbf16>
    %c0_12 = arith.constant 0 : index
    %c0_13 = arith.constant 0 : index
    %28 = vector.load %arg5[%c0_12, %c0_13] : memref<128x384xbf16, #tpu.memory_space<vmem>>, vector<128x384xbf16>
    tpu.vector_store %arg5[%c0_12, %c0_13], %27 {strides = array<i32>} : memref<128x384xbf16, #tpu.memory_space<vmem>>, vector<128x384xbf16>,
    return
  }
  func.func @transform_0(%arg0: i32) -> (i32, i32) {
    %c0_i32 = arith.constant 0 : i32
    %c0_i32_0 = arith.constant 0 : i32
    return %arg0, %c0_i32 : i32, i32
  }
  func.func @transform_1(%arg0: i32) -> (i32, i32) {
    %c0_i32 = arith.constant 0 : i32
    %c0_i32_0 = arith.constant 0 : i32
    %c0_i32_1 = arith.constant 0 : i32
    return %c0_i32, %c0_i32_0 : i32, i32
  }
  func.func @transform_2(%arg0: i32) -> (i32, i32) {
    %c0_i32 = arith.constant 0 : i32
    %c0_i32_0 = arith.constant 0 : i32
    %c0_i32_1 = arith.constant 0 : i32
    return %c0_i32, %c0_i32_0 : i32, i32
  }
  func.func @transform_3(%arg0: i32) -> (i32, i32) {
    %c0_i32 = arith.constant 0 : i32
    %c0_i32_0 = arith.constant 0 : i32
    %c0_i32_1 = arith.constant 0 : i32
    return %c0_i32, %c0_i32_0 : i32, i32
  }
  func.func @transform_4(%arg0: i32) -> (i32, i32) {
    %c0_i32 = arith.constant 0 : i32
    %c0_i32_0 = arith.constant 0 : i32
    return %arg0, %c0_i32 : i32, i32
  }
}

module attributes {stable_mosaic.version = 11 : i64} {
  func.func @kernel(%arg0: i32, %arg1: memref<128x128xbf16, #tpu.memory_space<vmem>>, %arg2: memref<128x384xbf16, #tpu.memory_space<vmem>>, %arg3: memref<1x128xf32, #tpu.memory_space<vmem>>, %arg4: memref<1x128xf32, #tpu.memory_space<vmem>>, %arg5: memref<128x384xbf16, #tpu.memory_space<vmem>>) attributes {dimension_semantics = [#tpu.dimension_semantics<parallel>], iteration_bounds = array<i64: 1>, scalar_prefetch = 0 : i64, scratch_operands = 0 : i64, tpu.core_type = #tpu.core_type<tc>, window_params = [{transform_indices = @transform_0, window_bounds = array<i64: 128, 128>}, {pipeline_mode = #tpu.pipeline_mode<synchronous>, transform_indices = @transform_1, window_bounds = array<i64: 128, 384>}, {pipeline_mode = #tpu.pipeline_mode<synchronous>, transform_indices = @transform_2, window_bounds = array<i64: 1, 128>}, {pipeline_mode = #tpu.pipeline_mode<synchronous>, transform_indices = @transform_3, window_bounds = array<i64: 1, 128>}, {transform_indices = @transform_4, window_bounds = array<i64: 128, 384>}]} {
    %c0 = arith.constant 0 : index
    %c0_0 = arith.constant 0 : index
    %0 = vector.load %arg1[%c0, %c0_0] : memref<128x128xbf16, #tpu.memory_space<vmem>>, vector<128x128xbf16>
    %1 = arith.extf %0 : vector<128x128xbf16> to vector<128x128xf32>
    %cst = arith.constant dense<0.000000e+00> : vector<128xf32>
    %2 = vector.multi_reduction <add>, %1, %cst [1] : vector<128x128xf32> to vector<128xf32>
    %3 = vector.shape_cast %2 : vector<128xf32> to vector<128x1xf32>
    %cst_1 = arith.constant 1.280000e+02 : f32
    %4 = vector.broadcast %cst_1 : f32 to vector<128x1xf32>
    %5 = arith.divf %3, %4 : vector<128x1xf32>
    %6 = vector.broadcast %5 : vector<128x1xf32> to vector<128x128xf32>
    %7 = arith.subf %1, %6 : vector<128x128xf32>
    %8 = arith.mulf %7, %7 : vector<128x128xf32>
    %cst_2 = arith.constant dense<0.000000e+00> : vector<128xf32>
    %9 = vector.multi_reduction <add>, %8, %cst_2 [1] : vector<128x128xf32> to vector<128xf32>
    %10 = vector.shape_cast %9 : vector<128xf32> to vector<128x1xf32>
    %cst_3 = arith.constant 1.280000e+02 : f32
    %11 = vector.broadcast %cst_3 : f32 to vector<128x1xf32>
    %12 = arith.divf %10, %11 : vector<128x1xf32>
    %cst_4 = arith.constant 9.99999974E-6 : f32
    %13 = vector.broadcast %cst_4 : f32 to vector<128x1xf32>
    %14 = arith.addf %12, %13 : vector<128x1xf32>
    %15 = math.rsqrt %14 : vector<128x1xf32>
    %16 = vector.broadcast %15 : vector<128x1xf32> to vector<128x128xf32>
    %17 = arith.mulf %7, %16 : vector<128x128xf32>
    %c0_5 = arith.constant 0 : index
    %c0_6 = arith.constant 0 : index
    %18 = vector.load %arg3[%c0_5, %c0_6] : memref<1x128xf32, #tpu.memory_space<vmem>>, vector<1x128xf32>
    %19 = vector.broadcast %18 : vector<1x128xf32> to vector<128x128xf32>
    %20 = arith.mulf %17, %19 : vector<128x128xf32>
    %c0_7 = arith.constant 0 : index
    %c0_8 = arith.constant 0 : index
    %21 = vector.load %arg4[%c0_7, %c0_8] : memref<1x128xf32, #tpu.memory_space<vmem>>, vector<1x128xf32>
    %22 = vector.broadcast %21 : vector<1x128xf32> to vector<128x128xf32>
    %23 = arith.addf %20, %22 : vector<128x128xf32>
    %24 = arith.truncf %23 : vector<128x128xf32> to vector<128x128xbf16>
    %c0_9 = arith.constant 0 : index
    %c0_10 = arith.constant 0 : index
    %25 = vector.load %arg2[%c0_9, %c0_10] : memref<128x384xbf16, #tpu.memory_space<vmem>>, vector<128x384xbf16>
    %cst_11 = arith.constant dense<0.000000e+00> : vector<128x384xf32>
    %26 = tpu.matmul %24, %25, %cst_11 {dimension_numbers = #tpu.dot_dimension_numbers<[1], [0], [0], [1], [0, 0, 1, 1], [], []>} : vector<128x128xbf16>, vector<128x384xbf16>, vector<128x384xf32> -> vector<128x384xf32>
    %27 = arith.truncf %26 : vector<128x384xf32> to vector<128x384xbf16>
    %c0_12 = arith.constant 0 : index
    %c0_13 = arith.constant 0 : index
    %28 = vector.load %arg5[%c0_12, %c0_13] : memref<128x384xbf16, #tpu.memory_space<vmem>>, vector<128x384xbf16>
    tpu.vector_store %arg5[%c0_12, %c0_13], %27 {strides = array<i32>} : memref<128x384xbf16, #tpu.memory_space<vmem>>, vector<128x384xbf16>,
    return
  }
  func.func @transform_0(%arg0: i32) -> (i32, i32) {
    %c0_i32 = arith.constant 0 : i32
    %c0_i32_0 = arith.constant 0 : i32
    return %arg0, %c0_i32 : i32, i32
  }
  func.func @transform_1(%arg0: i32) -> (i32, i32) {
    %c0_i32 = arith.constant 0 : i32
    %c0_i32_0 = arith.constant 0 : i32
    %c0_i32_1 = arith.constant 0 : i32
    return %c0_i32, %c0_i32_0 : i32, i32
  }
  func.func @transform_2(%arg0: i32) -> (i32, i32) {
    %c0_i32 = arith.constant 0 : i32
    %c0_i32_0 = arith.constant 0 : i32
    %c0_i32_1 = arith.constant 0 : i32
    return %c0_i32, %c0_i32_0 : i32, i32
  }
  func.func @transform_3(%arg0: i32) -> (i32, i32) {
    %c0_i32 = arith.constant 0 : i32
    %c0_i32_0 = arith.constant 0 : i32
    %c0_i32_1 = arith.constant 0 : i32
    return %c0_i32, %c0_i32_0 : i32, i32
  }
  func.func @transform_4(%arg0: i32) -> (i32, i32) {
    %c0_i32 = arith.constant 0 : i32
    %c0_i32_0 = arith.constant 0 : i32
    return %arg0, %c0_i32 : i32, i32
  }
}

module attributes {stable_mosaic.version = 11 : i64} {
  func.func @kernel(%arg0: i32, %arg1: memref<128x256xbf16, #tpu.memory_space<vmem>>, %arg2: memref<256x512xbf16, #tpu.memory_space<vmem>>, %arg3: memref<1x256xf32, #tpu.memory_space<vmem>>, %arg4: memref<1x256xf32, #tpu.memory_space<vmem>>, %arg5: memref<1x512xbf16, #tpu.memory_space<vmem>>, %arg6: memref<128x512xbf16, #tpu.memory_space<vmem>>) attributes {dimension_semantics = [#tpu.dimension_semantics<parallel>], iteration_bounds = array<i64: 1>, scalar_prefetch = 0 : i64, scratch_operands = 0 : i64, tpu.core_type = #tpu.core_type<tc>, window_params = [{transform_indices = @transform_0, window_bounds = array<i64: 128, 256>}, {pipeline_mode = #tpu.pipeline_mode<synchronous>, transform_indices = @transform_1, window_bounds = array<i64: 256, 512>}, {pipeline_mode = #tpu.pipeline_mode<synchronous>, transform_indices = @transform_2, window_bounds = array<i64: 1, 256>}, {pipeline_mode = #tpu.pipeline_mode<synchronous>, transform_indices = @transform_3, window_bounds = array<i64: 1, 256>}, {pipeline_mode = #tpu.pipeline_mode<synchronous>, transform_indices = @transform_4, window_bounds = array<i64: 1, 512>}, {transform_indices = @transform_5, window_bounds = array<i64: 128, 512>}]} {
    %c0 = arith.constant 0 : index
    %c0_0 = arith.constant 0 : index
    %0 = vector.load %arg1[%c0, %c0_0] : memref<128x256xbf16, #tpu.memory_space<vmem>>, vector<128x256xbf16>
    %1 = arith.extf %0 : vector<128x256xbf16> to vector<128x256xf32>
    %cst = arith.constant dense<0.000000e+00> : vector<128xf32>
    %2 = vector.multi_reduction <add>, %1, %cst [1] : vector<128x256xf32> to vector<128xf32>
    %3 = vector.shape_cast %2 : vector<128xf32> to vector<128x1xf32>
    %cst_1 = arith.constant 2.560000e+02 : f32
    %4 = vector.broadcast %cst_1 : f32 to vector<128x1xf32>
    %5 = arith.divf %3, %4 : vector<128x1xf32>
    %6 = vector.broadcast %5 : vector<128x1xf32> to vector<128x256xf32>
    %7 = arith.subf %1, %6 : vector<128x256xf32>
    %8 = arith.mulf %7, %7 : vector<128x256xf32>
    %cst_2 = arith.constant dense<0.000000e+00> : vector<128xf32>
    %9 = vector.multi_reduction <add>, %8, %cst_2 [1] : vector<128x256xf32> to vector<128xf32>
    %10 = vector.shape_cast %9 : vector<128xf32> to vector<128x1xf32>
    %cst_3 = arith.constant 2.560000e+02 : f32
    %11 = vector.broadcast %cst_3 : f32 to vector<128x1xf32>
    %12 = arith.divf %10, %11 : vector<128x1xf32>
    %cst_4 = arith.constant 9.99999974E-6 : f32
    %13 = vector.broadcast %cst_4 : f32 to vector<128x1xf32>
    %14 = arith.addf %12, %13 : vector<128x1xf32>
    %15 = math.rsqrt %14 : vector<128x1xf32>
    %16 = vector.broadcast %15 : vector<128x1xf32> to vector<128x256xf32>
    %17 = arith.mulf %7, %16 : vector<128x256xf32>
    %c0_5 = arith.constant 0 : index
    %c0_6 = arith.constant 0 : index
    %18 = vector.load %arg3[%c0_5, %c0_6] : memref<1x256xf32, #tpu.memory_space<vmem>>, vector<1x256xf32>
    %19 = vector.broadcast %18 : vector<1x256xf32> to vector<128x256xf32>
    %20 = arith.mulf %17, %19 : vector<128x256xf32>
    %c0_7 = arith.constant 0 : index
    %c0_8 = arith.constant 0 : index
    %21 = vector.load %arg4[%c0_7, %c0_8] : memref<1x256xf32, #tpu.memory_space<vmem>>, vector<1x256xf32>
    %22 = vector.broadcast %21 : vector<1x256xf32> to vector<128x256xf32>
    %23 = arith.addf %20, %22 : vector<128x256xf32>
    %24 = arith.truncf %23 : vector<128x256xf32> to vector<128x256xbf16>
    %c0_9 = arith.constant 0 : index
    %c0_10 = arith.constant 0 : index
    %25 = vector.load %arg2[%c0_9, %c0_10] : memref<256x512xbf16, #tpu.memory_space<vmem>>, vector<256x512xbf16>
    %cst_11 = arith.constant dense<0.000000e+00> : vector<128x512xf32>
    %26 = tpu.matmul %24, %25, %cst_11 {dimension_numbers = #tpu.dot_dimension_numbers<[1], [0], [0], [1], [0, 0, 1, 1], [], []>} : vector<128x256xbf16>, vector<256x512xbf16>, vector<128x512xf32> -> vector<128x512xf32>
    %c0_12 = arith.constant 0 : index
    %c0_13 = arith.constant 0 : index
    %27 = vector.load %arg5[%c0_12, %c0_13] : memref<1x512xbf16, #tpu.memory_space<vmem>>, vector<1x512xbf16>
    %28 = arith.extf %27 : vector<1x512xbf16> to vector<1x512xf32>
    %29 = vector.broadcast %28 : vector<1x512xf32> to vector<128x512xf32>
    %30 = arith.addf %26, %29 : vector<128x512xf32>
    %31 = arith.truncf %30 : vector<128x512xf32> to vector<128x512xbf16>
    %c0_14 = arith.constant 0 : index
    %c0_15 = arith.constant 0 : index
    %32 = vector.load %arg6[%c0_14, %c0_15] : memref<128x512xbf16, #tpu.memory_space<vmem>>, vector<128x512xbf16>
    tpu.vector_store %arg6[%c0_14, %c0_15], %31 {strides = array<i32>} : memref<128x512xbf16, #tpu.memory_space<vmem>>, vector<128x512xbf16>,
    return
  }
  func.func @transform_0(%arg0: i32) -> (i32, i32) {
    %c0_i32 = arith.constant 0 : i32
    %c0_i32_0 = arith.constant 0 : i32
    return %arg0, %c0_i32 : i32, i32
  }
  func.func @transform_1(%arg0: i32) -> (i32, i32) {
    %c0_i32 = arith.constant 0 : i32
    %c0_i32_0 = arith.constant 0 : i32
    %c0_i32_1 = arith.constant 0 : i32
    return %c0_i32, %c0_i32_0 : i32, i32
  }
  func.func @transform_2(%arg0: i32) -> (i32, i32) {
    %c0_i32 = arith.constant 0 : i32
    %c0_i32_0 = arith.constant 0 : i32
    %c0_i32_1 = arith.constant 0 : i32
    return %c0_i32, %c0_i32_0 : i32, i32
  }
  func.func @transform_3(%arg0: i32) -> (i32, i32) {
    %c0_i32 = arith.constant 0 : i32
    %c0_i32_0 = arith.constant 0 : i32
    %c0_i32_1 = arith.constant 0 : i32
    return %c0_i32, %c0_i32_0 : i32, i32
  }
  func.func @transform_4(%arg0: i32) -> (i32, i32) {
    %c0_i32 = arith.constant 0 : i32
    %c0_i32_0 = arith.constant 0 : i32
    %c0_i32_1 = arith.constant 0 : i32
    return %c0_i32, %c0_i32_0 : i32, i32
  }
  func.func @transform_5(%arg0: i32) -> (i32, i32) {
    %c0_i32 = arith.constant 0 : i32
    %c0_i32_0 = arith.constant 0 : i32
    return %arg0, %c0_i32 : i32, i32
  }
}

module attributes {stable_mosaic.version = 11 : i64} {
  func.func @kernel(%arg0: i32, %arg1: memref<8x8x4x128xbf16, #tpu.memory_space<vmem>>, %arg2: memref<3x3x4x128xbf16, #tpu.memory_space<vmem>>, %arg3: memref<4x128xbf16, #tpu.memory_space<vmem>>, %arg4: memref<8x8x4x128xbf16, #tpu.memory_space<vmem>>, %arg5: memref<10x10x4x128xf32, #tpu.memory_space<vmem>>) attributes {dimension_semantics = [#tpu.dimension_semantics<parallel>], iteration_bounds = array<i64: 2>, scalar_prefetch = 0 : i64, scratch_operands = 1 : i64, tpu.core_type = #tpu.core_type<tc>, window_params = [{transform_indices = @transform_0, window_bounds = array<i64: 8, 8, 4, 128>}, {pipeline_mode = #tpu.pipeline_mode<synchronous>, transform_indices = @transform_1, window_bounds = array<i64: 3, 3, 4, 128>}, {pipeline_mode = #tpu.pipeline_mode<synchronous>, transform_indices = @transform_2, window_bounds = array<i64: 4, 128>}, {transform_indices = @transform_3, window_bounds = array<i64: 8, 8, 4, 128>}]} {
    %cst = arith.constant 0.000000e+00 : f32
    %0 = vector.broadcast %cst : f32 to vector<1x10x4x128xf32>
    %c0 = arith.constant 0 : index
    %c0_0 = arith.constant 0 : index
    %c0_1 = arith.constant 0 : index
    %c0_2 = arith.constant 0 : index
    %1 = vector.load %arg5[%c0, %c0_0, %c0_1, %c0_2] : memref<10x10x4x128xf32, #tpu.memory_space<vmem>>, vector<1x10x4x128xf32>
    tpu.vector_store %arg5[%c0, %c0_0, %c0_1, %c0_2], %0 {strides = array<i32>} : memref<10x10x4x128xf32, #tpu.memory_space<vmem>>, vector<1x10x4x128xf32>,
    %cst_3 = arith.constant 0.000000e+00 : f32
    %2 = vector.broadcast %cst_3 : f32 to vector<1x10x4x128xf32>
    %c9 = arith.constant 9 : index
    %c0_4 = arith.constant 0 : index
    %c0_5 = arith.constant 0 : index
    %c0_6 = arith.constant 0 : index
    %3 = vector.load %arg5[%c9, %c0_4, %c0_5, %c0_6] : memref<10x10x4x128xf32, #tpu.memory_space<vmem>>, vector<1x10x4x128xf32>
    tpu.vector_store %arg5[%c9, %c0_4, %c0_5, %c0_6], %2 {strides = array<i32>} : memref<10x10x4x128xf32, #tpu.memory_space<vmem>>, vector<1x10x4x128xf32>,
    %cst_7 = arith.constant 0.000000e+00 : f32
    %4 = vector.broadcast %cst_7 : f32 to vector<10x1x4x128xf32>
    %c0_8 = arith.constant 0 : index
    %c0_9 = arith.constant 0 : index
    %c0_10 = arith.constant 0 : index
    %c0_11 = arith.constant 0 : index
    %5 = vector.load %arg5[%c0_8, %c0_9, %c0_10, %c0_11] : memref<10x10x4x128xf32, #tpu.memory_space<vmem>>, vector<10x1x4x128xf32>
    tpu.vector_store %arg5[%c0_8, %c0_9, %c0_10, %c0_11], %4 {strides = array<i32>} : memref<10x10x4x128xf32, #tpu.memory_space<vmem>>, vector<10x1x4x128xf32>,
    %cst_12 = arith.constant 0.000000e+00 : f32
    %6 = vector.broadcast %cst_12 : f32 to vector<10x1x4x128xf32>
    %c0_13 = arith.constant 0 : index
    %c9_14 = arith.constant 9 : index
    %c0_15 = arith.constant 0 : index
    %c0_16 = arith.constant 0 : index
    %7 = vector.load %arg5[%c0_13, %c9_14, %c0_15, %c0_16] : memref<10x10x4x128xf32, #tpu.memory_space<vmem>>, vector<10x1x4x128xf32>
    tpu.vector_store %arg5[%c0_13, %c9_14, %c0_15, %c0_16], %6 {strides = array<i32>} : memref<10x10x4x128xf32, #tpu.memory_space<vmem>>, vector<10x1x4x128xf32>,
    %c0_17 = arith.constant 0 : index
    %c0_18 = arith.constant 0 : index
    %c0_19 = arith.constant 0 : index
    %c0_20 = arith.constant 0 : index
    %8 = vector.load %arg1[%c0_17, %c0_18, %c0_19, %c0_20] : memref<8x8x4x128xbf16, #tpu.memory_space<vmem>>, vector<8x8x4x128xbf16>
    %9 = arith.extf %8 : vector<8x8x4x128xbf16> to vector<8x8x4x128xf32>
    %c1 = arith.constant 1 : index
    %c1_21 = arith.constant 1 : index
    %c0_22 = arith.constant 0 : index
    %c0_23 = arith.constant 0 : index
    %10 = vector.load %arg5[%c1, %c1_21, %c0_22, %c0_23] : memref<10x10x4x128xf32, #tpu.memory_space<vmem>>, vector<8x8x4x128xf32>
    tpu.vector_store %arg5[%c1, %c1_21, %c0_22, %c0_23], %9 {strides = array<i32>} : memref<10x10x4x128xf32, #tpu.memory_space<vmem>>, vector<8x8x4x128xf32>,
    %c0_24 = arith.constant 0 : index
    %c0_25 = arith.constant 0 : index
    %c0_26 = arith.constant 0 : index
    %c0_27 = arith.constant 0 : index
    %11 = vector.load %arg2[%c0_24, %c0_25, %c0_26, %c0_27] : memref<3x3x4x128xbf16, #tpu.memory_space<vmem>>, vector<3x3x4x128xbf16>
    %12 = arith.extf %11 : vector<3x3x4x128xbf16> to vector<3x3x4x128xf32>
    %cst_28 = arith.constant 0.000000e+00 : f32
    %13 = vector.broadcast %cst_28 : f32 to vector<8x8x4x128xf32>
    %c0_29 = arith.constant 0 : index
    %c0_30 = arith.constant 0 : index
    %c0_31 = arith.constant 0 : index
    %c0_32 = arith.constant 0 : index
    %14 = vector.load %arg5[%c0_29, %c0_30, %c0_31, %c0_32] : memref<10x10x4x128xf32, #tpu.memory_space<vmem>>, vector<8x8x4x128xf32>
    %15 = vector.extract_strided_slice %12 {offsets = [0, 0, 0, 0], sizes = [1, 1, 4, 128], strides = [1, 1, 1, 1]} : vector<3x3x4x128xf32> to vector<1x1x4x128xf32>
    %16 = vector.shape_cast %15 : vector<1x1x4x128xf32> to vector<4x128xf32>
    %17 = vector.shape_cast %16 : vector<4x128xf32> to vector<1x1x4x128xf32>
    %18 = vector.broadcast %17 : vector<1x1x4x128xf32> to vector<8x8x4x128xf32>
    %19 = arith.mulf %14, %18 : vector<8x8x4x128xf32>
    %20 = arith.addf %13, %19 : vector<8x8x4x128xf32>
    %c0_33 = arith.constant 0 : index
    %c1_34 = arith.constant 1 : index
    %c0_35 = arith.constant 0 : index
    %c0_36 = arith.constant 0 : index
    %21 = vector.load %arg5[%c0_33, %c1_34, %c0_35, %c0_36] : memref<10x10x4x128xf32, #tpu.memory_space<vmem>>, vector<8x8x4x128xf32>
    %22 = vector.extract_strided_slice %12 {offsets = [0, 1, 0, 0], sizes = [1, 1, 4, 128], strides = [1, 1, 1, 1]} : vector<3x3x4x128xf32> to vector<1x1x4x128xf32>
    %23 = vector.shape_cast %22 : vector<1x1x4x128xf32> to vector<4x128xf32>
    %24 = vector.shape_cast %23 : vector<4x128xf32> to vector<1x1x4x128xf32>
    %25 = vector.broadcast %24 : vector<1x1x4x128xf32> to vector<8x8x4x128xf32>
    %26 = arith.mulf %21, %25 : vector<8x8x4x128xf32>
    %27 = arith.addf %20, %26 : vector<8x8x4x128xf32>
    %c0_37 = arith.constant 0 : index
    %c2 = arith.constant 2 : index
    %c0_38 = arith.constant 0 : index
    %c0_39 = arith.constant 0 : index
    %28 = vector.load %arg5[%c0_37, %c2, %c0_38, %c0_39] : memref<10x10x4x128xf32, #tpu.memory_space<vmem>>, vector<8x8x4x128xf32>
    %29 = vector.extract_strided_slice %12 {offsets = [0, 2, 0, 0], sizes = [1, 1, 4, 128], strides = [1, 1, 1, 1]} : vector<3x3x4x128xf32> to vector<1x1x4x128xf32>
    %30 = vector.shape_cast %29 : vector<1x1x4x128xf32> to vector<4x128xf32>
    %31 = vector.shape_cast %30 : vector<4x128xf32> to vector<1x1x4x128xf32>
    %32 = vector.broadcast %31 : vector<1x1x4x128xf32> to vector<8x8x4x128xf32>
    %33 = arith.mulf %28, %32 : vector<8x8x4x128xf32>
    %34 = arith.addf %27, %33 : vector<8x8x4x128xf32>
    %c1_40 = arith.constant 1 : index
    %c0_41 = arith.constant 0 : index
    %c0_42 = arith.constant 0 : index
    %c0_43 = arith.constant 0 : index
    %35 = vector.load %arg5[%c1_40, %c0_41, %c0_42, %c0_43] : memref<10x10x4x128xf32, #tpu.memory_space<vmem>>, vector<8x8x4x128xf32>
    %36 = vector.extract_strided_slice %12 {offsets = [1, 0, 0, 0], sizes = [1, 1, 4, 128], strides = [1, 1, 1, 1]} : vector<3x3x4x128xf32> to vector<1x1x4x128xf32>
    %37 = vector.shape_cast %36 : vector<1x1x4x128xf32> to vector<4x128xf32>
    %38 = vector.shape_cast %37 : vector<4x128xf32> to vector<1x1x4x128xf32>
    %39 = vector.broadcast %38 : vector<1x1x4x128xf32> to vector<8x8x4x128xf32>
    %40 = arith.mulf %35, %39 : vector<8x8x4x128xf32>
    %41 = arith.addf %34, %40 : vector<8x8x4x128xf32>
    %c1_44 = arith.constant 1 : index
    %c1_45 = arith.constant 1 : index
    %c0_46 = arith.constant 0 : index
    %c0_47 = arith.constant 0 : index
    %42 = vector.load %arg5[%c1_44, %c1_45, %c0_46, %c0_47] : memref<10x10x4x128xf32, #tpu.memory_space<vmem>>, vector<8x8x4x128xf32>
    %43 = vector.extract_strided_slice %12 {offsets = [1, 1, 0, 0], sizes = [1, 1, 4, 128], strides = [1, 1, 1, 1]} : vector<3x3x4x128xf32> to vector<1x1x4x128xf32>
    %44 = vector.shape_cast %43 : vector<1x1x4x128xf32> to vector<4x128xf32>
    %45 = vector.shape_cast %44 : vector<4x128xf32> to vector<1x1x4x128xf32>
    %46 = vector.broadcast %45 : vector<1x1x4x128xf32> to vector<8x8x4x128xf32>
    %47 = arith.mulf %42, %46 : vector<8x8x4x128xf32>
    %48 = arith.addf %41, %47 : vector<8x8x4x128xf32>
    %c1_48 = arith.constant 1 : index
    %c2_49 = arith.constant 2 : index
    %c0_50 = arith.constant 0 : index
    %c0_51 = arith.constant 0 : index
    %49 = vector.load %arg5[%c1_48, %c2_49, %c0_50, %c0_51] : memref<10x10x4x128xf32, #tpu.memory_space<vmem>>, vector<8x8x4x128xf32>
    %50 = vector.extract_strided_slice %12 {offsets = [1, 2, 0, 0], sizes = [1, 1, 4, 128], strides = [1, 1, 1, 1]} : vector<3x3x4x128xf32> to vector<1x1x4x128xf32>
    %51 = vector.shape_cast %50 : vector<1x1x4x128xf32> to vector<4x128xf32>
    %52 = vector.shape_cast %51 : vector<4x128xf32> to vector<1x1x4x128xf32>
    %53 = vector.broadcast %52 : vector<1x1x4x128xf32> to vector<8x8x4x128xf32>
    %54 = arith.mulf %49, %53 : vector<8x8x4x128xf32>
    %55 = arith.addf %48, %54 : vector<8x8x4x128xf32>
    %c2_52 = arith.constant 2 : index
    %c0_53 = arith.constant 0 : index
    %c0_54 = arith.constant 0 : index
    %c0_55 = arith.constant 0 : index
    %56 = vector.load %arg5[%c2_52, %c0_53, %c0_54, %c0_55] : memref<10x10x4x128xf32, #tpu.memory_space<vmem>>, vector<8x8x4x128xf32>
    %57 = vector.extract_strided_slice %12 {offsets = [2, 0, 0, 0], sizes = [1, 1, 4, 128], strides = [1, 1, 1, 1]} : vector<3x3x4x128xf32> to vector<1x1x4x128xf32>
    %58 = vector.shape_cast %57 : vector<1x1x4x128xf32> to vector<4x128xf32>
    %59 = vector.shape_cast %58 : vector<4x128xf32> to vector<1x1x4x128xf32>
    %60 = vector.broadcast %59 : vector<1x1x4x128xf32> to vector<8x8x4x128xf32>
    %61 = arith.mulf %56, %60 : vector<8x8x4x128xf32>
    %62 = arith.addf %55, %61 : vector<8x8x4x128xf32>
    %c2_56 = arith.constant 2 : index
    %c1_57 = arith.constant 1 : index
    %c0_58 = arith.constant 0 : index
    %c0_59 = arith.constant 0 : index
    %63 = vector.load %arg5[%c2_56, %c1_57, %c0_58, %c0_59] : memref<10x10x4x128xf32, #tpu.memory_space<vmem>>, vector<8x8x4x128xf32>
    %64 = vector.extract_strided_slice %12 {offsets = [2, 1, 0, 0], sizes = [1, 1, 4, 128], strides = [1, 1, 1, 1]} : vector<3x3x4x128xf32> to vector<1x1x4x128xf32>
    %65 = vector.shape_cast %64 : vector<1x1x4x128xf32> to vector<4x128xf32>
    %66 = vector.shape_cast %65 : vector<4x128xf32> to vector<1x1x4x128xf32>
    %67 = vector.broadcast %66 : vector<1x1x4x128xf32> to vector<8x8x4x128xf32>
    %68 = arith.mulf %63, %67 : vector<8x8x4x128xf32>
    %69 = arith.addf %62, %68 : vector<8x8x4x128xf32>
    %c2_60 = arith.constant 2 : index
    %c2_61 = arith.constant 2 : index
    %c0_62 = arith.constant 0 : index
    %c0_63 = arith.constant 0 : index
    %70 = vector.load %arg5[%c2_60, %c2_61, %c0_62, %c0_63] : memref<10x10x4x128xf32, #tpu.memory_space<vmem>>, vector<8x8x4x128xf32>
    %71 = vector.extract_strided_slice %12 {offsets = [2, 2, 0, 0], sizes = [1, 1, 4, 128], strides = [1, 1, 1, 1]} : vector<3x3x4x128xf32> to vector<1x1x4x128xf32>
    %72 = vector.shape_cast %71 : vector<1x1x4x128xf32> to vector<4x128xf32>
    %73 = vector.shape_cast %72 : vector<4x128xf32> to vector<1x1x4x128xf32>
    %74 = vector.broadcast %73 : vector<1x1x4x128xf32> to vector<8x8x4x128xf32>
    %75 = arith.mulf %70, %74 : vector<8x8x4x128xf32>
    %76 = arith.addf %69, %75 : vector<8x8x4x128xf32>
    %c0_64 = arith.constant 0 : index
    %c0_65 = arith.constant 0 : index
    %77 = vector.load %arg3[%c0_64, %c0_65] : memref<4x128xbf16, #tpu.memory_space<vmem>>, vector<4x128xbf16>
    %78 = arith.extf %77 : vector<4x128xbf16> to vector<4x128xf32>
    %79 = vector.shape_cast %78 : vector<4x128xf32> to vector<1x1x4x128xf32>
    %80 = vector.broadcast %79 : vector<1x1x4x128xf32> to vector<8x8x4x128xf32>
    %81 = arith.addf %76, %80 : vector<8x8x4x128xf32>
    %82 = arith.mulf %81, %81 : vector<8x8x4x128xf32>
    %83 = arith.mulf %81, %82 : vector<8x8x4x128xf32>
    %cst_66 = arith.constant 4.471500e-02 : f32
    %84 = vector.broadcast %cst_66 : f32 to vector<8x8x4x128xf32>
    %85 = arith.mulf %84, %83 : vector<8x8x4x128xf32>
    %86 = arith.addf %81, %85 : vector<8x8x4x128xf32>
    %cst_67 = arith.constant 0.797884583 : f32
    %87 = vector.broadcast %cst_67 : f32 to vector<8x8x4x128xf32>
    %88 = arith.mulf %87, %86 : vector<8x8x4x128xf32>
    %89 = math.tanh %88 : vector<8x8x4x128xf32>
    %cst_68 = arith.constant 1.000000e+00 : f32
    %90 = vector.broadcast %cst_68 : f32 to vector<8x8x4x128xf32>
    %91 = arith.addf %90, %89 : vector<8x8x4x128xf32>
    %cst_69 = arith.constant 5.000000e-01 : f32
    %92 = vector.broadcast %cst_69 : f32 to vector<8x8x4x128xf32>
    %93 = arith.mulf %92, %91 : vector<8x8x4x128xf32>
    %94 = arith.mulf %81, %93 : vector<8x8x4x128xf32>
    %95 = arith.truncf %94 : vector<8x8x4x128xf32> to vector<8x8x4x128xbf16>
    %c0_70 = arith.constant 0 : index
    %c0_71 = arith.constant 0 : index
    %c0_72 = arith.constant 0 : index
    %c0_73 = arith.constant 0 : index
    %96 = vector.load %arg4[%c0_70, %c0_71, %c0_72, %c0_73] : memref<8x8x4x128xbf16, #tpu.memory_space<vmem>>, vector<8x8x4x128xbf16>
    tpu.vector_store %arg4[%c0_70, %c0_71, %c0_72, %c0_73], %95 {strides = array<i32>} : memref<8x8x4x128xbf16, #tpu.memory_space<vmem>>, vector<8x8x4x128xbf16>,
    return
  }
  func.func @transform_0(%arg0: i32) -> (i32, i32, i32, i32) {
    %c0_i32 = arith.constant 0 : i32
    %c0_i32_0 = arith.constant 0 : i32
    %c0_i32_1 = arith.constant 0 : i32
    %c0_i32_2 = arith.constant 0 : i32
    return %arg0, %c0_i32, %c0_i32_0, %c0_i32_1 : i32, i32, i32, i32
  }
  func.func @transform_1(%arg0: i32) -> (i32, i32, i32, i32) {
    %c0_i32 = arith.constant 0 : i32
    %c0_i32_0 = arith.constant 0 : i32
    %c0_i32_1 = arith.constant 0 : i32
    %c0_i32_2 = arith.constant 0 : i32
    %c0_i32_3 = arith.constant 0 : i32
    return %c0_i32, %c0_i32_0, %c0_i32_1, %c0_i32_2 : i32, i32, i32, i32
  }
  func.func @transform_2(%arg0: i32) -> (i32, i32) {
    %c0_i32 = arith.constant 0 : i32
    %c0_i32_0 = arith.constant 0 : i32
    %c0_i32_1 = arith.constant 0 : i32
    return %c0_i32, %c0_i32_0 : i32, i32
  }
  func.func @transform_3(%arg0: i32) -> (i32, i32, i32, i32) {
    %c0_i32 = arith.constant 0 : i32
    %c0_i32_0 = arith.constant 0 : i32
    %c0_i32_1 = arith.constant 0 : i32
    %c0_i32_2 = arith.constant 0 : i32
    return %arg0, %c0_i32, %c0_i32_0, %c0_i32_1 : i32, i32, i32, i32
  }
}

module attributes {stable_mosaic.version = 11 : i64} {
  func.func @kernel(%arg0: i32, %arg1: memref<1x64x128xbf16, #tpu.memory_space<vmem>>, %arg2: memref<1x64x128xbf16, #tpu.memory_space<vmem>>, %arg3: memref<1x128xf32, #tpu.memory_space<vmem>>, %arg4: memref<1x128xf32, #tpu.memory_space<vmem>>, %arg5: memref<128x256xbf16, #tpu.memory_space<vmem>>, %arg6: memref<1x256xbf16, #tpu.memory_space<vmem>>, %arg7: memref<1x256xf32, #tpu.memory_space<vmem>>, %arg8: memref<1x256xf32, #tpu.memory_space<vmem>>, %arg9: memref<1x64x256xbf16, #tpu.memory_space<vmem>>) attributes {dimension_semantics = [#tpu.dimension_semantics<parallel>], iteration_bounds = array<i64: 2>, scalar_prefetch = 0 : i64, scratch_operands = 0 : i64, tpu.core_type = #tpu.core_type<tc>, window_params = [{transform_indices = @transform_0, window_bounds = array<i64: 1, 64, 128>}, {transform_indices = @transform_1, window_bounds = array<i64: 1, 64, 128>}, {pipeline_mode = #tpu.pipeline_mode<synchronous>, transform_indices = @transform_2, window_bounds = array<i64: 1, 128>}, {pipeline_mode = #tpu.pipeline_mode<synchronous>, transform_indices = @transform_3, window_bounds = array<i64: 1, 128>}, {pipeline_mode = #tpu.pipeline_mode<synchronous>, transform_indices = @transform_4, window_bounds = array<i64: 128, 256>}, {pipeline_mode = #tpu.pipeline_mode<synchronous>, transform_indices = @transform_5, window_bounds = array<i64: 1, 256>}, {pipeline_mode = #tpu.pipeline_mode<synchronous>, transform_indices = @transform_6, window_bounds = array<i64: 1, 256>}, {pipeline_mode = #tpu.pipeline_mode<synchronous>, transform_indices = @transform_7, window_bounds = array<i64: 1, 256>}, {transform_indices = @transform_8, window_bounds = array<i64: 1, 64, 256>}]} {
    %c0 = arith.constant 0 : index
    %c0_0 = arith.constant 0 : index
    %c0_1 = arith.constant 0 : index
    %0 = vector.load %arg1[%c0, %c0_0, %c0_1] : memref<1x64x128xbf16, #tpu.memory_space<vmem>>, vector<1x64x128xbf16>
    %1 = vector.shape_cast %0 : vector<1x64x128xbf16> to vector<64x128xbf16>
    %2 = arith.extf %1 : vector<64x128xbf16> to vector<64x128xf32>
    %c0_2 = arith.constant 0 : index
    %c0_3 = arith.constant 0 : index
    %c0_4 = arith.constant 0 : index
    %3 = vector.load %arg2[%c0_2, %c0_3, %c0_4] : memref<1x64x128xbf16, #tpu.memory_space<vmem>>, vector<1x64x128xbf16>
    %4 = vector.shape_cast %3 : vector<1x64x128xbf16> to vector<64x128xbf16>
    %5 = arith.extf %4 : vector<64x128xbf16> to vector<64x128xf32>
    %c0_5 = arith.constant 0 : index
    %c0_6 = arith.constant 0 : index
    %6 = vector.load %arg3[%c0_5, %c0_6] : memref<1x128xf32, #tpu.memory_space<vmem>>, vector<1x128xf32>
    %c0_7 = arith.constant 0 : index
    %c0_8 = arith.constant 0 : index
    %7 = vector.load %arg4[%c0_7, %c0_8] : memref<1x128xf32, #tpu.memory_space<vmem>>, vector<1x128xf32>
    %cst = arith.constant dense<0.000000e+00> : vector<64xf32>
    %8 = vector.multi_reduction <add>, %2, %cst [1] : vector<64x128xf32> to vector<64xf32>
    %9 = vector.shape_cast %8 : vector<64xf32> to vector<64x1xf32>
    %cst_9 = arith.constant 1.280000e+02 : f32
    %10 = vector.broadcast %cst_9 : f32 to vector<64x1xf32>
    %11 = arith.divf %9, %10 : vector<64x1xf32>
    %12 = vector.broadcast %11 : vector<64x1xf32> to vector<64x128xf32>
    %13 = arith.subf %2, %12 : vector<64x128xf32>
    %14 = arith.mulf %13, %13 : vector<64x128xf32>
    %cst_10 = arith.constant dense<0.000000e+00> : vector<64xf32>
    %15 = vector.multi_reduction <add>, %14, %cst_10 [1] : vector<64x128xf32> to vector<64xf32>
    %16 = vector.shape_cast %15 : vector<64xf32> to vector<64x1xf32>
    %cst_11 = arith.constant 1.280000e+02 : f32
    %17 = vector.broadcast %cst_11 : f32 to vector<64x1xf32>
    %18 = arith.divf %16, %17 : vector<64x1xf32>
    %cst_12 = arith.constant 9.99999974E-6 : f32
    %19 = vector.broadcast %cst_12 : f32 to vector<64x1xf32>
    %20 = arith.addf %18, %19 : vector<64x1xf32>
    %21 = math.rsqrt %20 : vector<64x1xf32>
    %22 = vector.broadcast %21 : vector<64x1xf32> to vector<64x128xf32>
    %23 = arith.mulf %13, %22 : vector<64x128xf32>
    %24 = vector.broadcast %6 : vector<1x128xf32> to vector<64x128xf32>
    %25 = arith.mulf %23, %24 : vector<64x128xf32>
    %26 = vector.broadcast %7 : vector<1x128xf32> to vector<64x128xf32>
    %27 = arith.addf %25, %26 : vector<64x128xf32>
    %cst_13 = arith.constant dense<0.000000e+00> : vector<64xf32>
    %28 = vector.multi_reduction <add>, %5, %cst_13 [1] : vector<64x128xf32> to vector<64xf32>
    %29 = vector.shape_cast %28 : vector<64xf32> to vector<64x1xf32>
    %cst_14 = arith.constant 1.280000e+02 : f32
    %30 = vector.broadcast %cst_14 : f32 to vector<64x1xf32>
    %31 = arith.divf %29, %30 : vector<64x1xf32>
    %32 = vector.broadcast %31 : vector<64x1xf32> to vector<64x128xf32>
    %33 = arith.subf %5, %32 : vector<64x128xf32>
    %34 = arith.mulf %33, %33 : vector<64x128xf32>
    %cst_15 = arith.constant dense<0.000000e+00> : vector<64xf32>
    %35 = vector.multi_reduction <add>, %34, %cst_15 [1] : vector<64x128xf32> to vector<64xf32>
    %36 = vector.shape_cast %35 : vector<64xf32> to vector<64x1xf32>
    %cst_16 = arith.constant 1.280000e+02 : f32
    %37 = vector.broadcast %cst_16 : f32 to vector<64x1xf32>
    %38 = arith.divf %36, %37 : vector<64x1xf32>
    %cst_17 = arith.constant 9.99999974E-6 : f32
    %39 = vector.broadcast %cst_17 : f32 to vector<64x1xf32>
    %40 = arith.addf %38, %39 : vector<64x1xf32>
    %41 = math.rsqrt %40 : vector<64x1xf32>
    %42 = vector.broadcast %41 : vector<64x1xf32> to vector<64x128xf32>
    %43 = arith.mulf %33, %42 : vector<64x128xf32>
    %44 = vector.broadcast %6 : vector<1x128xf32> to vector<64x128xf32>
    %45 = arith.mulf %43, %44 : vector<64x128xf32>
    %46 = vector.broadcast %7 : vector<1x128xf32> to vector<64x128xf32>
    %47 = arith.addf %45, %46 : vector<64x128xf32>
    %cst_18 = arith.constant dense<0xFF800000> : vector<128xf32>
    %48 = vector.multi_reduction <maximumf>, %47, %cst_18 [0] : vector<64x128xf32> to vector<128xf32>
    %49 = vector.shape_cast %48 : vector<128xf32> to vector<1x128xf32>
    %50 = vector.broadcast %49 : vector<1x128xf32> to vector<64x128xf32>
    %51 = arith.subf %47, %50 : vector<64x128xf32>
    %52 = math.exp %51 : vector<64x128xf32>
    %cst_19 = arith.constant dense<0.000000e+00> : vector<128xf32>
    %53 = vector.multi_reduction <add>, %52, %cst_19 [0] : vector<64x128xf32> to vector<128xf32>
    %54 = vector.shape_cast %53 : vector<128xf32> to vector<1x128xf32>
    %55 = tpu.reciprocal %54 {approx = true} : vector<1x128xf32> -> vector<1x128xf32>
    %56 = vector.broadcast %55 : vector<1x128xf32> to vector<64x128xf32>
    %57 = arith.mulf %52, %56 : vector<64x128xf32>
    %cst_20 = arith.constant dense<0xFF800000> : vector<64xf32>
    %58 = vector.multi_reduction <maximumf>, %47, %cst_20 [1] : vector<64x128xf32> to vector<64xf32>
    %59 = vector.shape_cast %58 : vector<64xf32> to vector<64x1xf32>
    %60 = vector.broadcast %59 : vector<64x1xf32> to vector<64x128xf32>
    %61 = arith.subf %47, %60 : vector<64x128xf32>
    %62 = math.exp %61 : vector<64x128xf32>
    %cst_21 = arith.constant dense<0.000000e+00> : vector<64xf32>
    %63 = vector.multi_reduction <add>, %62, %cst_21 [1] : vector<64x128xf32> to vector<64xf32>
    %64 = vector.shape_cast %63 : vector<64xf32> to vector<64x1xf32>
    %65 = tpu.reciprocal %64 {approx = true} : vector<64x1xf32> -> vector<64x1xf32>
    %66 = vector.broadcast %65 : vector<64x1xf32> to vector<64x128xf32>
    %67 = arith.mulf %62, %66 : vector<64x128xf32>
    %68 = arith.truncf %57 : vector<64x128xf32> to vector<64x128xbf16>
    %69 = arith.truncf %27 : vector<64x128xf32> to vector<64x128xbf16>
    %cst_22 = arith.constant dense<0.000000e+00> : vector<128x128xf32>
    %70 = tpu.matmul %68, %69, %cst_22 {dimension_numbers = #tpu.dot_dimension_numbers<[0], [0], [1], [1], [0, 1, 1, 1], [], []>} : vector<64x128xbf16>, vector<64x128xbf16>, vector<128x128xf32> -> vector<128x128xf32>
    %71 = arith.truncf %67 : vector<64x128xf32> to vector<64x128xbf16>
    %72 = arith.truncf %70 : vector<128x128xf32> to vector<128x128xbf16>
    %cst_23 = arith.constant dense<0.000000e+00> : vector<64x128xf32>
    %73 = tpu.matmul %71, %72, %cst_23 {dimension_numbers = #tpu.dot_dimension_numbers<[1], [0], [0], [1], [0, 0, 1, 1], [], []>} : vector<64x128xbf16>, vector<128x128xbf16>, vector<64x128xf32> -> vector<64x128xf32>
    %74 = arith.truncf %73 : vector<64x128xf32> to vector<64x128xbf16>
    %c0_24 = arith.constant 0 : index
    %c0_25 = arith.constant 0 : index
    %75 = vector.load %arg5[%c0_24, %c0_25] : memref<128x256xbf16, #tpu.memory_space<vmem>>, vector<128x256xbf16>
    %cst_26 = arith.constant dense<0.000000e+00> : vector<64x256xf32>
    %76 = tpu.matmul %74, %75, %cst_26 {dimension_numbers = #tpu.dot_dimension_numbers<[1], [0], [0], [1], [0, 0, 1, 1], [], []>} : vector<64x128xbf16>, vector<128x256xbf16>, vector<64x256xf32> -> vector<64x256xf32>
    %c0_27 = arith.constant 0 : index
    %c0_28 = arith.constant 0 : index
    %77 = vector.load %arg6[%c0_27, %c0_28] : memref<1x256xbf16, #tpu.memory_space<vmem>>, vector<1x256xbf16>
    %78 = arith.extf %77 : vector<1x256xbf16> to vector<1x256xf32>
    %79 = vector.broadcast %78 : vector<1x256xf32> to vector<64x256xf32>
    %80 = arith.addf %76, %79 : vector<64x256xf32>
    %c0_29 = arith.constant 0 : index
    %c0_30 = arith.constant 0 : index
    %81 = vector.load %arg7[%c0_29, %c0_30] : memref<1x256xf32, #tpu.memory_space<vmem>>, vector<1x256xf32>
    %c0_31 = arith.constant 0 : index
    %c0_32 = arith.constant 0 : index
    %82 = vector.load %arg8[%c0_31, %c0_32] : memref<1x256xf32, #tpu.memory_space<vmem>>, vector<1x256xf32>
    %cst_33 = arith.constant dense<0.000000e+00> : vector<64xf32>
    %83 = vector.multi_reduction <add>, %80, %cst_33 [1] : vector<64x256xf32> to vector<64xf32>
    %84 = vector.shape_cast %83 : vector<64xf32> to vector<64x1xf32>
    %cst_34 = arith.constant 2.560000e+02 : f32
    %85 = vector.broadcast %cst_34 : f32 to vector<64x1xf32>
    %86 = arith.divf %84, %85 : vector<64x1xf32>
    %87 = vector.broadcast %86 : vector<64x1xf32> to vector<64x256xf32>
    %88 = arith.subf %80, %87 : vector<64x256xf32>
    %89 = arith.mulf %88, %88 : vector<64x256xf32>
    %cst_35 = arith.constant dense<0.000000e+00> : vector<64xf32>
    %90 = vector.multi_reduction <add>, %89, %cst_35 [1] : vector<64x256xf32> to vector<64xf32>
    %91 = vector.shape_cast %90 : vector<64xf32> to vector<64x1xf32>
    %cst_36 = arith.constant 2.560000e+02 : f32
    %92 = vector.broadcast %cst_36 : f32 to vector<64x1xf32>
    %93 = arith.divf %91, %92 : vector<64x1xf32>
    %cst_37 = arith.constant 9.99999974E-6 : f32
    %94 = vector.broadcast %cst_37 : f32 to vector<64x1xf32>
    %95 = arith.addf %93, %94 : vector<64x1xf32>
    %96 = math.rsqrt %95 : vector<64x1xf32>
    %97 = vector.broadcast %96 : vector<64x1xf32> to vector<64x256xf32>
    %98 = arith.mulf %88, %97 : vector<64x256xf32>
    %99 = vector.broadcast %81 : vector<1x256xf32> to vector<64x256xf32>
    %100 = arith.mulf %98, %99 : vector<64x256xf32>
    %101 = vector.broadcast %82 : vector<1x256xf32> to vector<64x256xf32>
    %102 = arith.addf %100, %101 : vector<64x256xf32>
    %103 = vector.extract_strided_slice %102 {offsets = [0, 0], sizes = [64, 128], strides = [1, 1]} : vector<64x256xf32> to vector<64x128xf32>
    %104 = arith.addf %103, %2 : vector<64x128xf32>
    %105 = arith.truncf %104 : vector<64x128xf32> to vector<64x128xbf16>
    %c0_38 = arith.constant 0 : index
    %c0_39 = arith.constant 0 : index
    %c0_40 = arith.constant 0 : index
    %106 = vector.load %arg9[%c0_38, %c0_39, %c0_40] : memref<1x64x256xbf16, #tpu.memory_space<vmem>>, vector<1x64x128xbf16>
    %107 = vector.shape_cast %106 : vector<1x64x128xbf16> to vector<64x128xbf16>
    %108 = vector.shape_cast %105 : vector<64x128xbf16> to vector<1x64x128xbf16>
    tpu.vector_store %arg9[%c0_38, %c0_39, %c0_40], %108 {strides = array<i32>} : memref<1x64x256xbf16, #tpu.memory_space<vmem>>, vector<1x64x128xbf16>,
    %109 = vector.extract_strided_slice %102 {offsets = [0, 128], sizes = [64, 128], strides = [1, 1]} : vector<64x256xf32> to vector<64x128xf32>
    %110 = arith.addf %109, %5 : vector<64x128xf32>
    %111 = arith.truncf %110 : vector<64x128xf32> to vector<64x128xbf16>
    %c0_41 = arith.constant 0 : index
    %c0_42 = arith.constant 0 : index
    %c128 = arith.constant 128 : index
    %112 = vector.load %arg9[%c0_41, %c0_42, %c128] : memref<1x64x256xbf16, #tpu.memory_space<vmem>>, vector<1x64x128xbf16>
    %113 = vector.shape_cast %112 : vector<1x64x128xbf16> to vector<64x128xbf16>
    %114 = vector.shape_cast %111 : vector<64x128xbf16> to vector<1x64x128xbf16>
    tpu.vector_store %arg9[%c0_41, %c0_42, %c128], %114 {strides = array<i32>} : memref<1x64x256xbf16, #tpu.memory_space<vmem>>, vector<1x64x128xbf16>,
    return
  }
  func.func @transform_0(%arg0: i32) -> (i32, i32, i32) {
    %c0_i32 = arith.constant 0 : i32
    %c0_i32_0 = arith.constant 0 : i32
    %c0_i32_1 = arith.constant 0 : i32
    return %arg0, %c0_i32, %c0_i32_0 : i32, i32, i32
  }
  func.func @transform_1(%arg0: i32) -> (i32, i32, i32) {
    %c0_i32 = arith.constant 0 : i32
    %c0_i32_0 = arith.constant 0 : i32
    %c0_i32_1 = arith.constant 0 : i32
    return %arg0, %c0_i32, %c0_i32_0 : i32, i32, i32
  }
  func.func @transform_2(%arg0: i32) -> (i32, i32) {
    %c0_i32 = arith.constant 0 : i32
    %c0_i32_0 = arith.constant 0 : i32
    %c0_i32_1 = arith.constant 0 : i32
    return %c0_i32, %c0_i32_0 : i32, i32
  }
  func.func @transform_3(%arg0: i32) -> (i32, i32) {
    %c0_i32 = arith.constant 0 : i32
    %c0_i32_0 = arith.constant 0 : i32
    %c0_i32_1 = arith.constant 0 : i32
    return %c0_i32, %c0_i32_0 : i32, i32
  }
  func.func @transform_4(%arg0: i32) -> (i32, i32) {
    %c0_i32 = arith.constant 0 : i32
    %c0_i32_0 = arith.constant 0 : i32
    %c0_i32_1 = arith.constant 0 : i32
    return %c0_i32, %c0_i32_0 : i32, i32
  }
  func.func @transform_5(%arg0: i32) -> (i32, i32) {
    %c0_i32 = arith.constant 0 : i32
    %c0_i32_0 = arith.constant 0 : i32
    %c0_i32_1 = arith.constant 0 : i32
    return %c0_i32, %c0_i32_0 : i32, i32
  }
  func.func @transform_6(%arg0: i32) -> (i32, i32) {
    %c0_i32 = arith.constant 0 : i32
    %c0_i32_0 = arith.constant 0 : i32
    %c0_i32_1 = arith.constant 0 : i32
    return %c0_i32, %c0_i32_0 : i32, i32
  }
  func.func @transform_7(%arg0: i32) -> (i32, i32) {
    %c0_i32 = arith.constant 0 : i32
    %c0_i32_0 = arith.constant 0 : i32
    %c0_i32_1 = arith.constant 0 : i32
    return %c0_i32, %c0_i32_0 : i32, i32
  }
  func.func @transform_8(%arg0: i32) -> (i32, i32, i32) {
    %c0_i32 = arith.constant 0 : i32
    %c0_i32_0 = arith.constant 0 : i32
    %c0_i32_1 = arith.constant 0 : i32
    return %arg0, %c0_i32, %c0_i32_0 : i32, i32, i32
  }
}

module attributes {stable_mosaic.version = 11 : i64} {
  func.func @kernel(%arg0: i32, %arg1: memref<128x512xbf16, #tpu.memory_space<vmem>>, %arg2: memref<512x256xbf16, #tpu.memory_space<vmem>>, %arg3: memref<1x256xbf16, #tpu.memory_space<vmem>>, %arg4: memref<128x256xbf16, #tpu.memory_space<vmem>>, %arg5: memref<128x256xbf16, #tpu.memory_space<vmem>>) attributes {dimension_semantics = [#tpu.dimension_semantics<parallel>], iteration_bounds = array<i64: 1>, scalar_prefetch = 0 : i64, scratch_operands = 0 : i64, tpu.core_type = #tpu.core_type<tc>, window_params = [{transform_indices = @transform_0, window_bounds = array<i64: 128, 512>}, {pipeline_mode = #tpu.pipeline_mode<synchronous>, transform_indices = @transform_1, window_bounds = array<i64: 512, 256>}, {pipeline_mode = #tpu.pipeline_mode<synchronous>, transform_indices = @transform_2, window_bounds = array<i64: 1, 256>}, {transform_indices = @transform_3, window_bounds = array<i64: 128, 256>}, {transform_indices = @transform_4, window_bounds = array<i64: 128, 256>}]} {
    %c0 = arith.constant 0 : index
    %c0_0 = arith.constant 0 : index
    %0 = vector.load %arg1[%c0, %c0_0] : memref<128x512xbf16, #tpu.memory_space<vmem>>, vector<128x512xbf16>
    %c0_1 = arith.constant 0 : index
    %c0_2 = arith.constant 0 : index
    %1 = vector.load %arg2[%c0_1, %c0_2] : memref<512x256xbf16, #tpu.memory_space<vmem>>, vector<512x256xbf16>
    %cst = arith.constant dense<0.000000e+00> : vector<128x256xf32>
    %2 = tpu.matmul %0, %1, %cst {dimension_numbers = #tpu.dot_dimension_numbers<[1], [0], [0], [1], [0, 0, 1, 1], [], []>} : vector<128x512xbf16>, vector<512x256xbf16>, vector<128x256xf32> -> vector<128x256xf32>
    %c0_3 = arith.constant 0 : index
    %c0_4 = arith.constant 0 : index
    %3 = vector.load %arg3[%c0_3, %c0_4] : memref<1x256xbf16, #tpu.memory_space<vmem>>, vector<1x256xbf16>
    %4 = arith.extf %3 : vector<1x256xbf16> to vector<1x256xf32>
    %5 = vector.broadcast %4 : vector<1x256xf32> to vector<128x256xf32>
    %6 = arith.addf %2, %5 : vector<128x256xf32>
    %c0_5 = arith.constant 0 : index
    %c0_6 = arith.constant 0 : index
    %7 = vector.load %arg4[%c0_5, %c0_6] : memref<128x256xbf16, #tpu.memory_space<vmem>>, vector<128x256xbf16>
    %8 = arith.extf %7 : vector<128x256xbf16> to vector<128x256xf32>
    %9 = arith.addf %6, %8 : vector<128x256xf32>
    %10 = arith.truncf %9 : vector<128x256xf32> to vector<128x256xbf16>
    %c0_7 = arith.constant 0 : index
    %c0_8 = arith.constant 0 : index
    %11 = vector.load %arg5[%c0_7, %c0_8] : memref<128x256xbf16, #tpu.memory_space<vmem>>, vector<128x256xbf16>
    tpu.vector_store %arg5[%c0_7, %c0_8], %10 {strides = array<i32>} : memref<128x256xbf16, #tpu.memory_space<vmem>>, vector<128x256xbf16>,
    return
  }
  func.func @transform_0(%arg0: i32) -> (i32, i32) {
    %c0_i32 = arith.constant 0 : i32
    %c0_i32_0 = arith.constant 0 : i32
    return %arg0, %c0_i32 : i32, i32
  }
  func.func @transform_1(%arg0: i32) -> (i32, i32) {
    %c0_i32 = arith.constant 0 : i32
    %c0_i32_0 = arith.constant 0 : i32
    %c0_i32_1 = arith.constant 0 : i32
    return %c0_i32, %c0_i32_0 : i32, i32
  }
  func.func @transform_2(%arg0: i32) -> (i32, i32) {
    %c0_i32 = arith.constant 0 : i32
    %c0_i32_0 = arith.constant 0 : i32
    %c0_i32_1 = arith.constant 0 : i32
    return %c0_i32, %c0_i32_0 : i32, i32
  }
  func.func @transform_3(%arg0: i32) -> (i32, i32) {
    %c0_i32 = arith.constant 0 : i32
    %c0_i32_0 = arith.constant 0 : i32
    return %arg0, %c0_i32 : i32, i32
  }
  func.func @transform_4(%arg0: i32) -> (i32, i32) {
    %c0_i32 = arith.constant 0 : i32
    %c0_i32_0 = arith.constant 0 : i32
    return %arg0, %c0_i32 : i32, i32
  }
}

</mosaic_0001>

<llo_original>
// kernel: cross_attention_block_forward.15
$region0: #{cross_attention_block_forward.15}
  #allocation0 [shape = 'u32[]', space=smem, size = 0x4, offset = 0x4, fixed_abs, tag = 'smem constant byte address 0x4 - core index']
  #allocation1 [shape = 'u32[72,128]{1,0:T(1,128)}', space=vmem, size = 0x9000, scoped, tag = 'internal scratch']
  %s0 = inlined_call_operand.vmem [shape: bf16[128,128], index: 0, kind: input, shape index: {}]
  %s1 = inlined_call_operand.vmem [shape: bf16[128,128], index: 1, kind: input, shape index: {}]
  %s2 = inlined_call_operand.vmem [shape: bf16[1,128], index: 2, kind: input, shape index: {}]
  %s3 = inlined_call_operand.vmem [shape: bf16[128,128], index: 3, kind: input, shape index: {}]
  %s4 = inlined_call_operand.vmem [shape: bf16[128,128], index: 4, kind: output, shape index: {}]
  %s5 = sld [smem:[#allocation0]]
  $region26: #{cross_attention_block_forward.15} parent=0
    _
  %s7 = ssub.s32 1, %s5
  %s8 = scalar_select 0, %s7, %s5
  // Predicated region
  $region2: #{cross_attention_block_forward.15} parent=0 // pred_check
    _
  $region3: #{cross_attention_block_forward.15} parent=0 // pred_check_branch
    %10 = sbr.rel (0) target = $region5
  $region4: #{cross_attention_block_forward.15} parent=0 // pred_region
    _
  $region5: #{cross_attention_block_forward.15} parent=0 // pred_fallthru
    _
  // Predicated region
  $region6: #{cross_attention_block_forward.15} parent=0 // pred_check
    _
  $region7: #{cross_attention_block_forward.15} parent=0 // pred_check_branch
    %12 = sbr.rel (0) target = $region9
  $region8: #{cross_attention_block_forward.15} parent=0 // pred_region
    _
  $region9: #{cross_attention_block_forward.15} parent=0 // pred_fallthru
    _
  // Predicated region
  $region10: #{cross_attention_block_forward.15} parent=0 // pred_check
    _
  $region11: #{cross_attention_block_forward.15} parent=0 // pred_check_branch
    %14 = sbr.rel (0) target = $region13
  $region12: #{cross_attention_block_forward.15} parent=0 // pred_region
    _
  $region13: #{cross_attention_block_forward.15} parent=0 // pred_fallthru
    _
  // Predicated region
  $region14: #{cross_attention_block_forward.15} parent=0 // pred_check
    _
  $region15: #{cross_attention_block_forward.15} parent=0 // pred_check_branch
    %16 = sbr.rel (0) target = $region17
  $region16: #{cross_attention_block_forward.15} parent=0 // pred_region
    _
  $region17: #{cross_attention_block_forward.15} parent=0 // pred_fallthru
    _
  %v17 = vld [vmem:[%s0] sm:$0xf]
  %v18 = vld [vmem:[%s0 + $0x4] sm:$0xf]
  %v19 = vld [vmem:[%s0 + $0x8] sm:$0xf]
  %v20 = vld [vmem:[%s0 + $0xc] sm:$0xf]
  %v21 = vld [vmem:[%s0 + $0x10] sm:$0xf]
  %v22 = vld [vmem:[%s0 + $0x14] sm:$0xf]
  %v23 = vld [vmem:[%s0 + $0x18] sm:$0xf]
  %v24 = vld [vmem:[%s0 + $0x1c] sm:$0xf]
  %v25 = vld [vmem:[%s0 + $0x20] sm:$0xf]
  %v26 = vld [vmem:[%s0 + $0x24] sm:$0xf]
  %v27 = vld [vmem:[%s0 + $0x28] sm:$0xf]
  %v28 = vld [vmem:[%s0 + $0x2c] sm:$0xf]
  %v29 = vld [vmem:[%s0 + $0x30] sm:$0xf]
  %v30 = vld [vmem:[%s0 + $0x34] sm:$0xf]
  %v31 = vld [vmem:[%s0 + $0x38] sm:$0xf]
  %v32 = vld [vmem:[%s0 + $0x3c] sm:$0xf]
  %v33 = vld [vmem:[%s1] sm:$0xf]
  %v34 = vld [vmem:[%s1 + $0x4] sm:$0xf]
  %v35 = vld [vmem:[%s1 + $0x8] sm:$0xf]
  %v36 = vld [vmem:[%s1 + $0xc] sm:$0xf]
  %v37 = vld [vmem:[%s1 + $0x10] sm:$0xf]
  %v38 = vld [vmem:[%s1 + $0x14] sm:$0xf]
  %v39 = vld [vmem:[%s1 + $0x18] sm:$0xf]
  %v40 = vld [vmem:[%s1 + $0x1c] sm:$0xf]
  %v41 = vld [vmem:[%s1 + $0x20] sm:$0xf]
  %v42 = vld [vmem:[%s1 + $0x24] sm:$0xf]
  %v43 = vld [vmem:[%s1 + $0x28] sm:$0xf]
  %v44 = vld [vmem:[%s1 + $0x2c] sm:$0xf]
  %v45 = vld [vmem:[%s1 + $0x30] sm:$0xf]
  %v46 = vld [vmem:[%s1 + $0x34] sm:$0xf]
  %v47 = vld [vmem:[%s1 + $0x38] sm:$0xf]
  %v48 = vld [vmem:[%s1 + $0x3c] sm:$0xf]
  %v49 = vld [vmem:[%s2] sm:$0x1]
  %v50 = vunpack.c.l.bf16 %v49
  %v51 = vperm.slane %v50, 0
  %v68 = vunpack.c.l.b16 %v17
  %v69 = vunpack.c.l.b16 %v18
  %v70 = vunpack.c.l.b16 %v19
  %v71 = vunpack.c.l.b16 %v20
  %v72 = vunpack.c.l.b16 %v21
  %v73 = vunpack.c.l.b16 %v22
  %v74 = vunpack.c.l.b16 %v23
  %v75 = vunpack.c.l.b16 %v24
  %v76 = vunpack.c.l.b16 %v25
  %v77 = vunpack.c.l.b16 %v26
  %v78 = vunpack.c.l.b16 %v27
  %v79 = vunpack.c.l.b16 %v28
  %v80 = vunpack.c.l.b16 %v29
  %v81 = vunpack.c.l.b16 %v30
  %v82 = vunpack.c.l.b16 %v31
  %v83 = vunpack.c.l.b16 %v32
  %v84 = vpack.c.b16 %v69, %v68
  %v85 = vpack.c.b16 %v71, %v70
  %v86 = vpack.c.b16 %v73, %v72
  %v87 = vpack.c.b16 %v75, %v74
  %v88 = vpack.c.b16 %v77, %v76
  %v89 = vpack.c.b16 %v79, %v78
  %v90 = vpack.c.b16 %v81, %v80
  %v91 = vpack.c.b16 %v83, %v82
  %v116 = vunpack.c.l.b16 %v33
  %v117 = vunpack.c.l.b16 %v34
  %v118 = vunpack.c.l.b16 %v35
  %v119 = vunpack.c.l.b16 %v36
  %v120 = vunpack.c.l.b16 %v37
  %v121 = vunpack.c.l.b16 %v38
  %v122 = vunpack.c.l.b16 %v39
  %v123 = vunpack.c.l.b16 %v40
  %v124 = vunpack.c.l.b16 %v41
  %v125 = vunpack.c.l.b16 %v42
  %v126 = vunpack.c.l.b16 %v43
  %v127 = vunpack.c.l.b16 %v44
  %v128 = vunpack.c.l.b16 %v45
  %v129 = vunpack.c.l.b16 %v46
  %v130 = vunpack.c.l.b16 %v47
  %v131 = vunpack.c.l.b16 %v48
  %v132 = vpack.c.b16 %v117, %v116
  %v133 = vpack.c.b16 %v119, %v118
  %v134 = vpack.c.b16 %v121, %v120
  %v135 = vpack.c.b16 %v123, %v122
  %v136 = vpack.c.b16 %v125, %v124
  %v137 = vpack.c.b16 %v127, %v126
  %v138 = vpack.c.b16 %v129, %v128
  %v139 = vpack.c.b16 %v131, %v130
  %148 = vmatpush.bf16.msra.mxu0 %v139
  %149 = vmatpush.bf16.msra.mxu0 %v138
  %150 = vmatpush.bf16.msra.mxu0 %v137
  %151 = vmatpush.bf16.msra.mxu0 %v136
  %152 = vmatpush.bf16.msra.mxu0 %v135
  %153 = vmatpush.bf16.msra.mxu0 %v134
  %154 = vmatpush.bf16.msra.mxu0 %v133
  %155 = vmatpush.bf16.msra.mxu0 %v132
  %156 = vmatmul.bf16.gmra.mxu0 %v84
  %v157 = vpop.f32.mrf.mxu0
  %v158 = vadd.f32 %v51, %v157
  %v159 = vpop.f32.mrf.mxu0
  %v160 = vadd.f32 %v51, %v159
  %161 = vmatmul.bf16.gmra.mxu0 %v85
  %v162 = vpop.f32.mrf.mxu0
  %v163 = vadd.f32 %v51, %v162
  %v164 = vpop.f32.mrf.mxu0
  %v165 = vadd.f32 %v51, %v164
  %166 = vmatmul.bf16.gmra.mxu0 %v86
  %v167 = vpop.f32.mrf.mxu0
  %v168 = vadd.f32 %v51, %v167
  %v169 = vpop.f32.mrf.mxu0
  %v170 = vadd.f32 %v51, %v169
  %171 = vmatmul.bf16.gmra.mxu0 %v87
  %v172 = vpop.f32.mrf.mxu0
  %v173 = vadd.f32 %v51, %v172
  %v174 = vpop.f32.mrf.mxu0
  %v175 = vadd.f32 %v51, %v174
  %176 = vmatmul.bf16.gmra.mxu0 %v88
  %v177 = vpop.f32.mrf.mxu0
  %v178 = vadd.f32 %v51, %v177
  %v179 = vpop.f32.mrf.mxu0
  %v180 = vadd.f32 %v51, %v179
  %181 = vmatmul.bf16.gmra.mxu0 %v89
  %v182 = vpop.f32.mrf.mxu0
  %v183 = vadd.f32 %v51, %v182
  %v184 = vpop.f32.mrf.mxu0
  %v185 = vadd.f32 %v51, %v184
  %186 = vmatmul.bf16.gmra.mxu0 %v90
  %v187 = vpop.f32.mrf.mxu0
  %v188 = vadd.f32 %v51, %v187
  %v189 = vpop.f32.mrf.mxu0
  %v190 = vadd.f32 %v51, %v189
  %191 = vmatmul.bf16.gmra.mxu0 %v91
  %v192 = vpop.f32.mrf.mxu0
  %v193 = vadd.f32 %v51, %v192
  %v194 = vpop.f32.mrf.mxu0
  %v195 = vadd.f32 %v51, %v194
  %196 = vdwg.mxu0
  %v197 = vld [vmem:[%s3] sm:$0xf]
  %v198 = vld [vmem:[%s3 + $0x4] sm:$0xf]
  %v199 = vld [vmem:[%s3 + $0x8] sm:$0xf]
  %v200 = vld [vmem:[%s3 + $0xc] sm:$0xf]
  %v201 = vld [vmem:[%s3 + $0x10] sm:$0xf]
  %v202 = vld [vmem:[%s3 + $0x14] sm:$0xf]
  %v203 = vld [vmem:[%s3 + $0x18] sm:$0xf]
  %v204 = vld [vmem:[%s3 + $0x1c] sm:$0xf]
  %v205 = vld [vmem:[%s3 + $0x20] sm:$0xf]
  %v206 = vld [vmem:[%s3 + $0x24] sm:$0xf]
  %v207 = vld [vmem:[%s3 + $0x28] sm:$0xf]
  %v208 = vld [vmem:[%s3 + $0x2c] sm:$0xf]
  %v209 = vld [vmem:[%s3 + $0x30] sm:$0xf]
  %v210 = vld [vmem:[%s3 + $0x34] sm:$0xf]
  %v211 = vld [vmem:[%s3 + $0x38] sm:$0xf]
  %v212 = vld [vmem:[%s3 + $0x3c] sm:$0xf]
  %v213 = vunpack.c.l.bf16 %v197
  %v214 = vunpack.c.l.bf16 %v198
  %v215 = vunpack.c.l.bf16 %v199
  %v216 = vunpack.c.l.bf16 %v200
  %v217 = vunpack.c.l.bf16 %v201
  %v218 = vunpack.c.l.bf16 %v202
  %v219 = vunpack.c.l.bf16 %v203
  %v220 = vunpack.c.l.bf16 %v204
  %v221 = vunpack.c.l.bf16 %v205
  %v222 = vunpack.c.l.bf16 %v206
  %v223 = vunpack.c.l.bf16 %v207
  %v224 = vunpack.c.l.bf16 %v208
  %v225 = vunpack.c.l.bf16 %v209
  %v226 = vunpack.c.l.bf16 %v210
  %v227 = vunpack.c.l.bf16 %v211
  %v228 = vunpack.c.l.bf16 %v212
  %v229 = vadd.f32 %v158, %v213
  %v230 = vadd.f32 %v160, %v214
  %v231 = vadd.f32 %v163, %v215
  %v232 = vadd.f32 %v165, %v216
  %v233 = vadd.f32 %v168, %v217
  %v234 = vadd.f32 %v170, %v218
  %v235 = vadd.f32 %v173, %v219
  %v236 = vadd.f32 %v175, %v220
  %v237 = vadd.f32 %v178, %v221
  %v238 = vadd.f32 %v180, %v222
  %v239 = vadd.f32 %v183, %v223
  %v240 = vadd.f32 %v185, %v224
  %v241 = vadd.f32 %v188, %v225
  %v242 = vadd.f32 %v190, %v226
  %v243 = vadd.f32 %v193, %v227
  %v244 = vadd.f32 %v195, %v228
  %v245 = vpack.c.bf16 %v229, %v229
  %v246 = vpack.c.bf16 %v230, %v230
  %v247 = vpack.c.bf16 %v231, %v231
  %v248 = vpack.c.bf16 %v232, %v232
  %v249 = vpack.c.bf16 %v233, %v233
  %v250 = vpack.c.bf16 %v234, %v234
  %v251 = vpack.c.bf16 %v235, %v235
  %v252 = vpack.c.bf16 %v236, %v236
  %v253 = vpack.c.bf16 %v237, %v237
  %v254 = vpack.c.bf16 %v238, %v238
  %v255 = vpack.c.bf16 %v239, %v239
  %v256 = vpack.c.bf16 %v240, %v240
  %v257 = vpack.c.bf16 %v241, %v241
  %v258 = vpack.c.bf16 %v242, %v242
  %v259 = vpack.c.bf16 %v243, %v243
  %v260 = vpack.c.bf16 %v244, %v244
  %261 = vst [vmem:[%s4] sm:$0xf] %v245
  %262 = vst [vmem:[%s4 + $0x4] sm:$0xf] %v246
  %263 = vst [vmem:[%s4 + $0x8] sm:$0xf] %v247
  %264 = vst [vmem:[%s4 + $0xc] sm:$0xf] %v248
  %265 = vst [vmem:[%s4 + $0x10] sm:$0xf] %v249
  %266 = vst [vmem:[%s4 + $0x14] sm:$0xf] %v250
  %267 = vst [vmem:[%s4 + $0x18] sm:$0xf] %v251
  %268 = vst [vmem:[%s4 + $0x1c] sm:$0xf] %v252
  %269 = vst [vmem:[%s4 + $0x20] sm:$0xf] %v253
  %270 = vst [vmem:[%s4 + $0x24] sm:$0xf] %v254
  %271 = vst [vmem:[%s4 + $0x28] sm:$0xf] %v255
  %272 = vst [vmem:[%s4 + $0x2c] sm:$0xf] %v256
  %273 = vst [vmem:[%s4 + $0x30] sm:$0xf] %v257
  %274 = vst [vmem:[%s4 + $0x34] sm:$0xf] %v258
  %275 = vst [vmem:[%s4 + $0x38] sm:$0xf] %v259
  %276 = vst [vmem:[%s4 + $0x3c] sm:$0xf] %v260
  // Predicated region
  $region18: #{cross_attention_block_forward.15} parent=0 // pred_check
    _
  $region19: #{cross_attention_block_forward.15} parent=0 // pred_check_branch
    %278 = sbr.rel (0) target = $region21
  $region20: #{cross_attention_block_forward.15} parent=0 // pred_region
    _
  $region21: #{cross_attention_block_forward.15} parent=0 // pred_fallthru
    _
  // Predicated region
  $region22: #{cross_attention_block_forward.15} parent=0 // pred_check
    _
  $region23: #{cross_attention_block_forward.15} parent=0 // pred_check_branch
    %280 = sbr.rel (0) target = $region25
  $region24: #{cross_attention_block_forward.15} parent=0 // pred_region
    _
  $region25: #{cross_attention_block_forward.15} parent=0 // pred_fallthru
    _

// kernel: cross_attention_block_forward.14
$region0: #{cross_attention_block_forward.14}
  #allocation0 [shape = 'u32[]', space=smem, size = 0x4, offset = 0x4, fixed_abs, tag = 'smem constant byte address 0x4 - core index']
  #allocation1 [shape = 'u32[72,128]{1,0:T(1,128)}', space=vmem, size = 0x9000, scoped, tag = 'internal scratch']
  %s0 = inlined_call_operand.vmem [shape: bf16[2,64,384], index: 0, kind: input, shape index: {}]
  %s1 = inlined_call_operand.vmem [shape: f32[1,128], index: 1, kind: input, shape index: {}]
  %s2 = inlined_call_operand.vmem [shape: bf16[2,64,128], index: 2, kind: output, shape index: {}]
  %s3 = sld [smem:[#allocation0]]
  $region41: #{cross_attention_block_forward.14} parent=0
    _
  %s5 = ssub.s32 1, %s3
  %s6 = scalar_select 0, %s5, %s3
  loop: start=0, step=1, limit=4
  $region2: #{cross_attention_block_forward.14} parent=0 // loop_pre_header
    _
  $region3: #{cross_attention_block_forward.14} parent=0 // loop_header
    %s8 = sphi 0, %s12
    %p9 = scmp.ge.s32.totalorder %s8, 4
    %s18 = sphi 0, %s20
    %s21 = sphi 0, %s18
    %s22 = sphi 0, %s21
    %s38 = sphi 0, %s22
    %s42 = sphi 0, %s42
    %s44 = sphi 0, %s42
    %s45 = sphi 0, %s44
    %s59 = sphi 0, %s45
    %s65 = sphi 0, %s67
    %s68 = sphi 0, %s65
    %s69 = sphi 0, %s68
    %s85 = sphi 0, %s69
  $region4: #{cross_attention_block_forward.14} parent=0 // loop_header_branch
    %11 = sbr.rel (%p9) target = $region8
  $region5: #{cross_attention_block_forward.14} parent=0 // loop_body
    %s13 = ssub.s32 %s8, 1
    %s14 = ssub.s32 %s8, 2
    %s15 = sadd.s32 %s8, 1
    %s16 = ssub.s32 %s8, %s15
    %p17 = scmp.eq.s32.totalorder %s16, 0
    %s19 = sadd.s32 %s18, 1
    %s20 = scalar_select %p17, %s18, %s19
    %p23 = pneg %p17
    %p24 = scmp.eq.s32.totalorder %s8, 1
    %p25 = por %p23, %p24
    %p26 = scmp.ne.s32.totalorder %s18, %s21
    %p27 = scmp.eq.s32.totalorder %s8, 0
    %p28 = por %p26, %p27
    %p29 = scmp.ne.s32.totalorder %s18, %s21
    %p30 = scmp.eq.s32.totalorder %s13, 1
    %p31 = por %p29, %p30
    %p32 = scmp.ne.s32.totalorder %s21, %s22
    %p33 = scmp.eq.s32.totalorder %s13, 0
    %p34 = por %p32, %p33
    %p35 = scmp.ne.s32.totalorder %s21, %s22
    %p36 = scmp.eq.s32.totalorder %s14, 1
    %p37 = por %p35, %p36
    %p39 = scmp.ne.s32.totalorder %s22, %s38
    %p40 = scmp.eq.s32.totalorder %s14, 0
    %p41 = por %p39, %p40
    %s43 = sadd.s32 %s42, 1
    %p46 = scmp.eq.s32.totalorder %s8, 1
    %p47 = scmp.ne.s32.totalorder %s42, %s44
    %p48 = scmp.eq.s32.totalorder %s8, 0
    %p49 = por %p47, %p48
    %p50 = scmp.ne.s32.totalorder %s42, %s44
    %p51 = scmp.eq.s32.totalorder %s13, 1
    %p52 = por %p50, %p51
    %p53 = scmp.ne.s32.totalorder %s44, %s45
    %p54 = scmp.eq.s32.totalorder %s13, 0
    %p55 = por %p53, %p54
    %p56 = scmp.ne.s32.totalorder %s44, %s45
    %p57 = scmp.eq.s32.totalorder %s14, 1
    %p58 = por %p56, %p57
    %p60 = scmp.ne.s32.totalorder %s45, %s59
    %p61 = scmp.eq.s32.totalorder %s14, 0
    %p62 = por %p60, %p61
    %s63 = ssub.s32 %s8, %s15
    %p64 = scmp.eq.s32.totalorder %s63, 0
    %s66 = sadd.s32 %s65, 1
    %s67 = scalar_select %p64, %s65, %s66
    %p70 = pneg %p64
    %p71 = scmp.eq.s32.totalorder %s8, 1
    %p72 = por %p70, %p71
    %p73 = scmp.ne.s32.totalorder %s65, %s68
    %p74 = scmp.eq.s32.totalorder %s8, 0
    %p75 = por %p73, %p74
    %p76 = scmp.ne.s32.totalorder %s65, %s68
    %p77 = scmp.eq.s32.totalorder %s13, 1
    %p78 = por %p76, %p77
    %p79 = scmp.ne.s32.totalorder %s68, %s69
    %p80 = scmp.eq.s32.totalorder %s13, 0
    %p81 = por %p79, %p80
    %p82 = scmp.ne.s32.totalorder %s68, %s69
    %p83 = scmp.eq.s32.totalorder %s14, 1
    %p84 = por %p82, %p83
    %p86 = scmp.ne.s32.totalorder %s69, %s85
    %p87 = scmp.eq.s32.totalorder %s14, 0
    %p88 = por %p86, %p87
    %p89 = scmp.le.s32.totalorder 1, %s8
    %p90 = scmp.lt.s32.totalorder %s8, 3
    %p91 = pnand %p89, %p90
    %p92 = pneg %p91
    // Predicated region
    $region9: #{cross_attention_block_forward.14} parent=5 // pred_check
      _
    $region10: #{cross_attention_block_forward.14} parent=5 // pred_check_branch
      %94 = sbr.rel (%p91) target = $region12
    $region11: #{cross_attention_block_forward.14} parent=5 // pred_region
      %s95 = ssub.s32 %s8, 1
      // Predicated region
      $region13: #{cross_attention_block_forward.14} parent=11 // pred_check
        %p96 = pneg %p55
      $region14: #{cross_attention_block_forward.14} parent=11 // pred_check_branch
        %98 = sbr.rel (%p96) target = $region16
      $region15: #{cross_attention_block_forward.14} parent=11 // pred_region
        _
      $region16: #{cross_attention_block_forward.14} parent=11 // pred_fallthru
        _
    $region12: #{cross_attention_block_forward.14} parent=5 // pred_fallthru
      _
    %p99 = scmp.lt.s32.totalorder %s8, 2
    // Predicated region
    $region17: #{cross_attention_block_forward.14} parent=5 // pred_check
      %p100 = pneg %p99
    $region18: #{cross_attention_block_forward.14} parent=5 // pred_check_branch
      %102 = sbr.rel (%p100) target = $region20
    $region19: #{cross_attention_block_forward.14} parent=5 // pred_region
      // Predicated region
      $region21: #{cross_attention_block_forward.14} parent=19 // pred_check
        %p103 = pneg %p28
      $region22: #{cross_attention_block_forward.14} parent=19 // pred_check_branch
        %105 = sbr.rel (%p103) target = $region24
      $region23: #{cross_attention_block_forward.14} parent=19 // pred_region
        %p106 = scmp.lt.s32.totalorder %s8, 1
        %s107 = scalar_select %p106, %s8, 1
        %s108 = smul.addr %s107, 24
        %s109 = smul.addr %s108, 4
        %s110 = scalar_lea.vmem %s0, %s109
      $region24: #{cross_attention_block_forward.14} parent=19 // pred_fallthru
        _
    $region20: #{cross_attention_block_forward.14} parent=5 // pred_fallthru
      _
    %p111 = scmp.le.s32.totalorder 1, %s8
    %p112 = scmp.lt.s32.totalorder %s8, 3
    %p113 = pnand %p111, %p112
    %p114 = pneg %p113
    // Predicated region
    $region25: #{cross_attention_block_forward.14} parent=5 // pred_check
      _
    $region26: #{cross_attention_block_forward.14} parent=5 // pred_check_branch
      %116 = sbr.rel (%p113) target = $region28
    $region27: #{cross_attention_block_forward.14} parent=5 // pred_region
      %s117 = ssub.s32 %s8, 1
      %p118 = scmp.lt.s32.totalorder %s13, 1
      %s119 = scalar_select %p118, %s13, 1
      %s120 = smul.addr %s119, 24
      %s121 = smul.addr %s120, 4
      %s122 = scalar_lea.vmem %s0, %s121
      %p123 = pneg %p34
      %p124 = pneg %p31
      %p125 = pneg %p55
      %p126 = pneg %p52
      %p127 = pneg %p81
      %p128 = pneg %p78
      %p129 = scmp.lt.s32.totalorder %s13, 1
      %s130 = scalar_select %p129, %s13, 1
      %s131 = smul.addr %s130, 8
      %s132 = smul.addr %s131, 4
      %s133 = scalar_lea.vmem %s2, %s132
      %p134 = scmp.lt.s32.totalorder %s13, 1
      %s135 = scalar_select %p134, %s13, 1
      %s136 = smul.addr %s135, 24
      %s137 = smul.addr %s136, 4
      %s138 = scalar_lea.vmem %s0, %s137
      %p139 = scmp.lt.s32.totalorder %s13, 1
      %s140 = scalar_select %p139, %s13, 1
      %s141 = smul.addr %s140, 8
      %s142 = smul.addr %s141, 4
      %s143 = scalar_lea.vmem %s2, %s142
      %v145 = vld [vmem:[%s138] sm:$0xff]
      %v146 = vld [vmem:[%s138 + $0x8] sm:$0xf]
      %v147 = vld [vmem:[%s138 + $0xc] sm:$0xff]
      %v148 = vld [vmem:[%s138 + $0x14] sm:$0xf]
      %v149 = vld [vmem:[%s138 + $0x18] sm:$0xff]
      %v150 = vld [vmem:[%s138 + $0x20] sm:$0xf]
      %v151 = vld [vmem:[%s138 + $0x24] sm:$0xff]
      %v152 = vld [vmem:[%s138 + $0x2c] sm:$0xf]
      %v153 = vld [vmem:[%s138 + $0x30] sm:$0xff]
      %v154 = vld [vmem:[%s138 + $0x38] sm:$0xf]
      %v155 = vld [vmem:[%s138 + $0x3c] sm:$0xff]
      %v156 = vld [vmem:[%s138 + $0x44] sm:$0xf]
      %v157 = vld [vmem:[%s138 + $0x48] sm:$0xff]
      %v158 = vld [vmem:[%s138 + $0x50] sm:$0xf]
      %v159 = vld [vmem:[%s138 + $0x54] sm:$0xff]
      %v160 = vld [vmem:[%s138 + $0x5c] sm:$0xf]
      %v161 = vunpack.c.l.bf16 %v145
      %v162 = vunpack.c.l.bf16 %v147
      %v163 = vunpack.c.l.bf16 %v149
      %v164 = vunpack.c.l.bf16 %v151
      %v165 = vunpack.c.l.bf16 %v153
      %v166 = vunpack.c.l.bf16 %v155
      %v167 = vunpack.c.l.bf16 %v157
      %v168 = vunpack.c.l.bf16 %v159
      %v177 = vrot.slane %v145, 4
      %v178 = vrot.slane %v147, 4
      %v179 = vrot.slane %v149, 4
      %v180 = vrot.slane %v151, 4
      %v181 = vrot.slane %v153, 4
      %v182 = vrot.slane %v155, 4
      %v183 = vrot.slane %v157, 4
      %v184 = vrot.slane %v159, 4
      %v193 = vunpack.c.l.bf16 %v177
      %v194 = vunpack.c.l.bf16 %v178
      %v195 = vunpack.c.l.bf16 %v179
      %v196 = vunpack.c.l.bf16 %v180
      %v197 = vunpack.c.l.bf16 %v181
      %v198 = vunpack.c.l.bf16 %v182
      %v199 = vunpack.c.l.bf16 %v183
      %v200 = vunpack.c.l.bf16 %v184
      %v201 = vmul.f32 %v161, %v161
      %v202 = vmul.f32 %v162, %v162
      %v203 = vmul.f32 %v163, %v163
      %v204 = vmul.f32 %v164, %v164
      %v205 = vmul.f32 %v165, %v165
      %v206 = vmul.f32 %v166, %v166
      %v207 = vmul.f32 %v167, %v167
      %v208 = vmul.f32 %v168, %v168
      %v209 = vadd.f32 %v201, %v202
      %v210 = vadd.f32 %v209, %v203
      %v211 = vadd.f32 %v210, %v204
      %v212 = vadd.f32 %v211, %v205
      %v213 = vadd.f32 %v212, %v206
      %v214 = vadd.f32 %v213, %v207
      %v215 = vadd.f32 %v214, %v208
      %v216 = vrot.slane %v215, 4
      %v217 = vadd.f32 %v215, %v216
      %v218 = vrot.slane %v217, 2
      %v219 = vadd.f32 %v217, %v218
      %v220 = vrot.slane %v219, 1
      %v221 = vadd.f32 %v219, %v220
      %v222 = vmax.f32 %v221, 1e-24
      %v223 = vrsqrt.pop %v222
      %v224 = vmul.f32 %v223, %v222
      %v225 = vmul.f32 %v224, %v223
      %v226 = vmul.f32 0.5, %v225
      %v227 = vsub.f32 1.5, %v226
      %v228 = vmul.f32 %v223, %v227
      %vm229 = vweird.f32 %v222
      %vm230 = vweird.f32 %v223
      %vm231 = vmor %vm229, %vm230
      %v232 = vsel %vm231, %v223, %v228
      %v233 = vmul.f32 %v161, %v232
      %v234 = vmul.f32 %v162, %v232
      %v235 = vmul.f32 %v163, %v232
      %v236 = vmul.f32 %v164, %v232
      %v237 = vmul.f32 %v165, %v232
      %v238 = vmul.f32 %v166, %v232
      %v239 = vmul.f32 %v167, %v232
      %v240 = vmul.f32 %v168, %v232
      %v241 = vmul.f32 %v193, %v193
      %v242 = vmul.f32 %v194, %v194
      %v243 = vmul.f32 %v195, %v195
      %v244 = vmul.f32 %v196, %v196
      %v245 = vmul.f32 %v197, %v197
      %v246 = vmul.f32 %v198, %v198
      %v247 = vmul.f32 %v199, %v199
      %v248 = vmul.f32 %v200, %v200
      %v249 = vadd.f32 %v241, %v242
      %v250 = vadd.f32 %v249, %v243
      %v251 = vadd.f32 %v250, %v244
      %v252 = vadd.f32 %v251, %v245
      %v253 = vadd.f32 %v252, %v246
      %v254 = vadd.f32 %v253, %v247
      %v255 = vadd.f32 %v254, %v248
      %v256 = vrot.slane %v255, 4
      %v257 = vadd.f32 %v255, %v256
      %v258 = vrot.slane %v257, 2
      %v259 = vadd.f32 %v257, %v258
      %v260 = vrot.slane %v259, 1
      %v261 = vadd.f32 %v259, %v260
      %v262 = vmax.f32 %v261, 1e-24
      %v263 = vrsqrt.pop %v262
      %v264 = vmul.f32 %v263, %v262
      %v265 = vmul.f32 %v264, %v263
      %v266 = vmul.f32 0.5, %v265
      %v267 = vsub.f32 1.5, %v266
      %v268 = vmul.f32 %v263, %v267
      %vm269 = vweird.f32 %v262
      %vm270 = vweird.f32 %v263
      %vm271 = vmor %vm269, %vm270
      %v272 = vsel %vm271, %v263, %v268
      %v273 = vmul.f32 %v193, %v272
      %v274 = vmul.f32 %v194, %v272
      %v275 = vmul.f32 %v195, %v272
      %v276 = vmul.f32 %v196, %v272
      %v277 = vmul.f32 %v197, %v272
      %v278 = vmul.f32 %v198, %v272
      %v279 = vmul.f32 %v199, %v272
      %v280 = vmul.f32 %v200, %v272
      %v281 = vld [vmem:[%s1] sm:$0x1]
      %v283 = vperm.slane %v281, 0
      %v285 = vmul.f32 %v233, %v283
      %v286 = vmul.f32 %v234, %v283
      %v287 = vmul.f32 %v235, %v283
      %v288 = vmul.f32 %v236, %v283
      %v289 = vmul.f32 %v237, %v283
      %v290 = vmul.f32 %v238, %v283
      %v291 = vmul.f32 %v239, %v283
      %v292 = vmul.f32 %v240, %v283
      %v293 = vpack.c.bf16 %v286, %v285
      %v294 = vpack.c.bf16 %v288, %v287
      %v295 = vpack.c.bf16 %v290, %v289
      %v296 = vpack.c.bf16 %v292, %v291
      %v297 = vpack.c.bf16 %v274, %v273
      %v298 = vpack.c.bf16 %v276, %v275
      %v299 = vpack.c.bf16 %v278, %v277
      %v300 = vpack.c.bf16 %v280, %v279
      %301 = vxpose.xlu0.c.b16.start [1/8] %v293, 128
      %302 = vxpose.xlu0.c.b16.cont [2/8] %v294, 128
      %303 = vxpose.xlu0.c.b16.cont [3/8] %v295, 128
      %304 = vxpose.xlu0.c.b16.cont [4/8] %v296, 128
      %305 = vxpose.xlu0.c.b16.cont [5/8] 0, 128
      %306 = vxpose.xlu0.c.b16.cont [6/8] 0, 128
      %307 = vxpose.xlu0.c.b16.cont [7/8] 0, 128
      %308 = vxpose.xlu0.c.b16.end [8/8] 0, 128
      %v309 = vpop.trf.xlu0
      %v310 = vpop.trf.xlu0
      %v311 = vpop.trf.xlu0
      %v312 = vpop.trf.xlu0
      %v313 = vpop.trf.xlu0
      %v314 = vpop.trf.xlu0
      %v315 = vpop.trf.xlu0
      %v316 = vpop.trf.xlu0
      %vm317 = vcmask 523264
      %v319 = vsel %vm317, %v309, 0
      %v322 = vsel %vm317, %v310, 0
      %v325 = vsel %vm317, %v311, 0
      %v328 = vsel %vm317, %v312, 0
      %v331 = vsel %vm317, %v313, 0
      %v334 = vsel %vm317, %v314, 0
      %v337 = vsel %vm317, %v315, 0
      %v340 = vsel %vm317, %v316, 0
      %342 = vmatpush.bf16.msra.mxu0 0
      %343 = vmatpush.bf16.msra.mxu0 0
      %344 = vmatpush.bf16.msra.mxu0 0
      %345 = vmatpush.bf16.msra.mxu0 0
      %346 = vmatpush.bf16.msra.mxu0 %v300
      %347 = vmatpush.bf16.msra.mxu0 %v299
      %348 = vmatpush.bf16.msra.mxu0 %v298
      %349 = vmatpush.bf16.msra.mxu0 %v297
      %350 = vmatmul.bf16.gmra.mxu0 %v319
      %v351 = vpop.f32.mrf.mxu0
      %v352 = vadd.f32 0.0, %v351
      %v353 = vpop.f32.mrf.mxu0
      %v354 = vadd.f32 0.0, %v353
      %355 = vmatmul.bf16.gmra.mxu0 %v322
      %v356 = vpop.f32.mrf.mxu0
      %v357 = vadd.f32 0.0, %v356
      %v358 = vpop.f32.mrf.mxu0
      %v359 = vadd.f32 0.0, %v358
      %360 = vmatmul.bf16.gmra.mxu0 %v325
      %v361 = vpop.f32.mrf.mxu0
      %v362 = vadd.f32 0.0, %v361
      %v363 = vpop.f32.mrf.mxu0
      %v364 = vadd.f32 0.0, %v363
      %365 = vmatmul.bf16.gmra.mxu0 %v328
      %v366 = vpop.f32.mrf.mxu0
      %v367 = vadd.f32 0.0, %v366
      %v368 = vpop.f32.mrf.mxu0
      %v369 = vadd.f32 0.0, %v368
      %370 = vmatmul.bf16.gmra.mxu0 %v331
      %v371 = vpop.f32.mrf.mxu0
      %v372 = vadd.f32 0.0, %v371
      %v373 = vpop.f32.mrf.mxu0
      %v374 = vadd.f32 0.0, %v373
      %375 = vmatmul.bf16.gmra.mxu0 %v334
      %v376 = vpop.f32.mrf.mxu0
      %v377 = vadd.f32 0.0, %v376
      %v378 = vpop.f32.mrf.mxu0
      %v379 = vadd.f32 0.0, %v378
      %380 = vmatmul.bf16.gmra.mxu0 %v337
      %v381 = vpop.f32.mrf.mxu0
      %v382 = vadd.f32 0.0, %v381
      %v383 = vpop.f32.mrf.mxu0
      %v384 = vadd.f32 0.0, %v383
      %385 = vmatmul.bf16.gmra.mxu0 %v340
      %v386 = vpop.f32.mrf.mxu0
      %v387 = vadd.f32 0.0, %v386
      %v388 = vpop.f32.mrf.mxu0
      %v389 = vadd.f32 0.0, %v388
      %390 = vdwg.mxu0
      %v391 = vlaneseq
      %v392 = vshrl.u32 %v391, 7
      %v393 = vadd.s32 %v392, 8
      %v394 = vadd.s32 %v392, 16
      %v395 = vadd.s32 %v392, 24
      %v396 = vadd.s32 %v392, 32
      %v397 = vadd.s32 %v392, 40
      %v398 = vadd.s32 %v392, 48
      %v399 = vadd.s32 %v392, 56
      %v400 = vadd.s32 %v392, 64
      %v401 = vadd.s32 %v392, 72
      %v402 = vadd.s32 %v392, 80
      %v403 = vadd.s32 %v392, 88
      %v404 = vadd.s32 %v392, 96
      %v405 = vadd.s32 %v392, 104
      %v406 = vadd.s32 %v392, 112
      %v407 = vadd.s32 %v392, 120
      %v408 = vlaneseq
      %v409 = vand.u32 %v408, 127
      %v410 = vxor.u32 %v392, %v409
      %v411 = vxor.u32 %v393, %v409
      %v412 = vxor.u32 %v394, %v409
      %v413 = vxor.u32 %v395, %v409
      %v414 = vxor.u32 %v396, %v409
      %v415 = vxor.u32 %v397, %v409
      %v416 = vxor.u32 %v398, %v409
      %v417 = vxor.u32 %v399, %v409
      %v418 = vxor.u32 %v400, %v409
      %v419 = vxor.u32 %v401, %v409
      %v420 = vxor.u32 %v402, %v409
      %v421 = vxor.u32 %v403, %v409
      %v422 = vxor.u32 %v404, %v409
      %v423 = vxor.u32 %v405, %v409
      %v424 = vxor.u32 %v406, %v409
      %v425 = vxor.u32 %v407, %v409
      %vm426 = vcmp.lt.s32.totalorder %v410, 16
      %vm427 = vcmp.lt.s32.totalorder %v411, 16
      %vm428 = vcmp.lt.s32.totalorder %v412, 16
      %vm429 = vcmp.lt.s32.totalorder %v413, 16
      %vm430 = vcmp.lt.s32.totalorder %v414, 16
      %vm431 = vcmp.lt.s32.totalorder %v415, 16
      %vm432 = vcmp.lt.s32.totalorder %v416, 16
      %vm433 = vcmp.lt.s32.totalorder %v417, 16
      %vm434 = vcmp.lt.s32.totalorder %v418, 16
      %vm435 = vcmp.lt.s32.totalorder %v419, 16
      %vm436 = vcmp.lt.s32.totalorder %v420, 16
      %vm437 = vcmp.lt.s32.totalorder %v421, 16
      %vm438 = vcmp.lt.s32.totalorder %v422, 16
      %vm439 = vcmp.lt.s32.totalorder %v423, 16
      %vm440 = vcmp.lt.s32.totalorder %v424, 16
      %vm441 = vcmp.lt.s32.totalorder %v425, 16
      %v442 = vsel %vm426, %v352, -1e+30
      %v443 = vsel %vm427, %v354, -1e+30
      %v444 = vsel %vm428, %v357, -1e+30
      %v445 = vsel %vm429, %v359, -1e+30
      %v446 = vsel %vm430, %v362, -1e+30
      %v447 = vsel %vm431, %v364, -1e+30
      %v448 = vsel %vm432, %v367, -1e+30
      %v449 = vsel %vm433, %v369, -1e+30
      %v450 = vsel %vm434, %v372, -1e+30
      %v451 = vsel %vm435, %v374, -1e+30
      %v452 = vsel %vm436, %v377, -1e+30
      %v453 = vsel %vm437, %v379, -1e+30
      %v454 = vsel %vm438, %v382, -1e+30
      %v455 = vsel %vm439, %v384, -1e+30
      %v456 = vsel %vm440, %v387, -1e+30
      %v457 = vsel %vm441, %v389, -1e+30
      %458 = vmax.xlane.f32.xlu0 %v442
      %v459 = vpop.xlane.xlu0 %458
      %460 = vmax.xlane.f32.xlu0 %v443
      %v461 = vpop.xlane.xlu0 %460
      %462 = vmax.xlane.f32.xlu0 %v444
      %v463 = vpop.xlane.xlu0 %462
      %464 = vmax.xlane.f32.xlu0 %v445
      %v465 = vpop.xlane.xlu0 %464
      %466 = vmax.xlane.f32.xlu0 %v446
      %v467 = vpop.xlane.xlu0 %466
      %468 = vmax.xlane.f32.xlu0 %v447
      %v469 = vpop.xlane.xlu0 %468
      %470 = vmax.xlane.f32.xlu0 %v448
      %v471 = vpop.xlane.xlu0 %470
      %472 = vmax.xlane.f32.xlu0 %v449
      %v473 = vpop.xlane.xlu0 %472
      %474 = vmax.xlane.f32.xlu0 %v450
      %v475 = vpop.xlane.xlu0 %474
      %476 = vmax.xlane.f32.xlu0 %v451
      %v477 = vpop.xlane.xlu0 %476
      %478 = vmax.xlane.f32.xlu0 %v452
      %v479 = vpop.xlane.xlu0 %478
      %480 = vmax.xlane.f32.xlu0 %v453
      %v481 = vpop.xlane.xlu0 %480
      %482 = vmax.xlane.f32.xlu0 %v454
      %v483 = vpop.xlane.xlu0 %482
      %484 = vmax.xlane.f32.xlu0 %v455
      %v485 = vpop.xlane.xlu0 %484
      %486 = vmax.xlane.f32.xlu0 %v456
      %v487 = vpop.xlane.xlu0 %486
      %488 = vmax.xlane.f32.xlu0 %v457
      %v489 = vpop.xlane.xlu0 %488
      %v490 = vsub.f32 %v442, %v459
      %v491 = vsub.f32 %v443, %v461
      %v492 = vsub.f32 %v444, %v463
      %v493 = vsub.f32 %v445, %v465
      %v494 = vsub.f32 %v446, %v467
      %v495 = vsub.f32 %v447, %v469
      %v496 = vsub.f32 %v448, %v471
      %v497 = vsub.f32 %v449, %v473
      %v498 = vsub.f32 %v450, %v475
      %v499 = vsub.f32 %v451, %v477
      %v500 = vsub.f32 %v452, %v479
      %v501 = vsub.f32 %v453, %v481
      %v502 = vsub.f32 %v454, %v483
      %v503 = vsub.f32 %v455, %v485
      %v504 = vsub.f32 %v456, %v487
      %v505 = vsub.f32 %v457, %v489
      %v506 = vmul.f32 %v490, 1.442695
      %v507 = vpow.pop %v506
      %v508 = vmul.f32 %v491, 1.442695
      %v509 = vpow.pop %v508
      %v510 = vmul.f32 %v492, 1.442695
      %v511 = vpow.pop %v510
      %v512 = vmul.f32 %v493, 1.442695
      %v513 = vpow.pop %v512
      %v514 = vmul.f32 %v494, 1.442695
      %v515 = vpow.pop %v514
      %v516 = vmul.f32 %v495, 1.442695
      %v517 = vpow.pop %v516
      %v518 = vmul.f32 %v496, 1.442695
      %v519 = vpow.pop %v518
      %v520 = vmul.f32 %v497, 1.442695
      %v521 = vpow.pop %v520
      %v522 = vmul.f32 %v498, 1.442695
      %v523 = vpow.pop %v522
      %v524 = vmul.f32 %v499, 1.442695
      %v525 = vpow.pop %v524
      %v526 = vmul.f32 %v500, 1.442695
      %v527 = vpow.pop %v526
      %v528 = vmul.f32 %v501, 1.442695
      %v529 = vpow.pop %v528
      %v530 = vmul.f32 %v502, 1.442695
      %v531 = vpow.pop %v530
      %v532 = vmul.f32 %v503, 1.442695
      %v533 = vpow.pop %v532
      %v534 = vmul.f32 %v504, 1.442695
      %v535 = vpow.pop %v534
      %v536 = vmul.f32 %v505, 1.442695
      %v537 = vpow.pop %v536
      %538 = vadd.xlane.f32.xlu0 %v507
      %v539 = vpop.xlane.xlu0 %538
      %540 = vadd.xlane.f32.xlu0 %v509
      %v541 = vpop.xlane.xlu0 %540
      %542 = vadd.xlane.f32.xlu0 %v511
      %v543 = vpop.xlane.xlu0 %542
      %544 = vadd.xlane.f32.xlu0 %v513
      %v545 = vpop.xlane.xlu0 %544
      %546 = vadd.xlane.f32.xlu0 %v515
      %v547 = vpop.xlane.xlu0 %546
      %548 = vadd.xlane.f32.xlu0 %v517
      %v549 = vpop.xlane.xlu0 %548
      %550 = vadd.xlane.f32.xlu0 %v519
      %v551 = vpop.xlane.xlu0 %550
      %552 = vadd.xlane.f32.xlu0 %v521
      %v553 = vpop.xlane.xlu0 %552
      %554 = vadd.xlane.f32.xlu0 %v523
      %v555 = vpop.xlane.xlu0 %554
      %556 = vadd.xlane.f32.xlu0 %v525
      %v557 = vpop.xlane.xlu0 %556
      %558 = vadd.xlane.f32.xlu0 %v527
      %v559 = vpop.xlane.xlu0 %558
      %560 = vadd.xlane.f32.xlu0 %v529
      %v561 = vpop.xlane.xlu0 %560
      %562 = vadd.xlane.f32.xlu0 %v531
      %v563 = vpop.xlane.xlu0 %562
      %564 = vadd.xlane.f32.xlu0 %v533
      %v565 = vpop.xlane.xlu0 %564
      %566 = vadd.xlane.f32.xlu0 %v535
      %v567 = vpop.xlane.xlu0 %566
      %568 = vadd.xlane.f32.xlu0 %v537
      %v569 = vpop.xlane.xlu0 %568
      %v570 = vrcp.pop %v539
      %v571 = vrcp.pop %v541
      %v572 = vrcp.pop %v543
      %v573 = vrcp.pop %v545
      %v574 = vrcp.pop %v547
      %v575 = vrcp.pop %v549
      %v576 = vrcp.pop %v551
      %v577 = vrcp.pop %v553
      %v578 = vrcp.pop %v555
      %v579 = vrcp.pop %v557
      %v580 = vrcp.pop %v559
      %v581 = vrcp.pop %v561
      %v582 = vrcp.pop %v563
      %v583 = vrcp.pop %v565
      %v584 = vrcp.pop %v567
      %v585 = vrcp.pop %v569
      %v586 = vmul.f32 %v507, %v570
      %v587 = vmul.f32 %v509, %v571
      %v588 = vmul.f32 %v511, %v572
      %v589 = vmul.f32 %v513, %v573
      %v590 = vmul.f32 %v515, %v574
      %v591 = vmul.f32 %v517, %v575
      %v592 = vmul.f32 %v519, %v576
      %v593 = vmul.f32 %v521, %v577
      %v594 = vmul.f32 %v523, %v578
      %v595 = vmul.f32 %v525, %v579
      %v596 = vmul.f32 %v527, %v580
      %v597 = vmul.f32 %v529, %v581
      %v598 = vmul.f32 %v531, %v582
      %v599 = vmul.f32 %v533, %v583
      %v600 = vmul.f32 %v535, %v584
      %v601 = vmul.f32 %v537, %v585
      %v602 = vpack.c.bf16 %v587, %v586
      %v603 = vpack.c.bf16 %v589, %v588
      %v604 = vpack.c.bf16 %v591, %v590
      %v605 = vpack.c.bf16 %v593, %v592
      %v606 = vpack.c.bf16 %v595, %v594
      %v607 = vpack.c.bf16 %v597, %v596
      %v608 = vpack.c.bf16 %v599, %v598
      %v609 = vpack.c.bf16 %v601, %v600
      %v618 = vunpack.c.l.b16 %v146
      %v619 = vunpack.c.l.b16 %v148
      %v620 = vunpack.c.l.b16 %v150
      %v621 = vunpack.c.l.b16 %v152
      %v622 = vunpack.c.l.b16 %v154
      %v623 = vunpack.c.l.b16 %v156
      %v624 = vunpack.c.l.b16 %v158
      %v625 = vunpack.c.l.b16 %v160
      %v626 = vpack.c.b16 %v619, %v618
      %v627 = vpack.c.b16 %v621, %v620
      %v628 = vpack.c.b16 %v623, %v622
      %v629 = vpack.c.b16 %v625, %v624
      %634 = vmatpush.bf16.xpose.msra.mxu0 %v609
      %635 = vmatpush.bf16.xpose.msra.mxu0 %v608
      %636 = vmatpush.bf16.xpose.msra.mxu0 %v607
      %637 = vmatpush.bf16.xpose.msra.mxu0 %v606
      %638 = vmatpush.bf16.xpose.msra.mxu0 %v605
      %639 = vmatpush.bf16.xpose.msra.mxu0 %v604
      %640 = vmatpush.bf16.xpose.msra.mxu0 %v603
      %641 = vmatpush.bf16.xpose.msra.mxu0 %v602
      %642 = vmatmul.bf16.gmra.mxu0 %v626
      %v643 = vpop.f32.mrf.mxu0
      %v644 = vadd.f32 0.0, %v643
      %v645 = vpop.f32.mrf.mxu0
      %v646 = vadd.f32 0.0, %v645
      %647 = vmatmul.bf16.gmra.mxu0 %v627
      %v648 = vpop.f32.mrf.mxu0
      %v649 = vadd.f32 0.0, %v648
      %v650 = vpop.f32.mrf.mxu0
      %v651 = vadd.f32 0.0, %v650
      %652 = vmatmul.bf16.gmra.mxu0 %v628
      %v653 = vpop.f32.mrf.mxu0
      %v654 = vadd.f32 0.0, %v653
      %v655 = vpop.f32.mrf.mxu0
      %v656 = vadd.f32 0.0, %v655
      %657 = vmatmul.bf16.gmra.mxu0 %v629
      %v658 = vpop.f32.mrf.mxu0
      %v659 = vadd.f32 0.0, %v658
      %v660 = vpop.f32.mrf.mxu0
      %v661 = vadd.f32 0.0, %v660
      %662 = vdwg.mxu0
      %v663 = vpack.c.bf16 %v644, %v644
      %v664 = vpack.c.bf16 %v646, %v646
      %v665 = vpack.c.bf16 %v649, %v649
      %v666 = vpack.c.bf16 %v651, %v651
      %v667 = vpack.c.bf16 %v654, %v654
      %v668 = vpack.c.bf16 %v656, %v656
      %v669 = vpack.c.bf16 %v659, %v659
      %v670 = vpack.c.bf16 %v661, %v661
      %671 = vst [vmem:[%s143] sm:$0xf] %v663
      %672 = vst [vmem:[%s143 + $0x4] sm:$0xf] %v664
      %673 = vst [vmem:[%s143 + $0x8] sm:$0xf] %v665
      %674 = vst [vmem:[%s143 + $0xc] sm:$0xf] %v666
      %675 = vst [vmem:[%s143 + $0x10] sm:$0xf] %v667
      %676 = vst [vmem:[%s143 + $0x14] sm:$0xf] %v668
      %677 = vst [vmem:[%s143 + $0x18] sm:$0xf] %v669
      %678 = vst [vmem:[%s143 + $0x1c] sm:$0xf] %v670
      %p679 = scmp.lt.s32.totalorder %s13, 1
      %s680 = scalar_select %p679, %s13, 1
      %s681 = smul.addr %s680, 8
      %s682 = smul.addr %s681, 4
      %s683 = scalar_lea.vmem %s2, %s682
      // Predicated region
      $region29: #{cross_attention_block_forward.14} parent=27 // pred_check
        %p684 = pneg %p78
      $region30: #{cross_attention_block_forward.14} parent=27 // pred_check_branch
        %686 = sbr.rel (%p684) target = $region32
      $region31: #{cross_attention_block_forward.14} parent=27 // pred_region
        _
      $region32: #{cross_attention_block_forward.14} parent=27 // pred_fallthru
        _
    $region28: #{cross_attention_block_forward.14} parent=5 // pred_fallthru
      _
    %p687 = scmp.le.s32.totalorder 2, %s8
    // Predicated region
    $region33: #{cross_attention_block_forward.14} parent=5 // pred_check
      %p688 = pneg %p687
    $region34: #{cross_attention_block_forward.14} parent=5 // pred_check_branch
      %690 = sbr.rel (%p688) target = $region36
    $region35: #{cross_attention_block_forward.14} parent=5 // pred_region
      %s691 = ssub.s32 %s8, 2
      // Predicated region
      $region37: #{cross_attention_block_forward.14} parent=35 // pred_check
        %p692 = pneg %p84
      $region38: #{cross_attention_block_forward.14} parent=35 // pred_check_branch
        %694 = sbr.rel (%p692) target = $region40
      $region39: #{cross_attention_block_forward.14} parent=35 // pred_region
        %p695 = scmp.lt.s32.totalorder %s14, 1
        %s696 = scalar_select %p695, %s14, 1
        %s697 = smul.addr %s696, 8
        %s698 = smul.addr %s697, 4
        %s699 = scalar_lea.vmem %s2, %s698
      $region40: #{cross_attention_block_forward.14} parent=35 // pred_fallthru
        _
    $region36: #{cross_attention_block_forward.14} parent=5 // pred_fallthru
      _
  $region6: #{cross_attention_block_forward.14} parent=0 // loop_footer
    %s12 = sadd.s32 1, %s8
  $region7: #{cross_attention_block_forward.14} parent=0 // loop_footer_branch
    %7 = sbr.rel target = $region3
  $region8: #{cross_attention_block_forward.14} parent=0 // loop_exit
    _

// kernel: cross_attention_block_forward.13
$region0: #{cross_attention_block_forward.13}
  #allocation0 [shape = 'u32[]', space=smem, size = 0x4, offset = 0x4, fixed_abs, tag = 'smem constant byte address 0x4 - core index']
  #allocation1 [shape = 'u32[72,128]{1,0:T(1,128)}', space=vmem, size = 0x9000, scoped, tag = 'internal scratch']
  %s0 = inlined_call_operand.vmem [shape: bf16[128,128], index: 0, kind: input, shape index: {}]
  %s1 = inlined_call_operand.hbm [shape: bf16[128,384], index: 1, kind: input, shape index: {}]
  %s2 = inlined_call_operand.vmem [shape: f32[1,128], index: 2, kind: input, shape index: {}]
  %s3 = inlined_call_operand.vmem [shape: f32[1,128], index: 3, kind: input, shape index: {}]
  %s4 = inlined_call_operand.vmem [shape: bf16[128,384], index: 4, kind: output, shape index: {}]
  %s5 = sld [smem:[#allocation0]]
  $region30: #{cross_attention_block_forward.13} parent=0
    _
  %s7 = ssub.s32 1, %s5
  %s8 = scalar_select 0, %s7, %s5
  $region1: #{cross_attention_block_forward.13} parent=0
    #allocation2 [shape = 'u8[98304]{0}', space=vmem, size = 0x18000, scoped, tag = 'input window, operand 1, single buffered']
    #allocation3 [shape = 's32[1]{0}', space=sflag, size = 0x4, scoped, tag = 'scoped memory for cross_attention_block_forward.13']
    %9 = vsyncpa [#allocation3], 0
    // Predicated region
    $region2: #{cross_attention_block_forward.13} parent=1 // pred_check
      _
    $region3: #{cross_attention_block_forward.13} parent=1 // pred_check_branch
      %11 = sbr.rel (0) target = $region5
    $region4: #{cross_attention_block_forward.13} parent=1 // pred_region
      _
    $region5: #{cross_attention_block_forward.13} parent=1 // pred_fallthru
      _
    // Predicated region
    $region6: #{cross_attention_block_forward.13} parent=1 // pred_check
      _
    $region7: #{cross_attention_block_forward.13} parent=1 // pred_check_branch
      %13 = sbr.rel (0) target = $region9
    $region8: #{cross_attention_block_forward.13} parent=1 // pred_region
      %15 = vsyncadd [#allocation3], 0
      %s16 = sshll.u32 %s1, 4
      %s17 = int_to_ptr.hbm [resolvable:$true] %s16
      %s18 = sshll.u32 [#allocation2], 4
      %s19 = int_to_ptr.vmem [resolvable:$true] %s18
      %24 = dma.hbm_to_vmem [thread:$0]  %s17, 3072, %s19, [#allocation3], 192, 192, 12
    $region9: #{cross_attention_block_forward.13} parent=1 // pred_fallthru
      _
    // Predicated region
    $region10: #{cross_attention_block_forward.13} parent=1 // pred_check
      _
    $region11: #{cross_attention_block_forward.13} parent=1 // pred_check_branch
      %26 = sbr.rel (0) target = $region13
    $region12: #{cross_attention_block_forward.13} parent=1 // pred_region
      _
    $region13: #{cross_attention_block_forward.13} parent=1 // pred_fallthru
      _
    // Predicated region
    $region14: #{cross_attention_block_forward.13} parent=1 // pred_check
      _
    $region15: #{cross_attention_block_forward.13} parent=1 // pred_check_branch
      %28 = sbr.rel (0) target = $region17
    $region16: #{cross_attention_block_forward.13} parent=1 // pred_region
      _
    $region17: #{cross_attention_block_forward.13} parent=1 // pred_fallthru
      _
    // Predicated region
    $region18: #{cross_attention_block_forward.13} parent=1 // pred_check
      _
    $region19: #{cross_attention_block_forward.13} parent=1 // pred_check_branch
      %30 = sbr.rel (0) target = $region21
    $region20: #{cross_attention_block_forward.13} parent=1 // pred_region
      %32 = dma.done [#allocation3], 3072
    $region21: #{cross_attention_block_forward.13} parent=1 // pred_fallthru
      _
    %v33 = vld [vmem:[%s0] sm:$0xf]
    %v34 = vld [vmem:[%s0 + $0x4] sm:$0xf]
    %v35 = vld [vmem:[%s0 + $0x8] sm:$0xf]
    %v36 = vld [vmem:[%s0 + $0xc] sm:$0xf]
    %v37 = vld [vmem:[%s0 + $0x10] sm:$0xf]
    %v38 = vld [vmem:[%s0 + $0x14] sm:$0xf]
    %v39 = vld [vmem:[%s0 + $0x18] sm:$0xf]
    %v40 = vld [vmem:[%s0 + $0x1c] sm:$0xf]
    %v41 = vld [vmem:[%s0 + $0x20] sm:$0xf]
    %v42 = vld [vmem:[%s0 + $0x24] sm:$0xf]
    %v43 = vld [vmem:[%s0 + $0x28] sm:$0xf]
    %v44 = vld [vmem:[%s0 + $0x2c] sm:$0xf]
    %v45 = vld [vmem:[%s0 + $0x30] sm:$0xf]
    %v46 = vld [vmem:[%s0 + $0x34] sm:$0xf]
    %v47 = vld [vmem:[%s0 + $0x38] sm:$0xf]
    %v48 = vld [vmem:[%s0 + $0x3c] sm:$0xf]
    %v49 = vunpack.c.l.bf16 %v33
    %v50 = vunpack.c.l.bf16 %v34
    %v51 = vunpack.c.l.bf16 %v35
    %v52 = vunpack.c.l.bf16 %v36
    %v53 = vunpack.c.l.bf16 %v37
    %v54 = vunpack.c.l.bf16 %v38
    %v55 = vunpack.c.l.bf16 %v39
    %v56 = vunpack.c.l.bf16 %v40
    %v57 = vunpack.c.l.bf16 %v41
    %v58 = vunpack.c.l.bf16 %v42
    %v59 = vunpack.c.l.bf16 %v43
    %v60 = vunpack.c.l.bf16 %v44
    %v61 = vunpack.c.l.bf16 %v45
    %v62 = vunpack.c.l.bf16 %v46
    %v63 = vunpack.c.l.bf16 %v47
    %v64 = vunpack.c.l.bf16 %v48
    %65 = vadd.xlane.f32.xlu0 %v49
    %v66 = vpop.xlane.xlu0 %65
    %67 = vadd.xlane.f32.xlu0 %v50
    %v68 = vpop.xlane.xlu0 %67
    %69 = vadd.xlane.f32.xlu0 %v51
    %v70 = vpop.xlane.xlu0 %69
    %71 = vadd.xlane.f32.xlu0 %v52
    %v72 = vpop.xlane.xlu0 %71
    %73 = vadd.xlane.f32.xlu0 %v53
    %v74 = vpop.xlane.xlu0 %73
    %75 = vadd.xlane.f32.xlu0 %v54
    %v76 = vpop.xlane.xlu0 %75
    %77 = vadd.xlane.f32.xlu0 %v55
    %v78 = vpop.xlane.xlu0 %77
    %79 = vadd.xlane.f32.xlu0 %v56
    %v80 = vpop.xlane.xlu0 %79
    %81 = vadd.xlane.f32.xlu0 %v57
    %v82 = vpop.xlane.xlu0 %81
    %83 = vadd.xlane.f32.xlu0 %v58
    %v84 = vpop.xlane.xlu0 %83
    %85 = vadd.xlane.f32.xlu0 %v59
    %v86 = vpop.xlane.xlu0 %85
    %87 = vadd.xlane.f32.xlu0 %v60
    %v88 = vpop.xlane.xlu0 %87
    %89 = vadd.xlane.f32.xlu0 %v61
    %v90 = vpop.xlane.xlu0 %89
    %91 = vadd.xlane.f32.xlu0 %v62
    %v92 = vpop.xlane.xlu0 %91
    %93 = vadd.xlane.f32.xlu0 %v63
    %v94 = vpop.xlane.xlu0 %93
    %95 = vadd.xlane.f32.xlu0 %v64
    %v96 = vpop.xlane.xlu0 %95
    %v97 = vrcp.pop 128.0
    %v98 = vmul.f32 128.0, %v97
    %v99 = vsub.f32 1.0, %v98
    %v100 = vmul.f32 %v97, %v99
    %v101 = vadd.f32 %v97, %v100
    %vm102 = vweird.f32 %v97
    %v103 = vsel %vm102, %v97, %v101
    %v104 = vmul.f32 %v66, %v103
    %v105 = vmul.f32 %v68, %v103
    %v106 = vmul.f32 %v70, %v103
    %v107 = vmul.f32 %v72, %v103
    %v108 = vmul.f32 %v74, %v103
    %v109 = vmul.f32 %v76, %v103
    %v110 = vmul.f32 %v78, %v103
    %v111 = vmul.f32 %v80, %v103
    %v112 = vmul.f32 %v82, %v103
    %v113 = vmul.f32 %v84, %v103
    %v114 = vmul.f32 %v86, %v103
    %v115 = vmul.f32 %v88, %v103
    %v116 = vmul.f32 %v90, %v103
    %v117 = vmul.f32 %v92, %v103
    %v118 = vmul.f32 %v94, %v103
    %v119 = vmul.f32 %v96, %v103
    %v120 = vsub.f32 %v49, %v104
    %v121 = vsub.f32 %v50, %v105
    %v122 = vsub.f32 %v51, %v106
    %v123 = vsub.f32 %v52, %v107
    %v124 = vsub.f32 %v53, %v108
    %v125 = vsub.f32 %v54, %v109
    %v126 = vsub.f32 %v55, %v110
    %v127 = vsub.f32 %v56, %v111
    %v128 = vsub.f32 %v57, %v112
    %v129 = vsub.f32 %v58, %v113
    %v130 = vsub.f32 %v59, %v114
    %v131 = vsub.f32 %v60, %v115
    %v132 = vsub.f32 %v61, %v116
    %v133 = vsub.f32 %v62, %v117
    %v134 = vsub.f32 %v63, %v118
    %v135 = vsub.f32 %v64, %v119
    %v136 = vmul.f32 %v120, %v120
    %v137 = vmul.f32 %v121, %v121
    %v138 = vmul.f32 %v122, %v122
    %v139 = vmul.f32 %v123, %v123
    %v140 = vmul.f32 %v124, %v124
    %v141 = vmul.f32 %v125, %v125
    %v142 = vmul.f32 %v126, %v126
    %v143 = vmul.f32 %v127, %v127
    %v144 = vmul.f32 %v128, %v128
    %v145 = vmul.f32 %v129, %v129
    %v146 = vmul.f32 %v130, %v130
    %v147 = vmul.f32 %v131, %v131
    %v148 = vmul.f32 %v132, %v132
    %v149 = vmul.f32 %v133, %v133
    %v150 = vmul.f32 %v134, %v134
    %v151 = vmul.f32 %v135, %v135
    %152 = vadd.xlane.f32.xlu0 %v136
    %v153 = vpop.xlane.xlu0 %152
    %154 = vadd.xlane.f32.xlu0 %v137
    %v155 = vpop.xlane.xlu0 %154
    %156 = vadd.xlane.f32.xlu0 %v138
    %v157 = vpop.xlane.xlu0 %156
    %158 = vadd.xlane.f32.xlu0 %v139
    %v159 = vpop.xlane.xlu0 %158
    %160 = vadd.xlane.f32.xlu0 %v140
    %v161 = vpop.xlane.xlu0 %160
    %162 = vadd.xlane.f32.xlu0 %v141
    %v163 = vpop.xlane.xlu0 %162
    %164 = vadd.xlane.f32.xlu0 %v142
    %v165 = vpop.xlane.xlu0 %164
    %166 = vadd.xlane.f32.xlu0 %v143
    %v167 = vpop.xlane.xlu0 %166
    %168 = vadd.xlane.f32.xlu0 %v144
    %v169 = vpop.xlane.xlu0 %168
    %170 = vadd.xlane.f32.xlu0 %v145
    %v171 = vpop.xlane.xlu0 %170
    %172 = vadd.xlane.f32.xlu0 %v146
    %v173 = vpop.xlane.xlu0 %172
    %174 = vadd.xlane.f32.xlu0 %v147
    %v175 = vpop.xlane.xlu0 %174
    %176 = vadd.xlane.f32.xlu0 %v148
    %v177 = vpop.xlane.xlu0 %176
    %178 = vadd.xlane.f32.xlu0 %v149
    %v179 = vpop.xlane.xlu0 %178
    %180 = vadd.xlane.f32.xlu0 %v150
    %v181 = vpop.xlane.xlu0 %180
    %182 = vadd.xlane.f32.xlu0 %v151
    %v183 = vpop.xlane.xlu0 %182
    %v184 = vmul.f32 %v153, %v103
    %v185 = vmul.f32 %v155, %v103
    %v186 = vmul.f32 %v157, %v103
    %v187 = vmul.f32 %v159, %v103
    %v188 = vmul.f32 %v161, %v103
    %v189 = vmul.f32 %v163, %v103
    %v190 = vmul.f32 %v165, %v103
    %v191 = vmul.f32 %v167, %v103
    %v192 = vmul.f32 %v169, %v103
    %v193 = vmul.f32 %v171, %v103
    %v194 = vmul.f32 %v173, %v103
    %v195 = vmul.f32 %v175, %v103
    %v196 = vmul.f32 %v177, %v103
    %v197 = vmul.f32 %v179, %v103
    %v198 = vmul.f32 %v181, %v103
    %v199 = vmul.f32 %v183, %v103
    %v200 = vadd.f32 %v184, 1e-05
    %v201 = vadd.f32 %v185, 1e-05
    %v202 = vadd.f32 %v186, 1e-05
    %v203 = vadd.f32 %v187, 1e-05
    %v204 = vadd.f32 %v188, 1e-05
    %v205 = vadd.f32 %v189, 1e-05
    %v206 = vadd.f32 %v190, 1e-05
    %v207 = vadd.f32 %v191, 1e-05
    %v208 = vadd.f32 %v192, 1e-05
    %v209 = vadd.f32 %v193, 1e-05
    %v210 = vadd.f32 %v194, 1e-05
    %v211 = vadd.f32 %v195, 1e-05
    %v212 = vadd.f32 %v196, 1e-05
    %v213 = vadd.f32 %v197, 1e-05
    %v214 = vadd.f32 %v198, 1e-05
    %v215 = vadd.f32 %v199, 1e-05
    %v216 = vrsqrt.pop %v200
    %v217 = vmul.f32 %v216, %v200
    %v218 = vmul.f32 %v217, %v216
    %v219 = vmul.f32 0.5, %v218
    %v220 = vsub.f32 1.5, %v219
    %v221 = vmul.f32 %v216, %v220
    %vm222 = vweird.f32 %v200
    %vm223 = vweird.f32 %v216
    %vm224 = vmor %vm222, %vm223
    %v225 = vsel %vm224, %v216, %v221
    %v226 = vrsqrt.pop %v201
    %v227 = vmul.f32 %v226, %v201
    %v228 = vmul.f32 %v227, %v226
    %v229 = vmul.f32 0.5, %v228
    %v230 = vsub.f32 1.5, %v229
    %v231 = vmul.f32 %v226, %v230
    %vm232 = vweird.f32 %v201
    %vm233 = vweird.f32 %v226
    %vm234 = vmor %vm232, %vm233
    %v235 = vsel %vm234, %v226, %v231
    %v236 = vrsqrt.pop %v202
    %v237 = vmul.f32 %v236, %v202
    %v238 = vmul.f32 %v237, %v236
    %v239 = vmul.f32 0.5, %v238
    %v240 = vsub.f32 1.5, %v239
    %v241 = vmul.f32 %v236, %v240
    %vm242 = vweird.f32 %v202
    %vm243 = vweird.f32 %v236
    %vm244 = vmor %vm242, %vm243
    %v245 = vsel %vm244, %v236, %v241
    %v246 = vrsqrt.pop %v203
    %v247 = vmul.f32 %v246, %v203
    %v248 = vmul.f32 %v247, %v246
    %v249 = vmul.f32 0.5, %v248
    %v250 = vsub.f32 1.5, %v249
    %v251 = vmul.f32 %v246, %v250
    %vm252 = vweird.f32 %v203
    %vm253 = vweird.f32 %v246
    %vm254 = vmor %vm252, %vm253
    %v255 = vsel %vm254, %v246, %v251
    %v256 = vrsqrt.pop %v204
    %v257 = vmul.f32 %v256, %v204
    %v258 = vmul.f32 %v257, %v256
    %v259 = vmul.f32 0.5, %v258
    %v260 = vsub.f32 1.5, %v259
    %v261 = vmul.f32 %v256, %v260
    %vm262 = vweird.f32 %v204
    %vm263 = vweird.f32 %v256
    %vm264 = vmor %vm262, %vm263
    %v265 = vsel %vm264, %v256, %v261
    %v266 = vrsqrt.pop %v205
    %v267 = vmul.f32 %v266, %v205
    %v268 = vmul.f32 %v267, %v266
    %v269 = vmul.f32 0.5, %v268
    %v270 = vsub.f32 1.5, %v269
    %v271 = vmul.f32 %v266, %v270
    %vm272 = vweird.f32 %v205
    %vm273 = vweird.f32 %v266
    %vm274 = vmor %vm272, %vm273
    %v275 = vsel %vm274, %v266, %v271
    %v276 = vrsqrt.pop %v206
    %v277 = vmul.f32 %v276, %v206
    %v278 = vmul.f32 %v277, %v276
    %v279 = vmul.f32 0.5, %v278
    %v280 = vsub.f32 1.5, %v279
    %v281 = vmul.f32 %v276, %v280
    %vm282 = vweird.f32 %v206
    %vm283 = vweird.f32 %v276
    %vm284 = vmor %vm282, %vm283
    %v285 = vsel %vm284, %v276, %v281
    %v286 = vrsqrt.pop %v207
    %v287 = vmul.f32 %v286, %v207
    %v288 = vmul.f32 %v287, %v286
    %v289 = vmul.f32 0.5, %v288
    %v290 = vsub.f32 1.5, %v289
    %v291 = vmul.f32 %v286, %v290
    %vm292 = vweird.f32 %v207
    %vm293 = vweird.f32 %v286
    %vm294 = vmor %vm292, %vm293
    %v295 = vsel %vm294, %v286, %v291
    %v296 = vrsqrt.pop %v208
    %v297 = vmul.f32 %v296, %v208
    %v298 = vmul.f32 %v297, %v296
    %v299 = vmul.f32 0.5, %v298
    %v300 = vsub.f32 1.5, %v299
    %v301 = vmul.f32 %v296, %v300
    %vm302 = vweird.f32 %v208
    %vm303 = vweird.f32 %v296
    %vm304 = vmor %vm302, %vm303
    %v305 = vsel %vm304, %v296, %v301
    %v306 = vrsqrt.pop %v209
    %v307 = vmul.f32 %v306, %v209
    %v308 = vmul.f32 %v307, %v306
    %v309 = vmul.f32 0.5, %v308
    %v310 = vsub.f32 1.5, %v309
    %v311 = vmul.f32 %v306, %v310
    %vm312 = vweird.f32 %v209
    %vm313 = vweird.f32 %v306
    %vm314 = vmor %vm312, %vm313
    %v315 = vsel %vm314, %v306, %v311
    %v316 = vrsqrt.pop %v210
    %v317 = vmul.f32 %v316, %v210
    %v318 = vmul.f32 %v317, %v316
    %v319 = vmul.f32 0.5, %v318
    %v320 = vsub.f32 1.5, %v319
    %v321 = vmul.f32 %v316, %v320
    %vm322 = vweird.f32 %v210
    %vm323 = vweird.f32 %v316
    %vm324 = vmor %vm322, %vm323
    %v325 = vsel %vm324, %v316, %v321
    %v326 = vrsqrt.pop %v211
    %v327 = vmul.f32 %v326, %v211
    %v328 = vmul.f32 %v327, %v326
    %v329 = vmul.f32 0.5, %v328
    %v330 = vsub.f32 1.5, %v329
    %v331 = vmul.f32 %v326, %v330
    %vm332 = vweird.f32 %v211
    %vm333 = vweird.f32 %v326
    %vm334 = vmor %vm332, %vm333
    %v335 = vsel %vm334, %v326, %v331
    %v336 = vrsqrt.pop %v212
    %v337 = vmul.f32 %v336, %v212
    %v338 = vmul.f32 %v337, %v336
    %v339 = vmul.f32 0.5, %v338
    %v340 = vsub.f32 1.5, %v339
    %v341 = vmul.f32 %v336, %v340
    %vm342 = vweird.f32 %v212
    %vm343 = vweird.f32 %v336
    %vm344 = vmor %vm342, %vm343
    %v345 = vsel %vm344, %v336, %v341
    %v346 = vrsqrt.pop %v213
    %v347 = vmul.f32 %v346, %v213
    %v348 = vmul.f32 %v347, %v346
    %v349 = vmul.f32 0.5, %v348
    %v350 = vsub.f32 1.5, %v349
    %v351 = vmul.f32 %v346, %v350
    %vm352 = vweird.f32 %v213
    %vm353 = vweird.f32 %v346
    %vm354 = vmor %vm352, %vm353
    %v355 = vsel %vm354, %v346, %v351
    %v356 = vrsqrt.pop %v214
    %v357 = vmul.f32 %v356, %v214
    %v358 = vmul.f32 %v357, %v356
    %v359 = vmul.f32 0.5, %v358
    %v360 = vsub.f32 1.5, %v359
    %v361 = vmul.f32 %v356, %v360
    %vm362 = vweird.f32 %v214
    %vm363 = vweird.f32 %v356
    %vm364 = vmor %vm362, %vm363
    %v365 = vsel %vm364, %v356, %v361
    %v366 = vrsqrt.pop %v215
    %v367 = vmul.f32 %v366, %v215
    %v368 = vmul.f32 %v367, %v366
    %v369 = vmul.f32 0.5, %v368
    %v370 = vsub.f32 1.5, %v369
    %v371 = vmul.f32 %v366, %v370
    %vm372 = vweird.f32 %v215
    %vm373 = vweird.f32 %v366
    %vm374 = vmor %vm372, %vm373
    %v375 = vsel %vm374, %v366, %v371
    %v376 = vmul.f32 %v120, %v225
    %v377 = vmul.f32 %v121, %v235
    %v378 = vmul.f32 %v122, %v245
    %v379 = vmul.f32 %v123, %v255
    %v380 = vmul.f32 %v124, %v265
    %v381 = vmul.f32 %v125, %v275
    %v382 = vmul.f32 %v126, %v285
    %v383 = vmul.f32 %v127, %v295
    %v384 = vmul.f32 %v128, %v305
    %v385 = vmul.f32 %v129, %v315
    %v386 = vmul.f32 %v130, %v325
    %v387 = vmul.f32 %v131, %v335
    %v388 = vmul.f32 %v132, %v345
    %v389 = vmul.f32 %v133, %v355
    %v390 = vmul.f32 %v134, %v365
    %v391 = vmul.f32 %v135, %v375
    %v392 = vld [vmem:[%s2] sm:$0x1]
    %v394 = vperm.slane %v392, 0
    %v396 = vmul.f32 %v376, %v394
    %v397 = vmul.f32 %v377, %v394
    %v398 = vmul.f32 %v378, %v394
    %v399 = vmul.f32 %v379, %v394
    %v400 = vmul.f32 %v380, %v394
    %v401 = vmul.f32 %v381, %v394
    %v402 = vmul.f32 %v382, %v394
    %v403 = vmul.f32 %v383, %v394
    %v404 = vmul.f32 %v384, %v394
    %v405 = vmul.f32 %v385, %v394
    %v406 = vmul.f32 %v386, %v394
    %v407 = vmul.f32 %v387, %v394
    %v408 = vmul.f32 %v388, %v394
    %v409 = vmul.f32 %v389, %v394
    %v410 = vmul.f32 %v390, %v394
    %v411 = vmul.f32 %v391, %v394
    %v412 = vld [vmem:[%s3] sm:$0x1]
    %v414 = vperm.slane %v412, 0
    %v416 = vadd.f32 %v396, %v414
    %v417 = vadd.f32 %v397, %v414
    %v418 = vadd.f32 %v398, %v414
    %v419 = vadd.f32 %v399, %v414
    %v420 = vadd.f32 %v400, %v414
    %v421 = vadd.f32 %v401, %v414
    %v422 = vadd.f32 %v402, %v414
    %v423 = vadd.f32 %v403, %v414
    %v424 = vadd.f32 %v404, %v414
    %v425 = vadd.f32 %v405, %v414
    %v426 = vadd.f32 %v406, %v414
    %v427 = vadd.f32 %v407, %v414
    %v428 = vadd.f32 %v408, %v414
    %v429 = vadd.f32 %v409, %v414
    %v430 = vadd.f32 %v410, %v414
    %v431 = vadd.f32 %v411, %v414
    %v432 = vpack.c.bf16 %v417, %v416
    %v433 = vpack.c.bf16 %v419, %v418
    %v434 = vpack.c.bf16 %v421, %v420
    %v435 = vpack.c.bf16 %v423, %v422
    %v436 = vpack.c.bf16 %v425, %v424
    %v437 = vpack.c.bf16 %v427, %v426
    %v438 = vpack.c.bf16 %v429, %v428
    %v439 = vpack.c.bf16 %v431, %v430
    %v440 = vld [vmem:[#allocation2] sm:$0xff]
    %v441 = vld [vmem:[#allocation2 + $0x8] sm:$0xf]
    %v442 = vld [vmem:[#allocation2 + $0xc] sm:$0xff]
    %v443 = vld [vmem:[#allocation2 + $0x14] sm:$0xf]
    %v444 = vld [vmem:[#allocation2 + $0x18] sm:$0xff]
    %v445 = vld [vmem:[#allocation2 + $0x20] sm:$0xf]
    %v446 = vld [vmem:[#allocation2 + $0x24] sm:$0xff]
    %v447 = vld [vmem:[#allocation2 + $0x2c] sm:$0xf]
    %v448 = vld [vmem:[#allocation2 + $0x30] sm:$0xff]
    %v449 = vld [vmem:[#allocation2 + $0x38] sm:$0xf]
    %v450 = vld [vmem:[#allocation2 + $0x3c] sm:$0xff]
    %v451 = vld [vmem:[#allocation2 + $0x44] sm:$0xf]
    %v452 = vld [vmem:[#allocation2 + $0x48] sm:$0xff]
    %v453 = vld [vmem:[#allocation2 + $0x50] sm:$0xf]
    %v454 = vld [vmem:[#allocation2 + $0x54] sm:$0xff]
    %v455 = vld [vmem:[#allocation2 + $0x5c] sm:$0xf]
    %v456 = vld [vmem:[#allocation2 + $0x60] sm:$0xff]
    %v457 = vld [vmem:[#allocation2 + $0x68] sm:$0xf]
    %v458 = vld [vmem:[#allocation2 + $0x6c] sm:$0xff]
    %v459 = vld [vmem:[#allocation2 + $0x74] sm:$0xf]
    %v460 = vld [vmem:[#allocation2 + $0x78] sm:$0xff]
    %v461 = vld [vmem:[#allocation2 + $0x80] sm:$0xf]
    %v462 = vld [vmem:[#allocation2 + $0x84] sm:$0xff]
    %v463 = vld [vmem:[#allocation2 + $0x8c] sm:$0xf]
    %v464 = vld [vmem:[#allocation2 + $0x90] sm:$0xff]
    %v465 = vld [vmem:[#allocation2 + $0x98] sm:$0xf]
    %v466 = vld [vmem:[#allocation2 + $0x9c] sm:$0xff]
    %v467 = vld [vmem:[#allocation2 + $0xa4] sm:$0xf]
    %v468 = vld [vmem:[#allocation2 + $0xa8] sm:$0xff]
    %v469 = vld [vmem:[#allocation2 + $0xb0] sm:$0xf]
    %v470 = vld [vmem:[#allocation2 + $0xb4] sm:$0xff]
    %v471 = vld [vmem:[#allocation2 + $0xbc] sm:$0xf]
    %v504 = vunpack.c.l.b16 %v440
    %v505 = vunpack.c.h.b16 %v440
    %v506 = vunpack.c.l.b16 %v441
    %v507 = vunpack.c.l.b16 %v442
    %v508 = vunpack.c.h.b16 %v442
    %v509 = vunpack.c.l.b16 %v443
    %v510 = vunpack.c.l.b16 %v444
    %v511 = vunpack.c.h.b16 %v444
    %v512 = vunpack.c.l.b16 %v445
    %v513 = vunpack.c.l.b16 %v446
    %v514 = vunpack.c.h.b16 %v446
    %v515 = vunpack.c.l.b16 %v447
    %v516 = vunpack.c.l.b16 %v448
    %v517 = vunpack.c.h.b16 %v448
    %v518 = vunpack.c.l.b16 %v449
    %v519 = vunpack.c.l.b16 %v450
    %v520 = vunpack.c.h.b16 %v450
    %v521 = vunpack.c.l.b16 %v451
    %v522 = vunpack.c.l.b16 %v452
    %v523 = vunpack.c.h.b16 %v452
    %v524 = vunpack.c.l.b16 %v453
    %v525 = vunpack.c.l.b16 %v454
    %v526 = vunpack.c.h.b16 %v454
    %v527 = vunpack.c.l.b16 %v455
    %v528 = vunpack.c.l.b16 %v456
    %v529 = vunpack.c.h.b16 %v456
    %v530 = vunpack.c.l.b16 %v457
    %v531 = vunpack.c.l.b16 %v458
    %v532 = vunpack.c.h.b16 %v458
    %v533 = vunpack.c.l.b16 %v459
    %v534 = vunpack.c.l.b16 %v460
    %v535 = vunpack.c.h.b16 %v460
    %v536 = vunpack.c.l.b16 %v461
    %v537 = vunpack.c.l.b16 %v462
    %v538 = vunpack.c.h.b16 %v462
    %v539 = vunpack.c.l.b16 %v463
    %v540 = vunpack.c.l.b16 %v464
    %v541 = vunpack.c.h.b16 %v464
    %v542 = vunpack.c.l.b16 %v465
    %v543 = vunpack.c.l.b16 %v466
    %v544 = vunpack.c.h.b16 %v466
    %v545 = vunpack.c.l.b16 %v467
    %v546 = vunpack.c.l.b16 %v468
    %v547 = vunpack.c.h.b16 %v468
    %v548 = vunpack.c.l.b16 %v469
    %v549 = vunpack.c.l.b16 %v470
    %v550 = vunpack.c.h.b16 %v470
    %v551 = vunpack.c.l.b16 %v471
    %v552 = vpack.c.b16 %v507, %v504
    %v553 = vpack.c.b16 %v508, %v505
    %v554 = vpack.c.b16 %v509, %v506
    %v555 = vpack.c.b16 %v513, %v510
    %v556 = vpack.c.b16 %v514, %v511
    %v557 = vpack.c.b16 %v515, %v512
    %v558 = vpack.c.b16 %v519, %v516
    %v559 = vpack.c.b16 %v520, %v517
    %v560 = vpack.c.b16 %v521, %v518
    %v561 = vpack.c.b16 %v525, %v522
    %v562 = vpack.c.b16 %v526, %v523
    %v563 = vpack.c.b16 %v527, %v524
    %v564 = vpack.c.b16 %v531, %v528
    %v565 = vpack.c.b16 %v532, %v529
    %v566 = vpack.c.b16 %v533, %v530
    %v567 = vpack.c.b16 %v537, %v534
    %v568 = vpack.c.b16 %v538, %v535
    %v569 = vpack.c.b16 %v539, %v536
    %v570 = vpack.c.b16 %v543, %v540
    %v571 = vpack.c.b16 %v544, %v541
    %v572 = vpack.c.b16 %v545, %v542
    %v573 = vpack.c.b16 %v549, %v546
    %v574 = vpack.c.b16 %v550, %v547
    %v575 = vpack.c.b16 %v551, %v548
    %600 = vmatpush.bf16.msra.mxu0 %v573
    %601 = vmatpush.bf16.msra.mxu0 %v570
    %602 = vmatpush.bf16.msra.mxu0 %v567
    %603 = vmatpush.bf16.msra.mxu0 %v564
    %604 = vmatpush.bf16.msra.mxu0 %v561
    %605 = vmatpush.bf16.msra.mxu0 %v558
    %606 = vmatpush.bf16.msra.mxu0 %v555
    %607 = vmatpush.bf16.msra.mxu0 %v552
    %608 = vmatmul.bf16.gmra.mxu0 %v432
    %v609 = vpop.f32.mrf.mxu0
    %v610 = vadd.f32 0.0, %v609
    %v611 = vpop.f32.mrf.mxu0
    %v612 = vadd.f32 0.0, %v611
    %613 = vmatmul.bf16.gmra.mxu0 %v433
    %v614 = vpop.f32.mrf.mxu0
    %v615 = vadd.f32 0.0, %v614
    %v616 = vpop.f32.mrf.mxu0
    %v617 = vadd.f32 0.0, %v616
    %618 = vmatmul.bf16.gmra.mxu0 %v434
    %v619 = vpop.f32.mrf.mxu0
    %v620 = vadd.f32 0.0, %v619
    %v621 = vpop.f32.mrf.mxu0
    %v622 = vadd.f32 0.0, %v621
    %623 = vmatmul.bf16.gmra.mxu0 %v435
    %v624 = vpop.f32.mrf.mxu0
    %v625 = vadd.f32 0.0, %v624
    %v626 = vpop.f32.mrf.mxu0
    %v627 = vadd.f32 0.0, %v626
    %628 = vmatmul.bf16.gmra.mxu0 %v436
    %v629 = vpop.f32.mrf.mxu0
    %v630 = vadd.f32 0.0, %v629
    %v631 = vpop.f32.mrf.mxu0
    %v632 = vadd.f32 0.0, %v631
    %633 = vmatmul.bf16.gmra.mxu0 %v437
    %v634 = vpop.f32.mrf.mxu0
    %v635 = vadd.f32 0.0, %v634
    %v636 = vpop.f32.mrf.mxu0
    %v637 = vadd.f32 0.0, %v636
    %638 = vmatmul.bf16.gmra.mxu0 %v438
    %v639 = vpop.f32.mrf.mxu0
    %v640 = vadd.f32 0.0, %v639
    %v641 = vpop.f32.mrf.mxu0
    %v642 = vadd.f32 0.0, %v641
    %643 = vmatmul.bf16.gmra.mxu0 %v439
    %v644 = vpop.f32.mrf.mxu0
    %v645 = vadd.f32 0.0, %v644
    %v646 = vpop.f32.mrf.mxu0
    %v647 = vadd.f32 0.0, %v646
    %648 = vdwg.mxu0
    %649 = vmatpush.bf16.msra.mxu0 %v574
    %650 = vmatpush.bf16.msra.mxu0 %v571
    %651 = vmatpush.bf16.msra.mxu0 %v568
    %652 = vmatpush.bf16.msra.mxu0 %v565
    %653 = vmatpush.bf16.msra.mxu0 %v562
    %654 = vmatpush.bf16.msra.mxu0 %v559
    %655 = vmatpush.bf16.msra.mxu0 %v556
    %656 = vmatpush.bf16.msra.mxu0 %v553
    %657 = vmatmul.bf16.gmra.mxu0 %v432
    %v658 = vpop.f32.mrf.mxu0
    %v659 = vadd.f32 0.0, %v658
    %v660 = vpop.f32.mrf.mxu0
    %v661 = vadd.f32 0.0, %v660
    %662 = vmatmul.bf16.gmra.mxu0 %v433
    %v663 = vpop.f32.mrf.mxu0
    %v664 = vadd.f32 0.0, %v663
    %v665 = vpop.f32.mrf.mxu0
    %v666 = vadd.f32 0.0, %v665
    %667 = vmatmul.bf16.gmra.mxu0 %v434
    %v668 = vpop.f32.mrf.mxu0
    %v669 = vadd.f32 0.0, %v668
    %v670 = vpop.f32.mrf.mxu0
    %v671 = vadd.f32 0.0, %v670
    %672 = vmatmul.bf16.gmra.mxu0 %v435
    %v673 = vpop.f32.mrf.mxu0
    %v674 = vadd.f32 0.0, %v673
    %v675 = vpop.f32.mrf.mxu0
    %v676 = vadd.f32 0.0, %v675
    %677 = vmatmul.bf16.gmra.mxu0 %v436
    %v678 = vpop.f32.mrf.mxu0
    %v679 = vadd.f32 0.0, %v678
    %v680 = vpop.f32.mrf.mxu0
    %v681 = vadd.f32 0.0, %v680
    %682 = vmatmul.bf16.gmra.mxu0 %v437
    %v683 = vpop.f32.mrf.mxu0
    %v684 = vadd.f32 0.0, %v683
    %v685 = vpop.f32.mrf.mxu0
    %v686 = vadd.f32 0.0, %v685
    %687 = vmatmul.bf16.gmra.mxu0 %v438
    %v688 = vpop.f32.mrf.mxu0
    %v689 = vadd.f32 0.0, %v688
    %v690 = vpop.f32.mrf.mxu0
    %v691 = vadd.f32 0.0, %v690
    %692 = vmatmul.bf16.gmra.mxu0 %v439
    %v693 = vpop.f32.mrf.mxu0
    %v694 = vadd.f32 0.0, %v693
    %v695 = vpop.f32.mrf.mxu0
    %v696 = vadd.f32 0.0, %v695
    %697 = vdwg.mxu0
    %698 = vmatpush.bf16.msra.mxu0 %v575
    %699 = vmatpush.bf16.msra.mxu0 %v572
    %700 = vmatpush.bf16.msra.mxu0 %v569
    %701 = vmatpush.bf16.msra.mxu0 %v566
    %702 = vmatpush.bf16.msra.mxu0 %v563
    %703 = vmatpush.bf16.msra.mxu0 %v560
    %704 = vmatpush.bf16.msra.mxu0 %v557
    %705 = vmatpush.bf16.msra.mxu0 %v554
    %706 = vmatmul.bf16.gmra.mxu0 %v432
    %v707 = vpop.f32.mrf.mxu0
    %v708 = vadd.f32 0.0, %v707
    %v709 = vpop.f32.mrf.mxu0
    %v710 = vadd.f32 0.0, %v709
    %711 = vmatmul.bf16.gmra.mxu0 %v433
    %v712 = vpop.f32.mrf.mxu0
    %v713 = vadd.f32 0.0, %v712
    %v714 = vpop.f32.mrf.mxu0
    %v715 = vadd.f32 0.0, %v714
    %716 = vmatmul.bf16.gmra.mxu0 %v434
    %v717 = vpop.f32.mrf.mxu0
    %v718 = vadd.f32 0.0, %v717
    %v719 = vpop.f32.mrf.mxu0
    %v720 = vadd.f32 0.0, %v719
    %721 = vmatmul.bf16.gmra.mxu0 %v435
    %v722 = vpop.f32.mrf.mxu0
    %v723 = vadd.f32 0.0, %v722
    %v724 = vpop.f32.mrf.mxu0
    %v725 = vadd.f32 0.0, %v724
    %726 = vmatmul.bf16.gmra.mxu0 %v436
    %v727 = vpop.f32.mrf.mxu0
    %v728 = vadd.f32 0.0, %v727
    %v729 = vpop.f32.mrf.mxu0
    %v730 = vadd.f32 0.0, %v729
    %731 = vmatmul.bf16.gmra.mxu0 %v437
    %v732 = vpop.f32.mrf.mxu0
    %v733 = vadd.f32 0.0, %v732
    %v734 = vpop.f32.mrf.mxu0
    %v735 = vadd.f32 0.0, %v734
    %736 = vmatmul.bf16.gmra.mxu0 %v438
    %v737 = vpop.f32.mrf.mxu0
    %v738 = vadd.f32 0.0, %v737
    %v739 = vpop.f32.mrf.mxu0
    %v740 = vadd.f32 0.0, %v739
    %741 = vmatmul.bf16.gmra.mxu0 %v439
    %v742 = vpop.f32.mrf.mxu0
    %v743 = vadd.f32 0.0, %v742
    %v744 = vpop.f32.mrf.mxu0
    %v745 = vadd.f32 0.0, %v744
    %746 = vdwg.mxu0
    %v747 = vpack.c.bf16 %v659, %v610
    %v748 = vpack.c.bf16 %v708, %v708
    %v749 = vpack.c.bf16 %v661, %v612
    %v750 = vpack.c.bf16 %v710, %v710
    %v751 = vpack.c.bf16 %v664, %v615
    %v752 = vpack.c.bf16 %v713, %v713
    %v753 = vpack.c.bf16 %v666, %v617
    %v754 = vpack.c.bf16 %v715, %v715
    %v755 = vpack.c.bf16 %v669, %v620
    %v756 = vpack.c.bf16 %v718, %v718
    %v757 = vpack.c.bf16 %v671, %v622
    %v758 = vpack.c.bf16 %v720, %v720
    %v759 = vpack.c.bf16 %v674, %v625
    %v760 = vpack.c.bf16 %v723, %v723
    %v761 = vpack.c.bf16 %v676, %v627
    %v762 = vpack.c.bf16 %v725, %v725
    %v763 = vpack.c.bf16 %v679, %v630
    %v764 = vpack.c.bf16 %v728, %v728
    %v765 = vpack.c.bf16 %v681, %v632
    %v766 = vpack.c.bf16 %v730, %v730
    %v767 = vpack.c.bf16 %v684, %v635
    %v768 = vpack.c.bf16 %v733, %v733
    %v769 = vpack.c.bf16 %v686, %v637
    %v770 = vpack.c.bf16 %v735, %v735
    %v771 = vpack.c.bf16 %v689, %v640
    %v772 = vpack.c.bf16 %v738, %v738
    %v773 = vpack.c.bf16 %v691, %v642
    %v774 = vpack.c.bf16 %v740, %v740
    %v775 = vpack.c.bf16 %v694, %v645
    %v776 = vpack.c.bf16 %v743, %v743
    %v777 = vpack.c.bf16 %v696, %v647
    %v778 = vpack.c.bf16 %v745, %v745
    %779 = vst [vmem:[%s4] sm:$0xff] %v747
    %780 = vst [vmem:[%s4 + $0x8] sm:$0xf] %v748
    %781 = vst [vmem:[%s4 + $0xc] sm:$0xff] %v749
    %782 = vst [vmem:[%s4 + $0x14] sm:$0xf] %v750
    %783 = vst [vmem:[%s4 + $0x18] sm:$0xff] %v751
    %784 = vst [vmem:[%s4 + $0x20] sm:$0xf] %v752
    %785 = vst [vmem:[%s4 + $0x24] sm:$0xff] %v753
    %786 = vst [vmem:[%s4 + $0x2c] sm:$0xf] %v754
    %787 = vst [vmem:[%s4 + $0x30] sm:$0xff] %v755
    %788 = vst [vmem:[%s4 + $0x38] sm:$0xf] %v756
    %789 = vst [vmem:[%s4 + $0x3c] sm:$0xff] %v757
    %790 = vst [vmem:[%s4 + $0x44] sm:$0xf] %v758
    %791 = vst [vmem:[%s4 + $0x48] sm:$0xff] %v759
    %792 = vst [vmem:[%s4 + $0x50] sm:$0xf] %v760
    %793 = vst [vmem:[%s4 + $0x54] sm:$0xff] %v761
    %794 = vst [vmem:[%s4 + $0x5c] sm:$0xf] %v762
    %795 = vst [vmem:[%s4 + $0x60] sm:$0xff] %v763
    %796 = vst [vmem:[%s4 + $0x68] sm:$0xf] %v764
    %797 = vst [vmem:[%s4 + $0x6c] sm:$0xff] %v765
    %798 = vst [vmem:[%s4 + $0x74] sm:$0xf] %v766
    %799 = vst [vmem:[%s4 + $0x78] sm:$0xff] %v767
    %800 = vst [vmem:[%s4 + $0x80] sm:$0xf] %v768
    %801 = vst [vmem:[%s4 + $0x84] sm:$0xff] %v769
    %802 = vst [vmem:[%s4 + $0x8c] sm:$0xf] %v770
    %803 = vst [vmem:[%s4 + $0x90] sm:$0xff] %v771
    %804 = vst [vmem:[%s4 + $0x98] sm:$0xf] %v772
    %805 = vst [vmem:[%s4 + $0x9c] sm:$0xff] %v773
    %806 = vst [vmem:[%s4 + $0xa4] sm:$0xf] %v774
    %807 = vst [vmem:[%s4 + $0xa8] sm:$0xff] %v775
    %808 = vst [vmem:[%s4 + $0xb0] sm:$0xf] %v776
    %809 = vst [vmem:[%s4 + $0xb4] sm:$0xff] %v777
    %810 = vst [vmem:[%s4 + $0xbc] sm:$0xf] %v778
    // Predicated region
    $region22: #{cross_attention_block_forward.13} parent=1 // pred_check
      _
    $region23: #{cross_attention_block_forward.13} parent=1 // pred_check_branch
      %812 = sbr.rel (0) target = $region25
    $region24: #{cross_attention_block_forward.13} parent=1 // pred_region
      _
    $region25: #{cross_attention_block_forward.13} parent=1 // pred_fallthru
      _
    // Predicated region
    $region26: #{cross_attention_block_forward.13} parent=1 // pred_check
      _
    $region27: #{cross_attention_block_forward.13} parent=1 // pred_check_branch
      %814 = sbr.rel (0) target = $region29
    $region28: #{cross_attention_block_forward.13} parent=1 // pred_region
      _
    $region29: #{cross_attention_block_forward.13} parent=1 // pred_fallthru
      _
    %815 = vsyncpa [#allocation3], 1

// kernel: cross_attention_block_forward.10
$region0: #{cross_attention_block_forward.10}
  #allocation0 [shape = 'u32[]', space=smem, size = 0x4, offset = 0x4, fixed_abs, tag = 'smem constant byte address 0x4 - core index']
  #allocation1 [shape = 'u32[72,128]{1,0:T(1,128)}', space=vmem, size = 0x9000, scoped, tag = 'internal scratch']
  %s0 = inlined_call_operand.vmem [shape: bf16[128,128], index: 0, kind: input, shape index: {}]
  %s1 = inlined_call_operand.vmem [shape: bf16[128,384], index: 1, kind: input, shape index: {}]
  %s2 = inlined_call_operand.vmem [shape: f32[1,128], index: 2, kind: input, shape index: {}]
  %s3 = inlined_call_operand.vmem [shape: f32[1,128], index: 3, kind: input, shape index: {}]
  %s4 = inlined_call_operand.vmem [shape: bf16[128,384], index: 4, kind: output, shape index: {}]
  %s5 = sld [smem:[#allocation0]]
  $region26: #{cross_attention_block_forward.10} parent=0
    _
  %s7 = ssub.s32 1, %s5
  %s8 = scalar_select 0, %s7, %s5
  // Predicated region
  $region2: #{cross_attention_block_forward.10} parent=0 // pred_check
    _
  $region3: #{cross_attention_block_forward.10} parent=0 // pred_check_branch
    %10 = sbr.rel (0) target = $region5
  $region4: #{cross_attention_block_forward.10} parent=0 // pred_region
    _
  $region5: #{cross_attention_block_forward.10} parent=0 // pred_fallthru
    _
  // Predicated region
  $region6: #{cross_attention_block_forward.10} parent=0 // pred_check
    _
  $region7: #{cross_attention_block_forward.10} parent=0 // pred_check_branch
    %12 = sbr.rel (0) target = $region9
  $region8: #{cross_attention_block_forward.10} parent=0 // pred_region
    _
  $region9: #{cross_attention_block_forward.10} parent=0 // pred_fallthru
    _
  // Predicated region
  $region10: #{cross_attention_block_forward.10} parent=0 // pred_check
    _
  $region11: #{cross_attention_block_forward.10} parent=0 // pred_check_branch
    %14 = sbr.rel (0) target = $region13
  $region12: #{cross_attention_block_forward.10} parent=0 // pred_region
    _
  $region13: #{cross_attention_block_forward.10} parent=0 // pred_fallthru
    _
  // Predicated region
  $region14: #{cross_attention_block_forward.10} parent=0 // pred_check
    _
  $region15: #{cross_attention_block_forward.10} parent=0 // pred_check_branch
    %16 = sbr.rel (0) target = $region17
  $region16: #{cross_attention_block_forward.10} parent=0 // pred_region
    _
  $region17: #{cross_attention_block_forward.10} parent=0 // pred_fallthru
    _
  %v17 = vld [vmem:[%s0] sm:$0xf]
  %v18 = vld [vmem:[%s0 + $0x4] sm:$0xf]
  %v19 = vld [vmem:[%s0 + $0x8] sm:$0xf]
  %v20 = vld [vmem:[%s0 + $0xc] sm:$0xf]
  %v21 = vld [vmem:[%s0 + $0x10] sm:$0xf]
  %v22 = vld [vmem:[%s0 + $0x14] sm:$0xf]
  %v23 = vld [vmem:[%s0 + $0x18] sm:$0xf]
  %v24 = vld [vmem:[%s0 + $0x1c] sm:$0xf]
  %v25 = vld [vmem:[%s0 + $0x20] sm:$0xf]
  %v26 = vld [vmem:[%s0 + $0x24] sm:$0xf]
  %v27 = vld [vmem:[%s0 + $0x28] sm:$0xf]
  %v28 = vld [vmem:[%s0 + $0x2c] sm:$0xf]
  %v29 = vld [vmem:[%s0 + $0x30] sm:$0xf]
  %v30 = vld [vmem:[%s0 + $0x34] sm:$0xf]
  %v31 = vld [vmem:[%s0 + $0x38] sm:$0xf]
  %v32 = vld [vmem:[%s0 + $0x3c] sm:$0xf]
  %v33 = vunpack.c.l.bf16 %v17
  %v34 = vunpack.c.l.bf16 %v18
  %v35 = vunpack.c.l.bf16 %v19
  %v36 = vunpack.c.l.bf16 %v20
  %v37 = vunpack.c.l.bf16 %v21
  %v38 = vunpack.c.l.bf16 %v22
  %v39 = vunpack.c.l.bf16 %v23
  %v40 = vunpack.c.l.bf16 %v24
  %v41 = vunpack.c.l.bf16 %v25
  %v42 = vunpack.c.l.bf16 %v26
  %v43 = vunpack.c.l.bf16 %v27
  %v44 = vunpack.c.l.bf16 %v28
  %v45 = vunpack.c.l.bf16 %v29
  %v46 = vunpack.c.l.bf16 %v30
  %v47 = vunpack.c.l.bf16 %v31
  %v48 = vunpack.c.l.bf16 %v32
  %49 = vadd.xlane.f32.xlu0 %v33
  %v50 = vpop.xlane.xlu0 %49
  %51 = vadd.xlane.f32.xlu0 %v34
  %v52 = vpop.xlane.xlu0 %51
  %53 = vadd.xlane.f32.xlu0 %v35
  %v54 = vpop.xlane.xlu0 %53
  %55 = vadd.xlane.f32.xlu0 %v36
  %v56 = vpop.xlane.xlu0 %55
  %57 = vadd.xlane.f32.xlu0 %v37
  %v58 = vpop.xlane.xlu0 %57
  %59 = vadd.xlane.f32.xlu0 %v38
  %v60 = vpop.xlane.xlu0 %59
  %61 = vadd.xlane.f32.xlu0 %v39
  %v62 = vpop.xlane.xlu0 %61
  %63 = vadd.xlane.f32.xlu0 %v40
  %v64 = vpop.xlane.xlu0 %63
  %65 = vadd.xlane.f32.xlu0 %v41
  %v66 = vpop.xlane.xlu0 %65
  %67 = vadd.xlane.f32.xlu0 %v42
  %v68 = vpop.xlane.xlu0 %67
  %69 = vadd.xlane.f32.xlu0 %v43
  %v70 = vpop.xlane.xlu0 %69
  %71 = vadd.xlane.f32.xlu0 %v44
  %v72 = vpop.xlane.xlu0 %71
  %73 = vadd.xlane.f32.xlu0 %v45
  %v74 = vpop.xlane.xlu0 %73
  %75 = vadd.xlane.f32.xlu0 %v46
  %v76 = vpop.xlane.xlu0 %75
  %77 = vadd.xlane.f32.xlu0 %v47
  %v78 = vpop.xlane.xlu0 %77
  %79 = vadd.xlane.f32.xlu0 %v48
  %v80 = vpop.xlane.xlu0 %79
  %v81 = vrcp.pop 128.0
  %v82 = vmul.f32 128.0, %v81
  %v83 = vsub.f32 1.0, %v82
  %v84 = vmul.f32 %v81, %v83
  %v85 = vadd.f32 %v81, %v84
  %vm86 = vweird.f32 %v81
  %v87 = vsel %vm86, %v81, %v85
  %v88 = vmul.f32 %v50, %v87
  %v89 = vmul.f32 %v52, %v87
  %v90 = vmul.f32 %v54, %v87
  %v91 = vmul.f32 %v56, %v87
  %v92 = vmul.f32 %v58, %v87
  %v93 = vmul.f32 %v60, %v87
  %v94 = vmul.f32 %v62, %v87
  %v95 = vmul.f32 %v64, %v87
  %v96 = vmul.f32 %v66, %v87
  %v97 = vmul.f32 %v68, %v87
  %v98 = vmul.f32 %v70, %v87
  %v99 = vmul.f32 %v72, %v87
  %v100 = vmul.f32 %v74, %v87
  %v101 = vmul.f32 %v76, %v87
  %v102 = vmul.f32 %v78, %v87
  %v103 = vmul.f32 %v80, %v87
  %v104 = vsub.f32 %v33, %v88
  %v105 = vsub.f32 %v34, %v89
  %v106 = vsub.f32 %v35, %v90
  %v107 = vsub.f32 %v36, %v91
  %v108 = vsub.f32 %v37, %v92
  %v109 = vsub.f32 %v38, %v93
  %v110 = vsub.f32 %v39, %v94
  %v111 = vsub.f32 %v40, %v95
  %v112 = vsub.f32 %v41, %v96
  %v113 = vsub.f32 %v42, %v97
  %v114 = vsub.f32 %v43, %v98
  %v115 = vsub.f32 %v44, %v99
  %v116 = vsub.f32 %v45, %v100
  %v117 = vsub.f32 %v46, %v101
  %v118 = vsub.f32 %v47, %v102
  %v119 = vsub.f32 %v48, %v103
  %v120 = vmul.f32 %v104, %v104
  %v121 = vmul.f32 %v105, %v105
  %v122 = vmul.f32 %v106, %v106
  %v123 = vmul.f32 %v107, %v107
  %v124 = vmul.f32 %v108, %v108
  %v125 = vmul.f32 %v109, %v109
  %v126 = vmul.f32 %v110, %v110
  %v127 = vmul.f32 %v111, %v111
  %v128 = vmul.f32 %v112, %v112
  %v129 = vmul.f32 %v113, %v113
  %v130 = vmul.f32 %v114, %v114
  %v131 = vmul.f32 %v115, %v115
  %v132 = vmul.f32 %v116, %v116
  %v133 = vmul.f32 %v117, %v117
  %v134 = vmul.f32 %v118, %v118
  %v135 = vmul.f32 %v119, %v119
  %136 = vadd.xlane.f32.xlu0 %v120
  %v137 = vpop.xlane.xlu0 %136
  %138 = vadd.xlane.f32.xlu0 %v121
  %v139 = vpop.xlane.xlu0 %138
  %140 = vadd.xlane.f32.xlu0 %v122
  %v141 = vpop.xlane.xlu0 %140
  %142 = vadd.xlane.f32.xlu0 %v123
  %v143 = vpop.xlane.xlu0 %142
  %144 = vadd.xlane.f32.xlu0 %v124
  %v145 = vpop.xlane.xlu0 %144
  %146 = vadd.xlane.f32.xlu0 %v125
  %v147 = vpop.xlane.xlu0 %146
  %148 = vadd.xlane.f32.xlu0 %v126
  %v149 = vpop.xlane.xlu0 %148
  %150 = vadd.xlane.f32.xlu0 %v127
  %v151 = vpop.xlane.xlu0 %150
  %152 = vadd.xlane.f32.xlu0 %v128
  %v153 = vpop.xlane.xlu0 %152
  %154 = vadd.xlane.f32.xlu0 %v129
  %v155 = vpop.xlane.xlu0 %154
  %156 = vadd.xlane.f32.xlu0 %v130
  %v157 = vpop.xlane.xlu0 %156
  %158 = vadd.xlane.f32.xlu0 %v131
  %v159 = vpop.xlane.xlu0 %158
  %160 = vadd.xlane.f32.xlu0 %v132
  %v161 = vpop.xlane.xlu0 %160
  %162 = vadd.xlane.f32.xlu0 %v133
  %v163 = vpop.xlane.xlu0 %162
  %164 = vadd.xlane.f32.xlu0 %v134
  %v165 = vpop.xlane.xlu0 %164
  %166 = vadd.xlane.f32.xlu0 %v135
  %v167 = vpop.xlane.xlu0 %166
  %v168 = vmul.f32 %v137, %v87
  %v169 = vmul.f32 %v139, %v87
  %v170 = vmul.f32 %v141, %v87
  %v171 = vmul.f32 %v143, %v87
  %v172 = vmul.f32 %v145, %v87
  %v173 = vmul.f32 %v147, %v87
  %v174 = vmul.f32 %v149, %v87
  %v175 = vmul.f32 %v151, %v87
  %v176 = vmul.f32 %v153, %v87
  %v177 = vmul.f32 %v155, %v87
  %v178 = vmul.f32 %v157, %v87
  %v179 = vmul.f32 %v159, %v87
  %v180 = vmul.f32 %v161, %v87
  %v181 = vmul.f32 %v163, %v87
  %v182 = vmul.f32 %v165, %v87
  %v183 = vmul.f32 %v167, %v87
  %v184 = vadd.f32 %v168, 1e-05
  %v185 = vadd.f32 %v169, 1e-05
  %v186 = vadd.f32 %v170, 1e-05
  %v187 = vadd.f32 %v171, 1e-05
  %v188 = vadd.f32 %v172, 1e-05
  %v189 = vadd.f32 %v173, 1e-05
  %v190 = vadd.f32 %v174, 1e-05
  %v191 = vadd.f32 %v175, 1e-05
  %v192 = vadd.f32 %v176, 1e-05
  %v193 = vadd.f32 %v177, 1e-05
  %v194 = vadd.f32 %v178, 1e-05
  %v195 = vadd.f32 %v179, 1e-05
  %v196 = vadd.f32 %v180, 1e-05
  %v197 = vadd.f32 %v181, 1e-05
  %v198 = vadd.f32 %v182, 1e-05
  %v199 = vadd.f32 %v183, 1e-05
  %v200 = vrsqrt.pop %v184
  %v201 = vmul.f32 %v200, %v184
  %v202 = vmul.f32 %v201, %v200
  %v203 = vmul.f32 0.5, %v202
  %v204 = vsub.f32 1.5, %v203
  %v205 = vmul.f32 %v200, %v204
  %vm206 = vweird.f32 %v184
  %vm207 = vweird.f32 %v200
  %vm208 = vmor %vm206, %vm207
  %v209 = vsel %vm208, %v200, %v205
  %v210 = vrsqrt.pop %v185
  %v211 = vmul.f32 %v210, %v185
  %v212 = vmul.f32 %v211, %v210
  %v213 = vmul.f32 0.5, %v212
  %v214 = vsub.f32 1.5, %v213
  %v215 = vmul.f32 %v210, %v214
  %vm216 = vweird.f32 %v185
  %vm217 = vweird.f32 %v210
  %vm218 = vmor %vm216, %vm217
  %v219 = vsel %vm218, %v210, %v215
  %v220 = vrsqrt.pop %v186
  %v221 = vmul.f32 %v220, %v186
  %v222 = vmul.f32 %v221, %v220
  %v223 = vmul.f32 0.5, %v222
  %v224 = vsub.f32 1.5, %v223
  %v225 = vmul.f32 %v220, %v224
  %vm226 = vweird.f32 %v186
  %vm227 = vweird.f32 %v220
  %vm228 = vmor %vm226, %vm227
  %v229 = vsel %vm228, %v220, %v225
  %v230 = vrsqrt.pop %v187
  %v231 = vmul.f32 %v230, %v187
  %v232 = vmul.f32 %v231, %v230
  %v233 = vmul.f32 0.5, %v232
  %v234 = vsub.f32 1.5, %v233
  %v235 = vmul.f32 %v230, %v234
  %vm236 = vweird.f32 %v187
  %vm237 = vweird.f32 %v230
  %vm238 = vmor %vm236, %vm237
  %v239 = vsel %vm238, %v230, %v235
  %v240 = vrsqrt.pop %v188
  %v241 = vmul.f32 %v240, %v188
  %v242 = vmul.f32 %v241, %v240
  %v243 = vmul.f32 0.5, %v242
  %v244 = vsub.f32 1.5, %v243
  %v245 = vmul.f32 %v240, %v244
  %vm246 = vweird.f32 %v188
  %vm247 = vweird.f32 %v240
  %vm248 = vmor %vm246, %vm247
  %v249 = vsel %vm248, %v240, %v245
  %v250 = vrsqrt.pop %v189
  %v251 = vmul.f32 %v250, %v189
  %v252 = vmul.f32 %v251, %v250
  %v253 = vmul.f32 0.5, %v252
  %v254 = vsub.f32 1.5, %v253
  %v255 = vmul.f32 %v250, %v254
  %vm256 = vweird.f32 %v189
  %vm257 = vweird.f32 %v250
  %vm258 = vmor %vm256, %vm257
  %v259 = vsel %vm258, %v250, %v255
  %v260 = vrsqrt.pop %v190
  %v261 = vmul.f32 %v260, %v190
  %v262 = vmul.f32 %v261, %v260
  %v263 = vmul.f32 0.5, %v262
  %v264 = vsub.f32 1.5, %v263
  %v265 = vmul.f32 %v260, %v264
  %vm266 = vweird.f32 %v190
  %vm267 = vweird.f32 %v260
  %vm268 = vmor %vm266, %vm267
  %v269 = vsel %vm268, %v260, %v265
  %v270 = vrsqrt.pop %v191
  %v271 = vmul.f32 %v270, %v191
  %v272 = vmul.f32 %v271, %v270
  %v273 = vmul.f32 0.5, %v272
  %v274 = vsub.f32 1.5, %v273
  %v275 = vmul.f32 %v270, %v274
  %vm276 = vweird.f32 %v191
  %vm277 = vweird.f32 %v270
  %vm278 = vmor %vm276, %vm277
  %v279 = vsel %vm278, %v270, %v275
  %v280 = vrsqrt.pop %v192
  %v281 = vmul.f32 %v280, %v192
  %v282 = vmul.f32 %v281, %v280
  %v283 = vmul.f32 0.5, %v282
  %v284 = vsub.f32 1.5, %v283
  %v285 = vmul.f32 %v280, %v284
  %vm286 = vweird.f32 %v192
  %vm287 = vweird.f32 %v280
  %vm288 = vmor %vm286, %vm287
  %v289 = vsel %vm288, %v280, %v285
  %v290 = vrsqrt.pop %v193
  %v291 = vmul.f32 %v290, %v193
  %v292 = vmul.f32 %v291, %v290
  %v293 = vmul.f32 0.5, %v292
  %v294 = vsub.f32 1.5, %v293
  %v295 = vmul.f32 %v290, %v294
  %vm296 = vweird.f32 %v193
  %vm297 = vweird.f32 %v290
  %vm298 = vmor %vm296, %vm297
  %v299 = vsel %vm298, %v290, %v295
  %v300 = vrsqrt.pop %v194
  %v301 = vmul.f32 %v300, %v194
  %v302 = vmul.f32 %v301, %v300
  %v303 = vmul.f32 0.5, %v302
  %v304 = vsub.f32 1.5, %v303
  %v305 = vmul.f32 %v300, %v304
  %vm306 = vweird.f32 %v194
  %vm307 = vweird.f32 %v300
  %vm308 = vmor %vm306, %vm307
  %v309 = vsel %vm308, %v300, %v305
  %v310 = vrsqrt.pop %v195
  %v311 = vmul.f32 %v310, %v195
  %v312 = vmul.f32 %v311, %v310
  %v313 = vmul.f32 0.5, %v312
  %v314 = vsub.f32 1.5, %v313
  %v315 = vmul.f32 %v310, %v314
  %vm316 = vweird.f32 %v195
  %vm317 = vweird.f32 %v310
  %vm318 = vmor %vm316, %vm317
  %v319 = vsel %vm318, %v310, %v315
  %v320 = vrsqrt.pop %v196
  %v321 = vmul.f32 %v320, %v196
  %v322 = vmul.f32 %v321, %v320
  %v323 = vmul.f32 0.5, %v322
  %v324 = vsub.f32 1.5, %v323
  %v325 = vmul.f32 %v320, %v324
  %vm326 = vweird.f32 %v196
  %vm327 = vweird.f32 %v320
  %vm328 = vmor %vm326, %vm327
  %v329 = vsel %vm328, %v320, %v325
  %v330 = vrsqrt.pop %v197
  %v331 = vmul.f32 %v330, %v197
  %v332 = vmul.f32 %v331, %v330
  %v333 = vmul.f32 0.5, %v332
  %v334 = vsub.f32 1.5, %v333
  %v335 = vmul.f32 %v330, %v334
  %vm336 = vweird.f32 %v197
  %vm337 = vweird.f32 %v330
  %vm338 = vmor %vm336, %vm337
  %v339 = vsel %vm338, %v330, %v335
  %v340 = vrsqrt.pop %v198
  %v341 = vmul.f32 %v340, %v198
  %v342 = vmul.f32 %v341, %v340
  %v343 = vmul.f32 0.5, %v342
  %v344 = vsub.f32 1.5, %v343
  %v345 = vmul.f32 %v340, %v344
  %vm346 = vweird.f32 %v198
  %vm347 = vweird.f32 %v340
  %vm348 = vmor %vm346, %vm347
  %v349 = vsel %vm348, %v340, %v345
  %v350 = vrsqrt.pop %v199
  %v351 = vmul.f32 %v350, %v199
  %v352 = vmul.f32 %v351, %v350
  %v353 = vmul.f32 0.5, %v352
  %v354 = vsub.f32 1.5, %v353
  %v355 = vmul.f32 %v350, %v354
  %vm356 = vweird.f32 %v199
  %vm357 = vweird.f32 %v350
  %vm358 = vmor %vm356, %vm357
  %v359 = vsel %vm358, %v350, %v355
  %v360 = vmul.f32 %v104, %v209
  %v361 = vmul.f32 %v105, %v219
  %v362 = vmul.f32 %v106, %v229
  %v363 = vmul.f32 %v107, %v239
  %v364 = vmul.f32 %v108, %v249
  %v365 = vmul.f32 %v109, %v259
  %v366 = vmul.f32 %v110, %v269
  %v367 = vmul.f32 %v111, %v279
  %v368 = vmul.f32 %v112, %v289
  %v369 = vmul.f32 %v113, %v299
  %v370 = vmul.f32 %v114, %v309
  %v371 = vmul.f32 %v115, %v319
  %v372 = vmul.f32 %v116, %v329
  %v373 = vmul.f32 %v117, %v339
  %v374 = vmul.f32 %v118, %v349
  %v375 = vmul.f32 %v119, %v359
  %v376 = vld [vmem:[%s2] sm:$0x1]
  %v378 = vperm.slane %v376, 0
  %v380 = vmul.f32 %v360, %v378
  %v381 = vmul.f32 %v361, %v378
  %v382 = vmul.f32 %v362, %v378
  %v383 = vmul.f32 %v363, %v378
  %v384 = vmul.f32 %v364, %v378
  %v385 = vmul.f32 %v365, %v378
  %v386 = vmul.f32 %v366, %v378
  %v387 = vmul.f32 %v367, %v378
  %v388 = vmul.f32 %v368, %v378
  %v389 = vmul.f32 %v369, %v378
  %v390 = vmul.f32 %v370, %v378
  %v391 = vmul.f32 %v371, %v378
  %v392 = vmul.f32 %v372, %v378
  %v393 = vmul.f32 %v373, %v378
  %v394 = vmul.f32 %v374, %v378
  %v395 = vmul.f32 %v375, %v378
  %v396 = vld [vmem:[%s3] sm:$0x1]
  %v398 = vperm.slane %v396, 0
  %v400 = vadd.f32 %v380, %v398
  %v401 = vadd.f32 %v381, %v398
  %v402 = vadd.f32 %v382, %v398
  %v403 = vadd.f32 %v383, %v398
  %v404 = vadd.f32 %v384, %v398
  %v405 = vadd.f32 %v385, %v398
  %v406 = vadd.f32 %v386, %v398
  %v407 = vadd.f32 %v387, %v398
  %v408 = vadd.f32 %v388, %v398
  %v409 = vadd.f32 %v389, %v398
  %v410 = vadd.f32 %v390, %v398
  %v411 = vadd.f32 %v391, %v398
  %v412 = vadd.f32 %v392, %v398
  %v413 = vadd.f32 %v393, %v398
  %v414 = vadd.f32 %v394, %v398
  %v415 = vadd.f32 %v395, %v398
  %v416 = vpack.c.bf16 %v401, %v400
  %v417 = vpack.c.bf16 %v403, %v402
  %v418 = vpack.c.bf16 %v405, %v404
  %v419 = vpack.c.bf16 %v407, %v406
  %v420 = vpack.c.bf16 %v409, %v408
  %v421 = vpack.c.bf16 %v411, %v410
  %v422 = vpack.c.bf16 %v413, %v412
  %v423 = vpack.c.bf16 %v415, %v414
  %v424 = vld [vmem:[%s1] sm:$0xff]
  %v425 = vld [vmem:[%s1 + $0x8] sm:$0xf]
  %v426 = vld [vmem:[%s1 + $0xc] sm:$0xff]
  %v427 = vld [vmem:[%s1 + $0x14] sm:$0xf]
  %v428 = vld [vmem:[%s1 + $0x18] sm:$0xff]
  %v429 = vld [vmem:[%s1 + $0x20] sm:$0xf]
  %v430 = vld [vmem:[%s1 + $0x24] sm:$0xff]
  %v431 = vld [vmem:[%s1 + $0x2c] sm:$0xf]
  %v432 = vld [vmem:[%s1 + $0x30] sm:$0xff]
  %v433 = vld [vmem:[%s1 + $0x38] sm:$0xf]
  %v434 = vld [vmem:[%s1 + $0x3c] sm:$0xff]
  %v435 = vld [vmem:[%s1 + $0x44] sm:$0xf]
  %v436 = vld [vmem:[%s1 + $0x48] sm:$0xff]
  %v437 = vld [vmem:[%s1 + $0x50] sm:$0xf]
  %v438 = vld [vmem:[%s1 + $0x54] sm:$0xff]
  %v439 = vld [vmem:[%s1 + $0x5c] sm:$0xf]
  %v440 = vld [vmem:[%s1 + $0x60] sm:$0xff]
  %v441 = vld [vmem:[%s1 + $0x68] sm:$0xf]
  %v442 = vld [vmem:[%s1 + $0x6c] sm:$0xff]
  %v443 = vld [vmem:[%s1 + $0x74] sm:$0xf]
  %v444 = vld [vmem:[%s1 + $0x78] sm:$0xff]
  %v445 = vld [vmem:[%s1 + $0x80] sm:$0xf]
  %v446 = vld [vmem:[%s1 + $0x84] sm:$0xff]
  %v447 = vld [vmem:[%s1 + $0x8c] sm:$0xf]
  %v448 = vld [vmem:[%s1 + $0x90] sm:$0xff]
  %v449 = vld [vmem:[%s1 + $0x98] sm:$0xf]
  %v450 = vld [vmem:[%s1 + $0x9c] sm:$0xff]
  %v451 = vld [vmem:[%s1 + $0xa4] sm:$0xf]
  %v452 = vld [vmem:[%s1 + $0xa8] sm:$0xff]
  %v453 = vld [vmem:[%s1 + $0xb0] sm:$0xf]
  %v454 = vld [vmem:[%s1 + $0xb4] sm:$0xff]
  %v455 = vld [vmem:[%s1 + $0xbc] sm:$0xf]
  %v488 = vunpack.c.l.b16 %v424
  %v489 = vunpack.c.h.b16 %v424
  %v490 = vunpack.c.l.b16 %v425
  %v491 = vunpack.c.l.b16 %v426
  %v492 = vunpack.c.h.b16 %v426
  %v493 = vunpack.c.l.b16 %v427
  %v494 = vunpack.c.l.b16 %v428
  %v495 = vunpack.c.h.b16 %v428
  %v496 = vunpack.c.l.b16 %v429
  %v497 = vunpack.c.l.b16 %v430
  %v498 = vunpack.c.h.b16 %v430
  %v499 = vunpack.c.l.b16 %v431
  %v500 = vunpack.c.l.b16 %v432
  %v501 = vunpack.c.h.b16 %v432
  %v502 = vunpack.c.l.b16 %v433
  %v503 = vunpack.c.l.b16 %v434
  %v504 = vunpack.c.h.b16 %v434
  %v505 = vunpack.c.l.b16 %v435
  %v506 = vunpack.c.l.b16 %v436
  %v507 = vunpack.c.h.b16 %v436
  %v508 = vunpack.c.l.b16 %v437
  %v509 = vunpack.c.l.b16 %v438
  %v510 = vunpack.c.h.b16 %v438
  %v511 = vunpack.c.l.b16 %v439
  %v512 = vunpack.c.l.b16 %v440
  %v513 = vunpack.c.h.b16 %v440
  %v514 = vunpack.c.l.b16 %v441
  %v515 = vunpack.c.l.b16 %v442
  %v516 = vunpack.c.h.b16 %v442
  %v517 = vunpack.c.l.b16 %v443
  %v518 = vunpack.c.l.b16 %v444
  %v519 = vunpack.c.h.b16 %v444
  %v520 = vunpack.c.l.b16 %v445
  %v521 = vunpack.c.l.b16 %v446
  %v522 = vunpack.c.h.b16 %v446
  %v523 = vunpack.c.l.b16 %v447
  %v524 = vunpack.c.l.b16 %v448
  %v525 = vunpack.c.h.b16 %v448
  %v526 = vunpack.c.l.b16 %v449
  %v527 = vunpack.c.l.b16 %v450
  %v528 = vunpack.c.h.b16 %v450
  %v529 = vunpack.c.l.b16 %v451
  %v530 = vunpack.c.l.b16 %v452
  %v531 = vunpack.c.h.b16 %v452
  %v532 = vunpack.c.l.b16 %v453
  %v533 = vunpack.c.l.b16 %v454
  %v534 = vunpack.c.h.b16 %v454
  %v535 = vunpack.c.l.b16 %v455
  %v536 = vpack.c.b16 %v491, %v488
  %v537 = vpack.c.b16 %v492, %v489
  %v538 = vpack.c.b16 %v493, %v490
  %v539 = vpack.c.b16 %v497, %v494
  %v540 = vpack.c.b16 %v498, %v495
  %v541 = vpack.c.b16 %v499, %v496
  %v542 = vpack.c.b16 %v503, %v500
  %v543 = vpack.c.b16 %v504, %v501
  %v544 = vpack.c.b16 %v505, %v502
  %v545 = vpack.c.b16 %v509, %v506
  %v546 = vpack.c.b16 %v510, %v507
  %v547 = vpack.c.b16 %v511, %v508
  %v548 = vpack.c.b16 %v515, %v512
  %v549 = vpack.c.b16 %v516, %v513
  %v550 = vpack.c.b16 %v517, %v514
  %v551 = vpack.c.b16 %v521, %v518
  %v552 = vpack.c.b16 %v522, %v519
  %v553 = vpack.c.b16 %v523, %v520
  %v554 = vpack.c.b16 %v527, %v524
  %v555 = vpack.c.b16 %v528, %v525
  %v556 = vpack.c.b16 %v529, %v526
  %v557 = vpack.c.b16 %v533, %v530
  %v558 = vpack.c.b16 %v534, %v531
  %v559 = vpack.c.b16 %v535, %v532
  %584 = vmatpush.bf16.msra.mxu0 %v557
  %585 = vmatpush.bf16.msra.mxu0 %v554
  %586 = vmatpush.bf16.msra.mxu0 %v551
  %587 = vmatpush.bf16.msra.mxu0 %v548
  %588 = vmatpush.bf16.msra.mxu0 %v545
  %589 = vmatpush.bf16.msra.mxu0 %v542
  %590 = vmatpush.bf16.msra.mxu0 %v539
  %591 = vmatpush.bf16.msra.mxu0 %v536
  %592 = vmatmul.bf16.gmra.mxu0 %v416
  %v593 = vpop.f32.mrf.mxu0
  %v594 = vadd.f32 0.0, %v593
  %v595 = vpop.f32.mrf.mxu0
  %v596 = vadd.f32 0.0, %v595
  %597 = vmatmul.bf16.gmra.mxu0 %v417
  %v598 = vpop.f32.mrf.mxu0
  %v599 = vadd.f32 0.0, %v598
  %v600 = vpop.f32.mrf.mxu0
  %v601 = vadd.f32 0.0, %v600
  %602 = vmatmul.bf16.gmra.mxu0 %v418
  %v603 = vpop.f32.mrf.mxu0
  %v604 = vadd.f32 0.0, %v603
  %v605 = vpop.f32.mrf.mxu0
  %v606 = vadd.f32 0.0, %v605
  %607 = vmatmul.bf16.gmra.mxu0 %v419
  %v608 = vpop.f32.mrf.mxu0
  %v609 = vadd.f32 0.0, %v608
  %v610 = vpop.f32.mrf.mxu0
  %v611 = vadd.f32 0.0, %v610
  %612 = vmatmul.bf16.gmra.mxu0 %v420
  %v613 = vpop.f32.mrf.mxu0
  %v614 = vadd.f32 0.0, %v613
  %v615 = vpop.f32.mrf.mxu0
  %v616 = vadd.f32 0.0, %v615
  %617 = vmatmul.bf16.gmra.mxu0 %v421
  %v618 = vpop.f32.mrf.mxu0
  %v619 = vadd.f32 0.0, %v618
  %v620 = vpop.f32.mrf.mxu0
  %v621 = vadd.f32 0.0, %v620
  %622 = vmatmul.bf16.gmra.mxu0 %v422
  %v623 = vpop.f32.mrf.mxu0
  %v624 = vadd.f32 0.0, %v623
  %v625 = vpop.f32.mrf.mxu0
  %v626 = vadd.f32 0.0, %v625
  %627 = vmatmul.bf16.gmra.mxu0 %v423
  %v628 = vpop.f32.mrf.mxu0
  %v629 = vadd.f32 0.0, %v628
  %v630 = vpop.f32.mrf.mxu0
  %v631 = vadd.f32 0.0, %v630
  %632 = vdwg.mxu0
  %633 = vmatpush.bf16.msra.mxu0 %v558
  %634 = vmatpush.bf16.msra.mxu0 %v555
  %635 = vmatpush.bf16.msra.mxu0 %v552
  %636 = vmatpush.bf16.msra.mxu0 %v549
  %637 = vmatpush.bf16.msra.mxu0 %v546
  %638 = vmatpush.bf16.msra.mxu0 %v543
  %639 = vmatpush.bf16.msra.mxu0 %v540
  %640 = vmatpush.bf16.msra.mxu0 %v537
  %641 = vmatmul.bf16.gmra.mxu0 %v416
  %v642 = vpop.f32.mrf.mxu0
  %v643 = vadd.f32 0.0, %v642
  %v644 = vpop.f32.mrf.mxu0
  %v645 = vadd.f32 0.0, %v644
  %646 = vmatmul.bf16.gmra.mxu0 %v417
  %v647 = vpop.f32.mrf.mxu0
  %v648 = vadd.f32 0.0, %v647
  %v649 = vpop.f32.mrf.mxu0
  %v650 = vadd.f32 0.0, %v649
  %651 = vmatmul.bf16.gmra.mxu0 %v418
  %v652 = vpop.f32.mrf.mxu0
  %v653 = vadd.f32 0.0, %v652
  %v654 = vpop.f32.mrf.mxu0
  %v655 = vadd.f32 0.0, %v654
  %656 = vmatmul.bf16.gmra.mxu0 %v419
  %v657 = vpop.f32.mrf.mxu0
  %v658 = vadd.f32 0.0, %v657
  %v659 = vpop.f32.mrf.mxu0
  %v660 = vadd.f32 0.0, %v659
  %661 = vmatmul.bf16.gmra.mxu0 %v420
  %v662 = vpop.f32.mrf.mxu0
  %v663 = vadd.f32 0.0, %v662
  %v664 = vpop.f32.mrf.mxu0
  %v665 = vadd.f32 0.0, %v664
  %666 = vmatmul.bf16.gmra.mxu0 %v421
  %v667 = vpop.f32.mrf.mxu0
  %v668 = vadd.f32 0.0, %v667
  %v669 = vpop.f32.mrf.mxu0
  %v670 = vadd.f32 0.0, %v669
  %671 = vmatmul.bf16.gmra.mxu0 %v422
  %v672 = vpop.f32.mrf.mxu0
  %v673 = vadd.f32 0.0, %v672
  %v674 = vpop.f32.mrf.mxu0
  %v675 = vadd.f32 0.0, %v674
  %676 = vmatmul.bf16.gmra.mxu0 %v423
  %v677 = vpop.f32.mrf.mxu0
  %v678 = vadd.f32 0.0, %v677
  %v679 = vpop.f32.mrf.mxu0
  %v680 = vadd.f32 0.0, %v679
  %681 = vdwg.mxu0
  %682 = vmatpush.bf16.msra.mxu0 %v559
  %683 = vmatpush.bf16.msra.mxu0 %v556
  %684 = vmatpush.bf16.msra.mxu0 %v553
  %685 = vmatpush.bf16.msra.mxu0 %v550
  %686 = vmatpush.bf16.msra.mxu0 %v547
  %687 = vmatpush.bf16.msra.mxu0 %v544
  %688 = vmatpush.bf16.msra.mxu0 %v541
  %689 = vmatpush.bf16.msra.mxu0 %v538
  %690 = vmatmul.bf16.gmra.mxu0 %v416
  %v691 = vpop.f32.mrf.mxu0
  %v692 = vadd.f32 0.0, %v691
  %v693 = vpop.f32.mrf.mxu0
  %v694 = vadd.f32 0.0, %v693
  %695 = vmatmul.bf16.gmra.mxu0 %v417
  %v696 = vpop.f32.mrf.mxu0
  %v697 = vadd.f32 0.0, %v696
  %v698 = vpop.f32.mrf.mxu0
  %v699 = vadd.f32 0.0, %v698
  %700 = vmatmul.bf16.gmra.mxu0 %v418
  %v701 = vpop.f32.mrf.mxu0
  %v702 = vadd.f32 0.0, %v701
  %v703 = vpop.f32.mrf.mxu0
  %v704 = vadd.f32 0.0, %v703
  %705 = vmatmul.bf16.gmra.mxu0 %v419
  %v706 = vpop.f32.mrf.mxu0
  %v707 = vadd.f32 0.0, %v706
  %v708 = vpop.f32.mrf.mxu0
  %v709 = vadd.f32 0.0, %v708
  %710 = vmatmul.bf16.gmra.mxu0 %v420
  %v711 = vpop.f32.mrf.mxu0
  %v712 = vadd.f32 0.0, %v711
  %v713 = vpop.f32.mrf.mxu0
  %v714 = vadd.f32 0.0, %v713
  %715 = vmatmul.bf16.gmra.mxu0 %v421
  %v716 = vpop.f32.mrf.mxu0
  %v717 = vadd.f32 0.0, %v716
  %v718 = vpop.f32.mrf.mxu0
  %v719 = vadd.f32 0.0, %v718
  %720 = vmatmul.bf16.gmra.mxu0 %v422
  %v721 = vpop.f32.mrf.mxu0
  %v722 = vadd.f32 0.0, %v721
  %v723 = vpop.f32.mrf.mxu0
  %v724 = vadd.f32 0.0, %v723
  %725 = vmatmul.bf16.gmra.mxu0 %v423
  %v726 = vpop.f32.mrf.mxu0
  %v727 = vadd.f32 0.0, %v726
  %v728 = vpop.f32.mrf.mxu0
  %v729 = vadd.f32 0.0, %v728
  %730 = vdwg.mxu0
  %v731 = vpack.c.bf16 %v643, %v594
  %v732 = vpack.c.bf16 %v692, %v692
  %v733 = vpack.c.bf16 %v645, %v596
  %v734 = vpack.c.bf16 %v694, %v694
  %v735 = vpack.c.bf16 %v648, %v599
  %v736 = vpack.c.bf16 %v697, %v697
  %v737 = vpack.c.bf16 %v650, %v601
  %v738 = vpack.c.bf16 %v699, %v699
  %v739 = vpack.c.bf16 %v653, %v604
  %v740 = vpack.c.bf16 %v702, %v702
  %v741 = vpack.c.bf16 %v655, %v606
  %v742 = vpack.c.bf16 %v704, %v704
  %v743 = vpack.c.bf16 %v658, %v609
  %v744 = vpack.c.bf16 %v707, %v707
  %v745 = vpack.c.bf16 %v660, %v611
  %v746 = vpack.c.bf16 %v709, %v709
  %v747 = vpack.c.bf16 %v663, %v614
  %v748 = vpack.c.bf16 %v712, %v712
  %v749 = vpack.c.bf16 %v665, %v616
  %v750 = vpack.c.bf16 %v714, %v714
  %v751 = vpack.c.bf16 %v668, %v619
  %v752 = vpack.c.bf16 %v717, %v717
  %v753 = vpack.c.bf16 %v670, %v621
  %v754 = vpack.c.bf16 %v719, %v719
  %v755 = vpack.c.bf16 %v673, %v624
  %v756 = vpack.c.bf16 %v722, %v722
  %v757 = vpack.c.bf16 %v675, %v626
  %v758 = vpack.c.bf16 %v724, %v724
  %v759 = vpack.c.bf16 %v678, %v629
  %v760 = vpack.c.bf16 %v727, %v727
  %v761 = vpack.c.bf16 %v680, %v631
  %v762 = vpack.c.bf16 %v729, %v729
  %763 = vst [vmem:[%s4] sm:$0xff] %v731
  %764 = vst [vmem:[%s4 + $0x8] sm:$0xf] %v732
  %765 = vst [vmem:[%s4 + $0xc] sm:$0xff] %v733
  %766 = vst [vmem:[%s4 + $0x14] sm:$0xf] %v734
  %767 = vst [vmem:[%s4 + $0x18] sm:$0xff] %v735
  %768 = vst [vmem:[%s4 + $0x20] sm:$0xf] %v736
  %769 = vst [vmem:[%s4 + $0x24] sm:$0xff] %v737
  %770 = vst [vmem:[%s4 + $0x2c] sm:$0xf] %v738
  %771 = vst [vmem:[%s4 + $0x30] sm:$0xff] %v739
  %772 = vst [vmem:[%s4 + $0x38] sm:$0xf] %v740
  %773 = vst [vmem:[%s4 + $0x3c] sm:$0xff] %v741
  %774 = vst [vmem:[%s4 + $0x44] sm:$0xf] %v742
  %775 = vst [vmem:[%s4 + $0x48] sm:$0xff] %v743
  %776 = vst [vmem:[%s4 + $0x50] sm:$0xf] %v744
  %777 = vst [vmem:[%s4 + $0x54] sm:$0xff] %v745
  %778 = vst [vmem:[%s4 + $0x5c] sm:$0xf] %v746
  %779 = vst [vmem:[%s4 + $0x60] sm:$0xff] %v747
  %780 = vst [vmem:[%s4 + $0x68] sm:$0xf] %v748
  %781 = vst [vmem:[%s4 + $0x6c] sm:$0xff] %v749
  %782 = vst [vmem:[%s4 + $0x74] sm:$0xf] %v750
  %783 = vst [vmem:[%s4 + $0x78] sm:$0xff] %v751
  %784 = vst [vmem:[%s4 + $0x80] sm:$0xf] %v752
  %785 = vst [vmem:[%s4 + $0x84] sm:$0xff] %v753
  %786 = vst [vmem:[%s4 + $0x8c] sm:$0xf] %v754
  %787 = vst [vmem:[%s4 + $0x90] sm:$0xff] %v755
  %788 = vst [vmem:[%s4 + $0x98] sm:$0xf] %v756
  %789 = vst [vmem:[%s4 + $0x9c] sm:$0xff] %v757
  %790 = vst [vmem:[%s4 + $0xa4] sm:$0xf] %v758
  %791 = vst [vmem:[%s4 + $0xa8] sm:$0xff] %v759
  %792 = vst [vmem:[%s4 + $0xb0] sm:$0xf] %v760
  %793 = vst [vmem:[%s4 + $0xb4] sm:$0xff] %v761
  %794 = vst [vmem:[%s4 + $0xbc] sm:$0xf] %v762
  // Predicated region
  $region18: #{cross_attention_block_forward.10} parent=0 // pred_check
    _
  $region19: #{cross_attention_block_forward.10} parent=0 // pred_check_branch
    %796 = sbr.rel (0) target = $region21
  $region20: #{cross_attention_block_forward.10} parent=0 // pred_region
    _
  $region21: #{cross_attention_block_forward.10} parent=0 // pred_fallthru
    _
  // Predicated region
  $region22: #{cross_attention_block_forward.10} parent=0 // pred_check
    _
  $region23: #{cross_attention_block_forward.10} parent=0 // pred_check_branch
    %798 = sbr.rel (0) target = $region25
  $region24: #{cross_attention_block_forward.10} parent=0 // pred_region
    _
  $region25: #{cross_attention_block_forward.10} parent=0 // pred_fallthru
    _

// kernel: cross_attention_block_forward.17
$region0: #{cross_attention_block_forward.17}
  #allocation0 [shape = 'u32[]', space=smem, size = 0x4, offset = 0x4, fixed_abs, tag = 'smem constant byte address 0x4 - core index']
  #allocation1 [shape = 'u32[72,128]{1,0:T(1,128)}', space=vmem, size = 0x9000, scoped, tag = 'internal scratch']
  %s0 = inlined_call_operand.vmem [shape: bf16[128,256], index: 0, kind: input, shape index: {}]
  %s1 = inlined_call_operand.hbm [shape: bf16[256,512], index: 1, kind: input, shape index: {}]
  %s2 = inlined_call_operand.vmem [shape: f32[1,256], index: 2, kind: input, shape index: {}]
  %s3 = inlined_call_operand.vmem [shape: f32[1,256], index: 3, kind: input, shape index: {}]
  %s4 = inlined_call_operand.vmem [shape: bf16[1,512], index: 4, kind: input, shape index: {}]
  %s5 = inlined_call_operand.vmem [shape: bf16[128,512], index: 5, kind: output, shape index: {}]
  %s6 = sld [smem:[#allocation0]]
  $region34: #{cross_attention_block_forward.17} parent=0
    _
  %s8 = ssub.s32 1, %s6
  %s9 = scalar_select 0, %s8, %s6
  $region1: #{cross_attention_block_forward.17} parent=0
    #allocation2 [shape = 'u8[262144]{0}', space=vmem, size = 0x40000, scoped, tag = 'input window, operand 1, single buffered']
    #allocation3 [shape = 's32[1]{0}', space=sflag, size = 0x4, scoped, tag = 'scoped memory for cross_attention_block_forward.17']
    %10 = vsyncpa [#allocation3], 0
    // Predicated region
    $region2: #{cross_attention_block_forward.17} parent=1 // pred_check
      _
    $region3: #{cross_attention_block_forward.17} parent=1 // pred_check_branch
      %12 = sbr.rel (0) target = $region5
    $region4: #{cross_attention_block_forward.17} parent=1 // pred_region
      _
    $region5: #{cross_attention_block_forward.17} parent=1 // pred_fallthru
      _
    // Predicated region
    $region6: #{cross_attention_block_forward.17} parent=1 // pred_check
      _
    $region7: #{cross_attention_block_forward.17} parent=1 // pred_check_branch
      %14 = sbr.rel (0) target = $region9
    $region8: #{cross_attention_block_forward.17} parent=1 // pred_region
      %16 = vsyncadd [#allocation3], 0
      %s17 = sshll.u32 %s1, 4
      %s18 = int_to_ptr.hbm [resolvable:$true] %s17
      %s19 = sshll.u32 [#allocation2], 4
      %s20 = int_to_ptr.vmem [resolvable:$true] %s19
      %25 = dma.hbm_to_vmem [thread:$0]  %s18, 8192, %s20, [#allocation3], 256, 256, 16
    $region9: #{cross_attention_block_forward.17} parent=1 // pred_fallthru
      _
    // Predicated region
    $region10: #{cross_attention_block_forward.17} parent=1 // pred_check
      _
    $region11: #{cross_attention_block_forward.17} parent=1 // pred_check_branch
      %27 = sbr.rel (0) target = $region13
    $region12: #{cross_attention_block_forward.17} parent=1 // pred_region
      _
    $region13: #{cross_attention_block_forward.17} parent=1 // pred_fallthru
      _
    // Predicated region
    $region14: #{cross_attention_block_forward.17} parent=1 // pred_check
      _
    $region15: #{cross_attention_block_forward.17} parent=1 // pred_check_branch
      %29 = sbr.rel (0) target = $region17
    $region16: #{cross_attention_block_forward.17} parent=1 // pred_region
      _
    $region17: #{cross_attention_block_forward.17} parent=1 // pred_fallthru
      _
    // Predicated region
    $region18: #{cross_attention_block_forward.17} parent=1 // pred_check
      _
    $region19: #{cross_attention_block_forward.17} parent=1 // pred_check_branch
      %31 = sbr.rel (0) target = $region21
    $region20: #{cross_attention_block_forward.17} parent=1 // pred_region
      _
    $region21: #{cross_attention_block_forward.17} parent=1 // pred_fallthru
      _
    // Predicated region
    $region22: #{cross_attention_block_forward.17} parent=1 // pred_check
      _
    $region23: #{cross_attention_block_forward.17} parent=1 // pred_check_branch
      %33 = sbr.rel (0) target = $region25
    $region24: #{cross_attention_block_forward.17} parent=1 // pred_region
      %35 = dma.done [#allocation3], 8192
    $region25: #{cross_attention_block_forward.17} parent=1 // pred_fallthru
      _
    %v36 = vld [vmem:[%s0] sm:$0xff]
    %v37 = vld [vmem:[%s0 + $0x8] sm:$0xff]
    %v38 = vld [vmem:[%s0 + $0x10] sm:$0xff]
    %v39 = vld [vmem:[%s0 + $0x18] sm:$0xff]
    %v40 = vld [vmem:[%s0 + $0x20] sm:$0xff]
    %v41 = vld [vmem:[%s0 + $0x28] sm:$0xff]
    %v42 = vld [vmem:[%s0 + $0x30] sm:$0xff]
    %v43 = vld [vmem:[%s0 + $0x38] sm:$0xff]
    %v44 = vld [vmem:[%s0 + $0x40] sm:$0xff]
    %v45 = vld [vmem:[%s0 + $0x48] sm:$0xff]
    %v46 = vld [vmem:[%s0 + $0x50] sm:$0xff]
    %v47 = vld [vmem:[%s0 + $0x58] sm:$0xff]
    %v48 = vld [vmem:[%s0 + $0x60] sm:$0xff]
    %v49 = vld [vmem:[%s0 + $0x68] sm:$0xff]
    %v50 = vld [vmem:[%s0 + $0x70] sm:$0xff]
    %v51 = vld [vmem:[%s0 + $0x78] sm:$0xff]
    %v52 = vunpack.c.l.bf16 %v36
    %v53 = vunpack.c.h.bf16 %v36
    %v54 = vunpack.c.l.bf16 %v37
    %v55 = vunpack.c.h.bf16 %v37
    %v56 = vunpack.c.l.bf16 %v38
    %v57 = vunpack.c.h.bf16 %v38
    %v58 = vunpack.c.l.bf16 %v39
    %v59 = vunpack.c.h.bf16 %v39
    %v60 = vunpack.c.l.bf16 %v40
    %v61 = vunpack.c.h.bf16 %v40
    %v62 = vunpack.c.l.bf16 %v41
    %v63 = vunpack.c.h.bf16 %v41
    %v64 = vunpack.c.l.bf16 %v42
    %v65 = vunpack.c.h.bf16 %v42
    %v66 = vunpack.c.l.bf16 %v43
    %v67 = vunpack.c.h.bf16 %v43
    %v68 = vunpack.c.l.bf16 %v44
    %v69 = vunpack.c.h.bf16 %v44
    %v70 = vunpack.c.l.bf16 %v45
    %v71 = vunpack.c.h.bf16 %v45
    %v72 = vunpack.c.l.bf16 %v46
    %v73 = vunpack.c.h.bf16 %v46
    %v74 = vunpack.c.l.bf16 %v47
    %v75 = vunpack.c.h.bf16 %v47
    %v76 = vunpack.c.l.bf16 %v48
    %v77 = vunpack.c.h.bf16 %v48
    %v78 = vunpack.c.l.bf16 %v49
    %v79 = vunpack.c.h.bf16 %v49
    %v80 = vunpack.c.l.bf16 %v50
    %v81 = vunpack.c.h.bf16 %v50
    %v82 = vunpack.c.l.bf16 %v51
    %v83 = vunpack.c.h.bf16 %v51
    %v84 = vadd.f32 %v52, %v53
    %85 = vadd.xlane.f32.xlu0 %v84
    %v86 = vpop.xlane.xlu0 %85
    %v87 = vadd.f32 %v54, %v55
    %88 = vadd.xlane.f32.xlu0 %v87
    %v89 = vpop.xlane.xlu0 %88
    %v90 = vadd.f32 %v56, %v57
    %91 = vadd.xlane.f32.xlu0 %v90
    %v92 = vpop.xlane.xlu0 %91
    %v93 = vadd.f32 %v58, %v59
    %94 = vadd.xlane.f32.xlu0 %v93
    %v95 = vpop.xlane.xlu0 %94
    %v96 = vadd.f32 %v60, %v61
    %97 = vadd.xlane.f32.xlu0 %v96
    %v98 = vpop.xlane.xlu0 %97
    %v99 = vadd.f32 %v62, %v63
    %100 = vadd.xlane.f32.xlu0 %v99
    %v101 = vpop.xlane.xlu0 %100
    %v102 = vadd.f32 %v64, %v65
    %103 = vadd.xlane.f32.xlu0 %v102
    %v104 = vpop.xlane.xlu0 %103
    %v105 = vadd.f32 %v66, %v67
    %106 = vadd.xlane.f32.xlu0 %v105
    %v107 = vpop.xlane.xlu0 %106
    %v108 = vadd.f32 %v68, %v69
    %109 = vadd.xlane.f32.xlu0 %v108
    %v110 = vpop.xlane.xlu0 %109
    %v111 = vadd.f32 %v70, %v71
    %112 = vadd.xlane.f32.xlu0 %v111
    %v113 = vpop.xlane.xlu0 %112
    %v114 = vadd.f32 %v72, %v73
    %115 = vadd.xlane.f32.xlu0 %v114
    %v116 = vpop.xlane.xlu0 %115
    %v117 = vadd.f32 %v74, %v75
    %118 = vadd.xlane.f32.xlu0 %v117
    %v119 = vpop.xlane.xlu0 %118
    %v120 = vadd.f32 %v76, %v77
    %121 = vadd.xlane.f32.xlu0 %v120
    %v122 = vpop.xlane.xlu0 %121
    %v123 = vadd.f32 %v78, %v79
    %124 = vadd.xlane.f32.xlu0 %v123
    %v125 = vpop.xlane.xlu0 %124
    %v126 = vadd.f32 %v80, %v81
    %127 = vadd.xlane.f32.xlu0 %v126
    %v128 = vpop.xlane.xlu0 %127
    %v129 = vadd.f32 %v82, %v83
    %130 = vadd.xlane.f32.xlu0 %v129
    %v131 = vpop.xlane.xlu0 %130
    %v132 = vrcp.pop 256.0
    %v133 = vmul.f32 256.0, %v132
    %v134 = vsub.f32 1.0, %v133
    %v135 = vmul.f32 %v132, %v134
    %v136 = vadd.f32 %v132, %v135
    %vm137 = vweird.f32 %v132
    %v138 = vsel %vm137, %v132, %v136
    %v139 = vmul.f32 %v86, %v138
    %v140 = vmul.f32 %v89, %v138
    %v141 = vmul.f32 %v92, %v138
    %v142 = vmul.f32 %v95, %v138
    %v143 = vmul.f32 %v98, %v138
    %v144 = vmul.f32 %v101, %v138
    %v145 = vmul.f32 %v104, %v138
    %v146 = vmul.f32 %v107, %v138
    %v147 = vmul.f32 %v110, %v138
    %v148 = vmul.f32 %v113, %v138
    %v149 = vmul.f32 %v116, %v138
    %v150 = vmul.f32 %v119, %v138
    %v151 = vmul.f32 %v122, %v138
    %v152 = vmul.f32 %v125, %v138
    %v153 = vmul.f32 %v128, %v138
    %v154 = vmul.f32 %v131, %v138
    %v155 = vsub.f32 %v52, %v139
    %v156 = vsub.f32 %v53, %v139
    %v157 = vsub.f32 %v54, %v140
    %v158 = vsub.f32 %v55, %v140
    %v159 = vsub.f32 %v56, %v141
    %v160 = vsub.f32 %v57, %v141
    %v161 = vsub.f32 %v58, %v142
    %v162 = vsub.f32 %v59, %v142
    %v163 = vsub.f32 %v60, %v143
    %v164 = vsub.f32 %v61, %v143
    %v165 = vsub.f32 %v62, %v144
    %v166 = vsub.f32 %v63, %v144
    %v167 = vsub.f32 %v64, %v145
    %v168 = vsub.f32 %v65, %v145
    %v169 = vsub.f32 %v66, %v146
    %v170 = vsub.f32 %v67, %v146
    %v171 = vsub.f32 %v68, %v147
    %v172 = vsub.f32 %v69, %v147
    %v173 = vsub.f32 %v70, %v148
    %v174 = vsub.f32 %v71, %v148
    %v175 = vsub.f32 %v72, %v149
    %v176 = vsub.f32 %v73, %v149
    %v177 = vsub.f32 %v74, %v150
    %v178 = vsub.f32 %v75, %v150
    %v179 = vsub.f32 %v76, %v151
    %v180 = vsub.f32 %v77, %v151
    %v181 = vsub.f32 %v78, %v152
    %v182 = vsub.f32 %v79, %v152
    %v183 = vsub.f32 %v80, %v153
    %v184 = vsub.f32 %v81, %v153
    %v185 = vsub.f32 %v82, %v154
    %v186 = vsub.f32 %v83, %v154
    %v187 = vmul.f32 %v155, %v155
    %v188 = vmul.f32 %v156, %v156
    %v189 = vmul.f32 %v157, %v157
    %v190 = vmul.f32 %v158, %v158
    %v191 = vmul.f32 %v159, %v159
    %v192 = vmul.f32 %v160, %v160
    %v193 = vmul.f32 %v161, %v161
    %v194 = vmul.f32 %v162, %v162
    %v195 = vmul.f32 %v163, %v163
    %v196 = vmul.f32 %v164, %v164
    %v197 = vmul.f32 %v165, %v165
    %v198 = vmul.f32 %v166, %v166
    %v199 = vmul.f32 %v167, %v167
    %v200 = vmul.f32 %v168, %v168
    %v201 = vmul.f32 %v169, %v169
    %v202 = vmul.f32 %v170, %v170
    %v203 = vmul.f32 %v171, %v171
    %v204 = vmul.f32 %v172, %v172
    %v205 = vmul.f32 %v173, %v173
    %v206 = vmul.f32 %v174, %v174
    %v207 = vmul.f32 %v175, %v175
    %v208 = vmul.f32 %v176, %v176
    %v209 = vmul.f32 %v177, %v177
    %v210 = vmul.f32 %v178, %v178
    %v211 = vmul.f32 %v179, %v179
    %v212 = vmul.f32 %v180, %v180
    %v213 = vmul.f32 %v181, %v181
    %v214 = vmul.f32 %v182, %v182
    %v215 = vmul.f32 %v183, %v183
    %v216 = vmul.f32 %v184, %v184
    %v217 = vmul.f32 %v185, %v185
    %v218 = vmul.f32 %v186, %v186
    %v219 = vadd.f32 %v187, %v188
    %220 = vadd.xlane.f32.xlu0 %v219
    %v221 = vpop.xlane.xlu0 %220
    %v222 = vadd.f32 %v189, %v190
    %223 = vadd.xlane.f32.xlu0 %v222
    %v224 = vpop.xlane.xlu0 %223
    %v225 = vadd.f32 %v191, %v192
    %226 = vadd.xlane.f32.xlu0 %v225
    %v227 = vpop.xlane.xlu0 %226
    %v228 = vadd.f32 %v193, %v194
    %229 = vadd.xlane.f32.xlu0 %v228
    %v230 = vpop.xlane.xlu0 %229
    %v231 = vadd.f32 %v195, %v196
    %232 = vadd.xlane.f32.xlu0 %v231
    %v233 = vpop.xlane.xlu0 %232
    %v234 = vadd.f32 %v197, %v198
    %235 = vadd.xlane.f32.xlu0 %v234
    %v236 = vpop.xlane.xlu0 %235
    %v237 = vadd.f32 %v199, %v200
    %238 = vadd.xlane.f32.xlu0 %v237
    %v239 = vpop.xlane.xlu0 %238
    %v240 = vadd.f32 %v201, %v202
    %241 = vadd.xlane.f32.xlu0 %v240
    %v242 = vpop.xlane.xlu0 %241
    %v243 = vadd.f32 %v203, %v204
    %244 = vadd.xlane.f32.xlu0 %v243
    %v245 = vpop.xlane.xlu0 %244
    %v246 = vadd.f32 %v205, %v206
    %247 = vadd.xlane.f32.xlu0 %v246
    %v248 = vpop.xlane.xlu0 %247
    %v249 = vadd.f32 %v207, %v208
    %250 = vadd.xlane.f32.xlu0 %v249
    %v251 = vpop.xlane.xlu0 %250
    %v252 = vadd.f32 %v209, %v210
    %253 = vadd.xlane.f32.xlu0 %v252
    %v254 = vpop.xlane.xlu0 %253
    %v255 = vadd.f32 %v211, %v212
    %256 = vadd.xlane.f32.xlu0 %v255
    %v257 = vpop.xlane.xlu0 %256
    %v258 = vadd.f32 %v213, %v214
    %259 = vadd.xlane.f32.xlu0 %v258
    %v260 = vpop.xlane.xlu0 %259
    %v261 = vadd.f32 %v215, %v216
    %262 = vadd.xlane.f32.xlu0 %v261
    %v263 = vpop.xlane.xlu0 %262
    %v264 = vadd.f32 %v217, %v218
    %265 = vadd.xlane.f32.xlu0 %v264
    %v266 = vpop.xlane.xlu0 %265
    %v267 = vmul.f32 %v221, %v138
    %v268 = vmul.f32 %v224, %v138
    %v269 = vmul.f32 %v227, %v138
    %v270 = vmul.f32 %v230, %v138
    %v271 = vmul.f32 %v233, %v138
    %v272 = vmul.f32 %v236, %v138
    %v273 = vmul.f32 %v239, %v138
    %v274 = vmul.f32 %v242, %v138
    %v275 = vmul.f32 %v245, %v138
    %v276 = vmul.f32 %v248, %v138
    %v277 = vmul.f32 %v251, %v138
    %v278 = vmul.f32 %v254, %v138
    %v279 = vmul.f32 %v257, %v138
    %v280 = vmul.f32 %v260, %v138
    %v281 = vmul.f32 %v263, %v138
    %v282 = vmul.f32 %v266, %v138
    %v283 = vadd.f32 %v267, 1e-05
    %v284 = vadd.f32 %v268, 1e-05
    %v285 = vadd.f32 %v269, 1e-05
    %v286 = vadd.f32 %v270, 1e-05
    %v287 = vadd.f32 %v271, 1e-05
    %v288 = vadd.f32 %v272, 1e-05
    %v289 = vadd.f32 %v273, 1e-05
    %v290 = vadd.f32 %v274, 1e-05
    %v291 = vadd.f32 %v275, 1e-05
    %v292 = vadd.f32 %v276, 1e-05
    %v293 = vadd.f32 %v277, 1e-05
    %v294 = vadd.f32 %v278, 1e-05
    %v295 = vadd.f32 %v279, 1e-05
    %v296 = vadd.f32 %v280, 1e-05
    %v297 = vadd.f32 %v281, 1e-05
    %v298 = vadd.f32 %v282, 1e-05
    %v299 = vrsqrt.pop %v283
    %v300 = vmul.f32 %v299, %v283
    %v301 = vmul.f32 %v300, %v299
    %v302 = vmul.f32 0.5, %v301
    %v303 = vsub.f32 1.5, %v302
    %v304 = vmul.f32 %v299, %v303
    %vm305 = vweird.f32 %v283
    %vm306 = vweird.f32 %v299
    %vm307 = vmor %vm305, %vm306
    %v308 = vsel %vm307, %v299, %v304
    %v309 = vrsqrt.pop %v284
    %v310 = vmul.f32 %v309, %v284
    %v311 = vmul.f32 %v310, %v309
    %v312 = vmul.f32 0.5, %v311
    %v313 = vsub.f32 1.5, %v312
    %v314 = vmul.f32 %v309, %v313
    %vm315 = vweird.f32 %v284
    %vm316 = vweird.f32 %v309
    %vm317 = vmor %vm315, %vm316
    %v318 = vsel %vm317, %v309, %v314
    %v319 = vrsqrt.pop %v285
    %v320 = vmul.f32 %v319, %v285
    %v321 = vmul.f32 %v320, %v319
    %v322 = vmul.f32 0.5, %v321
    %v323 = vsub.f32 1.5, %v322
    %v324 = vmul.f32 %v319, %v323
    %vm325 = vweird.f32 %v285
    %vm326 = vweird.f32 %v319
    %vm327 = vmor %vm325, %vm326
    %v328 = vsel %vm327, %v319, %v324
    %v329 = vrsqrt.pop %v286
    %v330 = vmul.f32 %v329, %v286
    %v331 = vmul.f32 %v330, %v329
    %v332 = vmul.f32 0.5, %v331
    %v333 = vsub.f32 1.5, %v332
    %v334 = vmul.f32 %v329, %v333
    %vm335 = vweird.f32 %v286
    %vm336 = vweird.f32 %v329
    %vm337 = vmor %vm335, %vm336
    %v338 = vsel %vm337, %v329, %v334
    %v339 = vrsqrt.pop %v287
    %v340 = vmul.f32 %v339, %v287
    %v341 = vmul.f32 %v340, %v339
    %v342 = vmul.f32 0.5, %v341
    %v343 = vsub.f32 1.5, %v342
    %v344 = vmul.f32 %v339, %v343
    %vm345 = vweird.f32 %v287
    %vm346 = vweird.f32 %v339
    %vm347 = vmor %vm345, %vm346
    %v348 = vsel %vm347, %v339, %v344
    %v349 = vrsqrt.pop %v288
    %v350 = vmul.f32 %v349, %v288
    %v351 = vmul.f32 %v350, %v349
    %v352 = vmul.f32 0.5, %v351
    %v353 = vsub.f32 1.5, %v352
    %v354 = vmul.f32 %v349, %v353
    %vm355 = vweird.f32 %v288
    %vm356 = vweird.f32 %v349
    %vm357 = vmor %vm355, %vm356
    %v358 = vsel %vm357, %v349, %v354
    %v359 = vrsqrt.pop %v289
    %v360 = vmul.f32 %v359, %v289
    %v361 = vmul.f32 %v360, %v359
    %v362 = vmul.f32 0.5, %v361
    %v363 = vsub.f32 1.5, %v362
    %v364 = vmul.f32 %v359, %v363
    %vm365 = vweird.f32 %v289
    %vm366 = vweird.f32 %v359
    %vm367 = vmor %vm365, %vm366
    %v368 = vsel %vm367, %v359, %v364
    %v369 = vrsqrt.pop %v290
    %v370 = vmul.f32 %v369, %v290
    %v371 = vmul.f32 %v370, %v369
    %v372 = vmul.f32 0.5, %v371
    %v373 = vsub.f32 1.5, %v372
    %v374 = vmul.f32 %v369, %v373
    %vm375 = vweird.f32 %v290
    %vm376 = vweird.f32 %v369
    %vm377 = vmor %vm375, %vm376
    %v378 = vsel %vm377, %v369, %v374
    %v379 = vrsqrt.pop %v291
    %v380 = vmul.f32 %v379, %v291
    %v381 = vmul.f32 %v380, %v379
    %v382 = vmul.f32 0.5, %v381
    %v383 = vsub.f32 1.5, %v382
    %v384 = vmul.f32 %v379, %v383
    %vm385 = vweird.f32 %v291
    %vm386 = vweird.f32 %v379
    %vm387 = vmor %vm385, %vm386
    %v388 = vsel %vm387, %v379, %v384
    %v389 = vrsqrt.pop %v292
    %v390 = vmul.f32 %v389, %v292
    %v391 = vmul.f32 %v390, %v389
    %v392 = vmul.f32 0.5, %v391
    %v393 = vsub.f32 1.5, %v392
    %v394 = vmul.f32 %v389, %v393
    %vm395 = vweird.f32 %v292
    %vm396 = vweird.f32 %v389
    %vm397 = vmor %vm395, %vm396
    %v398 = vsel %vm397, %v389, %v394
    %v399 = vrsqrt.pop %v293
    %v400 = vmul.f32 %v399, %v293
    %v401 = vmul.f32 %v400, %v399
    %v402 = vmul.f32 0.5, %v401
    %v403 = vsub.f32 1.5, %v402
    %v404 = vmul.f32 %v399, %v403
    %vm405 = vweird.f32 %v293
    %vm406 = vweird.f32 %v399
    %vm407 = vmor %vm405, %vm406
    %v408 = vsel %vm407, %v399, %v404
    %v409 = vrsqrt.pop %v294
    %v410 = vmul.f32 %v409, %v294
    %v411 = vmul.f32 %v410, %v409
    %v412 = vmul.f32 0.5, %v411
    %v413 = vsub.f32 1.5, %v412
    %v414 = vmul.f32 %v409, %v413
    %vm415 = vweird.f32 %v294
    %vm416 = vweird.f32 %v409
    %vm417 = vmor %vm415, %vm416
    %v418 = vsel %vm417, %v409, %v414
    %v419 = vrsqrt.pop %v295
    %v420 = vmul.f32 %v419, %v295
    %v421 = vmul.f32 %v420, %v419
    %v422 = vmul.f32 0.5, %v421
    %v423 = vsub.f32 1.5, %v422
    %v424 = vmul.f32 %v419, %v423
    %vm425 = vweird.f32 %v295
    %vm426 = vweird.f32 %v419
    %vm427 = vmor %vm425, %vm426
    %v428 = vsel %vm427, %v419, %v424
    %v429 = vrsqrt.pop %v296
    %v430 = vmul.f32 %v429, %v296
    %v431 = vmul.f32 %v430, %v429
    %v432 = vmul.f32 0.5, %v431
    %v433 = vsub.f32 1.5, %v432
    %v434 = vmul.f32 %v429, %v433
    %vm435 = vweird.f32 %v296
    %vm436 = vweird.f32 %v429
    %vm437 = vmor %vm435, %vm436
    %v438 = vsel %vm437, %v429, %v434
    %v439 = vrsqrt.pop %v297
    %v440 = vmul.f32 %v439, %v297
    %v441 = vmul.f32 %v440, %v439
    %v442 = vmul.f32 0.5, %v441
    %v443 = vsub.f32 1.5, %v442
    %v444 = vmul.f32 %v439, %v443
    %vm445 = vweird.f32 %v297
    %vm446 = vweird.f32 %v439
    %vm447 = vmor %vm445, %vm446
    %v448 = vsel %vm447, %v439, %v444
    %v449 = vrsqrt.pop %v298
    %v450 = vmul.f32 %v449, %v298
    %v451 = vmul.f32 %v450, %v449
    %v452 = vmul.f32 0.5, %v451
    %v453 = vsub.f32 1.5, %v452
    %v454 = vmul.f32 %v449, %v453
    %vm455 = vweird.f32 %v298
    %vm456 = vweird.f32 %v449
    %vm457 = vmor %vm455, %vm456
    %v458 = vsel %vm457, %v449, %v454
    %v459 = vmul.f32 %v155, %v308
    %v460 = vmul.f32 %v156, %v308
    %v461 = vmul.f32 %v157, %v318
    %v462 = vmul.f32 %v158, %v318
    %v463 = vmul.f32 %v159, %v328
    %v464 = vmul.f32 %v160, %v328
    %v465 = vmul.f32 %v161, %v338
    %v466 = vmul.f32 %v162, %v338
    %v467 = vmul.f32 %v163, %v348
    %v468 = vmul.f32 %v164, %v348
    %v469 = vmul.f32 %v165, %v358
    %v470 = vmul.f32 %v166, %v358
    %v471 = vmul.f32 %v167, %v368
    %v472 = vmul.f32 %v168, %v368
    %v473 = vmul.f32 %v169, %v378
    %v474 = vmul.f32 %v170, %v378
    %v475 = vmul.f32 %v171, %v388
    %v476 = vmul.f32 %v172, %v388
    %v477 = vmul.f32 %v173, %v398
    %v478 = vmul.f32 %v174, %v398
    %v479 = vmul.f32 %v175, %v408
    %v480 = vmul.f32 %v176, %v408
    %v481 = vmul.f32 %v177, %v418
    %v482 = vmul.f32 %v178, %v418
    %v483 = vmul.f32 %v179, %v428
    %v484 = vmul.f32 %v180, %v428
    %v485 = vmul.f32 %v181, %v438
    %v486 = vmul.f32 %v182, %v438
    %v487 = vmul.f32 %v183, %v448
    %v488 = vmul.f32 %v184, %v448
    %v489 = vmul.f32 %v185, %v458
    %v490 = vmul.f32 %v186, %v458
    %v491 = vld [vmem:[%s2] sm:$0x3]
    %v493 = vperm.slane %v491, 0
    %v494 = vperm.slane %v491, 1
    %v497 = vmul.f32 %v459, %v493
    %v498 = vmul.f32 %v460, %v494
    %v499 = vmul.f32 %v461, %v493
    %v500 = vmul.f32 %v462, %v494
    %v501 = vmul.f32 %v463, %v493
    %v502 = vmul.f32 %v464, %v494
    %v503 = vmul.f32 %v465, %v493
    %v504 = vmul.f32 %v466, %v494
    %v505 = vmul.f32 %v467, %v493
    %v506 = vmul.f32 %v468, %v494
    %v507 = vmul.f32 %v469, %v493
    %v508 = vmul.f32 %v470, %v494
    %v509 = vmul.f32 %v471, %v493
    %v510 = vmul.f32 %v472, %v494
    %v511 = vmul.f32 %v473, %v493
    %v512 = vmul.f32 %v474, %v494
    %v513 = vmul.f32 %v475, %v493
    %v514 = vmul.f32 %v476, %v494
    %v515 = vmul.f32 %v477, %v493
    %v516 = vmul.f32 %v478, %v494
    %v517 = vmul.f32 %v479, %v493
    %v518 = vmul.f32 %v480, %v494
    %v519 = vmul.f32 %v481, %v493
    %v520 = vmul.f32 %v482, %v494
    %v521 = vmul.f32 %v483, %v493
    %v522 = vmul.f32 %v484, %v494
    %v523 = vmul.f32 %v485, %v493
    %v524 = vmul.f32 %v486, %v494
    %v525 = vmul.f32 %v487, %v493
    %v526 = vmul.f32 %v488, %v494
    %v527 = vmul.f32 %v489, %v493
    %v528 = vmul.f32 %v490, %v494
    %v529 = vld [vmem:[%s3] sm:$0x3]
    %v531 = vperm.slane %v529, 0
    %v532 = vperm.slane %v529, 1
    %v535 = vadd.f32 %v497, %v531
    %v536 = vadd.f32 %v498, %v532
    %v537 = vadd.f32 %v499, %v531
    %v538 = vadd.f32 %v500, %v532
    %v539 = vadd.f32 %v501, %v531
    %v540 = vadd.f32 %v502, %v532
    %v541 = vadd.f32 %v503, %v531
    %v542 = vadd.f32 %v504, %v532
    %v543 = vadd.f32 %v505, %v531
    %v544 = vadd.f32 %v506, %v532
    %v545 = vadd.f32 %v507, %v531
    %v546 = vadd.f32 %v508, %v532
    %v547 = vadd.f32 %v509, %v531
    %v548 = vadd.f32 %v510, %v532
    %v549 = vadd.f32 %v511, %v531
    %v550 = vadd.f32 %v512, %v532
    %v551 = vadd.f32 %v513, %v531
    %v552 = vadd.f32 %v514, %v532
    %v553 = vadd.f32 %v515, %v531
    %v554 = vadd.f32 %v516, %v532
    %v555 = vadd.f32 %v517, %v531
    %v556 = vadd.f32 %v518, %v532
    %v557 = vadd.f32 %v519, %v531
    %v558 = vadd.f32 %v520, %v532
    %v559 = vadd.f32 %v521, %v531
    %v560 = vadd.f32 %v522, %v532
    %v561 = vadd.f32 %v523, %v531
    %v562 = vadd.f32 %v524, %v532
    %v563 = vadd.f32 %v525, %v531
    %v564 = vadd.f32 %v526, %v532
    %v565 = vadd.f32 %v527, %v531
    %v566 = vadd.f32 %v528, %v532
    %v567 = vpack.c.bf16 %v537, %v535
    %v568 = vpack.c.bf16 %v538, %v536
    %v569 = vpack.c.bf16 %v541, %v539
    %v570 = vpack.c.bf16 %v542, %v540
    %v571 = vpack.c.bf16 %v545, %v543
    %v572 = vpack.c.bf16 %v546, %v544
    %v573 = vpack.c.bf16 %v549, %v547
    %v574 = vpack.c.bf16 %v550, %v548
    %v575 = vpack.c.bf16 %v553, %v551
    %v576 = vpack.c.bf16 %v554, %v552
    %v577 = vpack.c.bf16 %v557, %v555
    %v578 = vpack.c.bf16 %v558, %v556
    %v579 = vpack.c.bf16 %v561, %v559
    %v580 = vpack.c.bf16 %v562, %v560
    %v581 = vpack.c.bf16 %v565, %v563
    %v582 = vpack.c.bf16 %v566, %v564
    %v583 = vld [vmem:[#allocation2] sm:$0xff]
    %v584 = vld [vmem:[#allocation2 + $0x8] sm:$0xff]
    %v585 = vld [vmem:[#allocation2 + $0x10] sm:$0xff]
    %v586 = vld [vmem:[#allocation2 + $0x18] sm:$0xff]
    %v587 = vld [vmem:[#allocation2 + $0x20] sm:$0xff]
    %v588 = vld [vmem:[#allocation2 + $0x28] sm:$0xff]
    %v589 = vld [vmem:[#allocation2 + $0x30] sm:$0xff]
    %v590 = vld [vmem:[#allocation2 + $0x38] sm:$0xff]
    %v591 = vld [vmem:[#allocation2 + $0x40] sm:$0xff]
    %v592 = vld [vmem:[#allocation2 + $0x48] sm:$0xff]
    %v593 = vld [vmem:[#allocation2 + $0x50] sm:$0xff]
    %v594 = vld [vmem:[#allocation2 + $0x58] sm:$0xff]
    %v595 = vld [vmem:[#allocation2 + $0x60] sm:$0xff]
    %v596 = vld [vmem:[#allocation2 + $0x68] sm:$0xff]
    %v597 = vld [vmem:[#allocation2 + $0x70] sm:$0xff]
    %v598 = vld [vmem:[#allocation2 + $0x78] sm:$0xff]
    %v599 = vld [vmem:[#allocation2 + $0x80] sm:$0xff]
    %v600 = vld [vmem:[#allocation2 + $0x88] sm:$0xff]
    %v601 = vld [vmem:[#allocation2 + $0x90] sm:$0xff]
    %v602 = vld [vmem:[#allocation2 + $0x98] sm:$0xff]
    %v603 = vld [vmem:[#allocation2 + $0xa0] sm:$0xff]
    %v604 = vld [vmem:[#allocation2 + $0xa8] sm:$0xff]
    %v605 = vld [vmem:[#allocation2 + $0xb0] sm:$0xff]
    %v606 = vld [vmem:[#allocation2 + $0xb8] sm:$0xff]
    %v607 = vld [vmem:[#allocation2 + $0xc0] sm:$0xff]
    %v608 = vld [vmem:[#allocation2 + $0xc8] sm:$0xff]
    %v609 = vld [vmem:[#allocation2 + $0xd0] sm:$0xff]
    %v610 = vld [vmem:[#allocation2 + $0xd8] sm:$0xff]
    %v611 = vld [vmem:[#allocation2 + $0xe0] sm:$0xff]
    %v612 = vld [vmem:[#allocation2 + $0xe8] sm:$0xff]
    %v613 = vld [vmem:[#allocation2 + $0xf0] sm:$0xff]
    %v614 = vld [vmem:[#allocation2 + $0xf8] sm:$0xff]
    %v615 = vld [vmem:[#allocation2 + $0x100] sm:$0xff]
    %v616 = vld [vmem:[#allocation2 + $0x108] sm:$0xff]
    %v617 = vld [vmem:[#allocation2 + $0x110] sm:$0xff]
    %v618 = vld [vmem:[#allocation2 + $0x118] sm:$0xff]
    %v619 = vld [vmem:[#allocation2 + $0x120] sm:$0xff]
    %v620 = vld [vmem:[#allocation2 + $0x128] sm:$0xff]
    %v621 = vld [vmem:[#allocation2 + $0x130] sm:$0xff]
    %v622 = vld [vmem:[#allocation2 + $0x138] sm:$0xff]
    %v623 = vld [vmem:[#allocation2 + $0x140] sm:$0xff]
    %v624 = vld [vmem:[#allocation2 + $0x148] sm:$0xff]
    %v625 = vld [vmem:[#allocation2 + $0x150] sm:$0xff]
    %v626 = vld [vmem:[#allocation2 + $0x158] sm:$0xff]
    %v627 = vld [vmem:[#allocation2 + $0x160] sm:$0xff]
    %v628 = vld [vmem:[#allocation2 + $0x168] sm:$0xff]
    %v629 = vld [vmem:[#allocation2 + $0x170] sm:$0xff]
    %v630 = vld [vmem:[#allocation2 + $0x178] sm:$0xff]
    %v631 = vld [vmem:[#allocation2 + $0x180] sm:$0xff]
    %v632 = vld [vmem:[#allocation2 + $0x188] sm:$0xff]
    %v633 = vld [vmem:[#allocation2 + $0x190] sm:$0xff]
    %v634 = vld [vmem:[#allocation2 + $0x198] sm:$0xff]
    %v635 = vld [vmem:[#allocation2 + $0x1a0] sm:$0xff]
    %v636 = vld [vmem:[#allocation2 + $0x1a8] sm:$0xff]
    %v637 = vld [vmem:[#allocation2 + $0x1b0] sm:$0xff]
    %v638 = vld [vmem:[#allocation2 + $0x1b8] sm:$0xff]
    %v639 = vld [vmem:[#allocation2 + $0x1c0] sm:$0xff]
    %v640 = vld [vmem:[#allocation2 + $0x1c8] sm:$0xff]
    %v641 = vld [vmem:[#allocation2 + $0x1d0] sm:$0xff]
    %v642 = vld [vmem:[#allocation2 + $0x1d8] sm:$0xff]
    %v643 = vld [vmem:[#allocation2 + $0x1e0] sm:$0xff]
    %v644 = vld [vmem:[#allocation2 + $0x1e8] sm:$0xff]
    %v645 = vld [vmem:[#allocation2 + $0x1f0] sm:$0xff]
    %v646 = vld [vmem:[#allocation2 + $0x1f8] sm:$0xff]
    %v647 = vld [vmem:[%s4] sm:$0xf]
    %v648 = vunpack.c.l.bf16 %v647
    %v650 = vperm.slane %v648, 0
    %v651 = vperm.slane %v648, 2
    %v652 = vperm.slane %v648, 4
    %v653 = vperm.slane %v648, 6
    %v658 = vperm.slane %v650, 0
    %v659 = vperm.slane %v651, 0
    %v660 = vperm.slane %v652, 0
    %v661 = vperm.slane %v653, 0
    %v726 = vunpack.c.l.b16 %v583
    %v727 = vunpack.c.h.b16 %v583
    %v728 = vunpack.c.l.b16 %v584
    %v729 = vunpack.c.h.b16 %v584
    %v730 = vunpack.c.l.b16 %v585
    %v731 = vunpack.c.h.b16 %v585
    %v732 = vunpack.c.l.b16 %v586
    %v733 = vunpack.c.h.b16 %v586
    %v734 = vunpack.c.l.b16 %v587
    %v735 = vunpack.c.h.b16 %v587
    %v736 = vunpack.c.l.b16 %v588
    %v737 = vunpack.c.h.b16 %v588
    %v738 = vunpack.c.l.b16 %v589
    %v739 = vunpack.c.h.b16 %v589
    %v740 = vunpack.c.l.b16 %v590
    %v741 = vunpack.c.h.b16 %v590
    %v742 = vunpack.c.l.b16 %v591
    %v743 = vunpack.c.h.b16 %v591
    %v744 = vunpack.c.l.b16 %v592
    %v745 = vunpack.c.h.b16 %v592
    %v746 = vunpack.c.l.b16 %v593
    %v747 = vunpack.c.h.b16 %v593
    %v748 = vunpack.c.l.b16 %v594
    %v749 = vunpack.c.h.b16 %v594
    %v750 = vunpack.c.l.b16 %v595
    %v751 = vunpack.c.h.b16 %v595
    %v752 = vunpack.c.l.b16 %v596
    %v753 = vunpack.c.h.b16 %v596
    %v754 = vunpack.c.l.b16 %v597
    %v755 = vunpack.c.h.b16 %v597
    %v756 = vunpack.c.l.b16 %v598
    %v757 = vunpack.c.h.b16 %v598
    %v758 = vunpack.c.l.b16 %v599
    %v759 = vunpack.c.h.b16 %v599
    %v760 = vunpack.c.l.b16 %v600
    %v761 = vunpack.c.h.b16 %v600
    %v762 = vunpack.c.l.b16 %v601
    %v763 = vunpack.c.h.b16 %v601
    %v764 = vunpack.c.l.b16 %v602
    %v765 = vunpack.c.h.b16 %v602
    %v766 = vunpack.c.l.b16 %v603
    %v767 = vunpack.c.h.b16 %v603
    %v768 = vunpack.c.l.b16 %v604
    %v769 = vunpack.c.h.b16 %v604
    %v770 = vunpack.c.l.b16 %v605
    %v771 = vunpack.c.h.b16 %v605
    %v772 = vunpack.c.l.b16 %v606
    %v773 = vunpack.c.h.b16 %v606
    %v774 = vunpack.c.l.b16 %v607
    %v775 = vunpack.c.h.b16 %v607
    %v776 = vunpack.c.l.b16 %v608
    %v777 = vunpack.c.h.b16 %v608
    %v778 = vunpack.c.l.b16 %v609
    %v779 = vunpack.c.h.b16 %v609
    %v780 = vunpack.c.l.b16 %v610
    %v781 = vunpack.c.h.b16 %v610
    %v782 = vunpack.c.l.b16 %v611
    %v783 = vunpack.c.h.b16 %v611
    %v784 = vunpack.c.l.b16 %v612
    %v785 = vunpack.c.h.b16 %v612
    %v786 = vunpack.c.l.b16 %v613
    %v787 = vunpack.c.h.b16 %v613
    %v788 = vunpack.c.l.b16 %v614
    %v789 = vunpack.c.h.b16 %v614
    %v790 = vunpack.c.l.b16 %v615
    %v791 = vunpack.c.h.b16 %v615
    %v792 = vunpack.c.l.b16 %v616
    %v793 = vunpack.c.h.b16 %v616
    %v794 = vunpack.c.l.b16 %v617
    %v795 = vunpack.c.h.b16 %v617
    %v796 = vunpack.c.l.b16 %v618
    %v797 = vunpack.c.h.b16 %v618
    %v798 = vunpack.c.l.b16 %v619
    %v799 = vunpack.c.h.b16 %v619
    %v800 = vunpack.c.l.b16 %v620
    %v801 = vunpack.c.h.b16 %v620
    %v802 = vunpack.c.l.b16 %v621
    %v803 = vunpack.c.h.b16 %v621
    %v804 = vunpack.c.l.b16 %v622
    %v805 = vunpack.c.h.b16 %v622
    %v806 = vunpack.c.l.b16 %v623
    %v807 = vunpack.c.h.b16 %v623
    %v808 = vunpack.c.l.b16 %v624
    %v809 = vunpack.c.h.b16 %v624
    %v810 = vunpack.c.l.b16 %v625
    %v811 = vunpack.c.h.b16 %v625
    %v812 = vunpack.c.l.b16 %v626
    %v813 = vunpack.c.h.b16 %v626
    %v814 = vunpack.c.l.b16 %v627
    %v815 = vunpack.c.h.b16 %v627
    %v816 = vunpack.c.l.b16 %v628
    %v817 = vunpack.c.h.b16 %v628
    %v818 = vunpack.c.l.b16 %v629
    %v819 = vunpack.c.h.b16 %v629
    %v820 = vunpack.c.l.b16 %v630
    %v821 = vunpack.c.h.b16 %v630
    %v822 = vunpack.c.l.b16 %v631
    %v823 = vunpack.c.h.b16 %v631
    %v824 = vunpack.c.l.b16 %v632
    %v825 = vunpack.c.h.b16 %v632
    %v826 = vunpack.c.l.b16 %v633
    %v827 = vunpack.c.h.b16 %v633
    %v828 = vunpack.c.l.b16 %v634
    %v829 = vunpack.c.h.b16 %v634
    %v830 = vunpack.c.l.b16 %v635
    %v831 = vunpack.c.h.b16 %v635
    %v832 = vunpack.c.l.b16 %v636
    %v833 = vunpack.c.h.b16 %v636
    %v834 = vunpack.c.l.b16 %v637
    %v835 = vunpack.c.h.b16 %v637
    %v836 = vunpack.c.l.b16 %v638
    %v837 = vunpack.c.h.b16 %v638
    %v838 = vunpack.c.l.b16 %v639
    %v839 = vunpack.c.h.b16 %v639
    %v840 = vunpack.c.l.b16 %v640
    %v841 = vunpack.c.h.b16 %v640
    %v842 = vunpack.c.l.b16 %v641
    %v843 = vunpack.c.h.b16 %v641
    %v844 = vunpack.c.l.b16 %v642
    %v845 = vunpack.c.h.b16 %v642
    %v846 = vunpack.c.l.b16 %v643
    %v847 = vunpack.c.h.b16 %v643
    %v848 = vunpack.c.l.b16 %v644
    %v849 = vunpack.c.h.b16 %v644
    %v850 = vunpack.c.l.b16 %v645
    %v851 = vunpack.c.h.b16 %v645
    %v852 = vunpack.c.l.b16 %v646
    %v853 = vunpack.c.h.b16 %v646
    %v854 = vpack.c.b16 %v730, %v726
    %v855 = vpack.c.b16 %v731, %v727
    %v856 = vpack.c.b16 %v732, %v728
    %v857 = vpack.c.b16 %v733, %v729
    %v858 = vpack.c.b16 %v738, %v734
    %v859 = vpack.c.b16 %v739, %v735
    %v860 = vpack.c.b16 %v740, %v736
    %v861 = vpack.c.b16 %v741, %v737
    %v862 = vpack.c.b16 %v746, %v742
    %v863 = vpack.c.b16 %v747, %v743
    %v864 = vpack.c.b16 %v748, %v744
    %v865 = vpack.c.b16 %v749, %v745
    %v866 = vpack.c.b16 %v754, %v750
    %v867 = vpack.c.b16 %v755, %v751
    %v868 = vpack.c.b16 %v756, %v752
    %v869 = vpack.c.b16 %v757, %v753
    %v870 = vpack.c.b16 %v762, %v758
    %v871 = vpack.c.b16 %v763, %v759
    %v872 = vpack.c.b16 %v764, %v760
    %v873 = vpack.c.b16 %v765, %v761
    %v874 = vpack.c.b16 %v770, %v766
    %v875 = vpack.c.b16 %v771, %v767
    %v876 = vpack.c.b16 %v772, %v768
    %v877 = vpack.c.b16 %v773, %v769
    %v878 = vpack.c.b16 %v778, %v774
    %v879 = vpack.c.b16 %v779, %v775
    %v880 = vpack.c.b16 %v780, %v776
    %v881 = vpack.c.b16 %v781, %v777
    %v882 = vpack.c.b16 %v786, %v782
    %v883 = vpack.c.b16 %v787, %v783
    %v884 = vpack.c.b16 %v788, %v784
    %v885 = vpack.c.b16 %v789, %v785
    %v886 = vpack.c.b16 %v794, %v790
    %v887 = vpack.c.b16 %v795, %v791
    %v888 = vpack.c.b16 %v796, %v792
    %v889 = vpack.c.b16 %v797, %v793
    %v890 = vpack.c.b16 %v802, %v798
    %v891 = vpack.c.b16 %v803, %v799
    %v892 = vpack.c.b16 %v804, %v800
    %v893 = vpack.c.b16 %v805, %v801
    %v894 = vpack.c.b16 %v810, %v806
    %v895 = vpack.c.b16 %v811, %v807
    %v896 = vpack.c.b16 %v812, %v808
    %v897 = vpack.c.b16 %v813, %v809
    %v898 = vpack.c.b16 %v818, %v814
    %v899 = vpack.c.b16 %v819, %v815
    %v900 = vpack.c.b16 %v820, %v816
    %v901 = vpack.c.b16 %v821, %v817
    %v902 = vpack.c.b16 %v826, %v822
    %v903 = vpack.c.b16 %v827, %v823
    %v904 = vpack.c.b16 %v828, %v824
    %v905 = vpack.c.b16 %v829, %v825
    %v906 = vpack.c.b16 %v834, %v830
    %v907 = vpack.c.b16 %v835, %v831
    %v908 = vpack.c.b16 %v836, %v832
    %v909 = vpack.c.b16 %v837, %v833
    %v910 = vpack.c.b16 %v842, %v838
    %v911 = vpack.c.b16 %v843, %v839
    %v912 = vpack.c.b16 %v844, %v840
    %v913 = vpack.c.b16 %v845, %v841
    %v914 = vpack.c.b16 %v850, %v846
    %v915 = vpack.c.b16 %v851, %v847
    %v916 = vpack.c.b16 %v852, %v848
    %v917 = vpack.c.b16 %v853, %v849
    %982 = vmatpush.bf16.msra.mxu0 %v882
    %983 = vmatpush.bf16.msra.mxu0 %v878
    %984 = vmatpush.bf16.msra.mxu0 %v874
    %985 = vmatpush.bf16.msra.mxu0 %v870
    %986 = vmatpush.bf16.msra.mxu0 %v866
    %987 = vmatpush.bf16.msra.mxu0 %v862
    %988 = vmatpush.bf16.msra.mxu0 %v858
    %989 = vmatpush.bf16.msra.mxu0 %v854
    %990 = vmatmul.bf16.gmra.mxu0 %v567
    %v991 = vpop.f32.mrf.mxu0
    %v992 = vadd.f32 %v658, %v991
    %v993 = vpop.f32.mrf.mxu0
    %v994 = vadd.f32 %v658, %v993
    %995 = vmatmul.bf16.gmra.mxu0 %v569
    %v996 = vpop.f32.mrf.mxu0
    %v997 = vadd.f32 %v658, %v996
    %v998 = vpop.f32.mrf.mxu0
    %v999 = vadd.f32 %v658, %v998
    %1000 = vmatmul.bf16.gmra.mxu0 %v571
    %v1001 = vpop.f32.mrf.mxu0
    %v1002 = vadd.f32 %v658, %v1001
    %v1003 = vpop.f32.mrf.mxu0
    %v1004 = vadd.f32 %v658, %v1003
    %1005 = vmatmul.bf16.gmra.mxu0 %v573
    %v1006 = vpop.f32.mrf.mxu0
    %v1007 = vadd.f32 %v658, %v1006
    %v1008 = vpop.f32.mrf.mxu0
    %v1009 = vadd.f32 %v658, %v1008
    %1010 = vmatmul.bf16.gmra.mxu0 %v575
    %v1011 = vpop.f32.mrf.mxu0
    %v1012 = vadd.f32 %v658, %v1011
    %v1013 = vpop.f32.mrf.mxu0
    %v1014 = vadd.f32 %v658, %v1013
    %1015 = vmatmul.bf16.gmra.mxu0 %v577
    %v1016 = vpop.f32.mrf.mxu0
    %v1017 = vadd.f32 %v658, %v1016
    %v1018 = vpop.f32.mrf.mxu0
    %v1019 = vadd.f32 %v658, %v1018
    %1020 = vmatmul.bf16.gmra.mxu0 %v579
    %v1021 = vpop.f32.mrf.mxu0
    %v1022 = vadd.f32 %v658, %v1021
    %v1023 = vpop.f32.mrf.mxu0
    %v1024 = vadd.f32 %v658, %v1023
    %1025 = vmatmul.bf16.gmra.mxu0 %v581
    %v1026 = vpop.f32.mrf.mxu0
    %v1027 = vadd.f32 %v658, %v1026
    %v1028 = vpop.f32.mrf.mxu0
    %v1029 = vadd.f32 %v658, %v1028
    %1030 = vdwg.mxu0
    %1031 = vmatpush.bf16.msra.mxu0 %v914
    %1032 = vmatpush.bf16.msra.mxu0 %v910
    %1033 = vmatpush.bf16.msra.mxu0 %v906
    %1034 = vmatpush.bf16.msra.mxu0 %v902
    %1035 = vmatpush.bf16.msra.mxu0 %v898
    %1036 = vmatpush.bf16.msra.mxu0 %v894
    %1037 = vmatpush.bf16.msra.mxu0 %v890
    %1038 = vmatpush.bf16.msra.mxu0 %v886
    %1039 = vmatmul.bf16.gmra.mxu0 %v568
    %v1040 = vpop.f32.mrf.mxu0
    %v1041 = vadd.f32 %v992, %v1040
    %v1042 = vpop.f32.mrf.mxu0
    %v1043 = vadd.f32 %v994, %v1042
    %1044 = vmatmul.bf16.gmra.mxu0 %v570
    %v1045 = vpop.f32.mrf.mxu0
    %v1046 = vadd.f32 %v997, %v1045
    %v1047 = vpop.f32.mrf.mxu0
    %v1048 = vadd.f32 %v999, %v1047
    %1049 = vmatmul.bf16.gmra.mxu0 %v572
    %v1050 = vpop.f32.mrf.mxu0
    %v1051 = vadd.f32 %v1002, %v1050
    %v1052 = vpop.f32.mrf.mxu0
    %v1053 = vadd.f32 %v1004, %v1052
    %1054 = vmatmul.bf16.gmra.mxu0 %v574
    %v1055 = vpop.f32.mrf.mxu0
    %v1056 = vadd.f32 %v1007, %v1055
    %v1057 = vpop.f32.mrf.mxu0
    %v1058 = vadd.f32 %v1009, %v1057
    %1059 = vmatmul.bf16.gmra.mxu0 %v576
    %v1060 = vpop.f32.mrf.mxu0
    %v1061 = vadd.f32 %v1012, %v1060
    %v1062 = vpop.f32.mrf.mxu0
    %v1063 = vadd.f32 %v1014, %v1062
    %1064 = vmatmul.bf16.gmra.mxu0 %v578
    %v1065 = vpop.f32.mrf.mxu0
    %v1066 = vadd.f32 %v1017, %v1065
    %v1067 = vpop.f32.mrf.mxu0
    %v1068 = vadd.f32 %v1019, %v1067
    %1069 = vmatmul.bf16.gmra.mxu0 %v580
    %v1070 = vpop.f32.mrf.mxu0
    %v1071 = vadd.f32 %v1022, %v1070
    %v1072 = vpop.f32.mrf.mxu0
    %v1073 = vadd.f32 %v1024, %v1072
    %1074 = vmatmul.bf16.gmra.mxu0 %v582
    %v1075 = vpop.f32.mrf.mxu0
    %v1076 = vadd.f32 %v1027, %v1075
    %v1077 = vpop.f32.mrf.mxu0
    %v1078 = vadd.f32 %v1029, %v1077
    %1079 = vdwg.mxu0
    %1080 = vmatpush.bf16.msra.mxu0 %v883
    %1081 = vmatpush.bf16.msra.mxu0 %v879
    %1082 = vmatpush.bf16.msra.mxu0 %v875
    %1083 = vmatpush.bf16.msra.mxu0 %v871
    %1084 = vmatpush.bf16.msra.mxu0 %v867
    %1085 = vmatpush.bf16.msra.mxu0 %v863
    %1086 = vmatpush.bf16.msra.mxu0 %v859
    %1087 = vmatpush.bf16.msra.mxu0 %v855
    %1088 = vmatmul.bf16.gmra.mxu0 %v567
    %v1089 = vpop.f32.mrf.mxu0
    %v1090 = vadd.f32 %v659, %v1089
    %v1091 = vpop.f32.mrf.mxu0
    %v1092 = vadd.f32 %v659, %v1091
    %1093 = vmatmul.bf16.gmra.mxu0 %v569
    %v1094 = vpop.f32.mrf.mxu0
    %v1095 = vadd.f32 %v659, %v1094
    %v1096 = vpop.f32.mrf.mxu0
    %v1097 = vadd.f32 %v659, %v1096
    %1098 = vmatmul.bf16.gmra.mxu0 %v571
    %v1099 = vpop.f32.mrf.mxu0
    %v1100 = vadd.f32 %v659, %v1099
    %v1101 = vpop.f32.mrf.mxu0
    %v1102 = vadd.f32 %v659, %v1101
    %1103 = vmatmul.bf16.gmra.mxu0 %v573
    %v1104 = vpop.f32.mrf.mxu0
    %v1105 = vadd.f32 %v659, %v1104
    %v1106 = vpop.f32.mrf.mxu0
    %v1107 = vadd.f32 %v659, %v1106
    %1108 = vmatmul.bf16.gmra.mxu0 %v575
    %v1109 = vpop.f32.mrf.mxu0
    %v1110 = vadd.f32 %v659, %v1109
    %v1111 = vpop.f32.mrf.mxu0
    %v1112 = vadd.f32 %v659, %v1111
    %1113 = vmatmul.bf16.gmra.mxu0 %v577
    %v1114 = vpop.f32.mrf.mxu0
    %v1115 = vadd.f32 %v659, %v1114
    %v1116 = vpop.f32.mrf.mxu0
    %v1117 = vadd.f32 %v659, %v1116
    %1118 = vmatmul.bf16.gmra.mxu0 %v579
    %v1119 = vpop.f32.mrf.mxu0
    %v1120 = vadd.f32 %v659, %v1119
    %v1121 = vpop.f32.mrf.mxu0
    %v1122 = vadd.f32 %v659, %v1121
    %1123 = vmatmul.bf16.gmra.mxu0 %v581
    %v1124 = vpop.f32.mrf.mxu0
    %v1125 = vadd.f32 %v659, %v1124
    %v1126 = vpop.f32.mrf.mxu0
    %v1127 = vadd.f32 %v659, %v1126
    %1128 = vdwg.mxu0
    %1129 = vmatpush.bf16.msra.mxu0 %v915
    %1130 = vmatpush.bf16.msra.mxu0 %v911
    %1131 = vmatpush.bf16.msra.mxu0 %v907
    %1132 = vmatpush.bf16.msra.mxu0 %v903
    %1133 = vmatpush.bf16.msra.mxu0 %v899
    %1134 = vmatpush.bf16.msra.mxu0 %v895
    %1135 = vmatpush.bf16.msra.mxu0 %v891
    %1136 = vmatpush.bf16.msra.mxu0 %v887
    %1137 = vmatmul.bf16.gmra.mxu0 %v568
    %v1138 = vpop.f32.mrf.mxu0
    %v1139 = vadd.f32 %v1090, %v1138
    %v1140 = vpop.f32.mrf.mxu0
    %v1141 = vadd.f32 %v1092, %v1140
    %1142 = vmatmul.bf16.gmra.mxu0 %v570
    %v1143 = vpop.f32.mrf.mxu0
    %v1144 = vadd.f32 %v1095, %v1143
    %v1145 = vpop.f32.mrf.mxu0
    %v1146 = vadd.f32 %v1097, %v1145
    %1147 = vmatmul.bf16.gmra.mxu0 %v572
    %v1148 = vpop.f32.mrf.mxu0
    %v1149 = vadd.f32 %v1100, %v1148
    %v1150 = vpop.f32.mrf.mxu0
    %v1151 = vadd.f32 %v1102, %v1150
    %1152 = vmatmul.bf16.gmra.mxu0 %v574
    %v1153 = vpop.f32.mrf.mxu0
    %v1154 = vadd.f32 %v1105, %v1153
    %v1155 = vpop.f32.mrf.mxu0
    %v1156 = vadd.f32 %v1107, %v1155
    %1157 = vmatmul.bf16.gmra.mxu0 %v576
    %v1158 = vpop.f32.mrf.mxu0
    %v1159 = vadd.f32 %v1110, %v1158
    %v1160 = vpop.f32.mrf.mxu0
    %v1161 = vadd.f32 %v1112, %v1160
    %1162 = vmatmul.bf16.gmra.mxu0 %v578
    %v1163 = vpop.f32.mrf.mxu0
    %v1164 = vadd.f32 %v1115, %v1163
    %v1165 = vpop.f32.mrf.mxu0
    %v1166 = vadd.f32 %v1117, %v1165
    %1167 = vmatmul.bf16.gmra.mxu0 %v580
    %v1168 = vpop.f32.mrf.mxu0
    %v1169 = vadd.f32 %v1120, %v1168
    %v1170 = vpop.f32.mrf.mxu0
    %v1171 = vadd.f32 %v1122, %v1170
    %1172 = vmatmul.bf16.gmra.mxu0 %v582
    %v1173 = vpop.f32.mrf.mxu0
    %v1174 = vadd.f32 %v1125, %v1173
    %v1175 = vpop.f32.mrf.mxu0
    %v1176 = vadd.f32 %v1127, %v1175
    %1177 = vdwg.mxu0
    %1178 = vmatpush.bf16.msra.mxu0 %v884
    %1179 = vmatpush.bf16.msra.mxu0 %v880
    %1180 = vmatpush.bf16.msra.mxu0 %v876
    %1181 = vmatpush.bf16.msra.mxu0 %v872
    %1182 = vmatpush.bf16.msra.mxu0 %v868
    %1183 = vmatpush.bf16.msra.mxu0 %v864
    %1184 = vmatpush.bf16.msra.mxu0 %v860
    %1185 = vmatpush.bf16.msra.mxu0 %v856
    %1186 = vmatmul.bf16.gmra.mxu0 %v567
    %v1187 = vpop.f32.mrf.mxu0
    %v1188 = vadd.f32 %v660, %v1187
    %v1189 = vpop.f32.mrf.mxu0
    %v1190 = vadd.f32 %v660, %v1189
    %1191 = vmatmul.bf16.gmra.mxu0 %v569
    %v1192 = vpop.f32.mrf.mxu0
    %v1193 = vadd.f32 %v660, %v1192
    %v1194 = vpop.f32.mrf.mxu0
    %v1195 = vadd.f32 %v660, %v1194
    %1196 = vmatmul.bf16.gmra.mxu0 %v571
    %v1197 = vpop.f32.mrf.mxu0
    %v1198 = vadd.f32 %v660, %v1197
    %v1199 = vpop.f32.mrf.mxu0
    %v1200 = vadd.f32 %v660, %v1199
    %1201 = vmatmul.bf16.gmra.mxu0 %v573
    %v1202 = vpop.f32.mrf.mxu0
    %v1203 = vadd.f32 %v660, %v1202
    %v1204 = vpop.f32.mrf.mxu0
    %v1205 = vadd.f32 %v660, %v1204
    %1206 = vmatmul.bf16.gmra.mxu0 %v575
    %v1207 = vpop.f32.mrf.mxu0
    %v1208 = vadd.f32 %v660, %v1207
    %v1209 = vpop.f32.mrf.mxu0
    %v1210 = vadd.f32 %v660, %v1209
    %1211 = vmatmul.bf16.gmra.mxu0 %v577
    %v1212 = vpop.f32.mrf.mxu0
    %v1213 = vadd.f32 %v660, %v1212
    %v1214 = vpop.f32.mrf.mxu0
    %v1215 = vadd.f32 %v660, %v1214
    %1216 = vmatmul.bf16.gmra.mxu0 %v579
    %v1217 = vpop.f32.mrf.mxu0
    %v1218 = vadd.f32 %v660, %v1217
    %v1219 = vpop.f32.mrf.mxu0
    %v1220 = vadd.f32 %v660, %v1219
    %1221 = vmatmul.bf16.gmra.mxu0 %v581
    %v1222 = vpop.f32.mrf.mxu0
    %v1223 = vadd.f32 %v660, %v1222
    %v1224 = vpop.f32.mrf.mxu0
    %v1225 = vadd.f32 %v660, %v1224
    %1226 = vdwg.mxu0
    %1227 = vmatpush.bf16.msra.mxu0 %v916
    %1228 = vmatpush.bf16.msra.mxu0 %v912
    %1229 = vmatpush.bf16.msra.mxu0 %v908
    %1230 = vmatpush.bf16.msra.mxu0 %v904
    %1231 = vmatpush.bf16.msra.mxu0 %v900
    %1232 = vmatpush.bf16.msra.mxu0 %v896
    %1233 = vmatpush.bf16.msra.mxu0 %v892
    %1234 = vmatpush.bf16.msra.mxu0 %v888
    %1235 = vmatmul.bf16.gmra.mxu0 %v568
    %v1236 = vpop.f32.mrf.mxu0
    %v1237 = vadd.f32 %v1188, %v1236
    %v1238 = vpop.f32.mrf.mxu0
    %v1239 = vadd.f32 %v1190, %v1238
    %1240 = vmatmul.bf16.gmra.mxu0 %v570
    %v1241 = vpop.f32.mrf.mxu0
    %v1242 = vadd.f32 %v1193, %v1241
    %v1243 = vpop.f32.mrf.mxu0
    %v1244 = vadd.f32 %v1195, %v1243
    %1245 = vmatmul.bf16.gmra.mxu0 %v572
    %v1246 = vpop.f32.mrf.mxu0
    %v1247 = vadd.f32 %v1198, %v1246
    %v1248 = vpop.f32.mrf.mxu0
    %v1249 = vadd.f32 %v1200, %v1248
    %1250 = vmatmul.bf16.gmra.mxu0 %v574
    %v1251 = vpop.f32.mrf.mxu0
    %v1252 = vadd.f32 %v1203, %v1251
    %v1253 = vpop.f32.mrf.mxu0
    %v1254 = vadd.f32 %v1205, %v1253
    %1255 = vmatmul.bf16.gmra.mxu0 %v576
    %v1256 = vpop.f32.mrf.mxu0
    %v1257 = vadd.f32 %v1208, %v1256
    %v1258 = vpop.f32.mrf.mxu0
    %v1259 = vadd.f32 %v1210, %v1258
    %1260 = vmatmul.bf16.gmra.mxu0 %v578
    %v1261 = vpop.f32.mrf.mxu0
    %v1262 = vadd.f32 %v1213, %v1261
    %v1263 = vpop.f32.mrf.mxu0
    %v1264 = vadd.f32 %v1215, %v1263
    %1265 = vmatmul.bf16.gmra.mxu0 %v580
    %v1266 = vpop.f32.mrf.mxu0
    %v1267 = vadd.f32 %v1218, %v1266
    %v1268 = vpop.f32.mrf.mxu0
    %v1269 = vadd.f32 %v1220, %v1268
    %1270 = vmatmul.bf16.gmra.mxu0 %v582
    %v1271 = vpop.f32.mrf.mxu0
    %v1272 = vadd.f32 %v1223, %v1271
    %v1273 = vpop.f32.mrf.mxu0
    %v1274 = vadd.f32 %v1225, %v1273
    %1275 = vdwg.mxu0
    %1276 = vmatpush.bf16.msra.mxu0 %v885
    %1277 = vmatpush.bf16.msra.mxu0 %v881
    %1278 = vmatpush.bf16.msra.mxu0 %v877
    %1279 = vmatpush.bf16.msra.mxu0 %v873
    %1280 = vmatpush.bf16.msra.mxu0 %v869
    %1281 = vmatpush.bf16.msra.mxu0 %v865
    %1282 = vmatpush.bf16.msra.mxu0 %v861
    %1283 = vmatpush.bf16.msra.mxu0 %v857
    %1284 = vmatmul.bf16.gmra.mxu0 %v567
    %v1285 = vpop.f32.mrf.mxu0
    %v1286 = vadd.f32 %v661, %v1285
    %v1287 = vpop.f32.mrf.mxu0
    %v1288 = vadd.f32 %v661, %v1287
    %1289 = vmatmul.bf16.gmra.mxu0 %v569
    %v1290 = vpop.f32.mrf.mxu0
    %v1291 = vadd.f32 %v661, %v1290
    %v1292 = vpop.f32.mrf.mxu0
    %v1293 = vadd.f32 %v661, %v1292
    %1294 = vmatmul.bf16.gmra.mxu0 %v571
    %v1295 = vpop.f32.mrf.mxu0
    %v1296 = vadd.f32 %v661, %v1295
    %v1297 = vpop.f32.mrf.mxu0
    %v1298 = vadd.f32 %v661, %v1297
    %1299 = vmatmul.bf16.gmra.mxu0 %v573
    %v1300 = vpop.f32.mrf.mxu0
    %v1301 = vadd.f32 %v661, %v1300
    %v1302 = vpop.f32.mrf.mxu0
    %v1303 = vadd.f32 %v661, %v1302
    %1304 = vmatmul.bf16.gmra.mxu0 %v575
    %v1305 = vpop.f32.mrf.mxu0
    %v1306 = vadd.f32 %v661, %v1305
    %v1307 = vpop.f32.mrf.mxu0
    %v1308 = vadd.f32 %v661, %v1307
    %1309 = vmatmul.bf16.gmra.mxu0 %v577
    %v1310 = vpop.f32.mrf.mxu0
    %v1311 = vadd.f32 %v661, %v1310
    %v1312 = vpop.f32.mrf.mxu0
    %v1313 = vadd.f32 %v661, %v1312
    %1314 = vmatmul.bf16.gmra.mxu0 %v579
    %v1315 = vpop.f32.mrf.mxu0
    %v1316 = vadd.f32 %v661, %v1315
    %v1317 = vpop.f32.mrf.mxu0
    %v1318 = vadd.f32 %v661, %v1317
    %1319 = vmatmul.bf16.gmra.mxu0 %v581
    %v1320 = vpop.f32.mrf.mxu0
    %v1321 = vadd.f32 %v661, %v1320
    %v1322 = vpop.f32.mrf.mxu0
    %v1323 = vadd.f32 %v661, %v1322
    %1324 = vdwg.mxu0
    %1325 = vmatpush.bf16.msra.mxu0 %v917
    %1326 = vmatpush.bf16.msra.mxu0 %v913
    %1327 = vmatpush.bf16.msra.mxu0 %v909
    %1328 = vmatpush.bf16.msra.mxu0 %v905
    %1329 = vmatpush.bf16.msra.mxu0 %v901
    %1330 = vmatpush.bf16.msra.mxu0 %v897
    %1331 = vmatpush.bf16.msra.mxu0 %v893
    %1332 = vmatpush.bf16.msra.mxu0 %v889
    %1333 = vmatmul.bf16.gmra.mxu0 %v568
    %v1334 = vpop.f32.mrf.mxu0
    %v1335 = vadd.f32 %v1286, %v1334
    %v1336 = vpop.f32.mrf.mxu0
    %v1337 = vadd.f32 %v1288, %v1336
    %1338 = vmatmul.bf16.gmra.mxu0 %v570
    %v1339 = vpop.f32.mrf.mxu0
    %v1340 = vadd.f32 %v1291, %v1339
    %v1341 = vpop.f32.mrf.mxu0
    %v1342 = vadd.f32 %v1293, %v1341
    %1343 = vmatmul.bf16.gmra.mxu0 %v572
    %v1344 = vpop.f32.mrf.mxu0
    %v1345 = vadd.f32 %v1296, %v1344
    %v1346 = vpop.f32.mrf.mxu0
    %v1347 = vadd.f32 %v1298, %v1346
    %1348 = vmatmul.bf16.gmra.mxu0 %v574
    %v1349 = vpop.f32.mrf.mxu0
    %v1350 = vadd.f32 %v1301, %v1349
    %v1351 = vpop.f32.mrf.mxu0
    %v1352 = vadd.f32 %v1303, %v1351
    %1353 = vmatmul.bf16.gmra.mxu0 %v576
    %v1354 = vpop.f32.mrf.mxu0
    %v1355 = vadd.f32 %v1306, %v1354
    %v1356 = vpop.f32.mrf.mxu0
    %v1357 = vadd.f32 %v1308, %v1356
    %1358 = vmatmul.bf16.gmra.mxu0 %v578
    %v1359 = vpop.f32.mrf.mxu0
    %v1360 = vadd.f32 %v1311, %v1359
    %v1361 = vpop.f32.mrf.mxu0
    %v1362 = vadd.f32 %v1313, %v1361
    %1363 = vmatmul.bf16.gmra.mxu0 %v580
    %v1364 = vpop.f32.mrf.mxu0
    %v1365 = vadd.f32 %v1316, %v1364
    %v1366 = vpop.f32.mrf.mxu0
    %v1367 = vadd.f32 %v1318, %v1366
    %1368 = vmatmul.bf16.gmra.mxu0 %v582
    %v1369 = vpop.f32.mrf.mxu0
    %v1370 = vadd.f32 %v1321, %v1369
    %v1371 = vpop.f32.mrf.mxu0
    %v1372 = vadd.f32 %v1323, %v1371
    %1373 = vdwg.mxu0
    %v1374 = vpack.c.bf16 %v1139, %v1041
    %v1375 = vpack.c.bf16 %v1335, %v1237
    %v1376 = vpack.c.bf16 %v1141, %v1043
    %v1377 = vpack.c.bf16 %v1337, %v1239
    %v1378 = vpack.c.bf16 %v1144, %v1046
    %v1379 = vpack.c.bf16 %v1340, %v1242
    %v1380 = vpack.c.bf16 %v1146, %v1048
    %v1381 = vpack.c.bf16 %v1342, %v1244
    %v1382 = vpack.c.bf16 %v1149, %v1051
    %v1383 = vpack.c.bf16 %v1345, %v1247
    %v1384 = vpack.c.bf16 %v1151, %v1053
    %v1385 = vpack.c.bf16 %v1347, %v1249
    %v1386 = vpack.c.bf16 %v1154, %v1056
    %v1387 = vpack.c.bf16 %v1350, %v1252
    %v1388 = vpack.c.bf16 %v1156, %v1058
    %v1389 = vpack.c.bf16 %v1352, %v1254
    %v1390 = vpack.c.bf16 %v1159, %v1061
    %v1391 = vpack.c.bf16 %v1355, %v1257
    %v1392 = vpack.c.bf16 %v1161, %v1063
    %v1393 = vpack.c.bf16 %v1357, %v1259
    %v1394 = vpack.c.bf16 %v1164, %v1066
    %v1395 = vpack.c.bf16 %v1360, %v1262
    %v1396 = vpack.c.bf16 %v1166, %v1068
    %v1397 = vpack.c.bf16 %v1362, %v1264
    %v1398 = vpack.c.bf16 %v1169, %v1071
    %v1399 = vpack.c.bf16 %v1365, %v1267
    %v1400 = vpack.c.bf16 %v1171, %v1073
    %v1401 = vpack.c.bf16 %v1367, %v1269
    %v1402 = vpack.c.bf16 %v1174, %v1076
    %v1403 = vpack.c.bf16 %v1370, %v1272
    %v1404 = vpack.c.bf16 %v1176, %v1078
    %v1405 = vpack.c.bf16 %v1372, %v1274
    %1406 = vst [vmem:[%s5] sm:$0xff] %v1374
    %1407 = vst [vmem:[%s5 + $0x8] sm:$0xff] %v1375
    %1408 = vst [vmem:[%s5 + $0x10] sm:$0xff] %v1376
    %1409 = vst [vmem:[%s5 + $0x18] sm:$0xff] %v1377
    %1410 = vst [vmem:[%s5 + $0x20] sm:$0xff] %v1378
    %1411 = vst [vmem:[%s5 + $0x28] sm:$0xff] %v1379
    %1412 = vst [vmem:[%s5 + $0x30] sm:$0xff] %v1380
    %1413 = vst [vmem:[%s5 + $0x38] sm:$0xff] %v1381
    %1414 = vst [vmem:[%s5 + $0x40] sm:$0xff] %v1382
    %1415 = vst [vmem:[%s5 + $0x48] sm:$0xff] %v1383
    %1416 = vst [vmem:[%s5 + $0x50] sm:$0xff] %v1384
    %1417 = vst [vmem:[%s5 + $0x58] sm:$0xff] %v1385
    %1418 = vst [vmem:[%s5 + $0x60] sm:$0xff] %v1386
    %1419 = vst [vmem:[%s5 + $0x68] sm:$0xff] %v1387
    %1420 = vst [vmem:[%s5 + $0x70] sm:$0xff] %v1388
    %1421 = vst [vmem:[%s5 + $0x78] sm:$0xff] %v1389
    %1422 = vst [vmem:[%s5 + $0x80] sm:$0xff] %v1390
    %1423 = vst [vmem:[%s5 + $0x88] sm:$0xff] %v1391
    %1424 = vst [vmem:[%s5 + $0x90] sm:$0xff] %v1392
    %1425 = vst [vmem:[%s5 + $0x98] sm:$0xff] %v1393
    %1426 = vst [vmem:[%s5 + $0xa0] sm:$0xff] %v1394
    %1427 = vst [vmem:[%s5 + $0xa8] sm:$0xff] %v1395
    %1428 = vst [vmem:[%s5 + $0xb0] sm:$0xff] %v1396
    %1429 = vst [vmem:[%s5 + $0xb8] sm:$0xff] %v1397
    %1430 = vst [vmem:[%s5 + $0xc0] sm:$0xff] %v1398
    %1431 = vst [vmem:[%s5 + $0xc8] sm:$0xff] %v1399
    %1432 = vst [vmem:[%s5 + $0xd0] sm:$0xff] %v1400
    %1433 = vst [vmem:[%s5 + $0xd8] sm:$0xff] %v1401
    %1434 = vst [vmem:[%s5 + $0xe0] sm:$0xff] %v1402
    %1435 = vst [vmem:[%s5 + $0xe8] sm:$0xff] %v1403
    %1436 = vst [vmem:[%s5 + $0xf0] sm:$0xff] %v1404
    %1437 = vst [vmem:[%s5 + $0xf8] sm:$0xff] %v1405
    // Predicated region
    $region26: #{cross_attention_block_forward.17} parent=1 // pred_check
      _
    $region27: #{cross_attention_block_forward.17} parent=1 // pred_check_branch
      %1439 = sbr.rel (0) target = $region29
    $region28: #{cross_attention_block_forward.17} parent=1 // pred_region
      _
    $region29: #{cross_attention_block_forward.17} parent=1 // pred_fallthru
      _
    // Predicated region
    $region30: #{cross_attention_block_forward.17} parent=1 // pred_check
      _
    $region31: #{cross_attention_block_forward.17} parent=1 // pred_check_branch
      %1441 = sbr.rel (0) target = $region33
    $region32: #{cross_attention_block_forward.17} parent=1 // pred_region
      _
    $region33: #{cross_attention_block_forward.17} parent=1 // pred_fallthru
      _
    %1442 = vsyncpa [#allocation3], 1

// kernel: cross_attention_block_forward.16
$region0: #{cross_attention_block_forward.16}
  #allocation0 [shape = 'u32[]', space=smem, size = 0x4, offset = 0x4, fixed_abs, tag = 'smem constant byte address 0x4 - core index']
  #allocation1 [shape = 'u32[72,128]{1,0:T(1,128)}', space=vmem, size = 0x9000, scoped, tag = 'internal scratch']
  %s0 = inlined_call_operand.vmem [shape: bf16[2,64,128], index: 0, kind: input, shape index: {}]
  %s1 = inlined_call_operand.vmem [shape: bf16[2,64,128], index: 1, kind: input, shape index: {}]
  %s2 = inlined_call_operand.vmem [shape: f32[1,128], index: 2, kind: input, shape index: {}]
  %s3 = inlined_call_operand.vmem [shape: f32[1,128], index: 3, kind: input, shape index: {}]
  %s4 = inlined_call_operand.hbm [shape: bf16[128,256], index: 4, kind: input, shape index: {}]
  %s5 = inlined_call_operand.vmem [shape: bf16[1,256], index: 5, kind: input, shape index: {}]
  %s6 = inlined_call_operand.vmem [shape: f32[1,256], index: 6, kind: input, shape index: {}]
  %s7 = inlined_call_operand.vmem [shape: f32[1,256], index: 7, kind: input, shape index: {}]
  %s8 = inlined_call_operand.vmem [shape: bf16[2,64,256], index: 8, kind: output, shape index: {}]
  %s9 = sld [smem:[#allocation0]]
  $region69: #{cross_attention_block_forward.16} parent=0
    _
  %s11 = ssub.s32 1, %s9
  %s12 = scalar_select 0, %s11, %s9
  $region1: #{cross_attention_block_forward.16} parent=0
    #allocation2 [shape = 'u8[65536]{0}', space=vmem, size = 0x10000, scoped, tag = 'input window, operand 4, single buffered']
    #allocation3 [shape = 's32[2]{0}', space=sflag, size = 0x8, scoped, tag = 'scoped memory for cross_attention_block_forward.16']
    %13 = vsyncpa [#allocation3], 0
    loop: start=0, step=1, limit=4
    $region2: #{cross_attention_block_forward.16} parent=1 // loop_pre_header
      _
    $region3: #{cross_attention_block_forward.16} parent=1 // loop_header
      %s15 = sphi 0, %s19
      %p16 = scmp.ge.s32.totalorder %s15, 4
      %s25 = sphi 0, %s27
      %s28 = sphi 0, %s25
      %s29 = sphi 0, %s28
      %s45 = sphi 0, %s29
      %s51 = sphi 0, %s53
      %s54 = sphi 0, %s51
      %s55 = sphi 0, %s54
      %s71 = sphi 0, %s55
      %s75 = sphi 0, %s75
      %s77 = sphi 0, %s75
      %s78 = sphi 0, %s77
      %s92 = sphi 0, %s78
      %s96 = sphi 0, %s96
      %s98 = sphi 0, %s96
      %s99 = sphi 0, %s98
      %s113 = sphi 0, %s99
      %s117 = sphi 0, %s117
      %s119 = sphi 0, %s117
      %s120 = sphi 0, %s119
      %s134 = sphi 0, %s120
      %s138 = sphi 0, %s138
      %s140 = sphi 0, %s138
      %s141 = sphi 0, %s140
      %s155 = sphi 0, %s141
      %s159 = sphi 0, %s159
      %s161 = sphi 0, %s159
      %s162 = sphi 0, %s161
      %s176 = sphi 0, %s162
      %s180 = sphi 0, %s180
      %s182 = sphi 0, %s180
      %s183 = sphi 0, %s182
      %s197 = sphi 0, %s183
      %s203 = sphi 0, %s205
      %s206 = sphi 0, %s203
      %s207 = sphi 0, %s206
      %s223 = sphi 0, %s207
    $region4: #{cross_attention_block_forward.16} parent=1 // loop_header_branch
      %18 = sbr.rel (%p16) target = $region8
    $region5: #{cross_attention_block_forward.16} parent=1 // loop_body
      %s20 = ssub.s32 %s15, 1
      %s21 = ssub.s32 %s15, 2
      %s22 = sadd.s32 %s15, 1
      %s23 = ssub.s32 %s15, %s22
      %p24 = scmp.eq.s32.totalorder %s23, 0
      %s26 = sadd.s32 %s25, 1
      %s27 = scalar_select %p24, %s25, %s26
      %p30 = pneg %p24
      %p31 = scmp.eq.s32.totalorder %s15, 1
      %p32 = por %p30, %p31
      %p33 = scmp.ne.s32.totalorder %s25, %s28
      %p34 = scmp.eq.s32.totalorder %s15, 0
      %p35 = por %p33, %p34
      %p36 = scmp.ne.s32.totalorder %s25, %s28
      %p37 = scmp.eq.s32.totalorder %s20, 1
      %p38 = por %p36, %p37
      %p39 = scmp.ne.s32.totalorder %s28, %s29
      %p40 = scmp.eq.s32.totalorder %s20, 0
      %p41 = por %p39, %p40
      %p42 = scmp.ne.s32.totalorder %s28, %s29
      %p43 = scmp.eq.s32.totalorder %s21, 1
      %p44 = por %p42, %p43
      %p46 = scmp.ne.s32.totalorder %s29, %s45
      %p47 = scmp.eq.s32.totalorder %s21, 0
      %p48 = por %p46, %p47
      %s49 = ssub.s32 %s15, %s22
      %p50 = scmp.eq.s32.totalorder %s49, 0
      %s52 = sadd.s32 %s51, 1
      %s53 = scalar_select %p50, %s51, %s52
      %p56 = pneg %p50
      %p57 = scmp.eq.s32.totalorder %s15, 1
      %p58 = por %p56, %p57
      %p59 = scmp.ne.s32.totalorder %s51, %s54
      %p60 = scmp.eq.s32.totalorder %s15, 0
      %p61 = por %p59, %p60
      %p62 = scmp.ne.s32.totalorder %s51, %s54
      %p63 = scmp.eq.s32.totalorder %s20, 1
      %p64 = por %p62, %p63
      %p65 = scmp.ne.s32.totalorder %s54, %s55
      %p66 = scmp.eq.s32.totalorder %s20, 0
      %p67 = por %p65, %p66
      %p68 = scmp.ne.s32.totalorder %s54, %s55
      %p69 = scmp.eq.s32.totalorder %s21, 1
      %p70 = por %p68, %p69
      %p72 = scmp.ne.s32.totalorder %s55, %s71
      %p73 = scmp.eq.s32.totalorder %s21, 0
      %p74 = por %p72, %p73
      %s76 = sadd.s32 %s75, 1
      %p79 = scmp.eq.s32.totalorder %s15, 1
      %p80 = scmp.ne.s32.totalorder %s75, %s77
      %p81 = scmp.eq.s32.totalorder %s15, 0
      %p82 = por %p80, %p81
      %p83 = scmp.ne.s32.totalorder %s75, %s77
      %p84 = scmp.eq.s32.totalorder %s20, 1
      %p85 = por %p83, %p84
      %p86 = scmp.ne.s32.totalorder %s77, %s78
      %p87 = scmp.eq.s32.totalorder %s20, 0
      %p88 = por %p86, %p87
      %p89 = scmp.ne.s32.totalorder %s77, %s78
      %p90 = scmp.eq.s32.totalorder %s21, 1
      %p91 = por %p89, %p90
      %p93 = scmp.ne.s32.totalorder %s78, %s92
      %p94 = scmp.eq.s32.totalorder %s21, 0
      %p95 = por %p93, %p94
      %s97 = sadd.s32 %s96, 1
      %p100 = scmp.eq.s32.totalorder %s15, 1
      %p101 = scmp.ne.s32.totalorder %s96, %s98
      %p102 = scmp.eq.s32.totalorder %s15, 0
      %p103 = por %p101, %p102
      %p104 = scmp.ne.s32.totalorder %s96, %s98
      %p105 = scmp.eq.s32.totalorder %s20, 1
      %p106 = por %p104, %p105
      %p107 = scmp.ne.s32.totalorder %s98, %s99
      %p108 = scmp.eq.s32.totalorder %s20, 0
      %p109 = por %p107, %p108
      %p110 = scmp.ne.s32.totalorder %s98, %s99
      %p111 = scmp.eq.s32.totalorder %s21, 1
      %p112 = por %p110, %p111
      %p114 = scmp.ne.s32.totalorder %s99, %s113
      %p115 = scmp.eq.s32.totalorder %s21, 0
      %p116 = por %p114, %p115
      %s118 = sadd.s32 %s117, 1
      %p121 = scmp.eq.s32.totalorder %s15, 1
      %p122 = scmp.ne.s32.totalorder %s117, %s119
      %p123 = scmp.eq.s32.totalorder %s15, 0
      %p124 = por %p122, %p123
      %p125 = scmp.ne.s32.totalorder %s117, %s119
      %p126 = scmp.eq.s32.totalorder %s20, 1
      %p127 = por %p125, %p126
      %p128 = scmp.ne.s32.totalorder %s119, %s120
      %p129 = scmp.eq.s32.totalorder %s20, 0
      %p130 = por %p128, %p129
      %p131 = scmp.ne.s32.totalorder %s119, %s120
      %p132 = scmp.eq.s32.totalorder %s21, 1
      %p133 = por %p131, %p132
      %p135 = scmp.ne.s32.totalorder %s120, %s134
      %p136 = scmp.eq.s32.totalorder %s21, 0
      %p137 = por %p135, %p136
      %s139 = sadd.s32 %s138, 1
      %p142 = scmp.eq.s32.totalorder %s15, 1
      %p143 = scmp.ne.s32.totalorder %s138, %s140
      %p144 = scmp.eq.s32.totalorder %s15, 0
      %p145 = por %p143, %p144
      %p146 = scmp.ne.s32.totalorder %s138, %s140
      %p147 = scmp.eq.s32.totalorder %s20, 1
      %p148 = por %p146, %p147
      %p149 = scmp.ne.s32.totalorder %s140, %s141
      %p150 = scmp.eq.s32.totalorder %s20, 0
      %p151 = por %p149, %p150
      %p152 = scmp.ne.s32.totalorder %s140, %s141
      %p153 = scmp.eq.s32.totalorder %s21, 1
      %p154 = por %p152, %p153
      %p156 = scmp.ne.s32.totalorder %s141, %s155
      %p157 = scmp.eq.s32.totalorder %s21, 0
      %p158 = por %p156, %p157
      %s160 = sadd.s32 %s159, 1
      %p163 = scmp.eq.s32.totalorder %s15, 1
      %p164 = scmp.ne.s32.totalorder %s159, %s161
      %p165 = scmp.eq.s32.totalorder %s15, 0
      %p166 = por %p164, %p165
      %p167 = scmp.ne.s32.totalorder %s159, %s161
      %p168 = scmp.eq.s32.totalorder %s20, 1
      %p169 = por %p167, %p168
      %p170 = scmp.ne.s32.totalorder %s161, %s162
      %p171 = scmp.eq.s32.totalorder %s20, 0
      %p172 = por %p170, %p171
      %p173 = scmp.ne.s32.totalorder %s161, %s162
      %p174 = scmp.eq.s32.totalorder %s21, 1
      %p175 = por %p173, %p174
      %p177 = scmp.ne.s32.totalorder %s162, %s176
      %p178 = scmp.eq.s32.totalorder %s21, 0
      %p179 = por %p177, %p178
      %s181 = sadd.s32 %s180, 1
      %p184 = scmp.eq.s32.totalorder %s15, 1
      %p185 = scmp.ne.s32.totalorder %s180, %s182
      %p186 = scmp.eq.s32.totalorder %s15, 0
      %p187 = por %p185, %p186
      %p188 = scmp.ne.s32.totalorder %s180, %s182
      %p189 = scmp.eq.s32.totalorder %s20, 1
      %p190 = por %p188, %p189
      %p191 = scmp.ne.s32.totalorder %s182, %s183
      %p192 = scmp.eq.s32.totalorder %s20, 0
      %p193 = por %p191, %p192
      %p194 = scmp.ne.s32.totalorder %s182, %s183
      %p195 = scmp.eq.s32.totalorder %s21, 1
      %p196 = por %p194, %p195
      %p198 = scmp.ne.s32.totalorder %s183, %s197
      %p199 = scmp.eq.s32.totalorder %s21, 0
      %p200 = por %p198, %p199
      %s201 = ssub.s32 %s15, %s22
      %p202 = scmp.eq.s32.totalorder %s201, 0
      %s204 = sadd.s32 %s203, 1
      %s205 = scalar_select %p202, %s203, %s204
      %p208 = pneg %p202
      %p209 = scmp.eq.s32.totalorder %s15, 1
      %p210 = por %p208, %p209
      %p211 = scmp.ne.s32.totalorder %s203, %s206
      %p212 = scmp.eq.s32.totalorder %s15, 0
      %p213 = por %p211, %p212
      %p214 = scmp.ne.s32.totalorder %s203, %s206
      %p215 = scmp.eq.s32.totalorder %s20, 1
      %p216 = por %p214, %p215
      %p217 = scmp.ne.s32.totalorder %s206, %s207
      %p218 = scmp.eq.s32.totalorder %s20, 0
      %p219 = por %p217, %p218
      %p220 = scmp.ne.s32.totalorder %s206, %s207
      %p221 = scmp.eq.s32.totalorder %s21, 1
      %p222 = por %p220, %p221
      %p224 = scmp.ne.s32.totalorder %s207, %s223
      %p225 = scmp.eq.s32.totalorder %s21, 0
      %p226 = por %p224, %p225
      %p227 = scmp.le.s32.totalorder 1, %s15
      %p228 = scmp.lt.s32.totalorder %s15, 3
      %p229 = pnand %p227, %p228
      %p230 = pneg %p229
      // Predicated region
      $region9: #{cross_attention_block_forward.16} parent=5 // pred_check
        _
      $region10: #{cross_attention_block_forward.16} parent=5 // pred_check_branch
        %232 = sbr.rel (%p229) target = $region12
      $region11: #{cross_attention_block_forward.16} parent=5 // pred_region
        %s233 = ssub.s32 %s15, 1
        // Predicated region
        $region13: #{cross_attention_block_forward.16} parent=11 // pred_check
          %p234 = pneg %p88
        $region14: #{cross_attention_block_forward.16} parent=11 // pred_check_branch
          %236 = sbr.rel (%p234) target = $region16
        $region15: #{cross_attention_block_forward.16} parent=11 // pred_region
          _
        $region16: #{cross_attention_block_forward.16} parent=11 // pred_fallthru
          _
        // Predicated region
        $region17: #{cross_attention_block_forward.16} parent=11 // pred_check
          %p237 = pneg %p109
        $region18: #{cross_attention_block_forward.16} parent=11 // pred_check_branch
          %239 = sbr.rel (%p237) target = $region20
        $region19: #{cross_attention_block_forward.16} parent=11 // pred_region
          _
        $region20: #{cross_attention_block_forward.16} parent=11 // pred_fallthru
          _
        // Predicated region
        $region21: #{cross_attention_block_forward.16} parent=11 // pred_check
          %p240 = pneg %p130
        $region22: #{cross_attention_block_forward.16} parent=11 // pred_check_branch
          %242 = sbr.rel (%p240) target = $region24
        $region23: #{cross_attention_block_forward.16} parent=11 // pred_region
          %244 = vsyncadd [#allocation3], 0
          %s245 = sshll.u32 %s4, 4
          %s246 = int_to_ptr.hbm [resolvable:$true] %s245
          %s247 = sshll.u32 [#allocation2], 4
          %s248 = int_to_ptr.vmem [resolvable:$true] %s247
          %253 = dma.hbm_to_vmem [thread:$0]  %s246, 2048, %s248, [#allocation3], 128, 128, 8
        $region24: #{cross_attention_block_forward.16} parent=11 // pred_fallthru
          _
        // Predicated region
        $region25: #{cross_attention_block_forward.16} parent=11 // pred_check
          %p254 = pneg %p151
        $region26: #{cross_attention_block_forward.16} parent=11 // pred_check_branch
          %256 = sbr.rel (%p254) target = $region28
        $region27: #{cross_attention_block_forward.16} parent=11 // pred_region
          _
        $region28: #{cross_attention_block_forward.16} parent=11 // pred_fallthru
          _
        // Predicated region
        $region29: #{cross_attention_block_forward.16} parent=11 // pred_check
          %p257 = pneg %p172
        $region30: #{cross_attention_block_forward.16} parent=11 // pred_check_branch
          %259 = sbr.rel (%p257) target = $region32
        $region31: #{cross_attention_block_forward.16} parent=11 // pred_region
          _
        $region32: #{cross_attention_block_forward.16} parent=11 // pred_fallthru
          _
        // Predicated region
        $region33: #{cross_attention_block_forward.16} parent=11 // pred_check
          %p260 = pneg %p193
        $region34: #{cross_attention_block_forward.16} parent=11 // pred_check_branch
          %262 = sbr.rel (%p260) target = $region36
        $region35: #{cross_attention_block_forward.16} parent=11 // pred_region
          _
        $region36: #{cross_attention_block_forward.16} parent=11 // pred_fallthru
          _
      $region12: #{cross_attention_block_forward.16} parent=5 // pred_fallthru
        _
      %p263 = scmp.lt.s32.totalorder %s15, 2
      // Predicated region
      $region37: #{cross_attention_block_forward.16} parent=5 // pred_check
        %p264 = pneg %p263
      $region38: #{cross_attention_block_forward.16} parent=5 // pred_check_branch
        %266 = sbr.rel (%p264) target = $region40
      $region39: #{cross_attention_block_forward.16} parent=5 // pred_region
        // Predicated region
        $region41: #{cross_attention_block_forward.16} parent=39 // pred_check
          %p267 = pneg %p35
        $region42: #{cross_attention_block_forward.16} parent=39 // pred_check_branch
          %269 = sbr.rel (%p267) target = $region44
        $region43: #{cross_attention_block_forward.16} parent=39 // pred_region
          %p270 = scmp.lt.s32.totalorder %s15, 1
          %s271 = scalar_select %p270, %s15, 1
          %s272 = smul.addr %s271, 8
          %s273 = smul.addr %s272, 4
          %s274 = scalar_lea.vmem %s0, %s273
        $region44: #{cross_attention_block_forward.16} parent=39 // pred_fallthru
          _
        // Predicated region
        $region45: #{cross_attention_block_forward.16} parent=39 // pred_check
          %p275 = pneg %p61
        $region46: #{cross_attention_block_forward.16} parent=39 // pred_check_branch
          %277 = sbr.rel (%p275) target = $region48
        $region47: #{cross_attention_block_forward.16} parent=39 // pred_region
          %p278 = scmp.lt.s32.totalorder %s15, 1
          %s279 = scalar_select %p278, %s15, 1
          %s280 = smul.addr %s279, 8
          %s281 = smul.addr %s280, 4
          %s282 = scalar_lea.vmem %s1, %s281
        $region48: #{cross_attention_block_forward.16} parent=39 // pred_fallthru
          _
      $region40: #{cross_attention_block_forward.16} parent=5 // pred_fallthru
        _
      %p283 = scmp.le.s32.totalorder 1, %s15
      %p284 = scmp.lt.s32.totalorder %s15, 3
      %p285 = pnand %p283, %p284
      %p286 = pneg %p285
      // Predicated region
      $region49: #{cross_attention_block_forward.16} parent=5 // pred_check
        _
      $region50: #{cross_attention_block_forward.16} parent=5 // pred_check_branch
        %288 = sbr.rel (%p285) target = $region52
      $region51: #{cross_attention_block_forward.16} parent=5 // pred_region
        %s289 = ssub.s32 %s15, 1
        // Predicated region
        $region53: #{cross_attention_block_forward.16} parent=51 // pred_check
          %p290 = pneg %p130
        $region54: #{cross_attention_block_forward.16} parent=51 // pred_check_branch
          %292 = sbr.rel (%p290) target = $region56
        $region55: #{cross_attention_block_forward.16} parent=51 // pred_region
          %294 = dma.done [#allocation3], 2048
        $region56: #{cross_attention_block_forward.16} parent=51 // pred_fallthru
          _
        %p295 = scmp.lt.s32.totalorder %s20, 1
        %s296 = scalar_select %p295, %s20, 1
        %s297 = smul.addr %s296, 8
        %s298 = smul.addr %s297, 4
        %s299 = scalar_lea.vmem %s0, %s298
        %p300 = pneg %p41
        %p301 = pneg %p38
        %p302 = scmp.lt.s32.totalorder %s20, 1
        %s303 = scalar_select %p302, %s20, 1
        %s304 = smul.addr %s303, 8
        %s305 = smul.addr %s304, 4
        %s306 = scalar_lea.vmem %s1, %s305
        %p307 = pneg %p67
        %p308 = pneg %p64
        %p309 = pneg %p88
        %p310 = pneg %p85
        %p311 = pneg %p109
        %p312 = pneg %p106
        %p313 = pneg %p130
        %p314 = pneg %p127
        %p315 = pneg %p151
        %p316 = pneg %p148
        %p317 = pneg %p172
        %p318 = pneg %p169
        %p319 = pneg %p193
        %p320 = pneg %p190
        %p321 = pneg %p219
        %p322 = pneg %p216
        %p323 = scmp.lt.s32.totalorder %s20, 1
        %s324 = scalar_select %p323, %s20, 1
        %s325 = smul.addr %s324, 16
        %s326 = smul.addr %s325, 4
        %s327 = scalar_lea.vmem %s8, %s326
        %p328 = scmp.lt.s32.totalorder %s20, 1
        %s329 = scalar_select %p328, %s20, 1
        %s330 = smul.addr %s329, 8
        %s331 = smul.addr %s330, 4
        %s332 = scalar_lea.vmem %s0, %s331
        %p333 = scmp.lt.s32.totalorder %s20, 1
        %s334 = scalar_select %p333, %s20, 1
        %s335 = smul.addr %s334, 8
        %s336 = smul.addr %s335, 4
        %s337 = scalar_lea.vmem %s1, %s336
        %p338 = scmp.lt.s32.totalorder %s20, 1
        %s339 = scalar_select %p338, %s20, 1
        %s340 = smul.addr %s339, 16
        %s341 = smul.addr %s340, 4
        %s342 = scalar_lea.vmem %s8, %s341
        %v344 = vld [vmem:[%s332] sm:$0xf]
        %v345 = vld [vmem:[%s332 + $0x4] sm:$0xf]
        %v346 = vld [vmem:[%s332 + $0x8] sm:$0xf]
        %v347 = vld [vmem:[%s332 + $0xc] sm:$0xf]
        %v348 = vld [vmem:[%s332 + $0x10] sm:$0xf]
        %v349 = vld [vmem:[%s332 + $0x14] sm:$0xf]
        %v350 = vld [vmem:[%s332 + $0x18] sm:$0xf]
        %v351 = vld [vmem:[%s332 + $0x1c] sm:$0xf]
        %v352 = vunpack.c.l.bf16 %v344
        %v353 = vunpack.c.l.bf16 %v345
        %v354 = vunpack.c.l.bf16 %v346
        %v355 = vunpack.c.l.bf16 %v347
        %v356 = vunpack.c.l.bf16 %v348
        %v357 = vunpack.c.l.bf16 %v349
        %v358 = vunpack.c.l.bf16 %v350
        %v359 = vunpack.c.l.bf16 %v351
        %v360 = vld [vmem:[%s337] sm:$0xf]
        %v361 = vld [vmem:[%s337 + $0x4] sm:$0xf]
        %v362 = vld [vmem:[%s337 + $0x8] sm:$0xf]
        %v363 = vld [vmem:[%s337 + $0xc] sm:$0xf]
        %v364 = vld [vmem:[%s337 + $0x10] sm:$0xf]
        %v365 = vld [vmem:[%s337 + $0x14] sm:$0xf]
        %v366 = vld [vmem:[%s337 + $0x18] sm:$0xf]
        %v367 = vld [vmem:[%s337 + $0x1c] sm:$0xf]
        %v368 = vunpack.c.l.bf16 %v360
        %v369 = vunpack.c.l.bf16 %v361
        %v370 = vunpack.c.l.bf16 %v362
        %v371 = vunpack.c.l.bf16 %v363
        %v372 = vunpack.c.l.bf16 %v364
        %v373 = vunpack.c.l.bf16 %v365
        %v374 = vunpack.c.l.bf16 %v366
        %v375 = vunpack.c.l.bf16 %v367
        %v376 = vld [vmem:[%s2] sm:$0x1]
        %v377 = vld [vmem:[%s3] sm:$0x1]
        %378 = vadd.xlane.f32.xlu0 %v352
        %v379 = vpop.xlane.xlu0 %378
        %380 = vadd.xlane.f32.xlu0 %v353
        %v381 = vpop.xlane.xlu0 %380
        %382 = vadd.xlane.f32.xlu0 %v354
        %v383 = vpop.xlane.xlu0 %382
        %384 = vadd.xlane.f32.xlu0 %v355
        %v385 = vpop.xlane.xlu0 %384
        %386 = vadd.xlane.f32.xlu0 %v356
        %v387 = vpop.xlane.xlu0 %386
        %388 = vadd.xlane.f32.xlu0 %v357
        %v389 = vpop.xlane.xlu0 %388
        %390 = vadd.xlane.f32.xlu0 %v358
        %v391 = vpop.xlane.xlu0 %390
        %392 = vadd.xlane.f32.xlu0 %v359
        %v393 = vpop.xlane.xlu0 %392
        %v394 = vrcp.pop 128.0
        %v395 = vmul.f32 128.0, %v394
        %v396 = vsub.f32 1.0, %v395
        %v397 = vmul.f32 %v394, %v396
        %v398 = vadd.f32 %v394, %v397
        %vm399 = vweird.f32 %v394
        %v400 = vsel %vm399, %v394, %v398
        %v401 = vmul.f32 %v379, %v400
        %v402 = vmul.f32 %v381, %v400
        %v403 = vmul.f32 %v383, %v400
        %v404 = vmul.f32 %v385, %v400
        %v405 = vmul.f32 %v387, %v400
        %v406 = vmul.f32 %v389, %v400
        %v407 = vmul.f32 %v391, %v400
        %v408 = vmul.f32 %v393, %v400
        %v409 = vsub.f32 %v352, %v401
        %v410 = vsub.f32 %v353, %v402
        %v411 = vsub.f32 %v354, %v403
        %v412 = vsub.f32 %v355, %v404
        %v413 = vsub.f32 %v356, %v405
        %v414 = vsub.f32 %v357, %v406
        %v415 = vsub.f32 %v358, %v407
        %v416 = vsub.f32 %v359, %v408
        %v417 = vmul.f32 %v409, %v409
        %v418 = vmul.f32 %v410, %v410
        %v419 = vmul.f32 %v411, %v411
        %v420 = vmul.f32 %v412, %v412
        %v421 = vmul.f32 %v413, %v413
        %v422 = vmul.f32 %v414, %v414
        %v423 = vmul.f32 %v415, %v415
        %v424 = vmul.f32 %v416, %v416
        %425 = vadd.xlane.f32.xlu0 %v417
        %v426 = vpop.xlane.xlu0 %425
        %427 = vadd.xlane.f32.xlu0 %v418
        %v428 = vpop.xlane.xlu0 %427
        %429 = vadd.xlane.f32.xlu0 %v419
        %v430 = vpop.xlane.xlu0 %429
        %431 = vadd.xlane.f32.xlu0 %v420
        %v432 = vpop.xlane.xlu0 %431
        %433 = vadd.xlane.f32.xlu0 %v421
        %v434 = vpop.xlane.xlu0 %433
        %435 = vadd.xlane.f32.xlu0 %v422
        %v436 = vpop.xlane.xlu0 %435
        %437 = vadd.xlane.f32.xlu0 %v423
        %v438 = vpop.xlane.xlu0 %437
        %439 = vadd.xlane.f32.xlu0 %v424
        %v440 = vpop.xlane.xlu0 %439
        %v441 = vmul.f32 %v426, %v400
        %v442 = vmul.f32 %v428, %v400
        %v443 = vmul.f32 %v430, %v400
        %v444 = vmul.f32 %v432, %v400
        %v445 = vmul.f32 %v434, %v400
        %v446 = vmul.f32 %v436, %v400
        %v447 = vmul.f32 %v438, %v400
        %v448 = vmul.f32 %v440, %v400
        %v449 = vadd.f32 %v441, 1e-05
        %v450 = vadd.f32 %v442, 1e-05
        %v451 = vadd.f32 %v443, 1e-05
        %v452 = vadd.f32 %v444, 1e-05
        %v453 = vadd.f32 %v445, 1e-05
        %v454 = vadd.f32 %v446, 1e-05
        %v455 = vadd.f32 %v447, 1e-05
        %v456 = vadd.f32 %v448, 1e-05
        %v457 = vrsqrt.pop %v449
        %v458 = vmul.f32 %v457, %v449
        %v459 = vmul.f32 %v458, %v457
        %v460 = vmul.f32 0.5, %v459
        %v461 = vsub.f32 1.5, %v460
        %v462 = vmul.f32 %v457, %v461
        %vm463 = vweird.f32 %v449
        %vm464 = vweird.f32 %v457
        %vm465 = vmor %vm463, %vm464
        %v466 = vsel %vm465, %v457, %v462
        %v467 = vrsqrt.pop %v450
        %v468 = vmul.f32 %v467, %v450
        %v469 = vmul.f32 %v468, %v467
        %v470 = vmul.f32 0.5, %v469
        %v471 = vsub.f32 1.5, %v470
        %v472 = vmul.f32 %v467, %v471
        %vm473 = vweird.f32 %v450
        %vm474 = vweird.f32 %v467
        %vm475 = vmor %vm473, %vm474
        %v476 = vsel %vm475, %v467, %v472
        %v477 = vrsqrt.pop %v451
        %v478 = vmul.f32 %v477, %v451
        %v479 = vmul.f32 %v478, %v477
        %v480 = vmul.f32 0.5, %v479
        %v481 = vsub.f32 1.5, %v480
        %v482 = vmul.f32 %v477, %v481
        %vm483 = vweird.f32 %v451
        %vm484 = vweird.f32 %v477
        %vm485 = vmor %vm483, %vm484
        %v486 = vsel %vm485, %v477, %v482
        %v487 = vrsqrt.pop %v452
        %v488 = vmul.f32 %v487, %v452
        %v489 = vmul.f32 %v488, %v487
        %v490 = vmul.f32 0.5, %v489
        %v491 = vsub.f32 1.5, %v490
        %v492 = vmul.f32 %v487, %v491
        %vm493 = vweird.f32 %v452
        %vm494 = vweird.f32 %v487
        %vm495 = vmor %vm493, %vm494
        %v496 = vsel %vm495, %v487, %v492
        %v497 = vrsqrt.pop %v453
        %v498 = vmul.f32 %v497, %v453
        %v499 = vmul.f32 %v498, %v497
        %v500 = vmul.f32 0.5, %v499
        %v501 = vsub.f32 1.5, %v500
        %v502 = vmul.f32 %v497, %v501
        %vm503 = vweird.f32 %v453
        %vm504 = vweird.f32 %v497
        %vm505 = vmor %vm503, %vm504
        %v506 = vsel %vm505, %v497, %v502
        %v507 = vrsqrt.pop %v454
        %v508 = vmul.f32 %v507, %v454
        %v509 = vmul.f32 %v508, %v507
        %v510 = vmul.f32 0.5, %v509
        %v511 = vsub.f32 1.5, %v510
        %v512 = vmul.f32 %v507, %v511
        %vm513 = vweird.f32 %v454
        %vm514 = vweird.f32 %v507
        %vm515 = vmor %vm513, %vm514
        %v516 = vsel %vm515, %v507, %v512
        %v517 = vrsqrt.pop %v455
        %v518 = vmul.f32 %v517, %v455
        %v519 = vmul.f32 %v518, %v517
        %v520 = vmul.f32 0.5, %v519
        %v521 = vsub.f32 1.5, %v520
        %v522 = vmul.f32 %v517, %v521
        %vm523 = vweird.f32 %v455
        %vm524 = vweird.f32 %v517
        %vm525 = vmor %vm523, %vm524
        %v526 = vsel %vm525, %v517, %v522
        %v527 = vrsqrt.pop %v456
        %v528 = vmul.f32 %v527, %v456
        %v529 = vmul.f32 %v528, %v527
        %v530 = vmul.f32 0.5, %v529
        %v531 = vsub.f32 1.5, %v530
        %v532 = vmul.f32 %v527, %v531
        %vm533 = vweird.f32 %v456
        %vm534 = vweird.f32 %v527
        %vm535 = vmor %vm533, %vm534
        %v536 = vsel %vm535, %v527, %v532
        %v537 = vmul.f32 %v409, %v466
        %v538 = vmul.f32 %v410, %v476
        %v539 = vmul.f32 %v411, %v486
        %v540 = vmul.f32 %v412, %v496
        %v541 = vmul.f32 %v413, %v506
        %v542 = vmul.f32 %v414, %v516
        %v543 = vmul.f32 %v415, %v526
        %v544 = vmul.f32 %v416, %v536
        %v546 = vperm.slane %v376, 0
        %v548 = vmul.f32 %v537, %v546
        %v549 = vmul.f32 %v538, %v546
        %v550 = vmul.f32 %v539, %v546
        %v551 = vmul.f32 %v540, %v546
        %v552 = vmul.f32 %v541, %v546
        %v553 = vmul.f32 %v542, %v546
        %v554 = vmul.f32 %v543, %v546
        %v555 = vmul.f32 %v544, %v546
        %v557 = vperm.slane %v377, 0
        %v559 = vadd.f32 %v548, %v557
        %v560 = vadd.f32 %v549, %v557
        %v561 = vadd.f32 %v550, %v557
        %v562 = vadd.f32 %v551, %v557
        %v563 = vadd.f32 %v552, %v557
        %v564 = vadd.f32 %v553, %v557
        %v565 = vadd.f32 %v554, %v557
        %v566 = vadd.f32 %v555, %v557
        %567 = vadd.xlane.f32.xlu0 %v368
        %v568 = vpop.xlane.xlu0 %567
        %569 = vadd.xlane.f32.xlu0 %v369
        %v570 = vpop.xlane.xlu0 %569
        %571 = vadd.xlane.f32.xlu0 %v370
        %v572 = vpop.xlane.xlu0 %571
        %573 = vadd.xlane.f32.xlu0 %v371
        %v574 = vpop.xlane.xlu0 %573
        %575 = vadd.xlane.f32.xlu0 %v372
        %v576 = vpop.xlane.xlu0 %575
        %577 = vadd.xlane.f32.xlu0 %v373
        %v578 = vpop.xlane.xlu0 %577
        %579 = vadd.xlane.f32.xlu0 %v374
        %v580 = vpop.xlane.xlu0 %579
        %581 = vadd.xlane.f32.xlu0 %v375
        %v582 = vpop.xlane.xlu0 %581
        %v583 = vmul.f32 %v568, %v400
        %v584 = vmul.f32 %v570, %v400
        %v585 = vmul.f32 %v572, %v400
        %v586 = vmul.f32 %v574, %v400
        %v587 = vmul.f32 %v576, %v400
        %v588 = vmul.f32 %v578, %v400
        %v589 = vmul.f32 %v580, %v400
        %v590 = vmul.f32 %v582, %v400
        %v591 = vsub.f32 %v368, %v583
        %v592 = vsub.f32 %v369, %v584
        %v593 = vsub.f32 %v370, %v585
        %v594 = vsub.f32 %v371, %v586
        %v595 = vsub.f32 %v372, %v587
        %v596 = vsub.f32 %v373, %v588
        %v597 = vsub.f32 %v374, %v589
        %v598 = vsub.f32 %v375, %v590
        %v599 = vmul.f32 %v591, %v591
        %v600 = vmul.f32 %v592, %v592
        %v601 = vmul.f32 %v593, %v593
        %v602 = vmul.f32 %v594, %v594
        %v603 = vmul.f32 %v595, %v595
        %v604 = vmul.f32 %v596, %v596
        %v605 = vmul.f32 %v597, %v597
        %v606 = vmul.f32 %v598, %v598
        %607 = vadd.xlane.f32.xlu0 %v599
        %v608 = vpop.xlane.xlu0 %607
        %609 = vadd.xlane.f32.xlu0 %v600
        %v610 = vpop.xlane.xlu0 %609
        %611 = vadd.xlane.f32.xlu0 %v601
        %v612 = vpop.xlane.xlu0 %611
        %613 = vadd.xlane.f32.xlu0 %v602
        %v614 = vpop.xlane.xlu0 %613
        %615 = vadd.xlane.f32.xlu0 %v603
        %v616 = vpop.xlane.xlu0 %615
        %617 = vadd.xlane.f32.xlu0 %v604
        %v618 = vpop.xlane.xlu0 %617
        %619 = vadd.xlane.f32.xlu0 %v605
        %v620 = vpop.xlane.xlu0 %619
        %621 = vadd.xlane.f32.xlu0 %v606
        %v622 = vpop.xlane.xlu0 %621
        %v623 = vmul.f32 %v608, %v400
        %v624 = vmul.f32 %v610, %v400
        %v625 = vmul.f32 %v612, %v400
        %v626 = vmul.f32 %v614, %v400
        %v627 = vmul.f32 %v616, %v400
        %v628 = vmul.f32 %v618, %v400
        %v629 = vmul.f32 %v620, %v400
        %v630 = vmul.f32 %v622, %v400
        %v631 = vadd.f32 %v623, 1e-05
        %v632 = vadd.f32 %v624, 1e-05
        %v633 = vadd.f32 %v625, 1e-05
        %v634 = vadd.f32 %v626, 1e-05
        %v635 = vadd.f32 %v627, 1e-05
        %v636 = vadd.f32 %v628, 1e-05
        %v637 = vadd.f32 %v629, 1e-05
        %v638 = vadd.f32 %v630, 1e-05
        %v639 = vrsqrt.pop %v631
        %v640 = vmul.f32 %v639, %v631
        %v641 = vmul.f32 %v640, %v639
        %v642 = vmul.f32 0.5, %v641
        %v643 = vsub.f32 1.5, %v642
        %v644 = vmul.f32 %v639, %v643
        %vm645 = vweird.f32 %v631
        %vm646 = vweird.f32 %v639
        %vm647 = vmor %vm645, %vm646
        %v648 = vsel %vm647, %v639, %v644
        %v649 = vrsqrt.pop %v632
        %v650 = vmul.f32 %v649, %v632
        %v651 = vmul.f32 %v650, %v649
        %v652 = vmul.f32 0.5, %v651
        %v653 = vsub.f32 1.5, %v652
        %v654 = vmul.f32 %v649, %v653
        %vm655 = vweird.f32 %v632
        %vm656 = vweird.f32 %v649
        %vm657 = vmor %vm655, %vm656
        %v658 = vsel %vm657, %v649, %v654
        %v659 = vrsqrt.pop %v633
        %v660 = vmul.f32 %v659, %v633
        %v661 = vmul.f32 %v660, %v659
        %v662 = vmul.f32 0.5, %v661
        %v663 = vsub.f32 1.5, %v662
        %v664 = vmul.f32 %v659, %v663
        %vm665 = vweird.f32 %v633
        %vm666 = vweird.f32 %v659
        %vm667 = vmor %vm665, %vm666
        %v668 = vsel %vm667, %v659, %v664
        %v669 = vrsqrt.pop %v634
        %v670 = vmul.f32 %v669, %v634
        %v671 = vmul.f32 %v670, %v669
        %v672 = vmul.f32 0.5, %v671
        %v673 = vsub.f32 1.5, %v672
        %v674 = vmul.f32 %v669, %v673
        %vm675 = vweird.f32 %v634
        %vm676 = vweird.f32 %v669
        %vm677 = vmor %vm675, %vm676
        %v678 = vsel %vm677, %v669, %v674
        %v679 = vrsqrt.pop %v635
        %v680 = vmul.f32 %v679, %v635
        %v681 = vmul.f32 %v680, %v679
        %v682 = vmul.f32 0.5, %v681
        %v683 = vsub.f32 1.5, %v682
        %v684 = vmul.f32 %v679, %v683
        %vm685 = vweird.f32 %v635
        %vm686 = vweird.f32 %v679
        %vm687 = vmor %vm685, %vm686
        %v688 = vsel %vm687, %v679, %v684
        %v689 = vrsqrt.pop %v636
        %v690 = vmul.f32 %v689, %v636
        %v691 = vmul.f32 %v690, %v689
        %v692 = vmul.f32 0.5, %v691
        %v693 = vsub.f32 1.5, %v692
        %v694 = vmul.f32 %v689, %v693
        %vm695 = vweird.f32 %v636
        %vm696 = vweird.f32 %v689
        %vm697 = vmor %vm695, %vm696
        %v698 = vsel %vm697, %v689, %v694
        %v699 = vrsqrt.pop %v637
        %v700 = vmul.f32 %v699, %v637
        %v701 = vmul.f32 %v700, %v699
        %v702 = vmul.f32 0.5, %v701
        %v703 = vsub.f32 1.5, %v702
        %v704 = vmul.f32 %v699, %v703
        %vm705 = vweird.f32 %v637
        %vm706 = vweird.f32 %v699
        %vm707 = vmor %vm705, %vm706
        %v708 = vsel %vm707, %v699, %v704
        %v709 = vrsqrt.pop %v638
        %v710 = vmul.f32 %v709, %v638
        %v711 = vmul.f32 %v710, %v709
        %v712 = vmul.f32 0.5, %v711
        %v713 = vsub.f32 1.5, %v712
        %v714 = vmul.f32 %v709, %v713
        %vm715 = vweird.f32 %v638
        %vm716 = vweird.f32 %v709
        %vm717 = vmor %vm715, %vm716
        %v718 = vsel %vm717, %v709, %v714
        %v719 = vmul.f32 %v591, %v648
        %v720 = vmul.f32 %v592, %v658
        %v721 = vmul.f32 %v593, %v668
        %v722 = vmul.f32 %v594, %v678
        %v723 = vmul.f32 %v595, %v688
        %v724 = vmul.f32 %v596, %v698
        %v725 = vmul.f32 %v597, %v708
        %v726 = vmul.f32 %v598, %v718
        %v727 = vmul.f32 %v719, %v546
        %v728 = vmul.f32 %v720, %v546
        %v729 = vmul.f32 %v721, %v546
        %v730 = vmul.f32 %v722, %v546
        %v731 = vmul.f32 %v723, %v546
        %v732 = vmul.f32 %v724, %v546
        %v733 = vmul.f32 %v725, %v546
        %v734 = vmul.f32 %v726, %v546
        %v735 = vadd.f32 %v727, %v557
        %v736 = vadd.f32 %v728, %v557
        %v737 = vadd.f32 %v729, %v557
        %v738 = vadd.f32 %v730, %v557
        %v739 = vadd.f32 %v731, %v557
        %v740 = vadd.f32 %v732, %v557
        %v741 = vadd.f32 %v733, %v557
        %v742 = vadd.f32 %v734, %v557
        %v743 = vmax.f32 %v735, %v739
        %v744 = vmax.f32 %v736, %v740
        %v745 = vmax.f32 %v737, %v741
        %v746 = vmax.f32 %v738, %v742
        %v747 = vmax.f32 %v743, %v744
        %v748 = vmax.f32 %v745, %v746
        %v749 = vmax.f32 %v747, %v748
        %v750 = vrot.slane %v749, 4
        %v751 = vmax.f32 %v749, %v750
        %v752 = vrot.slane %v751, 2
        %v753 = vmax.f32 %v751, %v752
        %v754 = vrot.slane %v753, 1
        %v755 = vmax.f32 %v753, %v754
        %v756 = vsub.f32 %v735, %v755
        %v757 = vsub.f32 %v736, %v755
        %v758 = vsub.f32 %v737, %v755
        %v759 = vsub.f32 %v738, %v755
        %v760 = vsub.f32 %v739, %v755
        %v761 = vsub.f32 %v740, %v755
        %v762 = vsub.f32 %v741, %v755
        %v763 = vsub.f32 %v742, %v755
        %v764 = vmul.f32 %v756, 1.442695
        %v765 = vpow.pop %v764
        %v766 = vmul.f32 %v757, 1.442695
        %v767 = vpow.pop %v766
        %v768 = vmul.f32 %v758, 1.442695
        %v769 = vpow.pop %v768
        %v770 = vmul.f32 %v759, 1.442695
        %v771 = vpow.pop %v770
        %v772 = vmul.f32 %v760, 1.442695
        %v773 = vpow.pop %v772
        %v774 = vmul.f32 %v761, 1.442695
        %v775 = vpow.pop %v774
        %v776 = vmul.f32 %v762, 1.442695
        %v777 = vpow.pop %v776
        %v778 = vmul.f32 %v763, 1.442695
        %v779 = vpow.pop %v778
        %v780 = vadd.f32 %v765, %v767
        %v781 = vadd.f32 %v780, %v769
        %v782 = vadd.f32 %v781, %v771
        %v783 = vadd.f32 %v782, %v773
        %v784 = vadd.f32 %v783, %v775
        %v785 = vadd.f32 %v784, %v777
        %v786 = vadd.f32 %v785, %v779
        %v787 = vrot.slane %v786, 4
        %v788 = vadd.f32 %v786, %v787
        %v789 = vrot.slane %v788, 2
        %v790 = vadd.f32 %v788, %v789
        %v791 = vrot.slane %v790, 1
        %v792 = vadd.f32 %v790, %v791
        %v793 = vrcp.pop %v792
        %v794 = vmul.f32 %v765, %v793
        %v795 = vmul.f32 %v767, %v793
        %v796 = vmul.f32 %v769, %v793
        %v797 = vmul.f32 %v771, %v793
        %v798 = vmul.f32 %v773, %v793
        %v799 = vmul.f32 %v775, %v793
        %v800 = vmul.f32 %v777, %v793
        %v801 = vmul.f32 %v779, %v793
        %802 = vmax.xlane.f32.xlu0 %v735
        %v803 = vpop.xlane.xlu0 %802
        %804 = vmax.xlane.f32.xlu0 %v736
        %v805 = vpop.xlane.xlu0 %804
        %806 = vmax.xlane.f32.xlu0 %v737
        %v807 = vpop.xlane.xlu0 %806
        %808 = vmax.xlane.f32.xlu0 %v738
        %v809 = vpop.xlane.xlu0 %808
        %810 = vmax.xlane.f32.xlu0 %v739
        %v811 = vpop.xlane.xlu0 %810
        %812 = vmax.xlane.f32.xlu0 %v740
        %v813 = vpop.xlane.xlu0 %812
        %814 = vmax.xlane.f32.xlu0 %v741
        %v815 = vpop.xlane.xlu0 %814
        %816 = vmax.xlane.f32.xlu0 %v742
        %v817 = vpop.xlane.xlu0 %816
        %v818 = vsub.f32 %v735, %v803
        %v819 = vsub.f32 %v736, %v805
        %v820 = vsub.f32 %v737, %v807
        %v821 = vsub.f32 %v738, %v809
        %v822 = vsub.f32 %v739, %v811
        %v823 = vsub.f32 %v740, %v813
        %v824 = vsub.f32 %v741, %v815
        %v825 = vsub.f32 %v742, %v817
        %v826 = vmul.f32 %v818, 1.442695
        %v827 = vpow.pop %v826
        %v828 = vmul.f32 %v819, 1.442695
        %v829 = vpow.pop %v828
        %v830 = vmul.f32 %v820, 1.442695
        %v831 = vpow.pop %v830
        %v832 = vmul.f32 %v821, 1.442695
        %v833 = vpow.pop %v832
        %v834 = vmul.f32 %v822, 1.442695
        %v835 = vpow.pop %v834
        %v836 = vmul.f32 %v823, 1.442695
        %v837 = vpow.pop %v836
        %v838 = vmul.f32 %v824, 1.442695
        %v839 = vpow.pop %v838
        %v840 = vmul.f32 %v825, 1.442695
        %v841 = vpow.pop %v840
        %842 = vadd.xlane.f32.xlu0 %v827
        %v843 = vpop.xlane.xlu0 %842
        %844 = vadd.xlane.f32.xlu0 %v829
        %v845 = vpop.xlane.xlu0 %844
        %846 = vadd.xlane.f32.xlu0 %v831
        %v847 = vpop.xlane.xlu0 %846
        %848 = vadd.xlane.f32.xlu0 %v833
        %v849 = vpop.xlane.xlu0 %848
        %850 = vadd.xlane.f32.xlu0 %v835
        %v851 = vpop.xlane.xlu0 %850
        %852 = vadd.xlane.f32.xlu0 %v837
        %v853 = vpop.xlane.xlu0 %852
        %854 = vadd.xlane.f32.xlu0 %v839
        %v855 = vpop.xlane.xlu0 %854
        %856 = vadd.xlane.f32.xlu0 %v841
        %v857 = vpop.xlane.xlu0 %856
        %v858 = vrcp.pop %v843
        %v859 = vrcp.pop %v845
        %v860 = vrcp.pop %v847
        %v861 = vrcp.pop %v849
        %v862 = vrcp.pop %v851
        %v863 = vrcp.pop %v853
        %v864 = vrcp.pop %v855
        %v865 = vrcp.pop %v857
        %v866 = vmul.f32 %v827, %v858
        %v867 = vmul.f32 %v829, %v859
        %v868 = vmul.f32 %v831, %v860
        %v869 = vmul.f32 %v833, %v861
        %v870 = vmul.f32 %v835, %v862
        %v871 = vmul.f32 %v837, %v863
        %v872 = vmul.f32 %v839, %v864
        %v873 = vmul.f32 %v841, %v865
        %v874 = vpack.c.bf16 %v795, %v794
        %v875 = vpack.c.bf16 %v797, %v796
        %v876 = vpack.c.bf16 %v799, %v798
        %v877 = vpack.c.bf16 %v801, %v800
        %v878 = vpack.c.bf16 %v560, %v559
        %v879 = vpack.c.bf16 %v562, %v561
        %v880 = vpack.c.bf16 %v564, %v563
        %v881 = vpack.c.bf16 %v566, %v565
        %882 = vxpose.xlu0.c.b16.start [1/8] %v874, 128
        %883 = vxpose.xlu0.c.b16.cont [2/8] %v875, 128
        %884 = vxpose.xlu0.c.b16.cont [3/8] %v876, 128
        %885 = vxpose.xlu0.c.b16.cont [4/8] %v877, 128
        %886 = vxpose.xlu0.c.b16.cont [5/8] 0, 128
        %887 = vxpose.xlu0.c.b16.cont [6/8] 0, 128
        %888 = vxpose.xlu0.c.b16.cont [7/8] 0, 128
        %889 = vxpose.xlu0.c.b16.end [8/8] 0, 128
        %v890 = vpop.trf.xlu0
        %v891 = vpop.trf.xlu0
        %v892 = vpop.trf.xlu0
        %v893 = vpop.trf.xlu0
        %v894 = vpop.trf.xlu0
        %v895 = vpop.trf.xlu0
        %v896 = vpop.trf.xlu0
        %v897 = vpop.trf.xlu0
        %vm898 = vcmask 523264
        %v900 = vsel %vm898, %v890, 0
        %v903 = vsel %vm898, %v891, 0
        %v906 = vsel %vm898, %v892, 0
        %v909 = vsel %vm898, %v893, 0
        %v912 = vsel %vm898, %v894, 0
        %v915 = vsel %vm898, %v895, 0
        %v918 = vsel %vm898, %v896, 0
        %v921 = vsel %vm898, %v897, 0
        %923 = vmatpush.bf16.msra.mxu0 0
        %924 = vmatpush.bf16.msra.mxu0 0
        %925 = vmatpush.bf16.msra.mxu0 0
        %926 = vmatpush.bf16.msra.mxu0 0
        %927 = vmatpush.bf16.msra.mxu0 %v881
        %928 = vmatpush.bf16.msra.mxu0 %v880
        %929 = vmatpush.bf16.msra.mxu0 %v879
        %930 = vmatpush.bf16.msra.mxu0 %v878
        %931 = vmatmul.bf16.gmra.mxu0 %v900
        %v932 = vpop.f32.mrf.mxu0
        %v933 = vadd.f32 0.0, %v932
        %v934 = vpop.f32.mrf.mxu0
        %v935 = vadd.f32 0.0, %v934
        %936 = vmatmul.bf16.gmra.mxu0 %v903
        %v937 = vpop.f32.mrf.mxu0
        %v938 = vadd.f32 0.0, %v937
        %v939 = vpop.f32.mrf.mxu0
        %v940 = vadd.f32 0.0, %v939
        %941 = vmatmul.bf16.gmra.mxu0 %v906
        %v942 = vpop.f32.mrf.mxu0
        %v943 = vadd.f32 0.0, %v942
        %v944 = vpop.f32.mrf.mxu0
        %v945 = vadd.f32 0.0, %v944
        %946 = vmatmul.bf16.gmra.mxu0 %v909
        %v947 = vpop.f32.mrf.mxu0
        %v948 = vadd.f32 0.0, %v947
        %v949 = vpop.f32.mrf.mxu0
        %v950 = vadd.f32 0.0, %v949
        %951 = vmatmul.bf16.gmra.mxu0 %v912
        %v952 = vpop.f32.mrf.mxu0
        %v953 = vadd.f32 0.0, %v952
        %v954 = vpop.f32.mrf.mxu0
        %v955 = vadd.f32 0.0, %v954
        %956 = vmatmul.bf16.gmra.mxu0 %v915
        %v957 = vpop.f32.mrf.mxu0
        %v958 = vadd.f32 0.0, %v957
        %v959 = vpop.f32.mrf.mxu0
        %v960 = vadd.f32 0.0, %v959
        %961 = vmatmul.bf16.gmra.mxu0 %v918
        %v962 = vpop.f32.mrf.mxu0
        %v963 = vadd.f32 0.0, %v962
        %v964 = vpop.f32.mrf.mxu0
        %v965 = vadd.f32 0.0, %v964
        %966 = vmatmul.bf16.gmra.mxu0 %v921
        %v967 = vpop.f32.mrf.mxu0
        %v968 = vadd.f32 0.0, %v967
        %v969 = vpop.f32.mrf.mxu0
        %v970 = vadd.f32 0.0, %v969
        %971 = vdwg.mxu0
        %v972 = vpack.c.bf16 %v867, %v866
        %v973 = vpack.c.bf16 %v869, %v868
        %v974 = vpack.c.bf16 %v871, %v870
        %v975 = vpack.c.bf16 %v873, %v872
        %v976 = vpack.c.bf16 %v935, %v933
        %v977 = vpack.c.bf16 %v940, %v938
        %v978 = vpack.c.bf16 %v945, %v943
        %v979 = vpack.c.bf16 %v950, %v948
        %v980 = vpack.c.bf16 %v955, %v953
        %v981 = vpack.c.bf16 %v960, %v958
        %v982 = vpack.c.bf16 %v965, %v963
        %v983 = vpack.c.bf16 %v970, %v968
        %984 = vmatpush.bf16.msra.mxu0 %v983
        %985 = vmatpush.bf16.msra.mxu0 %v982
        %986 = vmatpush.bf16.msra.mxu0 %v981
        %987 = vmatpush.bf16.msra.mxu0 %v980
        %988 = vmatpush.bf16.msra.mxu0 %v979
        %989 = vmatpush.bf16.msra.mxu0 %v978
        %990 = vmatpush.bf16.msra.mxu0 %v977
        %991 = vmatpush.bf16.msra.mxu0 %v976
        %992 = vmatmul.bf16.gmra.mxu0 %v972
        %v993 = vpop.f32.mrf.mxu0
        %v994 = vadd.f32 0.0, %v993
        %v995 = vpop.f32.mrf.mxu0
        %v996 = vadd.f32 0.0, %v995
        %997 = vmatmul.bf16.gmra.mxu0 %v973
        %v998 = vpop.f32.mrf.mxu0
        %v999 = vadd.f32 0.0, %v998
        %v1000 = vpop.f32.mrf.mxu0
        %v1001 = vadd.f32 0.0, %v1000
        %1002 = vmatmul.bf16.gmra.mxu0 %v974
        %v1003 = vpop.f32.mrf.mxu0
        %v1004 = vadd.f32 0.0, %v1003
        %v1005 = vpop.f32.mrf.mxu0
        %v1006 = vadd.f32 0.0, %v1005
        %1007 = vmatmul.bf16.gmra.mxu0 %v975
        %v1008 = vpop.f32.mrf.mxu0
        %v1009 = vadd.f32 0.0, %v1008
        %v1010 = vpop.f32.mrf.mxu0
        %v1011 = vadd.f32 0.0, %v1010
        %1012 = vdwg.mxu0
        %v1013 = vpack.c.bf16 %v996, %v994
        %v1014 = vpack.c.bf16 %v1001, %v999
        %v1015 = vpack.c.bf16 %v1006, %v1004
        %v1016 = vpack.c.bf16 %v1011, %v1009
        %v1017 = vld [vmem:[#allocation2] sm:$0xff]
        %v1018 = vld [vmem:[#allocation2 + $0x8] sm:$0xff]
        %v1019 = vld [vmem:[#allocation2 + $0x10] sm:$0xff]
        %v1020 = vld [vmem:[#allocation2 + $0x18] sm:$0xff]
        %v1021 = vld [vmem:[#allocation2 + $0x20] sm:$0xff]
        %v1022 = vld [vmem:[#allocation2 + $0x28] sm:$0xff]
        %v1023 = vld [vmem:[#allocation2 + $0x30] sm:$0xff]
        %v1024 = vld [vmem:[#allocation2 + $0x38] sm:$0xff]
        %v1025 = vld [vmem:[#allocation2 + $0x40] sm:$0xff]
        %v1026 = vld [vmem:[#allocation2 + $0x48] sm:$0xff]
        %v1027 = vld [vmem:[#allocation2 + $0x50] sm:$0xff]
        %v1028 = vld [vmem:[#allocation2 + $0x58] sm:$0xff]
        %v1029 = vld [vmem:[#allocation2 + $0x60] sm:$0xff]
        %v1030 = vld [vmem:[#allocation2 + $0x68] sm:$0xff]
        %v1031 = vld [vmem:[#allocation2 + $0x70] sm:$0xff]
        %v1032 = vld [vmem:[#allocation2 + $0x78] sm:$0xff]
        %v1033 = vld [vmem:[%s5] sm:$0x3]
        %v1034 = vunpack.c.l.bf16 %v1033
        %v1036 = vperm.slane %v1034, 0
        %v1037 = vperm.slane %v1034, 2
        %v1040 = vperm.slane %v1036, 0
        %v1041 = vperm.slane %v1037, 0
        %v1058 = vunpack.c.l.b16 %v1017
        %v1059 = vunpack.c.h.b16 %v1017
        %v1060 = vunpack.c.l.b16 %v1018
        %v1061 = vunpack.c.h.b16 %v1018
        %v1062 = vunpack.c.l.b16 %v1019
        %v1063 = vunpack.c.h.b16 %v1019
        %v1064 = vunpack.c.l.b16 %v1020
        %v1065 = vunpack.c.h.b16 %v1020
        %v1066 = vunpack.c.l.b16 %v1021
        %v1067 = vunpack.c.h.b16 %v1021
        %v1068 = vunpack.c.l.b16 %v1022
        %v1069 = vunpack.c.h.b16 %v1022
        %v1070 = vunpack.c.l.b16 %v1023
        %v1071 = vunpack.c.h.b16 %v1023
        %v1072 = vunpack.c.l.b16 %v1024
        %v1073 = vunpack.c.h.b16 %v1024
        %v1074 = vunpack.c.l.b16 %v1025
        %v1075 = vunpack.c.h.b16 %v1025
        %v1076 = vunpack.c.l.b16 %v1026
        %v1077 = vunpack.c.h.b16 %v1026
        %v1078 = vunpack.c.l.b16 %v1027
        %v1079 = vunpack.c.h.b16 %v1027
        %v1080 = vunpack.c.l.b16 %v1028
        %v1081 = vunpack.c.h.b16 %v1028
        %v1082 = vunpack.c.l.b16 %v1029
        %v1083 = vunpack.c.h.b16 %v1029
        %v1084 = vunpack.c.l.b16 %v1030
        %v1085 = vunpack.c.h.b16 %v1030
        %v1086 = vunpack.c.l.b16 %v1031
        %v1087 = vunpack.c.h.b16 %v1031
        %v1088 = vunpack.c.l.b16 %v1032
        %v1089 = vunpack.c.h.b16 %v1032
        %v1090 = vpack.c.b16 %v1060, %v1058
        %v1091 = vpack.c.b16 %v1061, %v1059
        %v1092 = vpack.c.b16 %v1064, %v1062
        %v1093 = vpack.c.b16 %v1065, %v1063
        %v1094 = vpack.c.b16 %v1068, %v1066
        %v1095 = vpack.c.b16 %v1069, %v1067
        %v1096 = vpack.c.b16 %v1072, %v1070
        %v1097 = vpack.c.b16 %v1073, %v1071
        %v1098 = vpack.c.b16 %v1076, %v1074
        %v1099 = vpack.c.b16 %v1077, %v1075
        %v1100 = vpack.c.b16 %v1080, %v1078
        %v1101 = vpack.c.b16 %v1081, %v1079
        %v1102 = vpack.c.b16 %v1084, %v1082
        %v1103 = vpack.c.b16 %v1085, %v1083
        %v1104 = vpack.c.b16 %v1088, %v1086
        %v1105 = vpack.c.b16 %v1089, %v1087
        %1122 = vmatpush.bf16.msra.mxu0 %v1104
        %1123 = vmatpush.bf16.msra.mxu0 %v1102
        %1124 = vmatpush.bf16.msra.mxu0 %v1100
        %1125 = vmatpush.bf16.msra.mxu0 %v1098
        %1126 = vmatpush.bf16.msra.mxu0 %v1096
        %1127 = vmatpush.bf16.msra.mxu0 %v1094
        %1128 = vmatpush.bf16.msra.mxu0 %v1092
        %1129 = vmatpush.bf16.msra.mxu0 %v1090
        %1130 = vmatmul.bf16.gmra.mxu0 %v1013
        %v1131 = vpop.f32.mrf.mxu0
        %v1132 = vadd.f32 %v1040, %v1131
        %v1133 = vpop.f32.mrf.mxu0
        %v1134 = vadd.f32 %v1040, %v1133
        %1135 = vmatmul.bf16.gmra.mxu0 %v1014
        %v1136 = vpop.f32.mrf.mxu0
        %v1137 = vadd.f32 %v1040, %v1136
        %v1138 = vpop.f32.mrf.mxu0
        %v1139 = vadd.f32 %v1040, %v1138
        %1140 = vmatmul.bf16.gmra.mxu0 %v1015
        %v1141 = vpop.f32.mrf.mxu0
        %v1142 = vadd.f32 %v1040, %v1141
        %v1143 = vpop.f32.mrf.mxu0
        %v1144 = vadd.f32 %v1040, %v1143
        %1145 = vmatmul.bf16.gmra.mxu0 %v1016
        %v1146 = vpop.f32.mrf.mxu0
        %v1147 = vadd.f32 %v1040, %v1146
        %v1148 = vpop.f32.mrf.mxu0
        %v1149 = vadd.f32 %v1040, %v1148
        %1150 = vdwg.mxu0
        %1151 = vmatpush.bf16.msra.mxu0 %v1105
        %1152 = vmatpush.bf16.msra.mxu0 %v1103
        %1153 = vmatpush.bf16.msra.mxu0 %v1101
        %1154 = vmatpush.bf16.msra.mxu0 %v1099
        %1155 = vmatpush.bf16.msra.mxu0 %v1097
        %1156 = vmatpush.bf16.msra.mxu0 %v1095
        %1157 = vmatpush.bf16.msra.mxu0 %v1093
        %1158 = vmatpush.bf16.msra.mxu0 %v1091
        %1159 = vmatmul.bf16.gmra.mxu0 %v1013
        %v1160 = vpop.f32.mrf.mxu0
        %v1161 = vadd.f32 %v1041, %v1160
        %v1162 = vpop.f32.mrf.mxu0
        %v1163 = vadd.f32 %v1041, %v1162
        %1164 = vmatmul.bf16.gmra.mxu0 %v1014
        %v1165 = vpop.f32.mrf.mxu0
        %v1166 = vadd.f32 %v1041, %v1165
        %v1167 = vpop.f32.mrf.mxu0
        %v1168 = vadd.f32 %v1041, %v1167
        %1169 = vmatmul.bf16.gmra.mxu0 %v1015
        %v1170 = vpop.f32.mrf.mxu0
        %v1171 = vadd.f32 %v1041, %v1170
        %v1172 = vpop.f32.mrf.mxu0
        %v1173 = vadd.f32 %v1041, %v1172
        %1174 = vmatmul.bf16.gmra.mxu0 %v1016
        %v1175 = vpop.f32.mrf.mxu0
        %v1176 = vadd.f32 %v1041, %v1175
        %v1177 = vpop.f32.mrf.mxu0
        %v1178 = vadd.f32 %v1041, %v1177
        %1179 = vdwg.mxu0
        %v1180 = vld [vmem:[%s6] sm:$0x3]
        %v1181 = vld [vmem:[%s7] sm:$0x3]
        %v1182 = vadd.f32 %v1132, %v1161
        %1183 = vadd.xlane.f32.xlu0 %v1182
        %v1184 = vpop.xlane.xlu0 %1183
        %v1185 = vadd.f32 %v1134, %v1163
        %1186 = vadd.xlane.f32.xlu0 %v1185
        %v1187 = vpop.xlane.xlu0 %1186
        %v1188 = vadd.f32 %v1137, %v1166
        %1189 = vadd.xlane.f32.xlu0 %v1188
        %v1190 = vpop.xlane.xlu0 %1189
        %v1191 = vadd.f32 %v1139, %v1168
        %1192 = vadd.xlane.f32.xlu0 %v1191
        %v1193 = vpop.xlane.xlu0 %1192
        %v1194 = vadd.f32 %v1142, %v1171
        %1195 = vadd.xlane.f32.xlu0 %v1194
        %v1196 = vpop.xlane.xlu0 %1195
        %v1197 = vadd.f32 %v1144, %v1173
        %1198 = vadd.xlane.f32.xlu0 %v1197
        %v1199 = vpop.xlane.xlu0 %1198
        %v1200 = vadd.f32 %v1147, %v1176
        %1201 = vadd.xlane.f32.xlu0 %v1200
        %v1202 = vpop.xlane.xlu0 %1201
        %v1203 = vadd.f32 %v1149, %v1178
        %1204 = vadd.xlane.f32.xlu0 %v1203
        %v1205 = vpop.xlane.xlu0 %1204
        %v1206 = vrcp.pop 256.0
        %v1207 = vmul.f32 256.0, %v1206
        %v1208 = vsub.f32 1.0, %v1207
        %v1209 = vmul.f32 %v1206, %v1208
        %v1210 = vadd.f32 %v1206, %v1209
        %vm1211 = vweird.f32 %v1206
        %v1212 = vsel %vm1211, %v1206, %v1210
        %v1213 = vmul.f32 %v1184, %v1212
        %v1214 = vmul.f32 %v1187, %v1212
        %v1215 = vmul.f32 %v1190, %v1212
        %v1216 = vmul.f32 %v1193, %v1212
        %v1217 = vmul.f32 %v1196, %v1212
        %v1218 = vmul.f32 %v1199, %v1212
        %v1219 = vmul.f32 %v1202, %v1212
        %v1220 = vmul.f32 %v1205, %v1212
        %v1221 = vsub.f32 %v1132, %v1213
        %v1222 = vsub.f32 %v1161, %v1213
        %v1223 = vsub.f32 %v1134, %v1214
        %v1224 = vsub.f32 %v1163, %v1214
        %v1225 = vsub.f32 %v1137, %v1215
        %v1226 = vsub.f32 %v1166, %v1215
        %v1227 = vsub.f32 %v1139, %v1216
        %v1228 = vsub.f32 %v1168, %v1216
        %v1229 = vsub.f32 %v1142, %v1217
        %v1230 = vsub.f32 %v1171, %v1217
        %v1231 = vsub.f32 %v1144, %v1218
        %v1232 = vsub.f32 %v1173, %v1218
        %v1233 = vsub.f32 %v1147, %v1219
        %v1234 = vsub.f32 %v1176, %v1219
        %v1235 = vsub.f32 %v1149, %v1220
        %v1236 = vsub.f32 %v1178, %v1220
        %v1237 = vmul.f32 %v1221, %v1221
        %v1238 = vmul.f32 %v1222, %v1222
        %v1239 = vmul.f32 %v1223, %v1223
        %v1240 = vmul.f32 %v1224, %v1224
        %v1241 = vmul.f32 %v1225, %v1225
        %v1242 = vmul.f32 %v1226, %v1226
        %v1243 = vmul.f32 %v1227, %v1227
        %v1244 = vmul.f32 %v1228, %v1228
        %v1245 = vmul.f32 %v1229, %v1229
        %v1246 = vmul.f32 %v1230, %v1230
        %v1247 = vmul.f32 %v1231, %v1231
        %v1248 = vmul.f32 %v1232, %v1232
        %v1249 = vmul.f32 %v1233, %v1233
        %v1250 = vmul.f32 %v1234, %v1234
        %v1251 = vmul.f32 %v1235, %v1235
        %v1252 = vmul.f32 %v1236, %v1236
        %v1253 = vadd.f32 %v1237, %v1238
        %1254 = vadd.xlane.f32.xlu0 %v1253
        %v1255 = vpop.xlane.xlu0 %1254
        %v1256 = vadd.f32 %v1239, %v1240
        %1257 = vadd.xlane.f32.xlu0 %v1256
        %v1258 = vpop.xlane.xlu0 %1257
        %v1259 = vadd.f32 %v1241, %v1242
        %1260 = vadd.xlane.f32.xlu0 %v1259
        %v1261 = vpop.xlane.xlu0 %1260
        %v1262 = vadd.f32 %v1243, %v1244
        %1263 = vadd.xlane.f32.xlu0 %v1262
        %v1264 = vpop.xlane.xlu0 %1263
        %v1265 = vadd.f32 %v1245, %v1246
        %1266 = vadd.xlane.f32.xlu0 %v1265
        %v1267 = vpop.xlane.xlu0 %1266
        %v1268 = vadd.f32 %v1247, %v1248
        %1269 = vadd.xlane.f32.xlu0 %v1268
        %v1270 = vpop.xlane.xlu0 %1269
        %v1271 = vadd.f32 %v1249, %v1250
        %1272 = vadd.xlane.f32.xlu0 %v1271
        %v1273 = vpop.xlane.xlu0 %1272
        %v1274 = vadd.f32 %v1251, %v1252
        %1275 = vadd.xlane.f32.xlu0 %v1274
        %v1276 = vpop.xlane.xlu0 %1275
        %v1277 = vmul.f32 %v1255, %v1212
        %v1278 = vmul.f32 %v1258, %v1212
        %v1279 = vmul.f32 %v1261, %v1212
        %v1280 = vmul.f32 %v1264, %v1212
        %v1281 = vmul.f32 %v1267, %v1212
        %v1282 = vmul.f32 %v1270, %v1212
        %v1283 = vmul.f32 %v1273, %v1212
        %v1284 = vmul.f32 %v1276, %v1212
        %v1285 = vadd.f32 %v1277, 1e-05
        %v1286 = vadd.f32 %v1278, 1e-05
        %v1287 = vadd.f32 %v1279, 1e-05
        %v1288 = vadd.f32 %v1280, 1e-05
        %v1289 = vadd.f32 %v1281, 1e-05
        %v1290 = vadd.f32 %v1282, 1e-05
        %v1291 = vadd.f32 %v1283, 1e-05
        %v1292 = vadd.f32 %v1284, 1e-05
        %v1293 = vrsqrt.pop %v1285
        %v1294 = vmul.f32 %v1293, %v1285
        %v1295 = vmul.f32 %v1294, %v1293
        %v1296 = vmul.f32 0.5, %v1295
        %v1297 = vsub.f32 1.5, %v1296
        %v1298 = vmul.f32 %v1293, %v1297
        %vm1299 = vweird.f32 %v1285
        %vm1300 = vweird.f32 %v1293
        %vm1301 = vmor %vm1299, %vm1300
        %v1302 = vsel %vm1301, %v1293, %v1298
        %v1303 = vrsqrt.pop %v1286
        %v1304 = vmul.f32 %v1303, %v1286
        %v1305 = vmul.f32 %v1304, %v1303
        %v1306 = vmul.f32 0.5, %v1305
        %v1307 = vsub.f32 1.5, %v1306
        %v1308 = vmul.f32 %v1303, %v1307
        %vm1309 = vweird.f32 %v1286
        %vm1310 = vweird.f32 %v1303
        %vm1311 = vmor %vm1309, %vm1310
        %v1312 = vsel %vm1311, %v1303, %v1308
        %v1313 = vrsqrt.pop %v1287
        %v1314 = vmul.f32 %v1313, %v1287
        %v1315 = vmul.f32 %v1314, %v1313
        %v1316 = vmul.f32 0.5, %v1315
        %v1317 = vsub.f32 1.5, %v1316
        %v1318 = vmul.f32 %v1313, %v1317
        %vm1319 = vweird.f32 %v1287
        %vm1320 = vweird.f32 %v1313
        %vm1321 = vmor %vm1319, %vm1320
        %v1322 = vsel %vm1321, %v1313, %v1318
        %v1323 = vrsqrt.pop %v1288
        %v1324 = vmul.f32 %v1323, %v1288
        %v1325 = vmul.f32 %v1324, %v1323
        %v1326 = vmul.f32 0.5, %v1325
        %v1327 = vsub.f32 1.5, %v1326
        %v1328 = vmul.f32 %v1323, %v1327
        %vm1329 = vweird.f32 %v1288
        %vm1330 = vweird.f32 %v1323
        %vm1331 = vmor %vm1329, %vm1330
        %v1332 = vsel %vm1331, %v1323, %v1328
        %v1333 = vrsqrt.pop %v1289
        %v1334 = vmul.f32 %v1333, %v1289
        %v1335 = vmul.f32 %v1334, %v1333
        %v1336 = vmul.f32 0.5, %v1335
        %v1337 = vsub.f32 1.5, %v1336
        %v1338 = vmul.f32 %v1333, %v1337
        %vm1339 = vweird.f32 %v1289
        %vm1340 = vweird.f32 %v1333
        %vm1341 = vmor %vm1339, %vm1340
        %v1342 = vsel %vm1341, %v1333, %v1338
        %v1343 = vrsqrt.pop %v1290
        %v1344 = vmul.f32 %v1343, %v1290
        %v1345 = vmul.f32 %v1344, %v1343
        %v1346 = vmul.f32 0.5, %v1345
        %v1347 = vsub.f32 1.5, %v1346
        %v1348 = vmul.f32 %v1343, %v1347
        %vm1349 = vweird.f32 %v1290
        %vm1350 = vweird.f32 %v1343
        %vm1351 = vmor %vm1349, %vm1350
        %v1352 = vsel %vm1351, %v1343, %v1348
        %v1353 = vrsqrt.pop %v1291
        %v1354 = vmul.f32 %v1353, %v1291
        %v1355 = vmul.f32 %v1354, %v1353
        %v1356 = vmul.f32 0.5, %v1355
        %v1357 = vsub.f32 1.5, %v1356
        %v1358 = vmul.f32 %v1353, %v1357
        %vm1359 = vweird.f32 %v1291
        %vm1360 = vweird.f32 %v1353
        %vm1361 = vmor %vm1359, %vm1360
        %v1362 = vsel %vm1361, %v1353, %v1358
        %v1363 = vrsqrt.pop %v1292
        %v1364 = vmul.f32 %v1363, %v1292
        %v1365 = vmul.f32 %v1364, %v1363
        %v1366 = vmul.f32 0.5, %v1365
        %v1367 = vsub.f32 1.5, %v1366
        %v1368 = vmul.f32 %v1363, %v1367
        %vm1369 = vweird.f32 %v1292
        %vm1370 = vweird.f32 %v1363
        %vm1371 = vmor %vm1369, %vm1370
        %v1372 = vsel %vm1371, %v1363, %v1368
        %v1373 = vmul.f32 %v1221, %v1302
        %v1374 = vmul.f32 %v1222, %v1302
        %v1375 = vmul.f32 %v1223, %v1312
        %v1376 = vmul.f32 %v1224, %v1312
        %v1377 = vmul.f32 %v1225, %v1322
        %v1378 = vmul.f32 %v1226, %v1322
        %v1379 = vmul.f32 %v1227, %v1332
        %v1380 = vmul.f32 %v1228, %v1332
        %v1381 = vmul.f32 %v1229, %v1342
        %v1382 = vmul.f32 %v1230, %v1342
        %v1383 = vmul.f32 %v1231, %v1352
        %v1384 = vmul.f32 %v1232, %v1352
        %v1385 = vmul.f32 %v1233, %v1362
        %v1386 = vmul.f32 %v1234, %v1362
        %v1387 = vmul.f32 %v1235, %v1372
        %v1388 = vmul.f32 %v1236, %v1372
        %v1390 = vperm.slane %v1180, 0
        %v1391 = vperm.slane %v1180, 1
        %v1394 = vmul.f32 %v1373, %v1390
        %v1395 = vmul.f32 %v1374, %v1391
        %v1396 = vmul.f32 %v1375, %v1390
        %v1397 = vmul.f32 %v1376, %v1391
        %v1398 = vmul.f32 %v1377, %v1390
        %v1399 = vmul.f32 %v1378, %v1391
        %v1400 = vmul.f32 %v1379, %v1390
        %v1401 = vmul.f32 %v1380, %v1391
        %v1402 = vmul.f32 %v1381, %v1390
        %v1403 = vmul.f32 %v1382, %v1391
        %v1404 = vmul.f32 %v1383, %v1390
        %v1405 = vmul.f32 %v1384, %v1391
        %v1406 = vmul.f32 %v1385, %v1390
        %v1407 = vmul.f32 %v1386, %v1391
        %v1408 = vmul.f32 %v1387, %v1390
        %v1409 = vmul.f32 %v1388, %v1391
        %v1411 = vperm.slane %v1181, 0
        %v1412 = vperm.slane %v1181, 1
        %v1415 = vadd.f32 %v1394, %v1411
        %v1416 = vadd.f32 %v1395, %v1412
        %v1417 = vadd.f32 %v1396, %v1411
        %v1418 = vadd.f32 %v1397, %v1412
        %v1419 = vadd.f32 %v1398, %v1411
        %v1420 = vadd.f32 %v1399, %v1412
        %v1421 = vadd.f32 %v1400, %v1411
        %v1422 = vadd.f32 %v1401, %v1412
        %v1423 = vadd.f32 %v1402, %v1411
        %v1424 = vadd.f32 %v1403, %v1412
        %v1425 = vadd.f32 %v1404, %v1411
        %v1426 = vadd.f32 %v1405, %v1412
        %v1427 = vadd.f32 %v1406, %v1411
        %v1428 = vadd.f32 %v1407, %v1412
        %v1429 = vadd.f32 %v1408, %v1411
        %v1430 = vadd.f32 %v1409, %v1412
        %v1431 = vadd.f32 %v1415, %v352
        %v1432 = vadd.f32 %v1417, %v353
        %v1433 = vadd.f32 %v1419, %v354
        %v1434 = vadd.f32 %v1421, %v355
        %v1435 = vadd.f32 %v1423, %v356
        %v1436 = vadd.f32 %v1425, %v357
        %v1437 = vadd.f32 %v1427, %v358
        %v1438 = vadd.f32 %v1429, %v359
        %v1439 = vpack.c.bf16 %v1431, %v1431
        %v1440 = vpack.c.bf16 %v1432, %v1432
        %v1441 = vpack.c.bf16 %v1433, %v1433
        %v1442 = vpack.c.bf16 %v1434, %v1434
        %v1443 = vpack.c.bf16 %v1435, %v1435
        %v1444 = vpack.c.bf16 %v1436, %v1436
        %v1445 = vpack.c.bf16 %v1437, %v1437
        %v1446 = vpack.c.bf16 %v1438, %v1438
        %1447 = vst [vmem:[%s342] sm:$0xf] %v1439
        %1448 = vst [vmem:[%s342 + $0x8] sm:$0xf] %v1440
        %1449 = vst [vmem:[%s342 + $0x10] sm:$0xf] %v1441
        %1450 = vst [vmem:[%s342 + $0x18] sm:$0xf] %v1442
        %1451 = vst [vmem:[%s342 + $0x20] sm:$0xf] %v1443
        %1452 = vst [vmem:[%s342 + $0x28] sm:$0xf] %v1444
        %1453 = vst [vmem:[%s342 + $0x30] sm:$0xf] %v1445
        %1454 = vst [vmem:[%s342 + $0x38] sm:$0xf] %v1446
        %v1455 = vadd.f32 %v1416, %v368
        %v1456 = vadd.f32 %v1418, %v369
        %v1457 = vadd.f32 %v1420, %v370
        %v1458 = vadd.f32 %v1422, %v371
        %v1459 = vadd.f32 %v1424, %v372
        %v1460 = vadd.f32 %v1426, %v373
        %v1461 = vadd.f32 %v1428, %v374
        %v1462 = vadd.f32 %v1430, %v375
        %v1463 = vpack.c.bf16 %v1455, %v1455
        %v1464 = vpack.c.bf16 %v1456, %v1456
        %v1465 = vpack.c.bf16 %v1457, %v1457
        %v1466 = vpack.c.bf16 %v1458, %v1458
        %v1467 = vpack.c.bf16 %v1459, %v1459
        %v1468 = vpack.c.bf16 %v1460, %v1460
        %v1469 = vpack.c.bf16 %v1461, %v1461
        %v1470 = vpack.c.bf16 %v1462, %v1462
        %1471 = vst [vmem:[%s342 + $0x4] sm:$0xf] %v1463
        %1472 = vst [vmem:[%s342 + $0xc] sm:$0xf] %v1464
        %1473 = vst [vmem:[%s342 + $0x14] sm:$0xf] %v1465
        %1474 = vst [vmem:[%s342 + $0x1c] sm:$0xf] %v1466
        %1475 = vst [vmem:[%s342 + $0x24] sm:$0xf] %v1467
        %1476 = vst [vmem:[%s342 + $0x2c] sm:$0xf] %v1468
        %1477 = vst [vmem:[%s342 + $0x34] sm:$0xf] %v1469
        %1478 = vst [vmem:[%s342 + $0x3c] sm:$0xf] %v1470
        %p1479 = scmp.lt.s32.totalorder %s20, 1
        %s1480 = scalar_select %p1479, %s20, 1
        %s1481 = smul.addr %s1480, 16
        %s1482 = smul.addr %s1481, 4
        %s1483 = scalar_lea.vmem %s8, %s1482
        // Predicated region
        $region57: #{cross_attention_block_forward.16} parent=51 // pred_check
          %p1484 = pneg %p216
        $region58: #{cross_attention_block_forward.16} parent=51 // pred_check_branch
          %1486 = sbr.rel (%p1484) target = $region60
        $region59: #{cross_attention_block_forward.16} parent=51 // pred_region
          _
        $region60: #{cross_attention_block_forward.16} parent=51 // pred_fallthru
          _
      $region52: #{cross_attention_block_forward.16} parent=5 // pred_fallthru
        _
      %p1487 = scmp.le.s32.totalorder 2, %s15
      // Predicated region
      $region61: #{cross_attention_block_forward.16} parent=5 // pred_check
        %p1488 = pneg %p1487
      $region62: #{cross_attention_block_forward.16} parent=5 // pred_check_branch
        %1490 = sbr.rel (%p1488) target = $region64
      $region63: #{cross_attention_block_forward.16} parent=5 // pred_region
        %s1491 = ssub.s32 %s15, 2
        // Predicated region
        $region65: #{cross_attention_block_forward.16} parent=63 // pred_check
          %p1492 = pneg %p222
        $region66: #{cross_attention_block_forward.16} parent=63 // pred_check_branch
          %1494 = sbr.rel (%p1492) target = $region68
        $region67: #{cross_attention_block_forward.16} parent=63 // pred_region
          %p1495 = scmp.lt.s32.totalorder %s21, 1
          %s1496 = scalar_select %p1495, %s21, 1
          %s1497 = smul.addr %s1496, 16
          %s1498 = smul.addr %s1497, 4
          %s1499 = scalar_lea.vmem %s8, %s1498
        $region68: #{cross_attention_block_forward.16} parent=63 // pred_fallthru
          _
      $region64: #{cross_attention_block_forward.16} parent=5 // pred_fallthru
        _
    $region6: #{cross_attention_block_forward.16} parent=1 // loop_footer
      %s19 = sadd.s32 1, %s15
    $region7: #{cross_attention_block_forward.16} parent=1 // loop_footer_branch
      %14 = sbr.rel target = $region3
    $region8: #{cross_attention_block_forward.16} parent=1 // loop_exit
      _
    %1500 = vsyncpa [#allocation3], 1
    %s1501 = scalar_lea.sflag [#allocation3], 1
    %1502 = vsyncpa %s1501, 1

// kernel: cross_attention_block_forward.19
$region0: #{cross_attention_block_forward.19}
  #allocation0 [shape = 'u32[]', space=smem, size = 0x4, offset = 0x4, fixed_abs, tag = 'smem constant byte address 0x4 - core index']
  #allocation1 [shape = 'u32[72,128]{1,0:T(1,128)}', space=vmem, size = 0x9000, scoped, tag = 'internal scratch']
  %s0 = inlined_call_operand.vmem [shape: bf16[128,512], index: 0, kind: input, shape index: {}]
  %s1 = inlined_call_operand.vmem [shape: bf16[512,256], index: 1, kind: input, shape index: {}]
  %s2 = inlined_call_operand.vmem [shape: bf16[1,256], index: 2, kind: input, shape index: {}]
  %s3 = inlined_call_operand.vmem [shape: bf16[128,256], index: 3, kind: input, shape index: {}]
  %s4 = inlined_call_operand.hbm [shape: bf16[128,256], index: 4, kind: output, shape index: {}]
  %s5 = sld [smem:[#allocation0]]
  $region26: #{cross_attention_block_forward.19} parent=0
    _
  %s7 = ssub.s32 1, %s5
  %s8 = scalar_select 0, %s7, %s5
  $region1: #{cross_attention_block_forward.19} parent=0
    #allocation2 [shape = 'u8[65536]{0}', space=vmem, size = 0x10000, scoped, tag = 'output window, operand 0, single buffered']
    #allocation3 [shape = 's32[1]{0}', space=sflag, size = 0x4, scoped, tag = 'scoped memory for cross_attention_block_forward.19']
    %9 = vsyncpa [#allocation3], 0
    // Predicated region
    $region2: #{cross_attention_block_forward.19} parent=1 // pred_check
      _
    $region3: #{cross_attention_block_forward.19} parent=1 // pred_check_branch
      %11 = sbr.rel (0) target = $region5
    $region4: #{cross_attention_block_forward.19} parent=1 // pred_region
      _
    $region5: #{cross_attention_block_forward.19} parent=1 // pred_fallthru
      _
    // Predicated region
    $region6: #{cross_attention_block_forward.19} parent=1 // pred_check
      _
    $region7: #{cross_attention_block_forward.19} parent=1 // pred_check_branch
      %13 = sbr.rel (0) target = $region9
    $region8: #{cross_attention_block_forward.19} parent=1 // pred_region
      _
    $region9: #{cross_attention_block_forward.19} parent=1 // pred_fallthru
      _
    // Predicated region
    $region10: #{cross_attention_block_forward.19} parent=1 // pred_check
      _
    $region11: #{cross_attention_block_forward.19} parent=1 // pred_check_branch
      %15 = sbr.rel (0) target = $region13
    $region12: #{cross_attention_block_forward.19} parent=1 // pred_region
      _
    $region13: #{cross_attention_block_forward.19} parent=1 // pred_fallthru
      _
    // Predicated region
    $region14: #{cross_attention_block_forward.19} parent=1 // pred_check
      _
    $region15: #{cross_attention_block_forward.19} parent=1 // pred_check_branch
      %17 = sbr.rel (0) target = $region17
    $region16: #{cross_attention_block_forward.19} parent=1 // pred_region
      _
    $region17: #{cross_attention_block_forward.19} parent=1 // pred_fallthru
      _
    %v18 = vld [vmem:[%s0] sm:$0xff]
    %v19 = vld [vmem:[%s0 + $0x8] sm:$0xff]
    %v20 = vld [vmem:[%s0 + $0x10] sm:$0xff]
    %v21 = vld [vmem:[%s0 + $0x18] sm:$0xff]
    %v22 = vld [vmem:[%s0 + $0x20] sm:$0xff]
    %v23 = vld [vmem:[%s0 + $0x28] sm:$0xff]
    %v24 = vld [vmem:[%s0 + $0x30] sm:$0xff]
    %v25 = vld [vmem:[%s0 + $0x38] sm:$0xff]
    %v26 = vld [vmem:[%s0 + $0x40] sm:$0xff]
    %v27 = vld [vmem:[%s0 + $0x48] sm:$0xff]
    %v28 = vld [vmem:[%s0 + $0x50] sm:$0xff]
    %v29 = vld [vmem:[%s0 + $0x58] sm:$0xff]
    %v30 = vld [vmem:[%s0 + $0x60] sm:$0xff]
    %v31 = vld [vmem:[%s0 + $0x68] sm:$0xff]
    %v32 = vld [vmem:[%s0 + $0x70] sm:$0xff]
    %v33 = vld [vmem:[%s0 + $0x78] sm:$0xff]
    %v34 = vld [vmem:[%s0 + $0x80] sm:$0xff]
    %v35 = vld [vmem:[%s0 + $0x88] sm:$0xff]
    %v36 = vld [vmem:[%s0 + $0x90] sm:$0xff]
    %v37 = vld [vmem:[%s0 + $0x98] sm:$0xff]
    %v38 = vld [vmem:[%s0 + $0xa0] sm:$0xff]
    %v39 = vld [vmem:[%s0 + $0xa8] sm:$0xff]
    %v40 = vld [vmem:[%s0 + $0xb0] sm:$0xff]
    %v41 = vld [vmem:[%s0 + $0xb8] sm:$0xff]
    %v42 = vld [vmem:[%s0 + $0xc0] sm:$0xff]
    %v43 = vld [vmem:[%s0 + $0xc8] sm:$0xff]
    %v44 = vld [vmem:[%s0 + $0xd0] sm:$0xff]
    %v45 = vld [vmem:[%s0 + $0xd8] sm:$0xff]
    %v46 = vld [vmem:[%s0 + $0xe0] sm:$0xff]
    %v47 = vld [vmem:[%s0 + $0xe8] sm:$0xff]
    %v48 = vld [vmem:[%s0 + $0xf0] sm:$0xff]
    %v49 = vld [vmem:[%s0 + $0xf8] sm:$0xff]
    %v50 = vld [vmem:[%s1] sm:$0xff]
    %v51 = vld [vmem:[%s1 + $0x8] sm:$0xff]
    %v52 = vld [vmem:[%s1 + $0x10] sm:$0xff]
    %v53 = vld [vmem:[%s1 + $0x18] sm:$0xff]
    %v54 = vld [vmem:[%s1 + $0x20] sm:$0xff]
    %v55 = vld [vmem:[%s1 + $0x28] sm:$0xff]
    %v56 = vld [vmem:[%s1 + $0x30] sm:$0xff]
    %v57 = vld [vmem:[%s1 + $0x38] sm:$0xff]
    %v58 = vld [vmem:[%s1 + $0x40] sm:$0xff]
    %v59 = vld [vmem:[%s1 + $0x48] sm:$0xff]
    %v60 = vld [vmem:[%s1 + $0x50] sm:$0xff]
    %v61 = vld [vmem:[%s1 + $0x58] sm:$0xff]
    %v62 = vld [vmem:[%s1 + $0x60] sm:$0xff]
    %v63 = vld [vmem:[%s1 + $0x68] sm:$0xff]
    %v64 = vld [vmem:[%s1 + $0x70] sm:$0xff]
    %v65 = vld [vmem:[%s1 + $0x78] sm:$0xff]
    %v66 = vld [vmem:[%s1 + $0x80] sm:$0xff]
    %v67 = vld [vmem:[%s1 + $0x88] sm:$0xff]
    %v68 = vld [vmem:[%s1 + $0x90] sm:$0xff]
    %v69 = vld [vmem:[%s1 + $0x98] sm:$0xff]
    %v70 = vld [vmem:[%s1 + $0xa0] sm:$0xff]
    %v71 = vld [vmem:[%s1 + $0xa8] sm:$0xff]
    %v72 = vld [vmem:[%s1 + $0xb0] sm:$0xff]
    %v73 = vld [vmem:[%s1 + $0xb8] sm:$0xff]
    %v74 = vld [vmem:[%s1 + $0xc0] sm:$0xff]
    %v75 = vld [vmem:[%s1 + $0xc8] sm:$0xff]
    %v76 = vld [vmem:[%s1 + $0xd0] sm:$0xff]
    %v77 = vld [vmem:[%s1 + $0xd8] sm:$0xff]
    %v78 = vld [vmem:[%s1 + $0xe0] sm:$0xff]
    %v79 = vld [vmem:[%s1 + $0xe8] sm:$0xff]
    %v80 = vld [vmem:[%s1 + $0xf0] sm:$0xff]
    %v81 = vld [vmem:[%s1 + $0xf8] sm:$0xff]
    %v82 = vld [vmem:[%s1 + $0x100] sm:$0xff]
    %v83 = vld [vmem:[%s1 + $0x108] sm:$0xff]
    %v84 = vld [vmem:[%s1 + $0x110] sm:$0xff]
    %v85 = vld [vmem:[%s1 + $0x118] sm:$0xff]
    %v86 = vld [vmem:[%s1 + $0x120] sm:$0xff]
    %v87 = vld [vmem:[%s1 + $0x128] sm:$0xff]
    %v88 = vld [vmem:[%s1 + $0x130] sm:$0xff]
    %v89 = vld [vmem:[%s1 + $0x138] sm:$0xff]
    %v90 = vld [vmem:[%s1 + $0x140] sm:$0xff]
    %v91 = vld [vmem:[%s1 + $0x148] sm:$0xff]
    %v92 = vld [vmem:[%s1 + $0x150] sm:$0xff]
    %v93 = vld [vmem:[%s1 + $0x158] sm:$0xff]
    %v94 = vld [vmem:[%s1 + $0x160] sm:$0xff]
    %v95 = vld [vmem:[%s1 + $0x168] sm:$0xff]
    %v96 = vld [vmem:[%s1 + $0x170] sm:$0xff]
    %v97 = vld [vmem:[%s1 + $0x178] sm:$0xff]
    %v98 = vld [vmem:[%s1 + $0x180] sm:$0xff]
    %v99 = vld [vmem:[%s1 + $0x188] sm:$0xff]
    %v100 = vld [vmem:[%s1 + $0x190] sm:$0xff]
    %v101 = vld [vmem:[%s1 + $0x198] sm:$0xff]
    %v102 = vld [vmem:[%s1 + $0x1a0] sm:$0xff]
    %v103 = vld [vmem:[%s1 + $0x1a8] sm:$0xff]
    %v104 = vld [vmem:[%s1 + $0x1b0] sm:$0xff]
    %v105 = vld [vmem:[%s1 + $0x1b8] sm:$0xff]
    %v106 = vld [vmem:[%s1 + $0x1c0] sm:$0xff]
    %v107 = vld [vmem:[%s1 + $0x1c8] sm:$0xff]
    %v108 = vld [vmem:[%s1 + $0x1d0] sm:$0xff]
    %v109 = vld [vmem:[%s1 + $0x1d8] sm:$0xff]
    %v110 = vld [vmem:[%s1 + $0x1e0] sm:$0xff]
    %v111 = vld [vmem:[%s1 + $0x1e8] sm:$0xff]
    %v112 = vld [vmem:[%s1 + $0x1f0] sm:$0xff]
    %v113 = vld [vmem:[%s1 + $0x1f8] sm:$0xff]
    %v114 = vld [vmem:[%s2] sm:$0x3]
    %v115 = vunpack.c.l.bf16 %v114
    %v117 = vperm.slane %v115, 0
    %v118 = vperm.slane %v115, 2
    %v121 = vperm.slane %v117, 0
    %v122 = vperm.slane %v118, 0
    %v155 = vunpack.c.l.b16 %v18
    %v156 = vunpack.c.h.b16 %v18
    %v157 = vunpack.c.l.b16 %v19
    %v158 = vunpack.c.h.b16 %v19
    %v159 = vunpack.c.l.b16 %v20
    %v160 = vunpack.c.h.b16 %v20
    %v161 = vunpack.c.l.b16 %v21
    %v162 = vunpack.c.h.b16 %v21
    %v163 = vunpack.c.l.b16 %v22
    %v164 = vunpack.c.h.b16 %v22
    %v165 = vunpack.c.l.b16 %v23
    %v166 = vunpack.c.h.b16 %v23
    %v167 = vunpack.c.l.b16 %v24
    %v168 = vunpack.c.h.b16 %v24
    %v169 = vunpack.c.l.b16 %v25
    %v170 = vunpack.c.h.b16 %v25
    %v171 = vunpack.c.l.b16 %v26
    %v172 = vunpack.c.h.b16 %v26
    %v173 = vunpack.c.l.b16 %v27
    %v174 = vunpack.c.h.b16 %v27
    %v175 = vunpack.c.l.b16 %v28
    %v176 = vunpack.c.h.b16 %v28
    %v177 = vunpack.c.l.b16 %v29
    %v178 = vunpack.c.h.b16 %v29
    %v179 = vunpack.c.l.b16 %v30
    %v180 = vunpack.c.h.b16 %v30
    %v181 = vunpack.c.l.b16 %v31
    %v182 = vunpack.c.h.b16 %v31
    %v183 = vunpack.c.l.b16 %v32
    %v184 = vunpack.c.h.b16 %v32
    %v185 = vunpack.c.l.b16 %v33
    %v186 = vunpack.c.h.b16 %v33
    %v187 = vunpack.c.l.b16 %v34
    %v188 = vunpack.c.h.b16 %v34
    %v189 = vunpack.c.l.b16 %v35
    %v190 = vunpack.c.h.b16 %v35
    %v191 = vunpack.c.l.b16 %v36
    %v192 = vunpack.c.h.b16 %v36
    %v193 = vunpack.c.l.b16 %v37
    %v194 = vunpack.c.h.b16 %v37
    %v195 = vunpack.c.l.b16 %v38
    %v196 = vunpack.c.h.b16 %v38
    %v197 = vunpack.c.l.b16 %v39
    %v198 = vunpack.c.h.b16 %v39
    %v199 = vunpack.c.l.b16 %v40
    %v200 = vunpack.c.h.b16 %v40
    %v201 = vunpack.c.l.b16 %v41
    %v202 = vunpack.c.h.b16 %v41
    %v203 = vunpack.c.l.b16 %v42
    %v204 = vunpack.c.h.b16 %v42
    %v205 = vunpack.c.l.b16 %v43
    %v206 = vunpack.c.h.b16 %v43
    %v207 = vunpack.c.l.b16 %v44
    %v208 = vunpack.c.h.b16 %v44
    %v209 = vunpack.c.l.b16 %v45
    %v210 = vunpack.c.h.b16 %v45
    %v211 = vunpack.c.l.b16 %v46
    %v212 = vunpack.c.h.b16 %v46
    %v213 = vunpack.c.l.b16 %v47
    %v214 = vunpack.c.h.b16 %v47
    %v215 = vunpack.c.l.b16 %v48
    %v216 = vunpack.c.h.b16 %v48
    %v217 = vunpack.c.l.b16 %v49
    %v218 = vunpack.c.h.b16 %v49
    %v219 = vpack.c.b16 %v159, %v155
    %v220 = vpack.c.b16 %v160, %v156
    %v221 = vpack.c.b16 %v161, %v157
    %v222 = vpack.c.b16 %v162, %v158
    %v223 = vpack.c.b16 %v167, %v163
    %v224 = vpack.c.b16 %v168, %v164
    %v225 = vpack.c.b16 %v169, %v165
    %v226 = vpack.c.b16 %v170, %v166
    %v227 = vpack.c.b16 %v175, %v171
    %v228 = vpack.c.b16 %v176, %v172
    %v229 = vpack.c.b16 %v177, %v173
    %v230 = vpack.c.b16 %v178, %v174
    %v231 = vpack.c.b16 %v183, %v179
    %v232 = vpack.c.b16 %v184, %v180
    %v233 = vpack.c.b16 %v185, %v181
    %v234 = vpack.c.b16 %v186, %v182
    %v235 = vpack.c.b16 %v191, %v187
    %v236 = vpack.c.b16 %v192, %v188
    %v237 = vpack.c.b16 %v193, %v189
    %v238 = vpack.c.b16 %v194, %v190
    %v239 = vpack.c.b16 %v199, %v195
    %v240 = vpack.c.b16 %v200, %v196
    %v241 = vpack.c.b16 %v201, %v197
    %v242 = vpack.c.b16 %v202, %v198
    %v243 = vpack.c.b16 %v207, %v203
    %v244 = vpack.c.b16 %v208, %v204
    %v245 = vpack.c.b16 %v209, %v205
    %v246 = vpack.c.b16 %v210, %v206
    %v247 = vpack.c.b16 %v215, %v211
    %v248 = vpack.c.b16 %v216, %v212
    %v249 = vpack.c.b16 %v217, %v213
    %v250 = vpack.c.b16 %v218, %v214
    %v347 = vunpack.c.l.b16 %v50
    %v348 = vunpack.c.h.b16 %v50
    %v349 = vunpack.c.l.b16 %v51
    %v350 = vunpack.c.h.b16 %v51
    %v351 = vunpack.c.l.b16 %v52
    %v352 = vunpack.c.h.b16 %v52
    %v353 = vunpack.c.l.b16 %v53
    %v354 = vunpack.c.h.b16 %v53
    %v355 = vunpack.c.l.b16 %v54
    %v356 = vunpack.c.h.b16 %v54
    %v357 = vunpack.c.l.b16 %v55
    %v358 = vunpack.c.h.b16 %v55
    %v359 = vunpack.c.l.b16 %v56
    %v360 = vunpack.c.h.b16 %v56
    %v361 = vunpack.c.l.b16 %v57
    %v362 = vunpack.c.h.b16 %v57
    %v363 = vunpack.c.l.b16 %v58
    %v364 = vunpack.c.h.b16 %v58
    %v365 = vunpack.c.l.b16 %v59
    %v366 = vunpack.c.h.b16 %v59
    %v367 = vunpack.c.l.b16 %v60
    %v368 = vunpack.c.h.b16 %v60
    %v369 = vunpack.c.l.b16 %v61
    %v370 = vunpack.c.h.b16 %v61
    %v371 = vunpack.c.l.b16 %v62
    %v372 = vunpack.c.h.b16 %v62
    %v373 = vunpack.c.l.b16 %v63
    %v374 = vunpack.c.h.b16 %v63
    %v375 = vunpack.c.l.b16 %v64
    %v376 = vunpack.c.h.b16 %v64
    %v377 = vunpack.c.l.b16 %v65
    %v378 = vunpack.c.h.b16 %v65
    %v379 = vunpack.c.l.b16 %v66
    %v380 = vunpack.c.h.b16 %v66
    %v381 = vunpack.c.l.b16 %v67
    %v382 = vunpack.c.h.b16 %v67
    %v383 = vunpack.c.l.b16 %v68
    %v384 = vunpack.c.h.b16 %v68
    %v385 = vunpack.c.l.b16 %v69
    %v386 = vunpack.c.h.b16 %v69
    %v387 = vunpack.c.l.b16 %v70
    %v388 = vunpack.c.h.b16 %v70
    %v389 = vunpack.c.l.b16 %v71
    %v390 = vunpack.c.h.b16 %v71
    %v391 = vunpack.c.l.b16 %v72
    %v392 = vunpack.c.h.b16 %v72
    %v393 = vunpack.c.l.b16 %v73
    %v394 = vunpack.c.h.b16 %v73
    %v395 = vunpack.c.l.b16 %v74
    %v396 = vunpack.c.h.b16 %v74
    %v397 = vunpack.c.l.b16 %v75
    %v398 = vunpack.c.h.b16 %v75
    %v399 = vunpack.c.l.b16 %v76
    %v400 = vunpack.c.h.b16 %v76
    %v401 = vunpack.c.l.b16 %v77
    %v402 = vunpack.c.h.b16 %v77
    %v403 = vunpack.c.l.b16 %v78
    %v404 = vunpack.c.h.b16 %v78
    %v405 = vunpack.c.l.b16 %v79
    %v406 = vunpack.c.h.b16 %v79
    %v407 = vunpack.c.l.b16 %v80
    %v408 = vunpack.c.h.b16 %v80
    %v409 = vunpack.c.l.b16 %v81
    %v410 = vunpack.c.h.b16 %v81
    %v411 = vunpack.c.l.b16 %v82
    %v412 = vunpack.c.h.b16 %v82
    %v413 = vunpack.c.l.b16 %v83
    %v414 = vunpack.c.h.b16 %v83
    %v415 = vunpack.c.l.b16 %v84
    %v416 = vunpack.c.h.b16 %v84
    %v417 = vunpack.c.l.b16 %v85
    %v418 = vunpack.c.h.b16 %v85
    %v419 = vunpack.c.l.b16 %v86
    %v420 = vunpack.c.h.b16 %v86
    %v421 = vunpack.c.l.b16 %v87
    %v422 = vunpack.c.h.b16 %v87
    %v423 = vunpack.c.l.b16 %v88
    %v424 = vunpack.c.h.b16 %v88
    %v425 = vunpack.c.l.b16 %v89
    %v426 = vunpack.c.h.b16 %v89
    %v427 = vunpack.c.l.b16 %v90
    %v428 = vunpack.c.h.b16 %v90
    %v429 = vunpack.c.l.b16 %v91
    %v430 = vunpack.c.h.b16 %v91
    %v431 = vunpack.c.l.b16 %v92
    %v432 = vunpack.c.h.b16 %v92
    %v433 = vunpack.c.l.b16 %v93
    %v434 = vunpack.c.h.b16 %v93
    %v435 = vunpack.c.l.b16 %v94
    %v436 = vunpack.c.h.b16 %v94
    %v437 = vunpack.c.l.b16 %v95
    %v438 = vunpack.c.h.b16 %v95
    %v439 = vunpack.c.l.b16 %v96
    %v440 = vunpack.c.h.b16 %v96
    %v441 = vunpack.c.l.b16 %v97
    %v442 = vunpack.c.h.b16 %v97
    %v443 = vunpack.c.l.b16 %v98
    %v444 = vunpack.c.h.b16 %v98
    %v445 = vunpack.c.l.b16 %v99
    %v446 = vunpack.c.h.b16 %v99
    %v447 = vunpack.c.l.b16 %v100
    %v448 = vunpack.c.h.b16 %v100
    %v449 = vunpack.c.l.b16 %v101
    %v450 = vunpack.c.h.b16 %v101
    %v451 = vunpack.c.l.b16 %v102
    %v452 = vunpack.c.h.b16 %v102
    %v453 = vunpack.c.l.b16 %v103
    %v454 = vunpack.c.h.b16 %v103
    %v455 = vunpack.c.l.b16 %v104
    %v456 = vunpack.c.h.b16 %v104
    %v457 = vunpack.c.l.b16 %v105
    %v458 = vunpack.c.h.b16 %v105
    %v459 = vunpack.c.l.b16 %v106
    %v460 = vunpack.c.h.b16 %v106
    %v461 = vunpack.c.l.b16 %v107
    %v462 = vunpack.c.h.b16 %v107
    %v463 = vunpack.c.l.b16 %v108
    %v464 = vunpack.c.h.b16 %v108
    %v465 = vunpack.c.l.b16 %v109
    %v466 = vunpack.c.h.b16 %v109
    %v467 = vunpack.c.l.b16 %v110
    %v468 = vunpack.c.h.b16 %v110
    %v469 = vunpack.c.l.b16 %v111
    %v470 = vunpack.c.h.b16 %v111
    %v471 = vunpack.c.l.b16 %v112
    %v472 = vunpack.c.h.b16 %v112
    %v473 = vunpack.c.l.b16 %v113
    %v474 = vunpack.c.h.b16 %v113
    %v475 = vpack.c.b16 %v349, %v347
    %v476 = vpack.c.b16 %v350, %v348
    %v477 = vpack.c.b16 %v353, %v351
    %v478 = vpack.c.b16 %v354, %v352
    %v479 = vpack.c.b16 %v357, %v355
    %v480 = vpack.c.b16 %v358, %v356
    %v481 = vpack.c.b16 %v361, %v359
    %v482 = vpack.c.b16 %v362, %v360
    %v483 = vpack.c.b16 %v365, %v363
    %v484 = vpack.c.b16 %v366, %v364
    %v485 = vpack.c.b16 %v369, %v367
    %v486 = vpack.c.b16 %v370, %v368
    %v487 = vpack.c.b16 %v373, %v371
    %v488 = vpack.c.b16 %v374, %v372
    %v489 = vpack.c.b16 %v377, %v375
    %v490 = vpack.c.b16 %v378, %v376
    %v491 = vpack.c.b16 %v381, %v379
    %v492 = vpack.c.b16 %v382, %v380
    %v493 = vpack.c.b16 %v385, %v383
    %v494 = vpack.c.b16 %v386, %v384
    %v495 = vpack.c.b16 %v389, %v387
    %v496 = vpack.c.b16 %v390, %v388
    %v497 = vpack.c.b16 %v393, %v391
    %v498 = vpack.c.b16 %v394, %v392
    %v499 = vpack.c.b16 %v397, %v395
    %v500 = vpack.c.b16 %v398, %v396
    %v501 = vpack.c.b16 %v401, %v399
    %v502 = vpack.c.b16 %v402, %v400
    %v503 = vpack.c.b16 %v405, %v403
    %v504 = vpack.c.b16 %v406, %v404
    %v505 = vpack.c.b16 %v409, %v407
    %v506 = vpack.c.b16 %v410, %v408
    %v507 = vpack.c.b16 %v413, %v411
    %v508 = vpack.c.b16 %v414, %v412
    %v509 = vpack.c.b16 %v417, %v415
    %v510 = vpack.c.b16 %v418, %v416
    %v511 = vpack.c.b16 %v421, %v419
    %v512 = vpack.c.b16 %v422, %v420
    %v513 = vpack.c.b16 %v425, %v423
    %v514 = vpack.c.b16 %v426, %v424
    %v515 = vpack.c.b16 %v429, %v427
    %v516 = vpack.c.b16 %v430, %v428
    %v517 = vpack.c.b16 %v433, %v431
    %v518 = vpack.c.b16 %v434, %v432
    %v519 = vpack.c.b16 %v437, %v435
    %v520 = vpack.c.b16 %v438, %v436
    %v521 = vpack.c.b16 %v441, %v439
    %v522 = vpack.c.b16 %v442, %v440
    %v523 = vpack.c.b16 %v445, %v443
    %v524 = vpack.c.b16 %v446, %v444
    %v525 = vpack.c.b16 %v449, %v447
    %v526 = vpack.c.b16 %v450, %v448
    %v527 = vpack.c.b16 %v453, %v451
    %v528 = vpack.c.b16 %v454, %v452
    %v529 = vpack.c.b16 %v457, %v455
    %v530 = vpack.c.b16 %v458, %v456
    %v531 = vpack.c.b16 %v461, %v459
    %v532 = vpack.c.b16 %v462, %v460
    %v533 = vpack.c.b16 %v465, %v463
    %v534 = vpack.c.b16 %v466, %v464
    %v535 = vpack.c.b16 %v469, %v467
    %v536 = vpack.c.b16 %v470, %v468
    %v537 = vpack.c.b16 %v473, %v471
    %v538 = vpack.c.b16 %v474, %v472
    %603 = vmatpush.bf16.msra.mxu0 %v489
    %604 = vmatpush.bf16.msra.mxu0 %v487
    %605 = vmatpush.bf16.msra.mxu0 %v485
    %606 = vmatpush.bf16.msra.mxu0 %v483
    %607 = vmatpush.bf16.msra.mxu0 %v481
    %608 = vmatpush.bf16.msra.mxu0 %v479
    %609 = vmatpush.bf16.msra.mxu0 %v477
    %610 = vmatpush.bf16.msra.mxu0 %v475
    %611 = vmatmul.bf16.gmra.mxu0 %v219
    %v612 = vpop.f32.mrf.mxu0
    %v613 = vadd.f32 %v121, %v612
    %v614 = vpop.f32.mrf.mxu0
    %v615 = vadd.f32 %v121, %v614
    %616 = vmatmul.bf16.gmra.mxu0 %v223
    %v617 = vpop.f32.mrf.mxu0
    %v618 = vadd.f32 %v121, %v617
    %v619 = vpop.f32.mrf.mxu0
    %v620 = vadd.f32 %v121, %v619
    %621 = vmatmul.bf16.gmra.mxu0 %v227
    %v622 = vpop.f32.mrf.mxu0
    %v623 = vadd.f32 %v121, %v622
    %v624 = vpop.f32.mrf.mxu0
    %v625 = vadd.f32 %v121, %v624
    %626 = vmatmul.bf16.gmra.mxu0 %v231
    %v627 = vpop.f32.mrf.mxu0
    %v628 = vadd.f32 %v121, %v627
    %v629 = vpop.f32.mrf.mxu0
    %v630 = vadd.f32 %v121, %v629
    %631 = vmatmul.bf16.gmra.mxu0 %v235
    %v632 = vpop.f32.mrf.mxu0
    %v633 = vadd.f32 %v121, %v632
    %v634 = vpop.f32.mrf.mxu0
    %v635 = vadd.f32 %v121, %v634
    %636 = vmatmul.bf16.gmra.mxu0 %v239
    %v637 = vpop.f32.mrf.mxu0
    %v638 = vadd.f32 %v121, %v637
    %v639 = vpop.f32.mrf.mxu0
    %v640 = vadd.f32 %v121, %v639
    %641 = vmatmul.bf16.gmra.mxu0 %v243
    %v642 = vpop.f32.mrf.mxu0
    %v643 = vadd.f32 %v121, %v642
    %v644 = vpop.f32.mrf.mxu0
    %v645 = vadd.f32 %v121, %v644
    %646 = vmatmul.bf16.gmra.mxu0 %v247
    %v647 = vpop.f32.mrf.mxu0
    %v648 = vadd.f32 %v121, %v647
    %v649 = vpop.f32.mrf.mxu0
    %v650 = vadd.f32 %v121, %v649
    %651 = vdwg.mxu0
    %652 = vmatpush.bf16.msra.mxu0 %v505
    %653 = vmatpush.bf16.msra.mxu0 %v503
    %654 = vmatpush.bf16.msra.mxu0 %v501
    %655 = vmatpush.bf16.msra.mxu0 %v499
    %656 = vmatpush.bf16.msra.mxu0 %v497
    %657 = vmatpush.bf16.msra.mxu0 %v495
    %658 = vmatpush.bf16.msra.mxu0 %v493
    %659 = vmatpush.bf16.msra.mxu0 %v491
    %660 = vmatmul.bf16.gmra.mxu0 %v220
    %v661 = vpop.f32.mrf.mxu0
    %v662 = vadd.f32 %v613, %v661
    %v663 = vpop.f32.mrf.mxu0
    %v664 = vadd.f32 %v615, %v663
    %665 = vmatmul.bf16.gmra.mxu0 %v224
    %v666 = vpop.f32.mrf.mxu0
    %v667 = vadd.f32 %v618, %v666
    %v668 = vpop.f32.mrf.mxu0
    %v669 = vadd.f32 %v620, %v668
    %670 = vmatmul.bf16.gmra.mxu0 %v228
    %v671 = vpop.f32.mrf.mxu0
    %v672 = vadd.f32 %v623, %v671
    %v673 = vpop.f32.mrf.mxu0
    %v674 = vadd.f32 %v625, %v673
    %675 = vmatmul.bf16.gmra.mxu0 %v232
    %v676 = vpop.f32.mrf.mxu0
    %v677 = vadd.f32 %v628, %v676
    %v678 = vpop.f32.mrf.mxu0
    %v679 = vadd.f32 %v630, %v678
    %680 = vmatmul.bf16.gmra.mxu0 %v236
    %v681 = vpop.f32.mrf.mxu0
    %v682 = vadd.f32 %v633, %v681
    %v683 = vpop.f32.mrf.mxu0
    %v684 = vadd.f32 %v635, %v683
    %685 = vmatmul.bf16.gmra.mxu0 %v240
    %v686 = vpop.f32.mrf.mxu0
    %v687 = vadd.f32 %v638, %v686
    %v688 = vpop.f32.mrf.mxu0
    %v689 = vadd.f32 %v640, %v688
    %690 = vmatmul.bf16.gmra.mxu0 %v244
    %v691 = vpop.f32.mrf.mxu0
    %v692 = vadd.f32 %v643, %v691
    %v693 = vpop.f32.mrf.mxu0
    %v694 = vadd.f32 %v645, %v693
    %695 = vmatmul.bf16.gmra.mxu0 %v248
    %v696 = vpop.f32.mrf.mxu0
    %v697 = vadd.f32 %v648, %v696
    %v698 = vpop.f32.mrf.mxu0
    %v699 = vadd.f32 %v650, %v698
    %700 = vdwg.mxu0
    %701 = vmatpush.bf16.msra.mxu0 %v521
    %702 = vmatpush.bf16.msra.mxu0 %v519
    %703 = vmatpush.bf16.msra.mxu0 %v517
    %704 = vmatpush.bf16.msra.mxu0 %v515
    %705 = vmatpush.bf16.msra.mxu0 %v513
    %706 = vmatpush.bf16.msra.mxu0 %v511
    %707 = vmatpush.bf16.msra.mxu0 %v509
    %708 = vmatpush.bf16.msra.mxu0 %v507
    %709 = vmatmul.bf16.gmra.mxu0 %v221
    %v710 = vpop.f32.mrf.mxu0
    %v711 = vadd.f32 %v662, %v710
    %v712 = vpop.f32.mrf.mxu0
    %v713 = vadd.f32 %v664, %v712
    %714 = vmatmul.bf16.gmra.mxu0 %v225
    %v715 = vpop.f32.mrf.mxu0
    %v716 = vadd.f32 %v667, %v715
    %v717 = vpop.f32.mrf.mxu0
    %v718 = vadd.f32 %v669, %v717
    %719 = vmatmul.bf16.gmra.mxu0 %v229
    %v720 = vpop.f32.mrf.mxu0
    %v721 = vadd.f32 %v672, %v720
    %v722 = vpop.f32.mrf.mxu0
    %v723 = vadd.f32 %v674, %v722
    %724 = vmatmul.bf16.gmra.mxu0 %v233
    %v725 = vpop.f32.mrf.mxu0
    %v726 = vadd.f32 %v677, %v725
    %v727 = vpop.f32.mrf.mxu0
    %v728 = vadd.f32 %v679, %v727
    %729 = vmatmul.bf16.gmra.mxu0 %v237
    %v730 = vpop.f32.mrf.mxu0
    %v731 = vadd.f32 %v682, %v730
    %v732 = vpop.f32.mrf.mxu0
    %v733 = vadd.f32 %v684, %v732
    %734 = vmatmul.bf16.gmra.mxu0 %v241
    %v735 = vpop.f32.mrf.mxu0
    %v736 = vadd.f32 %v687, %v735
    %v737 = vpop.f32.mrf.mxu0
    %v738 = vadd.f32 %v689, %v737
    %739 = vmatmul.bf16.gmra.mxu0 %v245
    %v740 = vpop.f32.mrf.mxu0
    %v741 = vadd.f32 %v692, %v740
    %v742 = vpop.f32.mrf.mxu0
    %v743 = vadd.f32 %v694, %v742
    %744 = vmatmul.bf16.gmra.mxu0 %v249
    %v745 = vpop.f32.mrf.mxu0
    %v746 = vadd.f32 %v697, %v745
    %v747 = vpop.f32.mrf.mxu0
    %v748 = vadd.f32 %v699, %v747
    %749 = vdwg.mxu0
    %750 = vmatpush.bf16.msra.mxu0 %v537
    %751 = vmatpush.bf16.msra.mxu0 %v535
    %752 = vmatpush.bf16.msra.mxu0 %v533
    %753 = vmatpush.bf16.msra.mxu0 %v531
    %754 = vmatpush.bf16.msra.mxu0 %v529
    %755 = vmatpush.bf16.msra.mxu0 %v527
    %756 = vmatpush.bf16.msra.mxu0 %v525
    %757 = vmatpush.bf16.msra.mxu0 %v523
    %758 = vmatmul.bf16.gmra.mxu0 %v222
    %v759 = vpop.f32.mrf.mxu0
    %v760 = vadd.f32 %v711, %v759
    %v761 = vpop.f32.mrf.mxu0
    %v762 = vadd.f32 %v713, %v761
    %763 = vmatmul.bf16.gmra.mxu0 %v226
    %v764 = vpop.f32.mrf.mxu0
    %v765 = vadd.f32 %v716, %v764
    %v766 = vpop.f32.mrf.mxu0
    %v767 = vadd.f32 %v718, %v766
    %768 = vmatmul.bf16.gmra.mxu0 %v230
    %v769 = vpop.f32.mrf.mxu0
    %v770 = vadd.f32 %v721, %v769
    %v771 = vpop.f32.mrf.mxu0
    %v772 = vadd.f32 %v723, %v771
    %773 = vmatmul.bf16.gmra.mxu0 %v234
    %v774 = vpop.f32.mrf.mxu0
    %v775 = vadd.f32 %v726, %v774
    %v776 = vpop.f32.mrf.mxu0
    %v777 = vadd.f32 %v728, %v776
    %778 = vmatmul.bf16.gmra.mxu0 %v238
    %v779 = vpop.f32.mrf.mxu0
    %v780 = vadd.f32 %v731, %v779
    %v781 = vpop.f32.mrf.mxu0
    %v782 = vadd.f32 %v733, %v781
    %783 = vmatmul.bf16.gmra.mxu0 %v242
    %v784 = vpop.f32.mrf.mxu0
    %v785 = vadd.f32 %v736, %v784
    %v786 = vpop.f32.mrf.mxu0
    %v787 = vadd.f32 %v738, %v786
    %788 = vmatmul.bf16.gmra.mxu0 %v246
    %v789 = vpop.f32.mrf.mxu0
    %v790 = vadd.f32 %v741, %v789
    %v791 = vpop.f32.mrf.mxu0
    %v792 = vadd.f32 %v743, %v791
    %793 = vmatmul.bf16.gmra.mxu0 %v250
    %v794 = vpop.f32.mrf.mxu0
    %v795 = vadd.f32 %v746, %v794
    %v796 = vpop.f32.mrf.mxu0
    %v797 = vadd.f32 %v748, %v796
    %798 = vdwg.mxu0
    %799 = vmatpush.bf16.msra.mxu0 %v490
    %800 = vmatpush.bf16.msra.mxu0 %v488
    %801 = vmatpush.bf16.msra.mxu0 %v486
    %802 = vmatpush.bf16.msra.mxu0 %v484
    %803 = vmatpush.bf16.msra.mxu0 %v482
    %804 = vmatpush.bf16.msra.mxu0 %v480
    %805 = vmatpush.bf16.msra.mxu0 %v478
    %806 = vmatpush.bf16.msra.mxu0 %v476
    %807 = vmatmul.bf16.gmra.mxu0 %v219
    %v808 = vpop.f32.mrf.mxu0
    %v809 = vadd.f32 %v122, %v808
    %v810 = vpop.f32.mrf.mxu0
    %v811 = vadd.f32 %v122, %v810
    %812 = vmatmul.bf16.gmra.mxu0 %v223
    %v813 = vpop.f32.mrf.mxu0
    %v814 = vadd.f32 %v122, %v813
    %v815 = vpop.f32.mrf.mxu0
    %v816 = vadd.f32 %v122, %v815
    %817 = vmatmul.bf16.gmra.mxu0 %v227
    %v818 = vpop.f32.mrf.mxu0
    %v819 = vadd.f32 %v122, %v818
    %v820 = vpop.f32.mrf.mxu0
    %v821 = vadd.f32 %v122, %v820
    %822 = vmatmul.bf16.gmra.mxu0 %v231
    %v823 = vpop.f32.mrf.mxu0
    %v824 = vadd.f32 %v122, %v823
    %v825 = vpop.f32.mrf.mxu0
    %v826 = vadd.f32 %v122, %v825
    %827 = vmatmul.bf16.gmra.mxu0 %v235
    %v828 = vpop.f32.mrf.mxu0
    %v829 = vadd.f32 %v122, %v828
    %v830 = vpop.f32.mrf.mxu0
    %v831 = vadd.f32 %v122, %v830
    %832 = vmatmul.bf16.gmra.mxu0 %v239
    %v833 = vpop.f32.mrf.mxu0
    %v834 = vadd.f32 %v122, %v833
    %v835 = vpop.f32.mrf.mxu0
    %v836 = vadd.f32 %v122, %v835
    %837 = vmatmul.bf16.gmra.mxu0 %v243
    %v838 = vpop.f32.mrf.mxu0
    %v839 = vadd.f32 %v122, %v838
    %v840 = vpop.f32.mrf.mxu0
    %v841 = vadd.f32 %v122, %v840
    %842 = vmatmul.bf16.gmra.mxu0 %v247
    %v843 = vpop.f32.mrf.mxu0
    %v844 = vadd.f32 %v122, %v843
    %v845 = vpop.f32.mrf.mxu0
    %v846 = vadd.f32 %v122, %v845
    %847 = vdwg.mxu0
    %848 = vmatpush.bf16.msra.mxu0 %v506
    %849 = vmatpush.bf16.msra.mxu0 %v504
    %850 = vmatpush.bf16.msra.mxu0 %v502
    %851 = vmatpush.bf16.msra.mxu0 %v500
    %852 = vmatpush.bf16.msra.mxu0 %v498
    %853 = vmatpush.bf16.msra.mxu0 %v496
    %854 = vmatpush.bf16.msra.mxu0 %v494
    %855 = vmatpush.bf16.msra.mxu0 %v492
    %856 = vmatmul.bf16.gmra.mxu0 %v220
    %v857 = vpop.f32.mrf.mxu0
    %v858 = vadd.f32 %v809, %v857
    %v859 = vpop.f32.mrf.mxu0
    %v860 = vadd.f32 %v811, %v859
    %861 = vmatmul.bf16.gmra.mxu0 %v224
    %v862 = vpop.f32.mrf.mxu0
    %v863 = vadd.f32 %v814, %v862
    %v864 = vpop.f32.mrf.mxu0
    %v865 = vadd.f32 %v816, %v864
    %866 = vmatmul.bf16.gmra.mxu0 %v228
    %v867 = vpop.f32.mrf.mxu0
    %v868 = vadd.f32 %v819, %v867
    %v869 = vpop.f32.mrf.mxu0
    %v870 = vadd.f32 %v821, %v869
    %871 = vmatmul.bf16.gmra.mxu0 %v232
    %v872 = vpop.f32.mrf.mxu0
    %v873 = vadd.f32 %v824, %v872
    %v874 = vpop.f32.mrf.mxu0
    %v875 = vadd.f32 %v826, %v874
    %876 = vmatmul.bf16.gmra.mxu0 %v236
    %v877 = vpop.f32.mrf.mxu0
    %v878 = vadd.f32 %v829, %v877
    %v879 = vpop.f32.mrf.mxu0
    %v880 = vadd.f32 %v831, %v879
    %881 = vmatmul.bf16.gmra.mxu0 %v240
    %v882 = vpop.f32.mrf.mxu0
    %v883 = vadd.f32 %v834, %v882
    %v884 = vpop.f32.mrf.mxu0
    %v885 = vadd.f32 %v836, %v884
    %886 = vmatmul.bf16.gmra.mxu0 %v244
    %v887 = vpop.f32.mrf.mxu0
    %v888 = vadd.f32 %v839, %v887
    %v889 = vpop.f32.mrf.mxu0
    %v890 = vadd.f32 %v841, %v889
    %891 = vmatmul.bf16.gmra.mxu0 %v248
    %v892 = vpop.f32.mrf.mxu0
    %v893 = vadd.f32 %v844, %v892
    %v894 = vpop.f32.mrf.mxu0
    %v895 = vadd.f32 %v846, %v894
    %896 = vdwg.mxu0
    %897 = vmatpush.bf16.msra.mxu0 %v522
    %898 = vmatpush.bf16.msra.mxu0 %v520
    %899 = vmatpush.bf16.msra.mxu0 %v518
    %900 = vmatpush.bf16.msra.mxu0 %v516
    %901 = vmatpush.bf16.msra.mxu0 %v514
    %902 = vmatpush.bf16.msra.mxu0 %v512
    %903 = vmatpush.bf16.msra.mxu0 %v510
    %904 = vmatpush.bf16.msra.mxu0 %v508
    %905 = vmatmul.bf16.gmra.mxu0 %v221
    %v906 = vpop.f32.mrf.mxu0
    %v907 = vadd.f32 %v858, %v906
    %v908 = vpop.f32.mrf.mxu0
    %v909 = vadd.f32 %v860, %v908
    %910 = vmatmul.bf16.gmra.mxu0 %v225
    %v911 = vpop.f32.mrf.mxu0
    %v912 = vadd.f32 %v863, %v911
    %v913 = vpop.f32.mrf.mxu0
    %v914 = vadd.f32 %v865, %v913
    %915 = vmatmul.bf16.gmra.mxu0 %v229
    %v916 = vpop.f32.mrf.mxu0
    %v917 = vadd.f32 %v868, %v916
    %v918 = vpop.f32.mrf.mxu0
    %v919 = vadd.f32 %v870, %v918
    %920 = vmatmul.bf16.gmra.mxu0 %v233
    %v921 = vpop.f32.mrf.mxu0
    %v922 = vadd.f32 %v873, %v921
    %v923 = vpop.f32.mrf.mxu0
    %v924 = vadd.f32 %v875, %v923
    %925 = vmatmul.bf16.gmra.mxu0 %v237
    %v926 = vpop.f32.mrf.mxu0
    %v927 = vadd.f32 %v878, %v926
    %v928 = vpop.f32.mrf.mxu0
    %v929 = vadd.f32 %v880, %v928
    %930 = vmatmul.bf16.gmra.mxu0 %v241
    %v931 = vpop.f32.mrf.mxu0
    %v932 = vadd.f32 %v883, %v931
    %v933 = vpop.f32.mrf.mxu0
    %v934 = vadd.f32 %v885, %v933
    %935 = vmatmul.bf16.gmra.mxu0 %v245
    %v936 = vpop.f32.mrf.mxu0
    %v937 = vadd.f32 %v888, %v936
    %v938 = vpop.f32.mrf.mxu0
    %v939 = vadd.f32 %v890, %v938
    %940 = vmatmul.bf16.gmra.mxu0 %v249
    %v941 = vpop.f32.mrf.mxu0
    %v942 = vadd.f32 %v893, %v941
    %v943 = vpop.f32.mrf.mxu0
    %v944 = vadd.f32 %v895, %v943
    %945 = vdwg.mxu0
    %946 = vmatpush.bf16.msra.mxu0 %v538
    %947 = vmatpush.bf16.msra.mxu0 %v536
    %948 = vmatpush.bf16.msra.mxu0 %v534
    %949 = vmatpush.bf16.msra.mxu0 %v532
    %950 = vmatpush.bf16.msra.mxu0 %v530
    %951 = vmatpush.bf16.msra.mxu0 %v528
    %952 = vmatpush.bf16.msra.mxu0 %v526
    %953 = vmatpush.bf16.msra.mxu0 %v524
    %954 = vmatmul.bf16.gmra.mxu0 %v222
    %v955 = vpop.f32.mrf.mxu0
    %v956 = vadd.f32 %v907, %v955
    %v957 = vpop.f32.mrf.mxu0
    %v958 = vadd.f32 %v909, %v957
    %959 = vmatmul.bf16.gmra.mxu0 %v226
    %v960 = vpop.f32.mrf.mxu0
    %v961 = vadd.f32 %v912, %v960
    %v962 = vpop.f32.mrf.mxu0
    %v963 = vadd.f32 %v914, %v962
    %964 = vmatmul.bf16.gmra.mxu0 %v230
    %v965 = vpop.f32.mrf.mxu0
    %v966 = vadd.f32 %v917, %v965
    %v967 = vpop.f32.mrf.mxu0
    %v968 = vadd.f32 %v919, %v967
    %969 = vmatmul.bf16.gmra.mxu0 %v234
    %v970 = vpop.f32.mrf.mxu0
    %v971 = vadd.f32 %v922, %v970
    %v972 = vpop.f32.mrf.mxu0
    %v973 = vadd.f32 %v924, %v972
    %974 = vmatmul.bf16.gmra.mxu0 %v238
    %v975 = vpop.f32.mrf.mxu0
    %v976 = vadd.f32 %v927, %v975
    %v977 = vpop.f32.mrf.mxu0
    %v978 = vadd.f32 %v929, %v977
    %979 = vmatmul.bf16.gmra.mxu0 %v242
    %v980 = vpop.f32.mrf.mxu0
    %v981 = vadd.f32 %v932, %v980
    %v982 = vpop.f32.mrf.mxu0
    %v983 = vadd.f32 %v934, %v982
    %984 = vmatmul.bf16.gmra.mxu0 %v246
    %v985 = vpop.f32.mrf.mxu0
    %v986 = vadd.f32 %v937, %v985
    %v987 = vpop.f32.mrf.mxu0
    %v988 = vadd.f32 %v939, %v987
    %989 = vmatmul.bf16.gmra.mxu0 %v250
    %v990 = vpop.f32.mrf.mxu0
    %v991 = vadd.f32 %v942, %v990
    %v992 = vpop.f32.mrf.mxu0
    %v993 = vadd.f32 %v944, %v992
    %994 = vdwg.mxu0
    %v995 = vld [vmem:[%s3] sm:$0xff]
    %v996 = vld [vmem:[%s3 + $0x8] sm:$0xff]
    %v997 = vld [vmem:[%s3 + $0x10] sm:$0xff]
    %v998 = vld [vmem:[%s3 + $0x18] sm:$0xff]
    %v999 = vld [vmem:[%s3 + $0x20] sm:$0xff]
    %v1000 = vld [vmem:[%s3 + $0x28] sm:$0xff]
    %v1001 = vld [vmem:[%s3 + $0x30] sm:$0xff]
    %v1002 = vld [vmem:[%s3 + $0x38] sm:$0xff]
    %v1003 = vld [vmem:[%s3 + $0x40] sm:$0xff]
    %v1004 = vld [vmem:[%s3 + $0x48] sm:$0xff]
    %v1005 = vld [vmem:[%s3 + $0x50] sm:$0xff]
    %v1006 = vld [vmem:[%s3 + $0x58] sm:$0xff]
    %v1007 = vld [vmem:[%s3 + $0x60] sm:$0xff]
    %v1008 = vld [vmem:[%s3 + $0x68] sm:$0xff]
    %v1009 = vld [vmem:[%s3 + $0x70] sm:$0xff]
    %v1010 = vld [vmem:[%s3 + $0x78] sm:$0xff]
    %v1011 = vunpack.c.l.bf16 %v995
    %v1012 = vunpack.c.h.bf16 %v995
    %v1013 = vunpack.c.l.bf16 %v996
    %v1014 = vunpack.c.h.bf16 %v996
    %v1015 = vunpack.c.l.bf16 %v997
    %v1016 = vunpack.c.h.bf16 %v997
    %v1017 = vunpack.c.l.bf16 %v998
    %v1018 = vunpack.c.h.bf16 %v998
    %v1019 = vunpack.c.l.bf16 %v999
    %v1020 = vunpack.c.h.bf16 %v999
    %v1021 = vunpack.c.l.bf16 %v1000
    %v1022 = vunpack.c.h.bf16 %v1000
    %v1023 = vunpack.c.l.bf16 %v1001
    %v1024 = vunpack.c.h.bf16 %v1001
    %v1025 = vunpack.c.l.bf16 %v1002
    %v1026 = vunpack.c.h.bf16 %v1002
    %v1027 = vunpack.c.l.bf16 %v1003
    %v1028 = vunpack.c.h.bf16 %v1003
    %v1029 = vunpack.c.l.bf16 %v1004
    %v1030 = vunpack.c.h.bf16 %v1004
    %v1031 = vunpack.c.l.bf16 %v1005
    %v1032 = vunpack.c.h.bf16 %v1005
    %v1033 = vunpack.c.l.bf16 %v1006
    %v1034 = vunpack.c.h.bf16 %v1006
    %v1035 = vunpack.c.l.bf16 %v1007
    %v1036 = vunpack.c.h.bf16 %v1007
    %v1037 = vunpack.c.l.bf16 %v1008
    %v1038 = vunpack.c.h.bf16 %v1008
    %v1039 = vunpack.c.l.bf16 %v1009
    %v1040 = vunpack.c.h.bf16 %v1009
    %v1041 = vunpack.c.l.bf16 %v1010
    %v1042 = vunpack.c.h.bf16 %v1010
    %v1043 = vadd.f32 %v760, %v1011
    %v1044 = vadd.f32 %v956, %v1012
    %v1045 = vadd.f32 %v762, %v1013
    %v1046 = vadd.f32 %v958, %v1014
    %v1047 = vadd.f32 %v765, %v1015
    %v1048 = vadd.f32 %v961, %v1016
    %v1049 = vadd.f32 %v767, %v1017
    %v1050 = vadd.f32 %v963, %v1018
    %v1051 = vadd.f32 %v770, %v1019
    %v1052 = vadd.f32 %v966, %v1020
    %v1053 = vadd.f32 %v772, %v1021
    %v1054 = vadd.f32 %v968, %v1022
    %v1055 = vadd.f32 %v775, %v1023
    %v1056 = vadd.f32 %v971, %v1024
    %v1057 = vadd.f32 %v777, %v1025
    %v1058 = vadd.f32 %v973, %v1026
    %v1059 = vadd.f32 %v780, %v1027
    %v1060 = vadd.f32 %v976, %v1028
    %v1061 = vadd.f32 %v782, %v1029
    %v1062 = vadd.f32 %v978, %v1030
    %v1063 = vadd.f32 %v785, %v1031
    %v1064 = vadd.f32 %v981, %v1032
    %v1065 = vadd.f32 %v787, %v1033
    %v1066 = vadd.f32 %v983, %v1034
    %v1067 = vadd.f32 %v790, %v1035
    %v1068 = vadd.f32 %v986, %v1036
    %v1069 = vadd.f32 %v792, %v1037
    %v1070 = vadd.f32 %v988, %v1038
    %v1071 = vadd.f32 %v795, %v1039
    %v1072 = vadd.f32 %v991, %v1040
    %v1073 = vadd.f32 %v797, %v1041
    %v1074 = vadd.f32 %v993, %v1042
    %v1075 = vpack.c.bf16 %v1044, %v1043
    %v1076 = vpack.c.bf16 %v1046, %v1045
    %v1077 = vpack.c.bf16 %v1048, %v1047
    %v1078 = vpack.c.bf16 %v1050, %v1049
    %v1079 = vpack.c.bf16 %v1052, %v1051
    %v1080 = vpack.c.bf16 %v1054, %v1053
    %v1081 = vpack.c.bf16 %v1056, %v1055
    %v1082 = vpack.c.bf16 %v1058, %v1057
    %v1083 = vpack.c.bf16 %v1060, %v1059
    %v1084 = vpack.c.bf16 %v1062, %v1061
    %v1085 = vpack.c.bf16 %v1064, %v1063
    %v1086 = vpack.c.bf16 %v1066, %v1065
    %v1087 = vpack.c.bf16 %v1068, %v1067
    %v1088 = vpack.c.bf16 %v1070, %v1069
    %v1089 = vpack.c.bf16 %v1072, %v1071
    %v1090 = vpack.c.bf16 %v1074, %v1073
    %1091 = vst [vmem:[#allocation2] sm:$0xff] %v1075
    %1092 = vst [vmem:[#allocation2 + $0x8] sm:$0xff] %v1076
    %1093 = vst [vmem:[#allocation2 + $0x10] sm:$0xff] %v1077
    %1094 = vst [vmem:[#allocation2 + $0x18] sm:$0xff] %v1078
    %1095 = vst [vmem:[#allocation2 + $0x20] sm:$0xff] %v1079
    %1096 = vst [vmem:[#allocation2 + $0x28] sm:$0xff] %v1080
    %1097 = vst [vmem:[#allocation2 + $0x30] sm:$0xff] %v1081
    %1098 = vst [vmem:[#allocation2 + $0x38] sm:$0xff] %v1082
    %1099 = vst [vmem:[#allocation2 + $0x40] sm:$0xff] %v1083
    %1100 = vst [vmem:[#allocation2 + $0x48] sm:$0xff] %v1084
    %1101 = vst [vmem:[#allocation2 + $0x50] sm:$0xff] %v1085
    %1102 = vst [vmem:[#allocation2 + $0x58] sm:$0xff] %v1086
    %1103 = vst [vmem:[#allocation2 + $0x60] sm:$0xff] %v1087
    %1104 = vst [vmem:[#allocation2 + $0x68] sm:$0xff] %v1088
    %1105 = vst [vmem:[#allocation2 + $0x70] sm:$0xff] %v1089
    %1106 = vst [vmem:[#allocation2 + $0x78] sm:$0xff] %v1090
    // Predicated region
    $region18: #{cross_attention_block_forward.19} parent=1 // pred_check
      _
    $region19: #{cross_attention_block_forward.19} parent=1 // pred_check_branch
      %1108 = sbr.rel (0) target = $region21
    $region20: #{cross_attention_block_forward.19} parent=1 // pred_region
      %1110 = vsyncadd [#allocation3], 0
      %s1111 = sshll.u32 [#allocation2], 4
      %s1112 = int_to_ptr.vmem [resolvable:$true] %s1111
      %s1113 = sshll.u32 %s4, 4
      %s1114 = int_to_ptr.hbm [resolvable:$true] %s1113
      %1119 = dma.vmem_to_hbm [thread:$0]  %s1112, 2048, %s1114, [#allocation3], 128, 128, 8
    $region21: #{cross_attention_block_forward.19} parent=1 // pred_fallthru
      _
    // Predicated region
    $region22: #{cross_attention_block_forward.19} parent=1 // pred_check
      _
    $region23: #{cross_attention_block_forward.19} parent=1 // pred_check_branch
      %1121 = sbr.rel (0) target = $region25
    $region24: #{cross_attention_block_forward.19} parent=1 // pred_region
      %1123 = dma.done [#allocation3], 2048
    $region25: #{cross_attention_block_forward.19} parent=1 // pred_fallthru
      _
    %1124 = vsyncpa [#allocation3], 1

// kernel: cross_attention_block_forward.18
$region0: #{cross_attention_block_forward.18}
  #allocation0 [shape = 'u32[]', space=smem, size = 0x4, offset = 0x4, fixed_abs, tag = 'smem constant byte address 0x4 - core index']
  #allocation1 [shape = 'u32[72,128]{1,0:T(1,128)}', space=vmem, size = 0x9000, scoped, tag = 'internal scratch']
  #allocation2 [shape = 'f32[10,10,4,128]{3,2,1,0:T(4,128)}', space=vmem, size = 0x32000, scoped, tag = 'scratch operand']
  %s0 = inlined_call_operand.vmem [shape: bf16[16,8,4,128], index: 0, kind: input, shape index: {}]
  %s1 = inlined_call_operand.vmem [shape: bf16[3,3,4,128], index: 1, kind: input, shape index: {}]
  %s2 = inlined_call_operand.vmem [shape: bf16[4,128], index: 2, kind: input, shape index: {}]
  %s3 = inlined_call_operand.vmem [shape: bf16[16,8,4,128], index: 3, kind: output, shape index: {}]
  %s4 = sld [smem:[#allocation0]]
  $region45: #{cross_attention_block_forward.18} parent=0
    _
  %s6 = ssub.s32 1, %s4
  %s7 = scalar_select 0, %s6, %s4
  loop: start=0, step=1, limit=4
  $region2: #{cross_attention_block_forward.18} parent=0 // loop_pre_header
    _
  $region3: #{cross_attention_block_forward.18} parent=0 // loop_header
    %s9 = sphi 0, %s13
    %p10 = scmp.ge.s32.totalorder %s9, 4
    %s19 = sphi 0, %s21
    %s22 = sphi 0, %s19
    %s23 = sphi 0, %s22
    %s39 = sphi 0, %s23
    %s43 = sphi 0, %s43
    %s45 = sphi 0, %s43
    %s46 = sphi 0, %s45
    %s60 = sphi 0, %s46
    %s64 = sphi 0, %s64
    %s66 = sphi 0, %s64
    %s67 = sphi 0, %s66
    %s81 = sphi 0, %s67
    %s87 = sphi 0, %s89
    %s90 = sphi 0, %s87
    %s91 = sphi 0, %s90
    %s107 = sphi 0, %s91
  $region4: #{cross_attention_block_forward.18} parent=0 // loop_header_branch
    %12 = sbr.rel (%p10) target = $region8
  $region5: #{cross_attention_block_forward.18} parent=0 // loop_body
    %s14 = ssub.s32 %s9, 1
    %s15 = ssub.s32 %s9, 2
    %s16 = sadd.s32 %s9, 1
    %s17 = ssub.s32 %s9, %s16
    %p18 = scmp.eq.s32.totalorder %s17, 0
    %s20 = sadd.s32 %s19, 1
    %s21 = scalar_select %p18, %s19, %s20
    %p24 = pneg %p18
    %p25 = scmp.eq.s32.totalorder %s9, 1
    %p26 = por %p24, %p25
    %p27 = scmp.ne.s32.totalorder %s19, %s22
    %p28 = scmp.eq.s32.totalorder %s9, 0
    %p29 = por %p27, %p28
    %p30 = scmp.ne.s32.totalorder %s19, %s22
    %p31 = scmp.eq.s32.totalorder %s14, 1
    %p32 = por %p30, %p31
    %p33 = scmp.ne.s32.totalorder %s22, %s23
    %p34 = scmp.eq.s32.totalorder %s14, 0
    %p35 = por %p33, %p34
    %p36 = scmp.ne.s32.totalorder %s22, %s23
    %p37 = scmp.eq.s32.totalorder %s15, 1
    %p38 = por %p36, %p37
    %p40 = scmp.ne.s32.totalorder %s23, %s39
    %p41 = scmp.eq.s32.totalorder %s15, 0
    %p42 = por %p40, %p41
    %s44 = sadd.s32 %s43, 1
    %p47 = scmp.eq.s32.totalorder %s9, 1
    %p48 = scmp.ne.s32.totalorder %s43, %s45
    %p49 = scmp.eq.s32.totalorder %s9, 0
    %p50 = por %p48, %p49
    %p51 = scmp.ne.s32.totalorder %s43, %s45
    %p52 = scmp.eq.s32.totalorder %s14, 1
    %p53 = por %p51, %p52
    %p54 = scmp.ne.s32.totalorder %s45, %s46
    %p55 = scmp.eq.s32.totalorder %s14, 0
    %p56 = por %p54, %p55
    %p57 = scmp.ne.s32.totalorder %s45, %s46
    %p58 = scmp.eq.s32.totalorder %s15, 1
    %p59 = por %p57, %p58
    %p61 = scmp.ne.s32.totalorder %s46, %s60
    %p62 = scmp.eq.s32.totalorder %s15, 0
    %p63 = por %p61, %p62
    %s65 = sadd.s32 %s64, 1
    %p68 = scmp.eq.s32.totalorder %s9, 1
    %p69 = scmp.ne.s32.totalorder %s64, %s66
    %p70 = scmp.eq.s32.totalorder %s9, 0
    %p71 = por %p69, %p70
    %p72 = scmp.ne.s32.totalorder %s64, %s66
    %p73 = scmp.eq.s32.totalorder %s14, 1
    %p74 = por %p72, %p73
    %p75 = scmp.ne.s32.totalorder %s66, %s67
    %p76 = scmp.eq.s32.totalorder %s14, 0
    %p77 = por %p75, %p76
    %p78 = scmp.ne.s32.totalorder %s66, %s67
    %p79 = scmp.eq.s32.totalorder %s15, 1
    %p80 = por %p78, %p79
    %p82 = scmp.ne.s32.totalorder %s67, %s81
    %p83 = scmp.eq.s32.totalorder %s15, 0
    %p84 = por %p82, %p83
    %s85 = ssub.s32 %s9, %s16
    %p86 = scmp.eq.s32.totalorder %s85, 0
    %s88 = sadd.s32 %s87, 1
    %s89 = scalar_select %p86, %s87, %s88
    %p92 = pneg %p86
    %p93 = scmp.eq.s32.totalorder %s9, 1
    %p94 = por %p92, %p93
    %p95 = scmp.ne.s32.totalorder %s87, %s90
    %p96 = scmp.eq.s32.totalorder %s9, 0
    %p97 = por %p95, %p96
    %p98 = scmp.ne.s32.totalorder %s87, %s90
    %p99 = scmp.eq.s32.totalorder %s14, 1
    %p100 = por %p98, %p99
    %p101 = scmp.ne.s32.totalorder %s90, %s91
    %p102 = scmp.eq.s32.totalorder %s14, 0
    %p103 = por %p101, %p102
    %p104 = scmp.ne.s32.totalorder %s90, %s91
    %p105 = scmp.eq.s32.totalorder %s15, 1
    %p106 = por %p104, %p105
    %p108 = scmp.ne.s32.totalorder %s91, %s107
    %p109 = scmp.eq.s32.totalorder %s15, 0
    %p110 = por %p108, %p109
    %p111 = scmp.le.s32.totalorder 1, %s9
    %p112 = scmp.lt.s32.totalorder %s9, 3
    %p113 = pnand %p111, %p112
    %p114 = pneg %p113
    // Predicated region
    $region9: #{cross_attention_block_forward.18} parent=5 // pred_check
      _
    $region10: #{cross_attention_block_forward.18} parent=5 // pred_check_branch
      %116 = sbr.rel (%p113) target = $region12
    $region11: #{cross_attention_block_forward.18} parent=5 // pred_region
      %s117 = ssub.s32 %s9, 1
      // Predicated region
      $region13: #{cross_attention_block_forward.18} parent=11 // pred_check
        %p118 = pneg %p56
      $region14: #{cross_attention_block_forward.18} parent=11 // pred_check_branch
        %120 = sbr.rel (%p118) target = $region16
      $region15: #{cross_attention_block_forward.18} parent=11 // pred_region
        _
      $region16: #{cross_attention_block_forward.18} parent=11 // pred_fallthru
        _
      // Predicated region
      $region17: #{cross_attention_block_forward.18} parent=11 // pred_check
        %p121 = pneg %p77
      $region18: #{cross_attention_block_forward.18} parent=11 // pred_check_branch
        %123 = sbr.rel (%p121) target = $region20
      $region19: #{cross_attention_block_forward.18} parent=11 // pred_region
        _
      $region20: #{cross_attention_block_forward.18} parent=11 // pred_fallthru
        _
    $region12: #{cross_attention_block_forward.18} parent=5 // pred_fallthru
      _
    %p124 = scmp.lt.s32.totalorder %s9, 2
    // Predicated region
    $region21: #{cross_attention_block_forward.18} parent=5 // pred_check
      %p125 = pneg %p124
    $region22: #{cross_attention_block_forward.18} parent=5 // pred_check_branch
      %127 = sbr.rel (%p125) target = $region24
    $region23: #{cross_attention_block_forward.18} parent=5 // pred_region
      // Predicated region
      $region25: #{cross_attention_block_forward.18} parent=23 // pred_check
        %p128 = pneg %p29
      $region26: #{cross_attention_block_forward.18} parent=23 // pred_check_branch
        %130 = sbr.rel (%p128) target = $region28
      $region27: #{cross_attention_block_forward.18} parent=23 // pred_region
        %s131 = smul.u32 8, %s9
        %p132 = scmp.lt.s32.totalorder %s131, 15
        %s133 = scalar_select %p132, %s131, 15
        %s134 = smul.addr %s133, 8
        %s135 = smul.addr %s134, 2
        %s136 = scalar_lea.vmem %s0, %s135
        %s137 = smul.u32 8, %s9
      $region28: #{cross_attention_block_forward.18} parent=23 // pred_fallthru
        _
    $region24: #{cross_attention_block_forward.18} parent=5 // pred_fallthru
      _
    %p138 = scmp.le.s32.totalorder 1, %s9
    %p139 = scmp.lt.s32.totalorder %s9, 3
    %p140 = pnand %p138, %p139
    %p141 = pneg %p140
    // Predicated region
    $region29: #{cross_attention_block_forward.18} parent=5 // pred_check
      _
    $region30: #{cross_attention_block_forward.18} parent=5 // pred_check_branch
      %143 = sbr.rel (%p140) target = $region32
    $region31: #{cross_attention_block_forward.18} parent=5 // pred_region
      %s144 = ssub.s32 %s9, 1
      %s145 = smul.u32 8, %s14
      %p146 = scmp.lt.s32.totalorder %s145, 15
      %s147 = scalar_select %p146, %s145, 15
      %s148 = smul.addr %s147, 8
      %s149 = smul.addr %s148, 2
      %s150 = scalar_lea.vmem %s0, %s149
      %p151 = pneg %p35
      %p152 = pneg %p32
      %p153 = pneg %p56
      %p154 = pneg %p53
      %p155 = pneg %p77
      %p156 = pneg %p74
      %p157 = pneg %p103
      %p158 = pneg %p100
      %s159 = smul.u32 8, %s14
      %p160 = scmp.lt.s32.totalorder %s159, 15
      %s161 = scalar_select %p160, %s159, 15
      %s162 = smul.addr %s161, 8
      %s163 = smul.addr %s162, 2
      %s164 = scalar_lea.vmem %s3, %s163
      %s165 = smul.u32 8, %s14
      %p166 = scmp.lt.s32.totalorder %s165, 15
      %s167 = scalar_select %p166, %s165, 15
      %s168 = smul.addr %s167, 8
      %s169 = smul.addr %s168, 2
      %s170 = scalar_lea.vmem %s0, %s169
      %s171 = smul.u32 8, %s14
      %s172 = smul.u32 8, %s14
      %p173 = scmp.lt.s32.totalorder %s172, 15
      %s174 = scalar_select %p173, %s172, 15
      %s175 = smul.addr %s174, 8
      %s176 = smul.addr %s175, 2
      %s177 = scalar_lea.vmem %s3, %s176
      %s178 = smul.u32 8, %s14
      %179 = vst [vmem:[#allocation2] sm:$0xf] 0.0
      %180 = vst [vmem:[#allocation2 + $0x4] sm:$0xf] 0.0
      %181 = vst [vmem:[#allocation2 + $0x8] sm:$0xf] 0.0
      %182 = vst [vmem:[#allocation2 + $0xc] sm:$0xf] 0.0
      %183 = vst [vmem:[#allocation2 + $0x10] sm:$0xf] 0.0
      %184 = vst [vmem:[#allocation2 + $0x14] sm:$0xf] 0.0
      %185 = vst [vmem:[#allocation2 + $0x18] sm:$0xf] 0.0
      %186 = vst [vmem:[#allocation2 + $0x1c] sm:$0xf] 0.0
      %187 = vst [vmem:[#allocation2 + $0x20] sm:$0xf] 0.0
      %188 = vst [vmem:[#allocation2 + $0x24] sm:$0xf] 0.0
      %s189 = scalar_lea.vmem [#allocation2], 360
      %190 = vst [vmem:[%s189] sm:$0xf] 0.0
      %191 = vst [vmem:[%s189 + $0x4] sm:$0xf] 0.0
      %192 = vst [vmem:[%s189 + $0x8] sm:$0xf] 0.0
      %193 = vst [vmem:[%s189 + $0xc] sm:$0xf] 0.0
      %194 = vst [vmem:[%s189 + $0x10] sm:$0xf] 0.0
      %195 = vst [vmem:[%s189 + $0x14] sm:$0xf] 0.0
      %196 = vst [vmem:[%s189 + $0x18] sm:$0xf] 0.0
      %197 = vst [vmem:[%s189 + $0x1c] sm:$0xf] 0.0
      %198 = vst [vmem:[%s189 + $0x20] sm:$0xf] 0.0
      %199 = vst [vmem:[%s189 + $0x24] sm:$0xf] 0.0
      %200 = vst [vmem:[#allocation2] sm:$0xf] 0.0
      %201 = vst [vmem:[#allocation2 + $0x28] sm:$0xf] 0.0
      %202 = vst [vmem:[#allocation2 + $0x50] sm:$0xf] 0.0
      %203 = vst [vmem:[#allocation2 + $0x78] sm:$0xf] 0.0
      %204 = vst [vmem:[#allocation2 + $0xa0] sm:$0xf] 0.0
      %205 = vst [vmem:[#allocation2 + $0xc8] sm:$0xf] 0.0
      %206 = vst [vmem:[#allocation2 + $0xf0] sm:$0xf] 0.0
      %207 = vst [vmem:[#allocation2 + $0x118] sm:$0xf] 0.0
      %208 = vst [vmem:[#allocation2 + $0x140] sm:$0xf] 0.0
      %209 = vst [vmem:[#allocation2 + $0x168] sm:$0xf] 0.0
      %s210 = scalar_lea.vmem [#allocation2], 36
      %211 = vst [vmem:[%s210] sm:$0xf] 0.0
      %212 = vst [vmem:[%s210 + $0x28] sm:$0xf] 0.0
      %213 = vst [vmem:[%s210 + $0x50] sm:$0xf] 0.0
      %214 = vst [vmem:[%s210 + $0x78] sm:$0xf] 0.0
      %215 = vst [vmem:[%s210 + $0xa0] sm:$0xf] 0.0
      %216 = vst [vmem:[%s210 + $0xc8] sm:$0xf] 0.0
      %217 = vst [vmem:[%s210 + $0xf0] sm:$0xf] 0.0
      %218 = vst [vmem:[%s210 + $0x118] sm:$0xf] 0.0
      %219 = vst [vmem:[%s210 + $0x140] sm:$0xf] 0.0
      %220 = vst [vmem:[%s210 + $0x168] sm:$0xf] 0.0
      %v221 = vld [vmem:[%s170] sm:$0x3]
      %v222 = vld [vmem:[%s170 + $0x2] sm:$0x3]
      %v223 = vld [vmem:[%s170 + $0x4] sm:$0x3]
      %v224 = vld [vmem:[%s170 + $0x6] sm:$0x3]
      %v225 = vld [vmem:[%s170 + $0x8] sm:$0x3]
      %v226 = vld [vmem:[%s170 + $0xa] sm:$0x3]
      %v227 = vld [vmem:[%s170 + $0xc] sm:$0x3]
      %v228 = vld [vmem:[%s170 + $0xe] sm:$0x3]
      %v229 = vld [vmem:[%s170 + $0x10] sm:$0x3]
      %v230 = vld [vmem:[%s170 + $0x12] sm:$0x3]
      %v231 = vld [vmem:[%s170 + $0x14] sm:$0x3]
      %v232 = vld [vmem:[%s170 + $0x16] sm:$0x3]
      %v233 = vld [vmem:[%s170 + $0x18] sm:$0x3]
      %v234 = vld [vmem:[%s170 + $0x1a] sm:$0x3]
      %v235 = vld [vmem:[%s170 + $0x1c] sm:$0x3]
      %v236 = vld [vmem:[%s170 + $0x1e] sm:$0x3]
      %v237 = vld [vmem:[%s170 + $0x20] sm:$0x3]
      %v238 = vld [vmem:[%s170 + $0x22] sm:$0x3]
      %v239 = vld [vmem:[%s170 + $0x24] sm:$0x3]
      %v240 = vld [vmem:[%s170 + $0x26] sm:$0x3]
      %v241 = vld [vmem:[%s170 + $0x28] sm:$0x3]
      %v242 = vld [vmem:[%s170 + $0x2a] sm:$0x3]
      %v243 = vld [vmem:[%s170 + $0x2c] sm:$0x3]
      %v244 = vld [vmem:[%s170 + $0x2e] sm:$0x3]
      %v245 = vld [vmem:[%s170 + $0x30] sm:$0x3]
      %v246 = vld [vmem:[%s170 + $0x32] sm:$0x3]
      %v247 = vld [vmem:[%s170 + $0x34] sm:$0x3]
      %v248 = vld [vmem:[%s170 + $0x36] sm:$0x3]
      %v249 = vld [vmem:[%s170 + $0x38] sm:$0x3]
      %v250 = vld [vmem:[%s170 + $0x3a] sm:$0x3]
      %v251 = vld [vmem:[%s170 + $0x3c] sm:$0x3]
      %v252 = vld [vmem:[%s170 + $0x3e] sm:$0x3]
      %v253 = vld [vmem:[%s170 + $0x40] sm:$0x3]
      %v254 = vld [vmem:[%s170 + $0x42] sm:$0x3]
      %v255 = vld [vmem:[%s170 + $0x44] sm:$0x3]
      %v256 = vld [vmem:[%s170 + $0x46] sm:$0x3]
      %v257 = vld [vmem:[%s170 + $0x48] sm:$0x3]
      %v258 = vld [vmem:[%s170 + $0x4a] sm:$0x3]
      %v259 = vld [vmem:[%s170 + $0x4c] sm:$0x3]
      %v260 = vld [vmem:[%s170 + $0x4e] sm:$0x3]
      %v261 = vld [vmem:[%s170 + $0x50] sm:$0x3]
      %v262 = vld [vmem:[%s170 + $0x52] sm:$0x3]
      %v263 = vld [vmem:[%s170 + $0x54] sm:$0x3]
      %v264 = vld [vmem:[%s170 + $0x56] sm:$0x3]
      %v265 = vld [vmem:[%s170 + $0x58] sm:$0x3]
      %v266 = vld [vmem:[%s170 + $0x5a] sm:$0x3]
      %v267 = vld [vmem:[%s170 + $0x5c] sm:$0x3]
      %v268 = vld [vmem:[%s170 + $0x5e] sm:$0x3]
      %v269 = vld [vmem:[%s170 + $0x60] sm:$0x3]
      %v270 = vld [vmem:[%s170 + $0x62] sm:$0x3]
      %v271 = vld [vmem:[%s170 + $0x64] sm:$0x3]
      %v272 = vld [vmem:[%s170 + $0x66] sm:$0x3]
      %v273 = vld [vmem:[%s170 + $0x68] sm:$0x3]
      %v274 = vld [vmem:[%s170 + $0x6a] sm:$0x3]
      %v275 = vld [vmem:[%s170 + $0x6c] sm:$0x3]
      %v276 = vld [vmem:[%s170 + $0x6e] sm:$0x3]
      %v277 = vld [vmem:[%s170 + $0x70] sm:$0x3]
      %v278 = vld [vmem:[%s170 + $0x72] sm:$0x3]
      %v279 = vld [vmem:[%s170 + $0x74] sm:$0x3]
      %v280 = vld [vmem:[%s170 + $0x76] sm:$0x3]
      %v281 = vld [vmem:[%s170 + $0x78] sm:$0x3]
      %v282 = vld [vmem:[%s170 + $0x7a] sm:$0x3]
      %v283 = vld [vmem:[%s170 + $0x7c] sm:$0x3]
      %v284 = vld [vmem:[%s170 + $0x7e] sm:$0x3]
      %v285 = vunpack.c.l.bf16 %v221
      %v286 = vunpack.c.l.bf16 %v222
      %v287 = vunpack.c.l.bf16 %v223
      %v288 = vunpack.c.l.bf16 %v224
      %v289 = vunpack.c.l.bf16 %v225
      %v290 = vunpack.c.l.bf16 %v226
      %v291 = vunpack.c.l.bf16 %v227
      %v292 = vunpack.c.l.bf16 %v228
      %v293 = vunpack.c.l.bf16 %v229
      %v294 = vunpack.c.l.bf16 %v230
      %v295 = vunpack.c.l.bf16 %v231
      %v296 = vunpack.c.l.bf16 %v232
      %v297 = vunpack.c.l.bf16 %v233
      %v298 = vunpack.c.l.bf16 %v234
      %v299 = vunpack.c.l.bf16 %v235
      %v300 = vunpack.c.l.bf16 %v236
      %v301 = vunpack.c.l.bf16 %v237
      %v302 = vunpack.c.l.bf16 %v238
      %v303 = vunpack.c.l.bf16 %v239
      %v304 = vunpack.c.l.bf16 %v240
      %v305 = vunpack.c.l.bf16 %v241
      %v306 = vunpack.c.l.bf16 %v242
      %v307 = vunpack.c.l.bf16 %v243
      %v308 = vunpack.c.l.bf16 %v244
      %v309 = vunpack.c.l.bf16 %v245
      %v310 = vunpack.c.l.bf16 %v246
      %v311 = vunpack.c.l.bf16 %v247
      %v312 = vunpack.c.l.bf16 %v248
      %v313 = vunpack.c.l.bf16 %v249
      %v314 = vunpack.c.l.bf16 %v250
      %v315 = vunpack.c.l.bf16 %v251
      %v316 = vunpack.c.l.bf16 %v252
      %v317 = vunpack.c.l.bf16 %v253
      %v318 = vunpack.c.l.bf16 %v254
      %v319 = vunpack.c.l.bf16 %v255
      %v320 = vunpack.c.l.bf16 %v256
      %v321 = vunpack.c.l.bf16 %v257
      %v322 = vunpack.c.l.bf16 %v258
      %v323 = vunpack.c.l.bf16 %v259
      %v324 = vunpack.c.l.bf16 %v260
      %v325 = vunpack.c.l.bf16 %v261
      %v326 = vunpack.c.l.bf16 %v262
      %v327 = vunpack.c.l.bf16 %v263
      %v328 = vunpack.c.l.bf16 %v264
      %v329 = vunpack.c.l.bf16 %v265
      %v330 = vunpack.c.l.bf16 %v266
      %v331 = vunpack.c.l.bf16 %v267
      %v332 = vunpack.c.l.bf16 %v268
      %v333 = vunpack.c.l.bf16 %v269
      %v334 = vunpack.c.l.bf16 %v270
      %v335 = vunpack.c.l.bf16 %v271
      %v336 = vunpack.c.l.bf16 %v272
      %v337 = vunpack.c.l.bf16 %v273
      %v338 = vunpack.c.l.bf16 %v274
      %v339 = vunpack.c.l.bf16 %v275
      %v340 = vunpack.c.l.bf16 %v276
      %v341 = vunpack.c.l.bf16 %v277
      %v342 = vunpack.c.l.bf16 %v278
      %v343 = vunpack.c.l.bf16 %v279
      %v344 = vunpack.c.l.bf16 %v280
      %v345 = vunpack.c.l.bf16 %v281
      %v346 = vunpack.c.l.bf16 %v282
      %v347 = vunpack.c.l.bf16 %v283
      %v348 = vunpack.c.l.bf16 %v284
      %s349 = scalar_lea.vmem [#allocation2], 44
      %350 = vst [vmem:[%s349] sm:$0xf] %v285
      %351 = vst [vmem:[%s349 + $0x4] sm:$0xf] %v286
      %352 = vst [vmem:[%s349 + $0x8] sm:$0xf] %v287
      %353 = vst [vmem:[%s349 + $0xc] sm:$0xf] %v288
      %354 = vst [vmem:[%s349 + $0x10] sm:$0xf] %v289
      %355 = vst [vmem:[%s349 + $0x14] sm:$0xf] %v290
      %356 = vst [vmem:[%s349 + $0x18] sm:$0xf] %v291
      %357 = vst [vmem:[%s349 + $0x1c] sm:$0xf] %v292
      %358 = vst [vmem:[%s349 + $0x28] sm:$0xf] %v293
      %359 = vst [vmem:[%s349 + $0x2c] sm:$0xf] %v294
      %360 = vst [vmem:[%s349 + $0x30] sm:$0xf] %v295
      %361 = vst [vmem:[%s349 + $0x34] sm:$0xf] %v296
      %362 = vst [vmem:[%s349 + $0x38] sm:$0xf] %v297
      %363 = vst [vmem:[%s349 + $0x3c] sm:$0xf] %v298
      %364 = vst [vmem:[%s349 + $0x40] sm:$0xf] %v299
      %365 = vst [vmem:[%s349 + $0x44] sm:$0xf] %v300
      %366 = vst [vmem:[%s349 + $0x50] sm:$0xf] %v301
      %367 = vst [vmem:[%s349 + $0x54] sm:$0xf] %v302
      %368 = vst [vmem:[%s349 + $0x58] sm:$0xf] %v303
      %369 = vst [vmem:[%s349 + $0x5c] sm:$0xf] %v304
      %370 = vst [vmem:[%s349 + $0x60] sm:$0xf] %v305
      %371 = vst [vmem:[%s349 + $0x64] sm:$0xf] %v306
      %372 = vst [vmem:[%s349 + $0x68] sm:$0xf] %v307
      %373 = vst [vmem:[%s349 + $0x6c] sm:$0xf] %v308
      %374 = vst [vmem:[%s349 + $0x78] sm:$0xf] %v309
      %375 = vst [vmem:[%s349 + $0x7c] sm:$0xf] %v310
      %376 = vst [vmem:[%s349 + $0x80] sm:$0xf] %v311
      %377 = vst [vmem:[%s349 + $0x84] sm:$0xf] %v312
      %378 = vst [vmem:[%s349 + $0x88] sm:$0xf] %v313
      %379 = vst [vmem:[%s349 + $0x8c] sm:$0xf] %v314
      %380 = vst [vmem:[%s349 + $0x90] sm:$0xf] %v315
      %381 = vst [vmem:[%s349 + $0x94] sm:$0xf] %v316
      %382 = vst [vmem:[%s349 + $0xa0] sm:$0xf] %v317
      %383 = vst [vmem:[%s349 + $0xa4] sm:$0xf] %v318
      %384 = vst [vmem:[%s349 + $0xa8] sm:$0xf] %v319
      %385 = vst [vmem:[%s349 + $0xac] sm:$0xf] %v320
      %386 = vst [vmem:[%s349 + $0xb0] sm:$0xf] %v321
      %387 = vst [vmem:[%s349 + $0xb4] sm:$0xf] %v322
      %388 = vst [vmem:[%s349 + $0xb8] sm:$0xf] %v323
      %389 = vst [vmem:[%s349 + $0xbc] sm:$0xf] %v324
      %390 = vst [vmem:[%s349 + $0xc8] sm:$0xf] %v325
      %391 = vst [vmem:[%s349 + $0xcc] sm:$0xf] %v326
      %392 = vst [vmem:[%s349 + $0xd0] sm:$0xf] %v327
      %393 = vst [vmem:[%s349 + $0xd4] sm:$0xf] %v328
      %394 = vst [vmem:[%s349 + $0xd8] sm:$0xf] %v329
      %395 = vst [vmem:[%s349 + $0xdc] sm:$0xf] %v330
      %396 = vst [vmem:[%s349 + $0xe0] sm:$0xf] %v331
      %397 = vst [vmem:[%s349 + $0xe4] sm:$0xf] %v332
      %398 = vst [vmem:[%s349 + $0xf0] sm:$0xf] %v333
      %399 = vst [vmem:[%s349 + $0xf4] sm:$0xf] %v334
      %400 = vst [vmem:[%s349 + $0xf8] sm:$0xf] %v335
      %401 = vst [vmem:[%s349 + $0xfc] sm:$0xf] %v336
      %402 = vst [vmem:[%s349 + $0x100] sm:$0xf] %v337
      %403 = vst [vmem:[%s349 + $0x104] sm:$0xf] %v338
      %404 = vst [vmem:[%s349 + $0x108] sm:$0xf] %v339
      %405 = vst [vmem:[%s349 + $0x10c] sm:$0xf] %v340
      %406 = vst [vmem:[%s349 + $0x118] sm:$0xf] %v341
      %407 = vst [vmem:[%s349 + $0x11c] sm:$0xf] %v342
      %408 = vst [vmem:[%s349 + $0x120] sm:$0xf] %v343
      %409 = vst [vmem:[%s349 + $0x124] sm:$0xf] %v344
      %410 = vst [vmem:[%s349 + $0x128] sm:$0xf] %v345
      %411 = vst [vmem:[%s349 + $0x12c] sm:$0xf] %v346
      %412 = vst [vmem:[%s349 + $0x130] sm:$0xf] %v347
      %413 = vst [vmem:[%s349 + $0x134] sm:$0xf] %v348
      %v414 = vld [vmem:[%s1] sm:$0x3]
      %v415 = vld [vmem:[%s1 + $0x2] sm:$0x3]
      %v416 = vld [vmem:[%s1 + $0x4] sm:$0x3]
      %v417 = vld [vmem:[%s1 + $0x6] sm:$0x3]
      %v418 = vld [vmem:[%s1 + $0x8] sm:$0x3]
      %v419 = vld [vmem:[%s1 + $0xa] sm:$0x3]
      %v420 = vld [vmem:[%s1 + $0xc] sm:$0x3]
      %v421 = vld [vmem:[%s1 + $0xe] sm:$0x3]
      %v422 = vld [vmem:[%s1 + $0x10] sm:$0x3]
      %v423 = vunpack.c.l.bf16 %v414
      %v424 = vunpack.c.l.bf16 %v415
      %v425 = vunpack.c.l.bf16 %v416
      %v426 = vunpack.c.l.bf16 %v417
      %v427 = vunpack.c.l.bf16 %v418
      %v428 = vunpack.c.l.bf16 %v419
      %v429 = vunpack.c.l.bf16 %v420
      %v430 = vunpack.c.l.bf16 %v421
      %v431 = vunpack.c.l.bf16 %v422
      %v432 = vld [vmem:[#allocation2] sm:$0xf]
      %v433 = vld [vmem:[#allocation2 + $0x4] sm:$0xf]
      %v434 = vld [vmem:[#allocation2 + $0x8] sm:$0xf]
      %v435 = vld [vmem:[#allocation2 + $0xc] sm:$0xf]
      %v436 = vld [vmem:[#allocation2 + $0x10] sm:$0xf]
      %v437 = vld [vmem:[#allocation2 + $0x14] sm:$0xf]
      %v438 = vld [vmem:[#allocation2 + $0x18] sm:$0xf]
      %v439 = vld [vmem:[#allocation2 + $0x1c] sm:$0xf]
      %v440 = vld [vmem:[#allocation2 + $0x28] sm:$0xf]
      %v441 = vld [vmem:[#allocation2 + $0x2c] sm:$0xf]
      %v442 = vld [vmem:[#allocation2 + $0x30] sm:$0xf]
      %v443 = vld [vmem:[#allocation2 + $0x34] sm:$0xf]
      %v444 = vld [vmem:[#allocation2 + $0x38] sm:$0xf]
      %v445 = vld [vmem:[#allocation2 + $0x3c] sm:$0xf]
      %v446 = vld [vmem:[#allocation2 + $0x40] sm:$0xf]
      %v447 = vld [vmem:[#allocation2 + $0x44] sm:$0xf]
      %v448 = vld [vmem:[#allocation2 + $0x50] sm:$0xf]
      %v449 = vld [vmem:[#allocation2 + $0x54] sm:$0xf]
      %v450 = vld [vmem:[#allocation2 + $0x58] sm:$0xf]
      %v451 = vld [vmem:[#allocation2 + $0x5c] sm:$0xf]
      %v452 = vld [vmem:[#allocation2 + $0x60] sm:$0xf]
      %v453 = vld [vmem:[#allocation2 + $0x64] sm:$0xf]
      %v454 = vld [vmem:[#allocation2 + $0x68] sm:$0xf]
      %v455 = vld [vmem:[#allocation2 + $0x6c] sm:$0xf]
      %v456 = vld [vmem:[#allocation2 + $0x78] sm:$0xf]
      %v457 = vld [vmem:[#allocation2 + $0x7c] sm:$0xf]
      %v458 = vld [vmem:[#allocation2 + $0x80] sm:$0xf]
      %v459 = vld [vmem:[#allocation2 + $0x84] sm:$0xf]
      %v460 = vld [vmem:[#allocation2 + $0x88] sm:$0xf]
      %v461 = vld [vmem:[#allocation2 + $0x8c] sm:$0xf]
      %v462 = vld [vmem:[#allocation2 + $0x90] sm:$0xf]
      %v463 = vld [vmem:[#allocation2 + $0x94] sm:$0xf]
      %v464 = vld [vmem:[#allocation2 + $0xa0] sm:$0xf]
      %v465 = vld [vmem:[#allocation2 + $0xa4] sm:$0xf]
      %v466 = vld [vmem:[#allocation2 + $0xa8] sm:$0xf]
      %v467 = vld [vmem:[#allocation2 + $0xac] sm:$0xf]
      %v468 = vld [vmem:[#allocation2 + $0xb0] sm:$0xf]
      %v469 = vld [vmem:[#allocation2 + $0xb4] sm:$0xf]
      %v470 = vld [vmem:[#allocation2 + $0xb8] sm:$0xf]
      %v471 = vld [vmem:[#allocation2 + $0xbc] sm:$0xf]
      %v472 = vld [vmem:[#allocation2 + $0xc8] sm:$0xf]
      %v473 = vld [vmem:[#allocation2 + $0xcc] sm:$0xf]
      %v474 = vld [vmem:[#allocation2 + $0xd0] sm:$0xf]
      %v475 = vld [vmem:[#allocation2 + $0xd4] sm:$0xf]
      %v476 = vld [vmem:[#allocation2 + $0xd8] sm:$0xf]
      %v477 = vld [vmem:[#allocation2 + $0xdc] sm:$0xf]
      %v478 = vld [vmem:[#allocation2 + $0xe0] sm:$0xf]
      %v479 = vld [vmem:[#allocation2 + $0xe4] sm:$0xf]
      %v480 = vld [vmem:[#allocation2 + $0xf0] sm:$0xf]
      %v481 = vld [vmem:[#allocation2 + $0xf4] sm:$0xf]
      %v482 = vld [vmem:[#allocation2 + $0xf8] sm:$0xf]
      %v483 = vld [vmem:[#allocation2 + $0xfc] sm:$0xf]
      %v484 = vld [vmem:[#allocation2 + $0x100] sm:$0xf]
      %v485 = vld [vmem:[#allocation2 + $0x104] sm:$0xf]
      %v486 = vld [vmem:[#allocation2 + $0x108] sm:$0xf]
      %v487 = vld [vmem:[#allocation2 + $0x10c] sm:$0xf]
      %v488 = vld [vmem:[#allocation2 + $0x118] sm:$0xf]
      %v489 = vld [vmem:[#allocation2 + $0x11c] sm:$0xf]
      %v490 = vld [vmem:[#allocation2 + $0x120] sm:$0xf]
      %v491 = vld [vmem:[#allocation2 + $0x124] sm:$0xf]
      %v492 = vld [vmem:[#allocation2 + $0x128] sm:$0xf]
      %v493 = vld [vmem:[#allocation2 + $0x12c] sm:$0xf]
      %v494 = vld [vmem:[#allocation2 + $0x130] sm:$0xf]
      %v495 = vld [vmem:[#allocation2 + $0x134] sm:$0xf]
      %v496 = vmul.f32 %v432, %v423
      %v497 = vmul.f32 %v433, %v423
      %v498 = vmul.f32 %v434, %v423
      %v499 = vmul.f32 %v435, %v423
      %v500 = vmul.f32 %v436, %v423
      %v501 = vmul.f32 %v437, %v423
      %v502 = vmul.f32 %v438, %v423
      %v503 = vmul.f32 %v439, %v423
      %v504 = vmul.f32 %v440, %v423
      %v505 = vmul.f32 %v441, %v423
      %v506 = vmul.f32 %v442, %v423
      %v507 = vmul.f32 %v443, %v423
      %v508 = vmul.f32 %v444, %v423
      %v509 = vmul.f32 %v445, %v423
      %v510 = vmul.f32 %v446, %v423
      %v511 = vmul.f32 %v447, %v423
      %v512 = vmul.f32 %v448, %v423
      %v513 = vmul.f32 %v449, %v423
      %v514 = vmul.f32 %v450, %v423
      %v515 = vmul.f32 %v451, %v423
      %v516 = vmul.f32 %v452, %v423
      %v517 = vmul.f32 %v453, %v423
      %v518 = vmul.f32 %v454, %v423
      %v519 = vmul.f32 %v455, %v423
      %v520 = vmul.f32 %v456, %v423
      %v521 = vmul.f32 %v457, %v423
      %v522 = vmul.f32 %v458, %v423
      %v523 = vmul.f32 %v459, %v423
      %v524 = vmul.f32 %v460, %v423
      %v525 = vmul.f32 %v461, %v423
      %v526 = vmul.f32 %v462, %v423
      %v527 = vmul.f32 %v463, %v423
      %v528 = vmul.f32 %v464, %v423
      %v529 = vmul.f32 %v465, %v423
      %v530 = vmul.f32 %v466, %v423
      %v531 = vmul.f32 %v467, %v423
      %v532 = vmul.f32 %v468, %v423
      %v533 = vmul.f32 %v469, %v423
      %v534 = vmul.f32 %v470, %v423
      %v535 = vmul.f32 %v471, %v423
      %v536 = vmul.f32 %v472, %v423
      %v537 = vmul.f32 %v473, %v423
      %v538 = vmul.f32 %v474, %v423
      %v539 = vmul.f32 %v475, %v423
      %v540 = vmul.f32 %v476, %v423
      %v541 = vmul.f32 %v477, %v423
      %v542 = vmul.f32 %v478, %v423
      %v543 = vmul.f32 %v479, %v423
      %v544 = vmul.f32 %v480, %v423
      %v545 = vmul.f32 %v481, %v423
      %v546 = vmul.f32 %v482, %v423
      %v547 = vmul.f32 %v483, %v423
      %v548 = vmul.f32 %v484, %v423
      %v549 = vmul.f32 %v485, %v423
      %v550 = vmul.f32 %v486, %v423
      %v551 = vmul.f32 %v487, %v423
      %v552 = vmul.f32 %v488, %v423
      %v553 = vmul.f32 %v489, %v423
      %v554 = vmul.f32 %v490, %v423
      %v555 = vmul.f32 %v491, %v423
      %v556 = vmul.f32 %v492, %v423
      %v557 = vmul.f32 %v493, %v423
      %v558 = vmul.f32 %v494, %v423
      %v559 = vmul.f32 %v495, %v423
      %v560 = vadd.f32 %v496, 0.0
      %v561 = vadd.f32 %v497, 0.0
      %v562 = vadd.f32 %v498, 0.0
      %v563 = vadd.f32 %v499, 0.0
      %v564 = vadd.f32 %v500, 0.0
      %v565 = vadd.f32 %v501, 0.0
      %v566 = vadd.f32 %v502, 0.0
      %v567 = vadd.f32 %v503, 0.0
      %v568 = vadd.f32 %v504, 0.0
      %v569 = vadd.f32 %v505, 0.0
      %v570 = vadd.f32 %v506, 0.0
      %v571 = vadd.f32 %v507, 0.0
      %v572 = vadd.f32 %v508, 0.0
      %v573 = vadd.f32 %v509, 0.0
      %v574 = vadd.f32 %v510, 0.0
      %v575 = vadd.f32 %v511, 0.0
      %v576 = vadd.f32 %v512, 0.0
      %v577 = vadd.f32 %v513, 0.0
      %v578 = vadd.f32 %v514, 0.0
      %v579 = vadd.f32 %v515, 0.0
      %v580 = vadd.f32 %v516, 0.0
      %v581 = vadd.f32 %v517, 0.0
      %v582 = vadd.f32 %v518, 0.0
      %v583 = vadd.f32 %v519, 0.0
      %v584 = vadd.f32 %v520, 0.0
      %v585 = vadd.f32 %v521, 0.0
      %v586 = vadd.f32 %v522, 0.0
      %v587 = vadd.f32 %v523, 0.0
      %v588 = vadd.f32 %v524, 0.0
      %v589 = vadd.f32 %v525, 0.0
      %v590 = vadd.f32 %v526, 0.0
      %v591 = vadd.f32 %v527, 0.0
      %v592 = vadd.f32 %v528, 0.0
      %v593 = vadd.f32 %v529, 0.0
      %v594 = vadd.f32 %v530, 0.0
      %v595 = vadd.f32 %v531, 0.0
      %v596 = vadd.f32 %v532, 0.0
      %v597 = vadd.f32 %v533, 0.0
      %v598 = vadd.f32 %v534, 0.0
      %v599 = vadd.f32 %v535, 0.0
      %v600 = vadd.f32 %v536, 0.0
      %v601 = vadd.f32 %v537, 0.0
      %v602 = vadd.f32 %v538, 0.0
      %v603 = vadd.f32 %v539, 0.0
      %v604 = vadd.f32 %v540, 0.0
      %v605 = vadd.f32 %v541, 0.0
      %v606 = vadd.f32 %v542, 0.0
      %v607 = vadd.f32 %v543, 0.0
      %v608 = vadd.f32 %v544, 0.0
      %v609 = vadd.f32 %v545, 0.0
      %v610 = vadd.f32 %v546, 0.0
      %v611 = vadd.f32 %v547, 0.0
      %v612 = vadd.f32 %v548, 0.0
      %v613 = vadd.f32 %v549, 0.0
      %v614 = vadd.f32 %v550, 0.0
      %v615 = vadd.f32 %v551, 0.0
      %v616 = vadd.f32 %v552, 0.0
      %v617 = vadd.f32 %v553, 0.0
      %v618 = vadd.f32 %v554, 0.0
      %v619 = vadd.f32 %v555, 0.0
      %v620 = vadd.f32 %v556, 0.0
      %v621 = vadd.f32 %v557, 0.0
      %v622 = vadd.f32 %v558, 0.0
      %v623 = vadd.f32 %v559, 0.0
      %s624 = scalar_lea.vmem [#allocation2], 4
      %v625 = vld [vmem:[%s624] sm:$0xf]
      %v626 = vld [vmem:[%s624 + $0x4] sm:$0xf]
      %v627 = vld [vmem:[%s624 + $0x8] sm:$0xf]
      %v628 = vld [vmem:[%s624 + $0xc] sm:$0xf]
      %v629 = vld [vmem:[%s624 + $0x10] sm:$0xf]
      %v630 = vld [vmem:[%s624 + $0x14] sm:$0xf]
      %v631 = vld [vmem:[%s624 + $0x18] sm:$0xf]
      %v632 = vld [vmem:[%s624 + $0x1c] sm:$0xf]
      %v633 = vld [vmem:[%s624 + $0x28] sm:$0xf]
      %v634 = vld [vmem:[%s624 + $0x2c] sm:$0xf]
      %v635 = vld [vmem:[%s624 + $0x30] sm:$0xf]
      %v636 = vld [vmem:[%s624 + $0x34] sm:$0xf]
      %v637 = vld [vmem:[%s624 + $0x38] sm:$0xf]
      %v638 = vld [vmem:[%s624 + $0x3c] sm:$0xf]
      %v639 = vld [vmem:[%s624 + $0x40] sm:$0xf]
      %v640 = vld [vmem:[%s624 + $0x44] sm:$0xf]
      %v641 = vld [vmem:[%s624 + $0x50] sm:$0xf]
      %v642 = vld [vmem:[%s624 + $0x54] sm:$0xf]
      %v643 = vld [vmem:[%s624 + $0x58] sm:$0xf]
      %v644 = vld [vmem:[%s624 + $0x5c] sm:$0xf]
      %v645 = vld [vmem:[%s624 + $0x60] sm:$0xf]
      %v646 = vld [vmem:[%s624 + $0x64] sm:$0xf]
      %v647 = vld [vmem:[%s624 + $0x68] sm:$0xf]
      %v648 = vld [vmem:[%s624 + $0x6c] sm:$0xf]
      %v649 = vld [vmem:[%s624 + $0x78] sm:$0xf]
      %v650 = vld [vmem:[%s624 + $0x7c] sm:$0xf]
      %v651 = vld [vmem:[%s624 + $0x80] sm:$0xf]
      %v652 = vld [vmem:[%s624 + $0x84] sm:$0xf]
      %v653 = vld [vmem:[%s624 + $0x88] sm:$0xf]
      %v654 = vld [vmem:[%s624 + $0x8c] sm:$0xf]
      %v655 = vld [vmem:[%s624 + $0x90] sm:$0xf]
      %v656 = vld [vmem:[%s624 + $0x94] sm:$0xf]
      %v657 = vld [vmem:[%s624 + $0xa0] sm:$0xf]
      %v658 = vld [vmem:[%s624 + $0xa4] sm:$0xf]
      %v659 = vld [vmem:[%s624 + $0xa8] sm:$0xf]
      %v660 = vld [vmem:[%s624 + $0xac] sm:$0xf]
      %v661 = vld [vmem:[%s624 + $0xb0] sm:$0xf]
      %v662 = vld [vmem:[%s624 + $0xb4] sm:$0xf]
      %v663 = vld [vmem:[%s624 + $0xb8] sm:$0xf]
      %v664 = vld [vmem:[%s624 + $0xbc] sm:$0xf]
      %v665 = vld [vmem:[%s624 + $0xc8] sm:$0xf]
      %v666 = vld [vmem:[%s624 + $0xcc] sm:$0xf]
      %v667 = vld [vmem:[%s624 + $0xd0] sm:$0xf]
      %v668 = vld [vmem:[%s624 + $0xd4] sm:$0xf]
      %v669 = vld [vmem:[%s624 + $0xd8] sm:$0xf]
      %v670 = vld [vmem:[%s624 + $0xdc] sm:$0xf]
      %v671 = vld [vmem:[%s624 + $0xe0] sm:$0xf]
      %v672 = vld [vmem:[%s624 + $0xe4] sm:$0xf]
      %v673 = vld [vmem:[%s624 + $0xf0] sm:$0xf]
      %v674 = vld [vmem:[%s624 + $0xf4] sm:$0xf]
      %v675 = vld [vmem:[%s624 + $0xf8] sm:$0xf]
      %v676 = vld [vmem:[%s624 + $0xfc] sm:$0xf]
      %v677 = vld [vmem:[%s624 + $0x100] sm:$0xf]
      %v678 = vld [vmem:[%s624 + $0x104] sm:$0xf]
      %v679 = vld [vmem:[%s624 + $0x108] sm:$0xf]
      %v680 = vld [vmem:[%s624 + $0x10c] sm:$0xf]
      %v681 = vld [vmem:[%s624 + $0x118] sm:$0xf]
      %v682 = vld [vmem:[%s624 + $0x11c] sm:$0xf]
      %v683 = vld [vmem:[%s624 + $0x120] sm:$0xf]
      %v684 = vld [vmem:[%s624 + $0x124] sm:$0xf]
      %v685 = vld [vmem:[%s624 + $0x128] sm:$0xf]
      %v686 = vld [vmem:[%s624 + $0x12c] sm:$0xf]
      %v687 = vld [vmem:[%s624 + $0x130] sm:$0xf]
      %v688 = vld [vmem:[%s624 + $0x134] sm:$0xf]
      %v689 = vmul.f32 %v625, %v424
      %v690 = vmul.f32 %v626, %v424
      %v691 = vmul.f32 %v627, %v424
      %v692 = vmul.f32 %v628, %v424
      %v693 = vmul.f32 %v629, %v424
      %v694 = vmul.f32 %v630, %v424
      %v695 = vmul.f32 %v631, %v424
      %v696 = vmul.f32 %v632, %v424
      %v697 = vmul.f32 %v633, %v424
      %v698 = vmul.f32 %v634, %v424
      %v699 = vmul.f32 %v635, %v424
      %v700 = vmul.f32 %v636, %v424
      %v701 = vmul.f32 %v637, %v424
      %v702 = vmul.f32 %v638, %v424
      %v703 = vmul.f32 %v639, %v424
      %v704 = vmul.f32 %v640, %v424
      %v705 = vmul.f32 %v641, %v424
      %v706 = vmul.f32 %v642, %v424
      %v707 = vmul.f32 %v643, %v424
      %v708 = vmul.f32 %v644, %v424
      %v709 = vmul.f32 %v645, %v424
      %v710 = vmul.f32 %v646, %v424
      %v711 = vmul.f32 %v647, %v424
      %v712 = vmul.f32 %v648, %v424
      %v713 = vmul.f32 %v649, %v424
      %v714 = vmul.f32 %v650, %v424
      %v715 = vmul.f32 %v651, %v424
      %v716 = vmul.f32 %v652, %v424
      %v717 = vmul.f32 %v653, %v424
      %v718 = vmul.f32 %v654, %v424
      %v719 = vmul.f32 %v655, %v424
      %v720 = vmul.f32 %v656, %v424
      %v721 = vmul.f32 %v657, %v424
      %v722 = vmul.f32 %v658, %v424
      %v723 = vmul.f32 %v659, %v424
      %v724 = vmul.f32 %v660, %v424
      %v725 = vmul.f32 %v661, %v424
      %v726 = vmul.f32 %v662, %v424
      %v727 = vmul.f32 %v663, %v424
      %v728 = vmul.f32 %v664, %v424
      %v729 = vmul.f32 %v665, %v424
      %v730 = vmul.f32 %v666, %v424
      %v731 = vmul.f32 %v667, %v424
      %v732 = vmul.f32 %v668, %v424
      %v733 = vmul.f32 %v669, %v424
      %v734 = vmul.f32 %v670, %v424
      %v735 = vmul.f32 %v671, %v424
      %v736 = vmul.f32 %v672, %v424
      %v737 = vmul.f32 %v673, %v424
      %v738 = vmul.f32 %v674, %v424
      %v739 = vmul.f32 %v675, %v424
      %v740 = vmul.f32 %v676, %v424
      %v741 = vmul.f32 %v677, %v424
      %v742 = vmul.f32 %v678, %v424
      %v743 = vmul.f32 %v679, %v424
      %v744 = vmul.f32 %v680, %v424
      %v745 = vmul.f32 %v681, %v424
      %v746 = vmul.f32 %v682, %v424
      %v747 = vmul.f32 %v683, %v424
      %v748 = vmul.f32 %v684, %v424
      %v749 = vmul.f32 %v685, %v424
      %v750 = vmul.f32 %v686, %v424
      %v751 = vmul.f32 %v687, %v424
      %v752 = vmul.f32 %v688, %v424
      %v753 = vadd.f32 %v560, %v689
      %v754 = vadd.f32 %v561, %v690
      %v755 = vadd.f32 %v562, %v691
      %v756 = vadd.f32 %v563, %v692
      %v757 = vadd.f32 %v564, %v693
      %v758 = vadd.f32 %v565, %v694
      %v759 = vadd.f32 %v566, %v695
      %v760 = vadd.f32 %v567, %v696
      %v761 = vadd.f32 %v568, %v697
      %v762 = vadd.f32 %v569, %v698
      %v763 = vadd.f32 %v570, %v699
      %v764 = vadd.f32 %v571, %v700
      %v765 = vadd.f32 %v572, %v701
      %v766 = vadd.f32 %v573, %v702
      %v767 = vadd.f32 %v574, %v703
      %v768 = vadd.f32 %v575, %v704
      %v769 = vadd.f32 %v576, %v705
      %v770 = vadd.f32 %v577, %v706
      %v771 = vadd.f32 %v578, %v707
      %v772 = vadd.f32 %v579, %v708
      %v773 = vadd.f32 %v580, %v709
      %v774 = vadd.f32 %v581, %v710
      %v775 = vadd.f32 %v582, %v711
      %v776 = vadd.f32 %v583, %v712
      %v777 = vadd.f32 %v584, %v713
      %v778 = vadd.f32 %v585, %v714
      %v779 = vadd.f32 %v586, %v715
      %v780 = vadd.f32 %v587, %v716
      %v781 = vadd.f32 %v588, %v717
      %v782 = vadd.f32 %v589, %v718
      %v783 = vadd.f32 %v590, %v719
      %v784 = vadd.f32 %v591, %v720
      %v785 = vadd.f32 %v592, %v721
      %v786 = vadd.f32 %v593, %v722
      %v787 = vadd.f32 %v594, %v723
      %v788 = vadd.f32 %v595, %v724
      %v789 = vadd.f32 %v596, %v725
      %v790 = vadd.f32 %v597, %v726
      %v791 = vadd.f32 %v598, %v727
      %v792 = vadd.f32 %v599, %v728
      %v793 = vadd.f32 %v600, %v729
      %v794 = vadd.f32 %v601, %v730
      %v795 = vadd.f32 %v602, %v731
      %v796 = vadd.f32 %v603, %v732
      %v797 = vadd.f32 %v604, %v733
      %v798 = vadd.f32 %v605, %v734
      %v799 = vadd.f32 %v606, %v735
      %v800 = vadd.f32 %v607, %v736
      %v801 = vadd.f32 %v608, %v737
      %v802 = vadd.f32 %v609, %v738
      %v803 = vadd.f32 %v610, %v739
      %v804 = vadd.f32 %v611, %v740
      %v805 = vadd.f32 %v612, %v741
      %v806 = vadd.f32 %v613, %v742
      %v807 = vadd.f32 %v614, %v743
      %v808 = vadd.f32 %v615, %v744
      %v809 = vadd.f32 %v616, %v745
      %v810 = vadd.f32 %v617, %v746
      %v811 = vadd.f32 %v618, %v747
      %v812 = vadd.f32 %v619, %v748
      %v813 = vadd.f32 %v620, %v749
      %v814 = vadd.f32 %v621, %v750
      %v815 = vadd.f32 %v622, %v751
      %v816 = vadd.f32 %v623, %v752
      %s817 = scalar_lea.vmem [#allocation2], 8
      %v818 = vld [vmem:[%s817] sm:$0xf]
      %v819 = vld [vmem:[%s817 + $0x4] sm:$0xf]
      %v820 = vld [vmem:[%s817 + $0x8] sm:$0xf]
      %v821 = vld [vmem:[%s817 + $0xc] sm:$0xf]
      %v822 = vld [vmem:[%s817 + $0x10] sm:$0xf]
      %v823 = vld [vmem:[%s817 + $0x14] sm:$0xf]
      %v824 = vld [vmem:[%s817 + $0x18] sm:$0xf]
      %v825 = vld [vmem:[%s817 + $0x1c] sm:$0xf]
      %v826 = vld [vmem:[%s817 + $0x28] sm:$0xf]
      %v827 = vld [vmem:[%s817 + $0x2c] sm:$0xf]
      %v828 = vld [vmem:[%s817 + $0x30] sm:$0xf]
      %v829 = vld [vmem:[%s817 + $0x34] sm:$0xf]
      %v830 = vld [vmem:[%s817 + $0x38] sm:$0xf]
      %v831 = vld [vmem:[%s817 + $0x3c] sm:$0xf]
      %v832 = vld [vmem:[%s817 + $0x40] sm:$0xf]
      %v833 = vld [vmem:[%s817 + $0x44] sm:$0xf]
      %v834 = vld [vmem:[%s817 + $0x50] sm:$0xf]
      %v835 = vld [vmem:[%s817 + $0x54] sm:$0xf]
      %v836 = vld [vmem:[%s817 + $0x58] sm:$0xf]
      %v837 = vld [vmem:[%s817 + $0x5c] sm:$0xf]
      %v838 = vld [vmem:[%s817 + $0x60] sm:$0xf]
      %v839 = vld [vmem:[%s817 + $0x64] sm:$0xf]
      %v840 = vld [vmem:[%s817 + $0x68] sm:$0xf]
      %v841 = vld [vmem:[%s817 + $0x6c] sm:$0xf]
      %v842 = vld [vmem:[%s817 + $0x78] sm:$0xf]
      %v843 = vld [vmem:[%s817 + $0x7c] sm:$0xf]
      %v844 = vld [vmem:[%s817 + $0x80] sm:$0xf]
      %v845 = vld [vmem:[%s817 + $0x84] sm:$0xf]
      %v846 = vld [vmem:[%s817 + $0x88] sm:$0xf]
      %v847 = vld [vmem:[%s817 + $0x8c] sm:$0xf]
      %v848 = vld [vmem:[%s817 + $0x90] sm:$0xf]
      %v849 = vld [vmem:[%s817 + $0x94] sm:$0xf]
      %v850 = vld [vmem:[%s817 + $0xa0] sm:$0xf]
      %v851 = vld [vmem:[%s817 + $0xa4] sm:$0xf]
      %v852 = vld [vmem:[%s817 + $0xa8] sm:$0xf]
      %v853 = vld [vmem:[%s817 + $0xac] sm:$0xf]
      %v854 = vld [vmem:[%s817 + $0xb0] sm:$0xf]
      %v855 = vld [vmem:[%s817 + $0xb4] sm:$0xf]
      %v856 = vld [vmem:[%s817 + $0xb8] sm:$0xf]
      %v857 = vld [vmem:[%s817 + $0xbc] sm:$0xf]
      %v858 = vld [vmem:[%s817 + $0xc8] sm:$0xf]
      %v859 = vld [vmem:[%s817 + $0xcc] sm:$0xf]
      %v860 = vld [vmem:[%s817 + $0xd0] sm:$0xf]
      %v861 = vld [vmem:[%s817 + $0xd4] sm:$0xf]
      %v862 = vld [vmem:[%s817 + $0xd8] sm:$0xf]
      %v863 = vld [vmem:[%s817 + $0xdc] sm:$0xf]
      %v864 = vld [vmem:[%s817 + $0xe0] sm:$0xf]
      %v865 = vld [vmem:[%s817 + $0xe4] sm:$0xf]
      %v866 = vld [vmem:[%s817 + $0xf0] sm:$0xf]
      %v867 = vld [vmem:[%s817 + $0xf4] sm:$0xf]
      %v868 = vld [vmem:[%s817 + $0xf8] sm:$0xf]
      %v869 = vld [vmem:[%s817 + $0xfc] sm:$0xf]
      %v870 = vld [vmem:[%s817 + $0x100] sm:$0xf]
      %v871 = vld [vmem:[%s817 + $0x104] sm:$0xf]
      %v872 = vld [vmem:[%s817 + $0x108] sm:$0xf]
      %v873 = vld [vmem:[%s817 + $0x10c] sm:$0xf]
      %v874 = vld [vmem:[%s817 + $0x118] sm:$0xf]
      %v875 = vld [vmem:[%s817 + $0x11c] sm:$0xf]
      %v876 = vld [vmem:[%s817 + $0x120] sm:$0xf]
      %v877 = vld [vmem:[%s817 + $0x124] sm:$0xf]
      %v878 = vld [vmem:[%s817 + $0x128] sm:$0xf]
      %v879 = vld [vmem:[%s817 + $0x12c] sm:$0xf]
      %v880 = vld [vmem:[%s817 + $0x130] sm:$0xf]
      %v881 = vld [vmem:[%s817 + $0x134] sm:$0xf]
      %v882 = vmul.f32 %v818, %v425
      %v883 = vmul.f32 %v819, %v425
      %v884 = vmul.f32 %v820, %v425
      %v885 = vmul.f32 %v821, %v425
      %v886 = vmul.f32 %v822, %v425
      %v887 = vmul.f32 %v823, %v425
      %v888 = vmul.f32 %v824, %v425
      %v889 = vmul.f32 %v825, %v425
      %v890 = vmul.f32 %v826, %v425
      %v891 = vmul.f32 %v827, %v425
      %v892 = vmul.f32 %v828, %v425
      %v893 = vmul.f32 %v829, %v425
      %v894 = vmul.f32 %v830, %v425
      %v895 = vmul.f32 %v831, %v425
      %v896 = vmul.f32 %v832, %v425
      %v897 = vmul.f32 %v833, %v425
      %v898 = vmul.f32 %v834, %v425
      %v899 = vmul.f32 %v835, %v425
      %v900 = vmul.f32 %v836, %v425
      %v901 = vmul.f32 %v837, %v425
      %v902 = vmul.f32 %v838, %v425
      %v903 = vmul.f32 %v839, %v425
      %v904 = vmul.f32 %v840, %v425
      %v905 = vmul.f32 %v841, %v425
      %v906 = vmul.f32 %v842, %v425
      %v907 = vmul.f32 %v843, %v425
      %v908 = vmul.f32 %v844, %v425
      %v909 = vmul.f32 %v845, %v425
      %v910 = vmul.f32 %v846, %v425
      %v911 = vmul.f32 %v847, %v425
      %v912 = vmul.f32 %v848, %v425
      %v913 = vmul.f32 %v849, %v425
      %v914 = vmul.f32 %v850, %v425
      %v915 = vmul.f32 %v851, %v425
      %v916 = vmul.f32 %v852, %v425
      %v917 = vmul.f32 %v853, %v425
      %v918 = vmul.f32 %v854, %v425
      %v919 = vmul.f32 %v855, %v425
      %v920 = vmul.f32 %v856, %v425
      %v921 = vmul.f32 %v857, %v425
      %v922 = vmul.f32 %v858, %v425
      %v923 = vmul.f32 %v859, %v425
      %v924 = vmul.f32 %v860, %v425
      %v925 = vmul.f32 %v861, %v425
      %v926 = vmul.f32 %v862, %v425
      %v927 = vmul.f32 %v863, %v425
      %v928 = vmul.f32 %v864, %v425
      %v929 = vmul.f32 %v865, %v425
      %v930 = vmul.f32 %v866, %v425
      %v931 = vmul.f32 %v867, %v425
      %v932 = vmul.f32 %v868, %v425
      %v933 = vmul.f32 %v869, %v425
      %v934 = vmul.f32 %v870, %v425
      %v935 = vmul.f32 %v871, %v425
      %v936 = vmul.f32 %v872, %v425
      %v937 = vmul.f32 %v873, %v425
      %v938 = vmul.f32 %v874, %v425
      %v939 = vmul.f32 %v875, %v425
      %v940 = vmul.f32 %v876, %v425
      %v941 = vmul.f32 %v877, %v425
      %v942 = vmul.f32 %v878, %v425
      %v943 = vmul.f32 %v879, %v425
      %v944 = vmul.f32 %v880, %v425
      %v945 = vmul.f32 %v881, %v425
      %v946 = vadd.f32 %v753, %v882
      %v947 = vadd.f32 %v754, %v883
      %v948 = vadd.f32 %v755, %v884
      %v949 = vadd.f32 %v756, %v885
      %v950 = vadd.f32 %v757, %v886
      %v951 = vadd.f32 %v758, %v887
      %v952 = vadd.f32 %v759, %v888
      %v953 = vadd.f32 %v760, %v889
      %v954 = vadd.f32 %v761, %v890
      %v955 = vadd.f32 %v762, %v891
      %v956 = vadd.f32 %v763, %v892
      %v957 = vadd.f32 %v764, %v893
      %v958 = vadd.f32 %v765, %v894
      %v959 = vadd.f32 %v766, %v895
      %v960 = vadd.f32 %v767, %v896
      %v961 = vadd.f32 %v768, %v897
      %v962 = vadd.f32 %v769, %v898
      %v963 = vadd.f32 %v770, %v899
      %v964 = vadd.f32 %v771, %v900
      %v965 = vadd.f32 %v772, %v901
      %v966 = vadd.f32 %v773, %v902
      %v967 = vadd.f32 %v774, %v903
      %v968 = vadd.f32 %v775, %v904
      %v969 = vadd.f32 %v776, %v905
      %v970 = vadd.f32 %v777, %v906
      %v971 = vadd.f32 %v778, %v907
      %v972 = vadd.f32 %v779, %v908
      %v973 = vadd.f32 %v780, %v909
      %v974 = vadd.f32 %v781, %v910
      %v975 = vadd.f32 %v782, %v911
      %v976 = vadd.f32 %v783, %v912
      %v977 = vadd.f32 %v784, %v913
      %v978 = vadd.f32 %v785, %v914
      %v979 = vadd.f32 %v786, %v915
      %v980 = vadd.f32 %v787, %v916
      %v981 = vadd.f32 %v788, %v917
      %v982 = vadd.f32 %v789, %v918
      %v983 = vadd.f32 %v790, %v919
      %v984 = vadd.f32 %v791, %v920
      %v985 = vadd.f32 %v792, %v921
      %v986 = vadd.f32 %v793, %v922
      %v987 = vadd.f32 %v794, %v923
      %v988 = vadd.f32 %v795, %v924
      %v989 = vadd.f32 %v796, %v925
      %v990 = vadd.f32 %v797, %v926
      %v991 = vadd.f32 %v798, %v927
      %v992 = vadd.f32 %v799, %v928
      %v993 = vadd.f32 %v800, %v929
      %v994 = vadd.f32 %v801, %v930
      %v995 = vadd.f32 %v802, %v931
      %v996 = vadd.f32 %v803, %v932
      %v997 = vadd.f32 %v804, %v933
      %v998 = vadd.f32 %v805, %v934
      %v999 = vadd.f32 %v806, %v935
      %v1000 = vadd.f32 %v807, %v936
      %v1001 = vadd.f32 %v808, %v937
      %v1002 = vadd.f32 %v809, %v938
      %v1003 = vadd.f32 %v810, %v939
      %v1004 = vadd.f32 %v811, %v940
      %v1005 = vadd.f32 %v812, %v941
      %v1006 = vadd.f32 %v813, %v942
      %v1007 = vadd.f32 %v814, %v943
      %v1008 = vadd.f32 %v815, %v944
      %v1009 = vadd.f32 %v816, %v945
      %s1010 = scalar_lea.vmem [#allocation2], 40
      %v1011 = vld [vmem:[%s1010] sm:$0xf]
      %v1012 = vld [vmem:[%s1010 + $0x4] sm:$0xf]
      %v1013 = vld [vmem:[%s1010 + $0x8] sm:$0xf]
      %v1014 = vld [vmem:[%s1010 + $0xc] sm:$0xf]
      %v1015 = vld [vmem:[%s1010 + $0x10] sm:$0xf]
      %v1016 = vld [vmem:[%s1010 + $0x14] sm:$0xf]
      %v1017 = vld [vmem:[%s1010 + $0x18] sm:$0xf]
      %v1018 = vld [vmem:[%s1010 + $0x1c] sm:$0xf]
      %v1019 = vld [vmem:[%s1010 + $0x28] sm:$0xf]
      %v1020 = vld [vmem:[%s1010 + $0x2c] sm:$0xf]
      %v1021 = vld [vmem:[%s1010 + $0x30] sm:$0xf]
      %v1022 = vld [vmem:[%s1010 + $0x34] sm:$0xf]
      %v1023 = vld [vmem:[%s1010 + $0x38] sm:$0xf]
      %v1024 = vld [vmem:[%s1010 + $0x3c] sm:$0xf]
      %v1025 = vld [vmem:[%s1010 + $0x40] sm:$0xf]
      %v1026 = vld [vmem:[%s1010 + $0x44] sm:$0xf]
      %v1027 = vld [vmem:[%s1010 + $0x50] sm:$0xf]
      %v1028 = vld [vmem:[%s1010 + $0x54] sm:$0xf]
      %v1029 = vld [vmem:[%s1010 + $0x58] sm:$0xf]
      %v1030 = vld [vmem:[%s1010 + $0x5c] sm:$0xf]
      %v1031 = vld [vmem:[%s1010 + $0x60] sm:$0xf]
      %v1032 = vld [vmem:[%s1010 + $0x64] sm:$0xf]
      %v1033 = vld [vmem:[%s1010 + $0x68] sm:$0xf]
      %v1034 = vld [vmem:[%s1010 + $0x6c] sm:$0xf]
      %v1035 = vld [vmem:[%s1010 + $0x78] sm:$0xf]
      %v1036 = vld [vmem:[%s1010 + $0x7c] sm:$0xf]
      %v1037 = vld [vmem:[%s1010 + $0x80] sm:$0xf]
      %v1038 = vld [vmem:[%s1010 + $0x84] sm:$0xf]
      %v1039 = vld [vmem:[%s1010 + $0x88] sm:$0xf]
      %v1040 = vld [vmem:[%s1010 + $0x8c] sm:$0xf]
      %v1041 = vld [vmem:[%s1010 + $0x90] sm:$0xf]
      %v1042 = vld [vmem:[%s1010 + $0x94] sm:$0xf]
      %v1043 = vld [vmem:[%s1010 + $0xa0] sm:$0xf]
      %v1044 = vld [vmem:[%s1010 + $0xa4] sm:$0xf]
      %v1045 = vld [vmem:[%s1010 + $0xa8] sm:$0xf]
      %v1046 = vld [vmem:[%s1010 + $0xac] sm:$0xf]
      %v1047 = vld [vmem:[%s1010 + $0xb0] sm:$0xf]
      %v1048 = vld [vmem:[%s1010 + $0xb4] sm:$0xf]
      %v1049 = vld [vmem:[%s1010 + $0xb8] sm:$0xf]
      %v1050 = vld [vmem:[%s1010 + $0xbc] sm:$0xf]
      %v1051 = vld [vmem:[%s1010 + $0xc8] sm:$0xf]
      %v1052 = vld [vmem:[%s1010 + $0xcc] sm:$0xf]
      %v1053 = vld [vmem:[%s1010 + $0xd0] sm:$0xf]
      %v1054 = vld [vmem:[%s1010 + $0xd4] sm:$0xf]
      %v1055 = vld [vmem:[%s1010 + $0xd8] sm:$0xf]
      %v1056 = vld [vmem:[%s1010 + $0xdc] sm:$0xf]
      %v1057 = vld [vmem:[%s1010 + $0xe0] sm:$0xf]
      %v1058 = vld [vmem:[%s1010 + $0xe4] sm:$0xf]
      %v1059 = vld [vmem:[%s1010 + $0xf0] sm:$0xf]
      %v1060 = vld [vmem:[%s1010 + $0xf4] sm:$0xf]
      %v1061 = vld [vmem:[%s1010 + $0xf8] sm:$0xf]
      %v1062 = vld [vmem:[%s1010 + $0xfc] sm:$0xf]
      %v1063 = vld [vmem:[%s1010 + $0x100] sm:$0xf]
      %v1064 = vld [vmem:[%s1010 + $0x104] sm:$0xf]
      %v1065 = vld [vmem:[%s1010 + $0x108] sm:$0xf]
      %v1066 = vld [vmem:[%s1010 + $0x10c] sm:$0xf]
      %v1067 = vld [vmem:[%s1010 + $0x118] sm:$0xf]
      %v1068 = vld [vmem:[%s1010 + $0x11c] sm:$0xf]
      %v1069 = vld [vmem:[%s1010 + $0x120] sm:$0xf]
      %v1070 = vld [vmem:[%s1010 + $0x124] sm:$0xf]
      %v1071 = vld [vmem:[%s1010 + $0x128] sm:$0xf]
      %v1072 = vld [vmem:[%s1010 + $0x12c] sm:$0xf]
      %v1073 = vld [vmem:[%s1010 + $0x130] sm:$0xf]
      %v1074 = vld [vmem:[%s1010 + $0x134] sm:$0xf]
      %v1075 = vmul.f32 %v1011, %v426
      %v1076 = vmul.f32 %v1012, %v426
      %v1077 = vmul.f32 %v1013, %v426
      %v1078 = vmul.f32 %v1014, %v426
      %v1079 = vmul.f32 %v1015, %v426
      %v1080 = vmul.f32 %v1016, %v426
      %v1081 = vmul.f32 %v1017, %v426
      %v1082 = vmul.f32 %v1018, %v426
      %v1083 = vmul.f32 %v1019, %v426
      %v1084 = vmul.f32 %v1020, %v426
      %v1085 = vmul.f32 %v1021, %v426
      %v1086 = vmul.f32 %v1022, %v426
      %v1087 = vmul.f32 %v1023, %v426
      %v1088 = vmul.f32 %v1024, %v426
      %v1089 = vmul.f32 %v1025, %v426
      %v1090 = vmul.f32 %v1026, %v426
      %v1091 = vmul.f32 %v1027, %v426
      %v1092 = vmul.f32 %v1028, %v426
      %v1093 = vmul.f32 %v1029, %v426
      %v1094 = vmul.f32 %v1030, %v426
      %v1095 = vmul.f32 %v1031, %v426
      %v1096 = vmul.f32 %v1032, %v426
      %v1097 = vmul.f32 %v1033, %v426
      %v1098 = vmul.f32 %v1034, %v426
      %v1099 = vmul.f32 %v1035, %v426
      %v1100 = vmul.f32 %v1036, %v426
      %v1101 = vmul.f32 %v1037, %v426
      %v1102 = vmul.f32 %v1038, %v426
      %v1103 = vmul.f32 %v1039, %v426
      %v1104 = vmul.f32 %v1040, %v426
      %v1105 = vmul.f32 %v1041, %v426
      %v1106 = vmul.f32 %v1042, %v426
      %v1107 = vmul.f32 %v1043, %v426
      %v1108 = vmul.f32 %v1044, %v426
      %v1109 = vmul.f32 %v1045, %v426
      %v1110 = vmul.f32 %v1046, %v426
      %v1111 = vmul.f32 %v1047, %v426
      %v1112 = vmul.f32 %v1048, %v426
      %v1113 = vmul.f32 %v1049, %v426
      %v1114 = vmul.f32 %v1050, %v426
      %v1115 = vmul.f32 %v1051, %v426
      %v1116 = vmul.f32 %v1052, %v426
      %v1117 = vmul.f32 %v1053, %v426
      %v1118 = vmul.f32 %v1054, %v426
      %v1119 = vmul.f32 %v1055, %v426
      %v1120 = vmul.f32 %v1056, %v426
      %v1121 = vmul.f32 %v1057, %v426
      %v1122 = vmul.f32 %v1058, %v426
      %v1123 = vmul.f32 %v1059, %v426
      %v1124 = vmul.f32 %v1060, %v426
      %v1125 = vmul.f32 %v1061, %v426
      %v1126 = vmul.f32 %v1062, %v426
      %v1127 = vmul.f32 %v1063, %v426
      %v1128 = vmul.f32 %v1064, %v426
      %v1129 = vmul.f32 %v1065, %v426
      %v1130 = vmul.f32 %v1066, %v426
      %v1131 = vmul.f32 %v1067, %v426
      %v1132 = vmul.f32 %v1068, %v426
      %v1133 = vmul.f32 %v1069, %v426
      %v1134 = vmul.f32 %v1070, %v426
      %v1135 = vmul.f32 %v1071, %v426
      %v1136 = vmul.f32 %v1072, %v426
      %v1137 = vmul.f32 %v1073, %v426
      %v1138 = vmul.f32 %v1074, %v426
      %v1139 = vadd.f32 %v946, %v1075
      %v1140 = vadd.f32 %v947, %v1076
      %v1141 = vadd.f32 %v948, %v1077
      %v1142 = vadd.f32 %v949, %v1078
      %v1143 = vadd.f32 %v950, %v1079
      %v1144 = vadd.f32 %v951, %v1080
      %v1145 = vadd.f32 %v952, %v1081
      %v1146 = vadd.f32 %v953, %v1082
      %v1147 = vadd.f32 %v954, %v1083
      %v1148 = vadd.f32 %v955, %v1084
      %v1149 = vadd.f32 %v956, %v1085
      %v1150 = vadd.f32 %v957, %v1086
      %v1151 = vadd.f32 %v958, %v1087
      %v1152 = vadd.f32 %v959, %v1088
      %v1153 = vadd.f32 %v960, %v1089
      %v1154 = vadd.f32 %v961, %v1090
      %v1155 = vadd.f32 %v962, %v1091
      %v1156 = vadd.f32 %v963, %v1092
      %v1157 = vadd.f32 %v964, %v1093
      %v1158 = vadd.f32 %v965, %v1094
      %v1159 = vadd.f32 %v966, %v1095
      %v1160 = vadd.f32 %v967, %v1096
      %v1161 = vadd.f32 %v968, %v1097
      %v1162 = vadd.f32 %v969, %v1098
      %v1163 = vadd.f32 %v970, %v1099
      %v1164 = vadd.f32 %v971, %v1100
      %v1165 = vadd.f32 %v972, %v1101
      %v1166 = vadd.f32 %v973, %v1102
      %v1167 = vadd.f32 %v974, %v1103
      %v1168 = vadd.f32 %v975, %v1104
      %v1169 = vadd.f32 %v976, %v1105
      %v1170 = vadd.f32 %v977, %v1106
      %v1171 = vadd.f32 %v978, %v1107
      %v1172 = vadd.f32 %v979, %v1108
      %v1173 = vadd.f32 %v980, %v1109
      %v1174 = vadd.f32 %v981, %v1110
      %v1175 = vadd.f32 %v982, %v1111
      %v1176 = vadd.f32 %v983, %v1112
      %v1177 = vadd.f32 %v984, %v1113
      %v1178 = vadd.f32 %v985, %v1114
      %v1179 = vadd.f32 %v986, %v1115
      %v1180 = vadd.f32 %v987, %v1116
      %v1181 = vadd.f32 %v988, %v1117
      %v1182 = vadd.f32 %v989, %v1118
      %v1183 = vadd.f32 %v990, %v1119
      %v1184 = vadd.f32 %v991, %v1120
      %v1185 = vadd.f32 %v992, %v1121
      %v1186 = vadd.f32 %v993, %v1122
      %v1187 = vadd.f32 %v994, %v1123
      %v1188 = vadd.f32 %v995, %v1124
      %v1189 = vadd.f32 %v996, %v1125
      %v1190 = vadd.f32 %v997, %v1126
      %v1191 = vadd.f32 %v998, %v1127
      %v1192 = vadd.f32 %v999, %v1128
      %v1193 = vadd.f32 %v1000, %v1129
      %v1194 = vadd.f32 %v1001, %v1130
      %v1195 = vadd.f32 %v1002, %v1131
      %v1196 = vadd.f32 %v1003, %v1132
      %v1197 = vadd.f32 %v1004, %v1133
      %v1198 = vadd.f32 %v1005, %v1134
      %v1199 = vadd.f32 %v1006, %v1135
      %v1200 = vadd.f32 %v1007, %v1136
      %v1201 = vadd.f32 %v1008, %v1137
      %v1202 = vadd.f32 %v1009, %v1138
      %v1203 = vld [vmem:[%s349] sm:$0xf]
      %v1204 = vld [vmem:[%s349 + $0x4] sm:$0xf]
      %v1205 = vld [vmem:[%s349 + $0x8] sm:$0xf]
      %v1206 = vld [vmem:[%s349 + $0xc] sm:$0xf]
      %v1207 = vld [vmem:[%s349 + $0x10] sm:$0xf]
      %v1208 = vld [vmem:[%s349 + $0x14] sm:$0xf]
      %v1209 = vld [vmem:[%s349 + $0x18] sm:$0xf]
      %v1210 = vld [vmem:[%s349 + $0x1c] sm:$0xf]
      %v1211 = vld [vmem:[%s349 + $0x28] sm:$0xf]
      %v1212 = vld [vmem:[%s349 + $0x2c] sm:$0xf]
      %v1213 = vld [vmem:[%s349 + $0x30] sm:$0xf]
      %v1214 = vld [vmem:[%s349 + $0x34] sm:$0xf]
      %v1215 = vld [vmem:[%s349 + $0x38] sm:$0xf]
      %v1216 = vld [vmem:[%s349 + $0x3c] sm:$0xf]
      %v1217 = vld [vmem:[%s349 + $0x40] sm:$0xf]
      %v1218 = vld [vmem:[%s349 + $0x44] sm:$0xf]
      %v1219 = vld [vmem:[%s349 + $0x50] sm:$0xf]
      %v1220 = vld [vmem:[%s349 + $0x54] sm:$0xf]
      %v1221 = vld [vmem:[%s349 + $0x58] sm:$0xf]
      %v1222 = vld [vmem:[%s349 + $0x5c] sm:$0xf]
      %v1223 = vld [vmem:[%s349 + $0x60] sm:$0xf]
      %v1224 = vld [vmem:[%s349 + $0x64] sm:$0xf]
      %v1225 = vld [vmem:[%s349 + $0x68] sm:$0xf]
      %v1226 = vld [vmem:[%s349 + $0x6c] sm:$0xf]
      %v1227 = vld [vmem:[%s349 + $0x78] sm:$0xf]
      %v1228 = vld [vmem:[%s349 + $0x7c] sm:$0xf]
      %v1229 = vld [vmem:[%s349 + $0x80] sm:$0xf]
      %v1230 = vld [vmem:[%s349 + $0x84] sm:$0xf]
      %v1231 = vld [vmem:[%s349 + $0x88] sm:$0xf]
      %v1232 = vld [vmem:[%s349 + $0x8c] sm:$0xf]
      %v1233 = vld [vmem:[%s349 + $0x90] sm:$0xf]
      %v1234 = vld [vmem:[%s349 + $0x94] sm:$0xf]
      %v1235 = vld [vmem:[%s349 + $0xa0] sm:$0xf]
      %v1236 = vld [vmem:[%s349 + $0xa4] sm:$0xf]
      %v1237 = vld [vmem:[%s349 + $0xa8] sm:$0xf]
      %v1238 = vld [vmem:[%s349 + $0xac] sm:$0xf]
      %v1239 = vld [vmem:[%s349 + $0xb0] sm:$0xf]
      %v1240 = vld [vmem:[%s349 + $0xb4] sm:$0xf]
      %v1241 = vld [vmem:[%s349 + $0xb8] sm:$0xf]
      %v1242 = vld [vmem:[%s349 + $0xbc] sm:$0xf]
      %v1243 = vld [vmem:[%s349 + $0xc8] sm:$0xf]
      %v1244 = vld [vmem:[%s349 + $0xcc] sm:$0xf]
      %v1245 = vld [vmem:[%s349 + $0xd0] sm:$0xf]
      %v1246 = vld [vmem:[%s349 + $0xd4] sm:$0xf]
      %v1247 = vld [vmem:[%s349 + $0xd8] sm:$0xf]
      %v1248 = vld [vmem:[%s349 + $0xdc] sm:$0xf]
      %v1249 = vld [vmem:[%s349 + $0xe0] sm:$0xf]
      %v1250 = vld [vmem:[%s349 + $0xe4] sm:$0xf]
      %v1251 = vld [vmem:[%s349 + $0xf0] sm:$0xf]
      %v1252 = vld [vmem:[%s349 + $0xf4] sm:$0xf]
      %v1253 = vld [vmem:[%s349 + $0xf8] sm:$0xf]
      %v1254 = vld [vmem:[%s349 + $0xfc] sm:$0xf]
      %v1255 = vld [vmem:[%s349 + $0x100] sm:$0xf]
      %v1256 = vld [vmem:[%s349 + $0x104] sm:$0xf]
      %v1257 = vld [vmem:[%s349 + $0x108] sm:$0xf]
      %v1258 = vld [vmem:[%s349 + $0x10c] sm:$0xf]
      %v1259 = vld [vmem:[%s349 + $0x118] sm:$0xf]
      %v1260 = vld [vmem:[%s349 + $0x11c] sm:$0xf]
      %v1261 = vld [vmem:[%s349 + $0x120] sm:$0xf]
      %v1262 = vld [vmem:[%s349 + $0x124] sm:$0xf]
      %v1263 = vld [vmem:[%s349 + $0x128] sm:$0xf]
      %v1264 = vld [vmem:[%s349 + $0x12c] sm:$0xf]
      %v1265 = vld [vmem:[%s349 + $0x130] sm:$0xf]
      %v1266 = vld [vmem:[%s349 + $0x134] sm:$0xf]
      %v1267 = vmul.f32 %v1203, %v427
      %v1268 = vmul.f32 %v1204, %v427
      %v1269 = vmul.f32 %v1205, %v427
      %v1270 = vmul.f32 %v1206, %v427
      %v1271 = vmul.f32 %v1207, %v427
      %v1272 = vmul.f32 %v1208, %v427
      %v1273 = vmul.f32 %v1209, %v427
      %v1274 = vmul.f32 %v1210, %v427
      %v1275 = vmul.f32 %v1211, %v427
      %v1276 = vmul.f32 %v1212, %v427
      %v1277 = vmul.f32 %v1213, %v427
      %v1278 = vmul.f32 %v1214, %v427
      %v1279 = vmul.f32 %v1215, %v427
      %v1280 = vmul.f32 %v1216, %v427
      %v1281 = vmul.f32 %v1217, %v427
      %v1282 = vmul.f32 %v1218, %v427
      %v1283 = vmul.f32 %v1219, %v427
      %v1284 = vmul.f32 %v1220, %v427
      %v1285 = vmul.f32 %v1221, %v427
      %v1286 = vmul.f32 %v1222, %v427
      %v1287 = vmul.f32 %v1223, %v427
      %v1288 = vmul.f32 %v1224, %v427
      %v1289 = vmul.f32 %v1225, %v427
      %v1290 = vmul.f32 %v1226, %v427
      %v1291 = vmul.f32 %v1227, %v427
      %v1292 = vmul.f32 %v1228, %v427
      %v1293 = vmul.f32 %v1229, %v427
      %v1294 = vmul.f32 %v1230, %v427
      %v1295 = vmul.f32 %v1231, %v427
      %v1296 = vmul.f32 %v1232, %v427
      %v1297 = vmul.f32 %v1233, %v427
      %v1298 = vmul.f32 %v1234, %v427
      %v1299 = vmul.f32 %v1235, %v427
      %v1300 = vmul.f32 %v1236, %v427
      %v1301 = vmul.f32 %v1237, %v427
      %v1302 = vmul.f32 %v1238, %v427
      %v1303 = vmul.f32 %v1239, %v427
      %v1304 = vmul.f32 %v1240, %v427
      %v1305 = vmul.f32 %v1241, %v427
      %v1306 = vmul.f32 %v1242, %v427
      %v1307 = vmul.f32 %v1243, %v427
      %v1308 = vmul.f32 %v1244, %v427
      %v1309 = vmul.f32 %v1245, %v427
      %v1310 = vmul.f32 %v1246, %v427
      %v1311 = vmul.f32 %v1247, %v427
      %v1312 = vmul.f32 %v1248, %v427
      %v1313 = vmul.f32 %v1249, %v427
      %v1314 = vmul.f32 %v1250, %v427
      %v1315 = vmul.f32 %v1251, %v427
      %v1316 = vmul.f32 %v1252, %v427
      %v1317 = vmul.f32 %v1253, %v427
      %v1318 = vmul.f32 %v1254, %v427
      %v1319 = vmul.f32 %v1255, %v427
      %v1320 = vmul.f32 %v1256, %v427
      %v1321 = vmul.f32 %v1257, %v427
      %v1322 = vmul.f32 %v1258, %v427
      %v1323 = vmul.f32 %v1259, %v427
      %v1324 = vmul.f32 %v1260, %v427
      %v1325 = vmul.f32 %v1261, %v427
      %v1326 = vmul.f32 %v1262, %v427
      %v1327 = vmul.f32 %v1263, %v427
      %v1328 = vmul.f32 %v1264, %v427
      %v1329 = vmul.f32 %v1265, %v427
      %v1330 = vmul.f32 %v1266, %v427
      %v1331 = vadd.f32 %v1139, %v1267
      %v1332 = vadd.f32 %v1140, %v1268
      %v1333 = vadd.f32 %v1141, %v1269
      %v1334 = vadd.f32 %v1142, %v1270
      %v1335 = vadd.f32 %v1143, %v1271
      %v1336 = vadd.f32 %v1144, %v1272
      %v1337 = vadd.f32 %v1145, %v1273
      %v1338 = vadd.f32 %v1146, %v1274
      %v1339 = vadd.f32 %v1147, %v1275
      %v1340 = vadd.f32 %v1148, %v1276
      %v1341 = vadd.f32 %v1149, %v1277
      %v1342 = vadd.f32 %v1150, %v1278
      %v1343 = vadd.f32 %v1151, %v1279
      %v1344 = vadd.f32 %v1152, %v1280
      %v1345 = vadd.f32 %v1153, %v1281
      %v1346 = vadd.f32 %v1154, %v1282
      %v1347 = vadd.f32 %v1155, %v1283
      %v1348 = vadd.f32 %v1156, %v1284
      %v1349 = vadd.f32 %v1157, %v1285
      %v1350 = vadd.f32 %v1158, %v1286
      %v1351 = vadd.f32 %v1159, %v1287
      %v1352 = vadd.f32 %v1160, %v1288
      %v1353 = vadd.f32 %v1161, %v1289
      %v1354 = vadd.f32 %v1162, %v1290
      %v1355 = vadd.f32 %v1163, %v1291
      %v1356 = vadd.f32 %v1164, %v1292
      %v1357 = vadd.f32 %v1165, %v1293
      %v1358 = vadd.f32 %v1166, %v1294
      %v1359 = vadd.f32 %v1167, %v1295
      %v1360 = vadd.f32 %v1168, %v1296
      %v1361 = vadd.f32 %v1169, %v1297
      %v1362 = vadd.f32 %v1170, %v1298
      %v1363 = vadd.f32 %v1171, %v1299
      %v1364 = vadd.f32 %v1172, %v1300
      %v1365 = vadd.f32 %v1173, %v1301
      %v1366 = vadd.f32 %v1174, %v1302
      %v1367 = vadd.f32 %v1175, %v1303
      %v1368 = vadd.f32 %v1176, %v1304
      %v1369 = vadd.f32 %v1177, %v1305
      %v1370 = vadd.f32 %v1178, %v1306
      %v1371 = vadd.f32 %v1179, %v1307
      %v1372 = vadd.f32 %v1180, %v1308
      %v1373 = vadd.f32 %v1181, %v1309
      %v1374 = vadd.f32 %v1182, %v1310
      %v1375 = vadd.f32 %v1183, %v1311
      %v1376 = vadd.f32 %v1184, %v1312
      %v1377 = vadd.f32 %v1185, %v1313
      %v1378 = vadd.f32 %v1186, %v1314
      %v1379 = vadd.f32 %v1187, %v1315
      %v1380 = vadd.f32 %v1188, %v1316
      %v1381 = vadd.f32 %v1189, %v1317
      %v1382 = vadd.f32 %v1190, %v1318
      %v1383 = vadd.f32 %v1191, %v1319
      %v1384 = vadd.f32 %v1192, %v1320
      %v1385 = vadd.f32 %v1193, %v1321
      %v1386 = vadd.f32 %v1194, %v1322
      %v1387 = vadd.f32 %v1195, %v1323
      %v1388 = vadd.f32 %v1196, %v1324
      %v1389 = vadd.f32 %v1197, %v1325
      %v1390 = vadd.f32 %v1198, %v1326
      %v1391 = vadd.f32 %v1199, %v1327
      %v1392 = vadd.f32 %v1200, %v1328
      %v1393 = vadd.f32 %v1201, %v1329
      %v1394 = vadd.f32 %v1202, %v1330
      %s1395 = scalar_lea.vmem [#allocation2], 48
      %v1396 = vld [vmem:[%s1395] sm:$0xf]
      %v1397 = vld [vmem:[%s1395 + $0x4] sm:$0xf]
      %v1398 = vld [vmem:[%s1395 + $0x8] sm:$0xf]
      %v1399 = vld [vmem:[%s1395 + $0xc] sm:$0xf]
      %v1400 = vld [vmem:[%s1395 + $0x10] sm:$0xf]
      %v1401 = vld [vmem:[%s1395 + $0x14] sm:$0xf]
      %v1402 = vld [vmem:[%s1395 + $0x18] sm:$0xf]
      %v1403 = vld [vmem:[%s1395 + $0x1c] sm:$0xf]
      %v1404 = vld [vmem:[%s1395 + $0x28] sm:$0xf]
      %v1405 = vld [vmem:[%s1395 + $0x2c] sm:$0xf]
      %v1406 = vld [vmem:[%s1395 + $0x30] sm:$0xf]
      %v1407 = vld [vmem:[%s1395 + $0x34] sm:$0xf]
      %v1408 = vld [vmem:[%s1395 + $0x38] sm:$0xf]
      %v1409 = vld [vmem:[%s1395 + $0x3c] sm:$0xf]
      %v1410 = vld [vmem:[%s1395 + $0x40] sm:$0xf]
      %v1411 = vld [vmem:[%s1395 + $0x44] sm:$0xf]
      %v1412 = vld [vmem:[%s1395 + $0x50] sm:$0xf]
      %v1413 = vld [vmem:[%s1395 + $0x54] sm:$0xf]
      %v1414 = vld [vmem:[%s1395 + $0x58] sm:$0xf]
      %v1415 = vld [vmem:[%s1395 + $0x5c] sm:$0xf]
      %v1416 = vld [vmem:[%s1395 + $0x60] sm:$0xf]
      %v1417 = vld [vmem:[%s1395 + $0x64] sm:$0xf]
      %v1418 = vld [vmem:[%s1395 + $0x68] sm:$0xf]
      %v1419 = vld [vmem:[%s1395 + $0x6c] sm:$0xf]
      %v1420 = vld [vmem:[%s1395 + $0x78] sm:$0xf]
      %v1421 = vld [vmem:[%s1395 + $0x7c] sm:$0xf]
      %v1422 = vld [vmem:[%s1395 + $0x80] sm:$0xf]
      %v1423 = vld [vmem:[%s1395 + $0x84] sm:$0xf]
      %v1424 = vld [vmem:[%s1395 + $0x88] sm:$0xf]
      %v1425 = vld [vmem:[%s1395 + $0x8c] sm:$0xf]
      %v1426 = vld [vmem:[%s1395 + $0x90] sm:$0xf]
      %v1427 = vld [vmem:[%s1395 + $0x94] sm:$0xf]
      %v1428 = vld [vmem:[%s1395 + $0xa0] sm:$0xf]
      %v1429 = vld [vmem:[%s1395 + $0xa4] sm:$0xf]
      %v1430 = vld [vmem:[%s1395 + $0xa8] sm:$0xf]
      %v1431 = vld [vmem:[%s1395 + $0xac] sm:$0xf]
      %v1432 = vld [vmem:[%s1395 + $0xb0] sm:$0xf]
      %v1433 = vld [vmem:[%s1395 + $0xb4] sm:$0xf]
      %v1434 = vld [vmem:[%s1395 + $0xb8] sm:$0xf]
      %v1435 = vld [vmem:[%s1395 + $0xbc] sm:$0xf]
      %v1436 = vld [vmem:[%s1395 + $0xc8] sm:$0xf]
      %v1437 = vld [vmem:[%s1395 + $0xcc] sm:$0xf]
      %v1438 = vld [vmem:[%s1395 + $0xd0] sm:$0xf]
      %v1439 = vld [vmem:[%s1395 + $0xd4] sm:$0xf]
      %v1440 = vld [vmem:[%s1395 + $0xd8] sm:$0xf]
      %v1441 = vld [vmem:[%s1395 + $0xdc] sm:$0xf]
      %v1442 = vld [vmem:[%s1395 + $0xe0] sm:$0xf]
      %v1443 = vld [vmem:[%s1395 + $0xe4] sm:$0xf]
      %v1444 = vld [vmem:[%s1395 + $0xf0] sm:$0xf]
      %v1445 = vld [vmem:[%s1395 + $0xf4] sm:$0xf]
      %v1446 = vld [vmem:[%s1395 + $0xf8] sm:$0xf]
      %v1447 = vld [vmem:[%s1395 + $0xfc] sm:$0xf]
      %v1448 = vld [vmem:[%s1395 + $0x100] sm:$0xf]
      %v1449 = vld [vmem:[%s1395 + $0x104] sm:$0xf]
      %v1450 = vld [vmem:[%s1395 + $0x108] sm:$0xf]
      %v1451 = vld [vmem:[%s1395 + $0x10c] sm:$0xf]
      %v1452 = vld [vmem:[%s1395 + $0x118] sm:$0xf]
      %v1453 = vld [vmem:[%s1395 + $0x11c] sm:$0xf]
      %v1454 = vld [vmem:[%s1395 + $0x120] sm:$0xf]
      %v1455 = vld [vmem:[%s1395 + $0x124] sm:$0xf]
      %v1456 = vld [vmem:[%s1395 + $0x128] sm:$0xf]
      %v1457 = vld [vmem:[%s1395 + $0x12c] sm:$0xf]
      %v1458 = vld [vmem:[%s1395 + $0x130] sm:$0xf]
      %v1459 = vld [vmem:[%s1395 + $0x134] sm:$0xf]
      %v1460 = vmul.f32 %v1396, %v428
      %v1461 = vmul.f32 %v1397, %v428
      %v1462 = vmul.f32 %v1398, %v428
      %v1463 = vmul.f32 %v1399, %v428
      %v1464 = vmul.f32 %v1400, %v428
      %v1465 = vmul.f32 %v1401, %v428
      %v1466 = vmul.f32 %v1402, %v428
      %v1467 = vmul.f32 %v1403, %v428
      %v1468 = vmul.f32 %v1404, %v428
      %v1469 = vmul.f32 %v1405, %v428
      %v1470 = vmul.f32 %v1406, %v428
      %v1471 = vmul.f32 %v1407, %v428
      %v1472 = vmul.f32 %v1408, %v428
      %v1473 = vmul.f32 %v1409, %v428
      %v1474 = vmul.f32 %v1410, %v428
      %v1475 = vmul.f32 %v1411, %v428
      %v1476 = vmul.f32 %v1412, %v428
      %v1477 = vmul.f32 %v1413, %v428
      %v1478 = vmul.f32 %v1414, %v428
      %v1479 = vmul.f32 %v1415, %v428
      %v1480 = vmul.f32 %v1416, %v428
      %v1481 = vmul.f32 %v1417, %v428
      %v1482 = vmul.f32 %v1418, %v428
      %v1483 = vmul.f32 %v1419, %v428
      %v1484 = vmul.f32 %v1420, %v428
      %v1485 = vmul.f32 %v1421, %v428
      %v1486 = vmul.f32 %v1422, %v428
      %v1487 = vmul.f32 %v1423, %v428
      %v1488 = vmul.f32 %v1424, %v428
      %v1489 = vmul.f32 %v1425, %v428
      %v1490 = vmul.f32 %v1426, %v428
      %v1491 = vmul.f32 %v1427, %v428
      %v1492 = vmul.f32 %v1428, %v428
      %v1493 = vmul.f32 %v1429, %v428
      %v1494 = vmul.f32 %v1430, %v428
      %v1495 = vmul.f32 %v1431, %v428
      %v1496 = vmul.f32 %v1432, %v428
      %v1497 = vmul.f32 %v1433, %v428
      %v1498 = vmul.f32 %v1434, %v428
      %v1499 = vmul.f32 %v1435, %v428
      %v1500 = vmul.f32 %v1436, %v428
      %v1501 = vmul.f32 %v1437, %v428
      %v1502 = vmul.f32 %v1438, %v428
      %v1503 = vmul.f32 %v1439, %v428
      %v1504 = vmul.f32 %v1440, %v428
      %v1505 = vmul.f32 %v1441, %v428
      %v1506 = vmul.f32 %v1442, %v428
      %v1507 = vmul.f32 %v1443, %v428
      %v1508 = vmul.f32 %v1444, %v428
      %v1509 = vmul.f32 %v1445, %v428
      %v1510 = vmul.f32 %v1446, %v428
      %v1511 = vmul.f32 %v1447, %v428
      %v1512 = vmul.f32 %v1448, %v428
      %v1513 = vmul.f32 %v1449, %v428
      %v1514 = vmul.f32 %v1450, %v428
      %v1515 = vmul.f32 %v1451, %v428
      %v1516 = vmul.f32 %v1452, %v428
      %v1517 = vmul.f32 %v1453, %v428
      %v1518 = vmul.f32 %v1454, %v428
      %v1519 = vmul.f32 %v1455, %v428
      %v1520 = vmul.f32 %v1456, %v428
      %v1521 = vmul.f32 %v1457, %v428
      %v1522 = vmul.f32 %v1458, %v428
      %v1523 = vmul.f32 %v1459, %v428
      %v1524 = vadd.f32 %v1331, %v1460
      %v1525 = vadd.f32 %v1332, %v1461
      %v1526 = vadd.f32 %v1333, %v1462
      %v1527 = vadd.f32 %v1334, %v1463
      %v1528 = vadd.f32 %v1335, %v1464
      %v1529 = vadd.f32 %v1336, %v1465
      %v1530 = vadd.f32 %v1337, %v1466
      %v1531 = vadd.f32 %v1338, %v1467
      %v1532 = vadd.f32 %v1339, %v1468
      %v1533 = vadd.f32 %v1340, %v1469
      %v1534 = vadd.f32 %v1341, %v1470
      %v1535 = vadd.f32 %v1342, %v1471
      %v1536 = vadd.f32 %v1343, %v1472
      %v1537 = vadd.f32 %v1344, %v1473
      %v1538 = vadd.f32 %v1345, %v1474
      %v1539 = vadd.f32 %v1346, %v1475
      %v1540 = vadd.f32 %v1347, %v1476
      %v1541 = vadd.f32 %v1348, %v1477
      %v1542 = vadd.f32 %v1349, %v1478
      %v1543 = vadd.f32 %v1350, %v1479
      %v1544 = vadd.f32 %v1351, %v1480
      %v1545 = vadd.f32 %v1352, %v1481
      %v1546 = vadd.f32 %v1353, %v1482
      %v1547 = vadd.f32 %v1354, %v1483
      %v1548 = vadd.f32 %v1355, %v1484
      %v1549 = vadd.f32 %v1356, %v1485
      %v1550 = vadd.f32 %v1357, %v1486
      %v1551 = vadd.f32 %v1358, %v1487
      %v1552 = vadd.f32 %v1359, %v1488
      %v1553 = vadd.f32 %v1360, %v1489
      %v1554 = vadd.f32 %v1361, %v1490
      %v1555 = vadd.f32 %v1362, %v1491
      %v1556 = vadd.f32 %v1363, %v1492
      %v1557 = vadd.f32 %v1364, %v1493
      %v1558 = vadd.f32 %v1365, %v1494
      %v1559 = vadd.f32 %v1366, %v1495
      %v1560 = vadd.f32 %v1367, %v1496
      %v1561 = vadd.f32 %v1368, %v1497
      %v1562 = vadd.f32 %v1369, %v1498
      %v1563 = vadd.f32 %v1370, %v1499
      %v1564 = vadd.f32 %v1371, %v1500
      %v1565 = vadd.f32 %v1372, %v1501
      %v1566 = vadd.f32 %v1373, %v1502
      %v1567 = vadd.f32 %v1374, %v1503
      %v1568 = vadd.f32 %v1375, %v1504
      %v1569 = vadd.f32 %v1376, %v1505
      %v1570 = vadd.f32 %v1377, %v1506
      %v1571 = vadd.f32 %v1378, %v1507
      %v1572 = vadd.f32 %v1379, %v1508
      %v1573 = vadd.f32 %v1380, %v1509
      %v1574 = vadd.f32 %v1381, %v1510
      %v1575 = vadd.f32 %v1382, %v1511
      %v1576 = vadd.f32 %v1383, %v1512
      %v1577 = vadd.f32 %v1384, %v1513
      %v1578 = vadd.f32 %v1385, %v1514
      %v1579 = vadd.f32 %v1386, %v1515
      %v1580 = vadd.f32 %v1387, %v1516
      %v1581 = vadd.f32 %v1388, %v1517
      %v1582 = vadd.f32 %v1389, %v1518
      %v1583 = vadd.f32 %v1390, %v1519
      %v1584 = vadd.f32 %v1391, %v1520
      %v1585 = vadd.f32 %v1392, %v1521
      %v1586 = vadd.f32 %v1393, %v1522
      %v1587 = vadd.f32 %v1394, %v1523
      %s1588 = scalar_lea.vmem [#allocation2], 80
      %v1589 = vld [vmem:[%s1588] sm:$0xf]
      %v1590 = vld [vmem:[%s1588 + $0x4] sm:$0xf]
      %v1591 = vld [vmem:[%s1588 + $0x8] sm:$0xf]
      %v1592 = vld [vmem:[%s1588 + $0xc] sm:$0xf]
      %v1593 = vld [vmem:[%s1588 + $0x10] sm:$0xf]
      %v1594 = vld [vmem:[%s1588 + $0x14] sm:$0xf]
      %v1595 = vld [vmem:[%s1588 + $0x18] sm:$0xf]
      %v1596 = vld [vmem:[%s1588 + $0x1c] sm:$0xf]
      %v1597 = vld [vmem:[%s1588 + $0x28] sm:$0xf]
      %v1598 = vld [vmem:[%s1588 + $0x2c] sm:$0xf]
      %v1599 = vld [vmem:[%s1588 + $0x30] sm:$0xf]
      %v1600 = vld [vmem:[%s1588 + $0x34] sm:$0xf]
      %v1601 = vld [vmem:[%s1588 + $0x38] sm:$0xf]
      %v1602 = vld [vmem:[%s1588 + $0x3c] sm:$0xf]
      %v1603 = vld [vmem:[%s1588 + $0x40] sm:$0xf]
      %v1604 = vld [vmem:[%s1588 + $0x44] sm:$0xf]
      %v1605 = vld [vmem:[%s1588 + $0x50] sm:$0xf]
      %v1606 = vld [vmem:[%s1588 + $0x54] sm:$0xf]
      %v1607 = vld [vmem:[%s1588 + $0x58] sm:$0xf]
      %v1608 = vld [vmem:[%s1588 + $0x5c] sm:$0xf]
      %v1609 = vld [vmem:[%s1588 + $0x60] sm:$0xf]
      %v1610 = vld [vmem:[%s1588 + $0x64] sm:$0xf]
      %v1611 = vld [vmem:[%s1588 + $0x68] sm:$0xf]
      %v1612 = vld [vmem:[%s1588 + $0x6c] sm:$0xf]
      %v1613 = vld [vmem:[%s1588 + $0x78] sm:$0xf]
      %v1614 = vld [vmem:[%s1588 + $0x7c] sm:$0xf]
      %v1615 = vld [vmem:[%s1588 + $0x80] sm:$0xf]
      %v1616 = vld [vmem:[%s1588 + $0x84] sm:$0xf]
      %v1617 = vld [vmem:[%s1588 + $0x88] sm:$0xf]
      %v1618 = vld [vmem:[%s1588 + $0x8c] sm:$0xf]
      %v1619 = vld [vmem:[%s1588 + $0x90] sm:$0xf]
      %v1620 = vld [vmem:[%s1588 + $0x94] sm:$0xf]
      %v1621 = vld [vmem:[%s1588 + $0xa0] sm:$0xf]
      %v1622 = vld [vmem:[%s1588 + $0xa4] sm:$0xf]
      %v1623 = vld [vmem:[%s1588 + $0xa8] sm:$0xf]
      %v1624 = vld [vmem:[%s1588 + $0xac] sm:$0xf]
      %v1625 = vld [vmem:[%s1588 + $0xb0] sm:$0xf]
      %v1626 = vld [vmem:[%s1588 + $0xb4] sm:$0xf]
      %v1627 = vld [vmem:[%s1588 + $0xb8] sm:$0xf]
      %v1628 = vld [vmem:[%s1588 + $0xbc] sm:$0xf]
      %v1629 = vld [vmem:[%s1588 + $0xc8] sm:$0xf]
      %v1630 = vld [vmem:[%s1588 + $0xcc] sm:$0xf]
      %v1631 = vld [vmem:[%s1588 + $0xd0] sm:$0xf]
      %v1632 = vld [vmem:[%s1588 + $0xd4] sm:$0xf]
      %v1633 = vld [vmem:[%s1588 + $0xd8] sm:$0xf]
      %v1634 = vld [vmem:[%s1588 + $0xdc] sm:$0xf]
      %v1635 = vld [vmem:[%s1588 + $0xe0] sm:$0xf]
      %v1636 = vld [vmem:[%s1588 + $0xe4] sm:$0xf]
      %v1637 = vld [vmem:[%s1588 + $0xf0] sm:$0xf]
      %v1638 = vld [vmem:[%s1588 + $0xf4] sm:$0xf]
      %v1639 = vld [vmem:[%s1588 + $0xf8] sm:$0xf]
      %v1640 = vld [vmem:[%s1588 + $0xfc] sm:$0xf]
      %v1641 = vld [vmem:[%s1588 + $0x100] sm:$0xf]
      %v1642 = vld [vmem:[%s1588 + $0x104] sm:$0xf]
      %v1643 = vld [vmem:[%s1588 + $0x108] sm:$0xf]
      %v1644 = vld [vmem:[%s1588 + $0x10c] sm:$0xf]
      %v1645 = vld [vmem:[%s1588 + $0x118] sm:$0xf]
      %v1646 = vld [vmem:[%s1588 + $0x11c] sm:$0xf]
      %v1647 = vld [vmem:[%s1588 + $0x120] sm:$0xf]
      %v1648 = vld [vmem:[%s1588 + $0x124] sm:$0xf]
      %v1649 = vld [vmem:[%s1588 + $0x128] sm:$0xf]
      %v1650 = vld [vmem:[%s1588 + $0x12c] sm:$0xf]
      %v1651 = vld [vmem:[%s1588 + $0x130] sm:$0xf]
      %v1652 = vld [vmem:[%s1588 + $0x134] sm:$0xf]
      %v1653 = vmul.f32 %v1589, %v429
      %v1654 = vmul.f32 %v1590, %v429
      %v1655 = vmul.f32 %v1591, %v429
      %v1656 = vmul.f32 %v1592, %v429
      %v1657 = vmul.f32 %v1593, %v429
      %v1658 = vmul.f32 %v1594, %v429
      %v1659 = vmul.f32 %v1595, %v429
      %v1660 = vmul.f32 %v1596, %v429
      %v1661 = vmul.f32 %v1597, %v429
      %v1662 = vmul.f32 %v1598, %v429
      %v1663 = vmul.f32 %v1599, %v429
      %v1664 = vmul.f32 %v1600, %v429
      %v1665 = vmul.f32 %v1601, %v429
      %v1666 = vmul.f32 %v1602, %v429
      %v1667 = vmul.f32 %v1603, %v429
      %v1668 = vmul.f32 %v1604, %v429
      %v1669 = vmul.f32 %v1605, %v429
      %v1670 = vmul.f32 %v1606, %v429
      %v1671 = vmul.f32 %v1607, %v429
      %v1672 = vmul.f32 %v1608, %v429
      %v1673 = vmul.f32 %v1609, %v429
      %v1674 = vmul.f32 %v1610, %v429
      %v1675 = vmul.f32 %v1611, %v429
      %v1676 = vmul.f32 %v1612, %v429
      %v1677 = vmul.f32 %v1613, %v429
      %v1678 = vmul.f32 %v1614, %v429
      %v1679 = vmul.f32 %v1615, %v429
      %v1680 = vmul.f32 %v1616, %v429
      %v1681 = vmul.f32 %v1617, %v429
      %v1682 = vmul.f32 %v1618, %v429
      %v1683 = vmul.f32 %v1619, %v429
      %v1684 = vmul.f32 %v1620, %v429
      %v1685 = vmul.f32 %v1621, %v429
      %v1686 = vmul.f32 %v1622, %v429
      %v1687 = vmul.f32 %v1623, %v429
      %v1688 = vmul.f32 %v1624, %v429
      %v1689 = vmul.f32 %v1625, %v429
      %v1690 = vmul.f32 %v1626, %v429
      %v1691 = vmul.f32 %v1627, %v429
      %v1692 = vmul.f32 %v1628, %v429
      %v1693 = vmul.f32 %v1629, %v429
      %v1694 = vmul.f32 %v1630, %v429
      %v1695 = vmul.f32 %v1631, %v429
      %v1696 = vmul.f32 %v1632, %v429
      %v1697 = vmul.f32 %v1633, %v429
      %v1698 = vmul.f32 %v1634, %v429
      %v1699 = vmul.f32 %v1635, %v429
      %v1700 = vmul.f32 %v1636, %v429
      %v1701 = vmul.f32 %v1637, %v429
      %v1702 = vmul.f32 %v1638, %v429
      %v1703 = vmul.f32 %v1639, %v429
      %v1704 = vmul.f32 %v1640, %v429
      %v1705 = vmul.f32 %v1641, %v429
      %v1706 = vmul.f32 %v1642, %v429
      %v1707 = vmul.f32 %v1643, %v429
      %v1708 = vmul.f32 %v1644, %v429
      %v1709 = vmul.f32 %v1645, %v429
      %v1710 = vmul.f32 %v1646, %v429
      %v1711 = vmul.f32 %v1647, %v429
      %v1712 = vmul.f32 %v1648, %v429
      %v1713 = vmul.f32 %v1649, %v429
      %v1714 = vmul.f32 %v1650, %v429
      %v1715 = vmul.f32 %v1651, %v429
      %v1716 = vmul.f32 %v1652, %v429
      %v1717 = vadd.f32 %v1524, %v1653
      %v1718 = vadd.f32 %v1525, %v1654
      %v1719 = vadd.f32 %v1526, %v1655
      %v1720 = vadd.f32 %v1527, %v1656
      %v1721 = vadd.f32 %v1528, %v1657
      %v1722 = vadd.f32 %v1529, %v1658
      %v1723 = vadd.f32 %v1530, %v1659
      %v1724 = vadd.f32 %v1531, %v1660
      %v1725 = vadd.f32 %v1532, %v1661
      %v1726 = vadd.f32 %v1533, %v1662
      %v1727 = vadd.f32 %v1534, %v1663
      %v1728 = vadd.f32 %v1535, %v1664
      %v1729 = vadd.f32 %v1536, %v1665
      %v1730 = vadd.f32 %v1537, %v1666
      %v1731 = vadd.f32 %v1538, %v1667
      %v1732 = vadd.f32 %v1539, %v1668
      %v1733 = vadd.f32 %v1540, %v1669
      %v1734 = vadd.f32 %v1541, %v1670
      %v1735 = vadd.f32 %v1542, %v1671
      %v1736 = vadd.f32 %v1543, %v1672
      %v1737 = vadd.f32 %v1544, %v1673
      %v1738 = vadd.f32 %v1545, %v1674
      %v1739 = vadd.f32 %v1546, %v1675
      %v1740 = vadd.f32 %v1547, %v1676
      %v1741 = vadd.f32 %v1548, %v1677
      %v1742 = vadd.f32 %v1549, %v1678
      %v1743 = vadd.f32 %v1550, %v1679
      %v1744 = vadd.f32 %v1551, %v1680
      %v1745 = vadd.f32 %v1552, %v1681
      %v1746 = vadd.f32 %v1553, %v1682
      %v1747 = vadd.f32 %v1554, %v1683
      %v1748 = vadd.f32 %v1555, %v1684
      %v1749 = vadd.f32 %v1556, %v1685
      %v1750 = vadd.f32 %v1557, %v1686
      %v1751 = vadd.f32 %v1558, %v1687
      %v1752 = vadd.f32 %v1559, %v1688
      %v1753 = vadd.f32 %v1560, %v1689
      %v1754 = vadd.f32 %v1561, %v1690
      %v1755 = vadd.f32 %v1562, %v1691
      %v1756 = vadd.f32 %v1563, %v1692
      %v1757 = vadd.f32 %v1564, %v1693
      %v1758 = vadd.f32 %v1565, %v1694
      %v1759 = vadd.f32 %v1566, %v1695
      %v1760 = vadd.f32 %v1567, %v1696
      %v1761 = vadd.f32 %v1568, %v1697
      %v1762 = vadd.f32 %v1569, %v1698
      %v1763 = vadd.f32 %v1570, %v1699
      %v1764 = vadd.f32 %v1571, %v1700
      %v1765 = vadd.f32 %v1572, %v1701
      %v1766 = vadd.f32 %v1573, %v1702
      %v1767 = vadd.f32 %v1574, %v1703
      %v1768 = vadd.f32 %v1575, %v1704
      %v1769 = vadd.f32 %v1576, %v1705
      %v1770 = vadd.f32 %v1577, %v1706
      %v1771 = vadd.f32 %v1578, %v1707
      %v1772 = vadd.f32 %v1579, %v1708
      %v1773 = vadd.f32 %v1580, %v1709
      %v1774 = vadd.f32 %v1581, %v1710
      %v1775 = vadd.f32 %v1582, %v1711
      %v1776 = vadd.f32 %v1583, %v1712
      %v1777 = vadd.f32 %v1584, %v1713
      %v1778 = vadd.f32 %v1585, %v1714
      %v1779 = vadd.f32 %v1586, %v1715
      %v1780 = vadd.f32 %v1587, %v1716
      %s1781 = scalar_lea.vmem [#allocation2], 84
      %v1782 = vld [vmem:[%s1781] sm:$0xf]
      %v1783 = vld [vmem:[%s1781 + $0x4] sm:$0xf]
      %v1784 = vld [vmem:[%s1781 + $0x8] sm:$0xf]
      %v1785 = vld [vmem:[%s1781 + $0xc] sm:$0xf]
      %v1786 = vld [vmem:[%s1781 + $0x10] sm:$0xf]
      %v1787 = vld [vmem:[%s1781 + $0x14] sm:$0xf]
      %v1788 = vld [vmem:[%s1781 + $0x18] sm:$0xf]
      %v1789 = vld [vmem:[%s1781 + $0x1c] sm:$0xf]
      %v1790 = vld [vmem:[%s1781 + $0x28] sm:$0xf]
      %v1791 = vld [vmem:[%s1781 + $0x2c] sm:$0xf]
      %v1792 = vld [vmem:[%s1781 + $0x30] sm:$0xf]
      %v1793 = vld [vmem:[%s1781 + $0x34] sm:$0xf]
      %v1794 = vld [vmem:[%s1781 + $0x38] sm:$0xf]
      %v1795 = vld [vmem:[%s1781 + $0x3c] sm:$0xf]
      %v1796 = vld [vmem:[%s1781 + $0x40] sm:$0xf]
      %v1797 = vld [vmem:[%s1781 + $0x44] sm:$0xf]
      %v1798 = vld [vmem:[%s1781 + $0x50] sm:$0xf]
      %v1799 = vld [vmem:[%s1781 + $0x54] sm:$0xf]
      %v1800 = vld [vmem:[%s1781 + $0x58] sm:$0xf]
      %v1801 = vld [vmem:[%s1781 + $0x5c] sm:$0xf]
      %v1802 = vld [vmem:[%s1781 + $0x60] sm:$0xf]
      %v1803 = vld [vmem:[%s1781 + $0x64] sm:$0xf]
      %v1804 = vld [vmem:[%s1781 + $0x68] sm:$0xf]
      %v1805 = vld [vmem:[%s1781 + $0x6c] sm:$0xf]
      %v1806 = vld [vmem:[%s1781 + $0x78] sm:$0xf]
      %v1807 = vld [vmem:[%s1781 + $0x7c] sm:$0xf]
      %v1808 = vld [vmem:[%s1781 + $0x80] sm:$0xf]
      %v1809 = vld [vmem:[%s1781 + $0x84] sm:$0xf]
      %v1810 = vld [vmem:[%s1781 + $0x88] sm:$0xf]
      %v1811 = vld [vmem:[%s1781 + $0x8c] sm:$0xf]
      %v1812 = vld [vmem:[%s1781 + $0x90] sm:$0xf]
      %v1813 = vld [vmem:[%s1781 + $0x94] sm:$0xf]
      %v1814 = vld [vmem:[%s1781 + $0xa0] sm:$0xf]
      %v1815 = vld [vmem:[%s1781 + $0xa4] sm:$0xf]
      %v1816 = vld [vmem:[%s1781 + $0xa8] sm:$0xf]
      %v1817 = vld [vmem:[%s1781 + $0xac] sm:$0xf]
      %v1818 = vld [vmem:[%s1781 + $0xb0] sm:$0xf]
      %v1819 = vld [vmem:[%s1781 + $0xb4] sm:$0xf]
      %v1820 = vld [vmem:[%s1781 + $0xb8] sm:$0xf]
      %v1821 = vld [vmem:[%s1781 + $0xbc] sm:$0xf]
      %v1822 = vld [vmem:[%s1781 + $0xc8] sm:$0xf]
      %v1823 = vld [vmem:[%s1781 + $0xcc] sm:$0xf]
      %v1824 = vld [vmem:[%s1781 + $0xd0] sm:$0xf]
      %v1825 = vld [vmem:[%s1781 + $0xd4] sm:$0xf]
      %v1826 = vld [vmem:[%s1781 + $0xd8] sm:$0xf]
      %v1827 = vld [vmem:[%s1781 + $0xdc] sm:$0xf]
      %v1828 = vld [vmem:[%s1781 + $0xe0] sm:$0xf]
      %v1829 = vld [vmem:[%s1781 + $0xe4] sm:$0xf]
      %v1830 = vld [vmem:[%s1781 + $0xf0] sm:$0xf]
      %v1831 = vld [vmem:[%s1781 + $0xf4] sm:$0xf]
      %v1832 = vld [vmem:[%s1781 + $0xf8] sm:$0xf]
      %v1833 = vld [vmem:[%s1781 + $0xfc] sm:$0xf]
      %v1834 = vld [vmem:[%s1781 + $0x100] sm:$0xf]
      %v1835 = vld [vmem:[%s1781 + $0x104] sm:$0xf]
      %v1836 = vld [vmem:[%s1781 + $0x108] sm:$0xf]
      %v1837 = vld [vmem:[%s1781 + $0x10c] sm:$0xf]
      %v1838 = vld [vmem:[%s1781 + $0x118] sm:$0xf]
      %v1839 = vld [vmem:[%s1781 + $0x11c] sm:$0xf]
      %v1840 = vld [vmem:[%s1781 + $0x120] sm:$0xf]
      %v1841 = vld [vmem:[%s1781 + $0x124] sm:$0xf]
      %v1842 = vld [vmem:[%s1781 + $0x128] sm:$0xf]
      %v1843 = vld [vmem:[%s1781 + $0x12c] sm:$0xf]
      %v1844 = vld [vmem:[%s1781 + $0x130] sm:$0xf]
      %v1845 = vld [vmem:[%s1781 + $0x134] sm:$0xf]
      %v1846 = vmul.f32 %v1782, %v430
      %v1847 = vmul.f32 %v1783, %v430
      %v1848 = vmul.f32 %v1784, %v430
      %v1849 = vmul.f32 %v1785, %v430
      %v1850 = vmul.f32 %v1786, %v430
      %v1851 = vmul.f32 %v1787, %v430
      %v1852 = vmul.f32 %v1788, %v430
      %v1853 = vmul.f32 %v1789, %v430
      %v1854 = vmul.f32 %v1790, %v430
      %v1855 = vmul.f32 %v1791, %v430
      %v1856 = vmul.f32 %v1792, %v430
      %v1857 = vmul.f32 %v1793, %v430
      %v1858 = vmul.f32 %v1794, %v430
      %v1859 = vmul.f32 %v1795, %v430
      %v1860 = vmul.f32 %v1796, %v430
      %v1861 = vmul.f32 %v1797, %v430
      %v1862 = vmul.f32 %v1798, %v430
      %v1863 = vmul.f32 %v1799, %v430
      %v1864 = vmul.f32 %v1800, %v430
      %v1865 = vmul.f32 %v1801, %v430
      %v1866 = vmul.f32 %v1802, %v430
      %v1867 = vmul.f32 %v1803, %v430
      %v1868 = vmul.f32 %v1804, %v430
      %v1869 = vmul.f32 %v1805, %v430
      %v1870 = vmul.f32 %v1806, %v430
      %v1871 = vmul.f32 %v1807, %v430
      %v1872 = vmul.f32 %v1808, %v430
      %v1873 = vmul.f32 %v1809, %v430
      %v1874 = vmul.f32 %v1810, %v430
      %v1875 = vmul.f32 %v1811, %v430
      %v1876 = vmul.f32 %v1812, %v430
      %v1877 = vmul.f32 %v1813, %v430
      %v1878 = vmul.f32 %v1814, %v430
      %v1879 = vmul.f32 %v1815, %v430
      %v1880 = vmul.f32 %v1816, %v430
      %v1881 = vmul.f32 %v1817, %v430
      %v1882 = vmul.f32 %v1818, %v430
      %v1883 = vmul.f32 %v1819, %v430
      %v1884 = vmul.f32 %v1820, %v430
      %v1885 = vmul.f32 %v1821, %v430
      %v1886 = vmul.f32 %v1822, %v430
      %v1887 = vmul.f32 %v1823, %v430
      %v1888 = vmul.f32 %v1824, %v430
      %v1889 = vmul.f32 %v1825, %v430
      %v1890 = vmul.f32 %v1826, %v430
      %v1891 = vmul.f32 %v1827, %v430
      %v1892 = vmul.f32 %v1828, %v430
      %v1893 = vmul.f32 %v1829, %v430
      %v1894 = vmul.f32 %v1830, %v430
      %v1895 = vmul.f32 %v1831, %v430
      %v1896 = vmul.f32 %v1832, %v430
      %v1897 = vmul.f32 %v1833, %v430
      %v1898 = vmul.f32 %v1834, %v430
      %v1899 = vmul.f32 %v1835, %v430
      %v1900 = vmul.f32 %v1836, %v430
      %v1901 = vmul.f32 %v1837, %v430
      %v1902 = vmul.f32 %v1838, %v430
      %v1903 = vmul.f32 %v1839, %v430
      %v1904 = vmul.f32 %v1840, %v430
      %v1905 = vmul.f32 %v1841, %v430
      %v1906 = vmul.f32 %v1842, %v430
      %v1907 = vmul.f32 %v1843, %v430
      %v1908 = vmul.f32 %v1844, %v430
      %v1909 = vmul.f32 %v1845, %v430
      %v1910 = vadd.f32 %v1717, %v1846
      %v1911 = vadd.f32 %v1718, %v1847
      %v1912 = vadd.f32 %v1719, %v1848
      %v1913 = vadd.f32 %v1720, %v1849
      %v1914 = vadd.f32 %v1721, %v1850
      %v1915 = vadd.f32 %v1722, %v1851
      %v1916 = vadd.f32 %v1723, %v1852
      %v1917 = vadd.f32 %v1724, %v1853
      %v1918 = vadd.f32 %v1725, %v1854
      %v1919 = vadd.f32 %v1726, %v1855
      %v1920 = vadd.f32 %v1727, %v1856
      %v1921 = vadd.f32 %v1728, %v1857
      %v1922 = vadd.f32 %v1729, %v1858
      %v1923 = vadd.f32 %v1730, %v1859
      %v1924 = vadd.f32 %v1731, %v1860
      %v1925 = vadd.f32 %v1732, %v1861
      %v1926 = vadd.f32 %v1733, %v1862
      %v1927 = vadd.f32 %v1734, %v1863
      %v1928 = vadd.f32 %v1735, %v1864
      %v1929 = vadd.f32 %v1736, %v1865
      %v1930 = vadd.f32 %v1737, %v1866
      %v1931 = vadd.f32 %v1738, %v1867
      %v1932 = vadd.f32 %v1739, %v1868
      %v1933 = vadd.f32 %v1740, %v1869
      %v1934 = vadd.f32 %v1741, %v1870
      %v1935 = vadd.f32 %v1742, %v1871
      %v1936 = vadd.f32 %v1743, %v1872
      %v1937 = vadd.f32 %v1744, %v1873
      %v1938 = vadd.f32 %v1745, %v1874
      %v1939 = vadd.f32 %v1746, %v1875
      %v1940 = vadd.f32 %v1747, %v1876
      %v1941 = vadd.f32 %v1748, %v1877
      %v1942 = vadd.f32 %v1749, %v1878
      %v1943 = vadd.f32 %v1750, %v1879
      %v1944 = vadd.f32 %v1751, %v1880
      %v1945 = vadd.f32 %v1752, %v1881
      %v1946 = vadd.f32 %v1753, %v1882
      %v1947 = vadd.f32 %v1754, %v1883
      %v1948 = vadd.f32 %v1755, %v1884
      %v1949 = vadd.f32 %v1756, %v1885
      %v1950 = vadd.f32 %v1757, %v1886
      %v1951 = vadd.f32 %v1758, %v1887
      %v1952 = vadd.f32 %v1759, %v1888
      %v1953 = vadd.f32 %v1760, %v1889
      %v1954 = vadd.f32 %v1761, %v1890
      %v1955 = vadd.f32 %v1762, %v1891
      %v1956 = vadd.f32 %v1763, %v1892
      %v1957 = vadd.f32 %v1764, %v1893
      %v1958 = vadd.f32 %v1765, %v1894
      %v1959 = vadd.f32 %v1766, %v1895
      %v1960 = vadd.f32 %v1767, %v1896
      %v1961 = vadd.f32 %v1768, %v1897
      %v1962 = vadd.f32 %v1769, %v1898
      %v1963 = vadd.f32 %v1770, %v1899
      %v1964 = vadd.f32 %v1771, %v1900
      %v1965 = vadd.f32 %v1772, %v1901
      %v1966 = vadd.f32 %v1773, %v1902
      %v1967 = vadd.f32 %v1774, %v1903
      %v1968 = vadd.f32 %v1775, %v1904
      %v1969 = vadd.f32 %v1776, %v1905
      %v1970 = vadd.f32 %v1777, %v1906
      %v1971 = vadd.f32 %v1778, %v1907
      %v1972 = vadd.f32 %v1779, %v1908
      %v1973 = vadd.f32 %v1780, %v1909
      %s1974 = scalar_lea.vmem [#allocation2], 88
      %v1975 = vld [vmem:[%s1974] sm:$0xf]
      %v1976 = vld [vmem:[%s1974 + $0x4] sm:$0xf]
      %v1977 = vld [vmem:[%s1974 + $0x8] sm:$0xf]
      %v1978 = vld [vmem:[%s1974 + $0xc] sm:$0xf]
      %v1979 = vld [vmem:[%s1974 + $0x10] sm:$0xf]
      %v1980 = vld [vmem:[%s1974 + $0x14] sm:$0xf]
      %v1981 = vld [vmem:[%s1974 + $0x18] sm:$0xf]
      %v1982 = vld [vmem:[%s1974 + $0x1c] sm:$0xf]
      %v1983 = vld [vmem:[%s1974 + $0x28] sm:$0xf]
      %v1984 = vld [vmem:[%s1974 + $0x2c] sm:$0xf]
      %v1985 = vld [vmem:[%s1974 + $0x30] sm:$0xf]
      %v1986 = vld [vmem:[%s1974 + $0x34] sm:$0xf]
      %v1987 = vld [vmem:[%s1974 + $0x38] sm:$0xf]
      %v1988 = vld [vmem:[%s1974 + $0x3c] sm:$0xf]
      %v1989 = vld [vmem:[%s1974 + $0x40] sm:$0xf]
      %v1990 = vld [vmem:[%s1974 + $0x44] sm:$0xf]
      %v1991 = vld [vmem:[%s1974 + $0x50] sm:$0xf]
      %v1992 = vld [vmem:[%s1974 + $0x54] sm:$0xf]
      %v1993 = vld [vmem:[%s1974 + $0x58] sm:$0xf]
      %v1994 = vld [vmem:[%s1974 + $0x5c] sm:$0xf]
      %v1995 = vld [vmem:[%s1974 + $0x60] sm:$0xf]
      %v1996 = vld [vmem:[%s1974 + $0x64] sm:$0xf]
      %v1997 = vld [vmem:[%s1974 + $0x68] sm:$0xf]
      %v1998 = vld [vmem:[%s1974 + $0x6c] sm:$0xf]
      %v1999 = vld [vmem:[%s1974 + $0x78] sm:$0xf]
      %v2000 = vld [vmem:[%s1974 + $0x7c] sm:$0xf]
      %v2001 = vld [vmem:[%s1974 + $0x80] sm:$0xf]
      %v2002 = vld [vmem:[%s1974 + $0x84] sm:$0xf]
      %v2003 = vld [vmem:[%s1974 + $0x88] sm:$0xf]
      %v2004 = vld [vmem:[%s1974 + $0x8c] sm:$0xf]
      %v2005 = vld [vmem:[%s1974 + $0x90] sm:$0xf]
      %v2006 = vld [vmem:[%s1974 + $0x94] sm:$0xf]
      %v2007 = vld [vmem:[%s1974 + $0xa0] sm:$0xf]
      %v2008 = vld [vmem:[%s1974 + $0xa4] sm:$0xf]
      %v2009 = vld [vmem:[%s1974 + $0xa8] sm:$0xf]
      %v2010 = vld [vmem:[%s1974 + $0xac] sm:$0xf]
      %v2011 = vld [vmem:[%s1974 + $0xb0] sm:$0xf]
      %v2012 = vld [vmem:[%s1974 + $0xb4] sm:$0xf]
      %v2013 = vld [vmem:[%s1974 + $0xb8] sm:$0xf]
      %v2014 = vld [vmem:[%s1974 + $0xbc] sm:$0xf]
      %v2015 = vld [vmem:[%s1974 + $0xc8] sm:$0xf]
      %v2016 = vld [vmem:[%s1974 + $0xcc] sm:$0xf]
      %v2017 = vld [vmem:[%s1974 + $0xd0] sm:$0xf]
      %v2018 = vld [vmem:[%s1974 + $0xd4] sm:$0xf]
      %v2019 = vld [vmem:[%s1974 + $0xd8] sm:$0xf]
      %v2020 = vld [vmem:[%s1974 + $0xdc] sm:$0xf]
      %v2021 = vld [vmem:[%s1974 + $0xe0] sm:$0xf]
      %v2022 = vld [vmem:[%s1974 + $0xe4] sm:$0xf]
      %v2023 = vld [vmem:[%s1974 + $0xf0] sm:$0xf]
      %v2024 = vld [vmem:[%s1974 + $0xf4] sm:$0xf]
      %v2025 = vld [vmem:[%s1974 + $0xf8] sm:$0xf]
      %v2026 = vld [vmem:[%s1974 + $0xfc] sm:$0xf]
      %v2027 = vld [vmem:[%s1974 + $0x100] sm:$0xf]
      %v2028 = vld [vmem:[%s1974 + $0x104] sm:$0xf]
      %v2029 = vld [vmem:[%s1974 + $0x108] sm:$0xf]
      %v2030 = vld [vmem:[%s1974 + $0x10c] sm:$0xf]
      %v2031 = vld [vmem:[%s1974 + $0x118] sm:$0xf]
      %v2032 = vld [vmem:[%s1974 + $0x11c] sm:$0xf]
      %v2033 = vld [vmem:[%s1974 + $0x120] sm:$0xf]
      %v2034 = vld [vmem:[%s1974 + $0x124] sm:$0xf]
      %v2035 = vld [vmem:[%s1974 + $0x128] sm:$0xf]
      %v2036 = vld [vmem:[%s1974 + $0x12c] sm:$0xf]
      %v2037 = vld [vmem:[%s1974 + $0x130] sm:$0xf]
      %v2038 = vld [vmem:[%s1974 + $0x134] sm:$0xf]
      %v2039 = vmul.f32 %v1975, %v431
      %v2040 = vmul.f32 %v1976, %v431
      %v2041 = vmul.f32 %v1977, %v431
      %v2042 = vmul.f32 %v1978, %v431
      %v2043 = vmul.f32 %v1979, %v431
      %v2044 = vmul.f32 %v1980, %v431
      %v2045 = vmul.f32 %v1981, %v431
      %v2046 = vmul.f32 %v1982, %v431
      %v2047 = vmul.f32 %v1983, %v431
      %v2048 = vmul.f32 %v1984, %v431
      %v2049 = vmul.f32 %v1985, %v431
      %v2050 = vmul.f32 %v1986, %v431
      %v2051 = vmul.f32 %v1987, %v431
      %v2052 = vmul.f32 %v1988, %v431
      %v2053 = vmul.f32 %v1989, %v431
      %v2054 = vmul.f32 %v1990, %v431
      %v2055 = vmul.f32 %v1991, %v431
      %v2056 = vmul.f32 %v1992, %v431
      %v2057 = vmul.f32 %v1993, %v431
      %v2058 = vmul.f32 %v1994, %v431
      %v2059 = vmul.f32 %v1995, %v431
      %v2060 = vmul.f32 %v1996, %v431
      %v2061 = vmul.f32 %v1997, %v431
      %v2062 = vmul.f32 %v1998, %v431
      %v2063 = vmul.f32 %v1999, %v431
      %v2064 = vmul.f32 %v2000, %v431
      %v2065 = vmul.f32 %v2001, %v431
      %v2066 = vmul.f32 %v2002, %v431
      %v2067 = vmul.f32 %v2003, %v431
      %v2068 = vmul.f32 %v2004, %v431
      %v2069 = vmul.f32 %v2005, %v431
      %v2070 = vmul.f32 %v2006, %v431
      %v2071 = vmul.f32 %v2007, %v431
      %v2072 = vmul.f32 %v2008, %v431
      %v2073 = vmul.f32 %v2009, %v431
      %v2074 = vmul.f32 %v2010, %v431
      %v2075 = vmul.f32 %v2011, %v431
      %v2076 = vmul.f32 %v2012, %v431
      %v2077 = vmul.f32 %v2013, %v431
      %v2078 = vmul.f32 %v2014, %v431
      %v2079 = vmul.f32 %v2015, %v431
      %v2080 = vmul.f32 %v2016, %v431
      %v2081 = vmul.f32 %v2017, %v431
      %v2082 = vmul.f32 %v2018, %v431
      %v2083 = vmul.f32 %v2019, %v431
      %v2084 = vmul.f32 %v2020, %v431
      %v2085 = vmul.f32 %v2021, %v431
      %v2086 = vmul.f32 %v2022, %v431
      %v2087 = vmul.f32 %v2023, %v431
      %v2088 = vmul.f32 %v2024, %v431
      %v2089 = vmul.f32 %v2025, %v431
      %v2090 = vmul.f32 %v2026, %v431
      %v2091 = vmul.f32 %v2027, %v431
      %v2092 = vmul.f32 %v2028, %v431
      %v2093 = vmul.f32 %v2029, %v431
      %v2094 = vmul.f32 %v2030, %v431
      %v2095 = vmul.f32 %v2031, %v431
      %v2096 = vmul.f32 %v2032, %v431
      %v2097 = vmul.f32 %v2033, %v431
      %v2098 = vmul.f32 %v2034, %v431
      %v2099 = vmul.f32 %v2035, %v431
      %v2100 = vmul.f32 %v2036, %v431
      %v2101 = vmul.f32 %v2037, %v431
      %v2102 = vmul.f32 %v2038, %v431
      %v2103 = vadd.f32 %v1910, %v2039
      %v2104 = vadd.f32 %v1911, %v2040
      %v2105 = vadd.f32 %v1912, %v2041
      %v2106 = vadd.f32 %v1913, %v2042
      %v2107 = vadd.f32 %v1914, %v2043
      %v2108 = vadd.f32 %v1915, %v2044
      %v2109 = vadd.f32 %v1916, %v2045
      %v2110 = vadd.f32 %v1917, %v2046
      %v2111 = vadd.f32 %v1918, %v2047
      %v2112 = vadd.f32 %v1919, %v2048
      %v2113 = vadd.f32 %v1920, %v2049
      %v2114 = vadd.f32 %v1921, %v2050
      %v2115 = vadd.f32 %v1922, %v2051
      %v2116 = vadd.f32 %v1923, %v2052
      %v2117 = vadd.f32 %v1924, %v2053
      %v2118 = vadd.f32 %v1925, %v2054
      %v2119 = vadd.f32 %v1926, %v2055
      %v2120 = vadd.f32 %v1927, %v2056
      %v2121 = vadd.f32 %v1928, %v2057
      %v2122 = vadd.f32 %v1929, %v2058
      %v2123 = vadd.f32 %v1930, %v2059
      %v2124 = vadd.f32 %v1931, %v2060
      %v2125 = vadd.f32 %v1932, %v2061
      %v2126 = vadd.f32 %v1933, %v2062
      %v2127 = vadd.f32 %v1934, %v2063
      %v2128 = vadd.f32 %v1935, %v2064
      %v2129 = vadd.f32 %v1936, %v2065
      %v2130 = vadd.f32 %v1937, %v2066
      %v2131 = vadd.f32 %v1938, %v2067
      %v2132 = vadd.f32 %v1939, %v2068
      %v2133 = vadd.f32 %v1940, %v2069
      %v2134 = vadd.f32 %v1941, %v2070
      %v2135 = vadd.f32 %v1942, %v2071
      %v2136 = vadd.f32 %v1943, %v2072
      %v2137 = vadd.f32 %v1944, %v2073
      %v2138 = vadd.f32 %v1945, %v2074
      %v2139 = vadd.f32 %v1946, %v2075
      %v2140 = vadd.f32 %v1947, %v2076
      %v2141 = vadd.f32 %v1948, %v2077
      %v2142 = vadd.f32 %v1949, %v2078
      %v2143 = vadd.f32 %v1950, %v2079
      %v2144 = vadd.f32 %v1951, %v2080
      %v2145 = vadd.f32 %v1952, %v2081
      %v2146 = vadd.f32 %v1953, %v2082
      %v2147 = vadd.f32 %v1954, %v2083
      %v2148 = vadd.f32 %v1955, %v2084
      %v2149 = vadd.f32 %v1956, %v2085
      %v2150 = vadd.f32 %v1957, %v2086
      %v2151 = vadd.f32 %v1958, %v2087
      %v2152 = vadd.f32 %v1959, %v2088
      %v2153 = vadd.f32 %v1960, %v2089
      %v2154 = vadd.f32 %v1961, %v2090
      %v2155 = vadd.f32 %v1962, %v2091
      %v2156 = vadd.f32 %v1963, %v2092
      %v2157 = vadd.f32 %v1964, %v2093
      %v2158 = vadd.f32 %v1965, %v2094
      %v2159 = vadd.f32 %v1966, %v2095
      %v2160 = vadd.f32 %v1967, %v2096
      %v2161 = vadd.f32 %v1968, %v2097
      %v2162 = vadd.f32 %v1969, %v2098
      %v2163 = vadd.f32 %v1970, %v2099
      %v2164 = vadd.f32 %v1971, %v2100
      %v2165 = vadd.f32 %v1972, %v2101
      %v2166 = vadd.f32 %v1973, %v2102
      %v2167 = vld [vmem:[%s2] sm:$0x3]
      %v2168 = vunpack.c.l.bf16 %v2167
      %v2169 = vadd.f32 %v2103, %v2168
      %v2170 = vadd.f32 %v2104, %v2168
      %v2171 = vadd.f32 %v2105, %v2168
      %v2172 = vadd.f32 %v2106, %v2168
      %v2173 = vadd.f32 %v2107, %v2168
      %v2174 = vadd.f32 %v2108, %v2168
      %v2175 = vadd.f32 %v2109, %v2168
      %v2176 = vadd.f32 %v2110, %v2168
      %v2177 = vadd.f32 %v2111, %v2168
      %v2178 = vadd.f32 %v2112, %v2168
      %v2179 = vadd.f32 %v2113, %v2168
      %v2180 = vadd.f32 %v2114, %v2168
      %v2181 = vadd.f32 %v2115, %v2168
      %v2182 = vadd.f32 %v2116, %v2168
      %v2183 = vadd.f32 %v2117, %v2168
      %v2184 = vadd.f32 %v2118, %v2168
      %v2185 = vadd.f32 %v2119, %v2168
      %v2186 = vadd.f32 %v2120, %v2168
      %v2187 = vadd.f32 %v2121, %v2168
      %v2188 = vadd.f32 %v2122, %v2168
      %v2189 = vadd.f32 %v2123, %v2168
      %v2190 = vadd.f32 %v2124, %v2168
      %v2191 = vadd.f32 %v2125, %v2168
      %v2192 = vadd.f32 %v2126, %v2168
      %v2193 = vadd.f32 %v2127, %v2168
      %v2194 = vadd.f32 %v2128, %v2168
      %v2195 = vadd.f32 %v2129, %v2168
      %v2196 = vadd.f32 %v2130, %v2168
      %v2197 = vadd.f32 %v2131, %v2168
      %v2198 = vadd.f32 %v2132, %v2168
      %v2199 = vadd.f32 %v2133, %v2168
      %v2200 = vadd.f32 %v2134, %v2168
      %v2201 = vadd.f32 %v2135, %v2168
      %v2202 = vadd.f32 %v2136, %v2168
      %v2203 = vadd.f32 %v2137, %v2168
      %v2204 = vadd.f32 %v2138, %v2168
      %v2205 = vadd.f32 %v2139, %v2168
      %v2206 = vadd.f32 %v2140, %v2168
      %v2207 = vadd.f32 %v2141, %v2168
      %v2208 = vadd.f32 %v2142, %v2168
      %v2209 = vadd.f32 %v2143, %v2168
      %v2210 = vadd.f32 %v2144, %v2168
      %v2211 = vadd.f32 %v2145, %v2168
      %v2212 = vadd.f32 %v2146, %v2168
      %v2213 = vadd.f32 %v2147, %v2168
      %v2214 = vadd.f32 %v2148, %v2168
      %v2215 = vadd.f32 %v2149, %v2168
      %v2216 = vadd.f32 %v2150, %v2168
      %v2217 = vadd.f32 %v2151, %v2168
      %v2218 = vadd.f32 %v2152, %v2168
      %v2219 = vadd.f32 %v2153, %v2168
      %v2220 = vadd.f32 %v2154, %v2168
      %v2221 = vadd.f32 %v2155, %v2168
      %v2222 = vadd.f32 %v2156, %v2168
      %v2223 = vadd.f32 %v2157, %v2168
      %v2224 = vadd.f32 %v2158, %v2168
      %v2225 = vadd.f32 %v2159, %v2168
      %v2226 = vadd.f32 %v2160, %v2168
      %v2227 = vadd.f32 %v2161, %v2168
      %v2228 = vadd.f32 %v2162, %v2168
      %v2229 = vadd.f32 %v2163, %v2168
      %v2230 = vadd.f32 %v2164, %v2168
      %v2231 = vadd.f32 %v2165, %v2168
      %v2232 = vadd.f32 %v2166, %v2168
      %v2233 = vmul.f32 %v2169, %v2169
      %v2234 = vmul.f32 %v2170, %v2170
      %v2235 = vmul.f32 %v2171, %v2171
      %v2236 = vmul.f32 %v2172, %v2172
      %v2237 = vmul.f32 %v2173, %v2173
      %v2238 = vmul.f32 %v2174, %v2174
      %v2239 = vmul.f32 %v2175, %v2175
      %v2240 = vmul.f32 %v2176, %v2176
      %v2241 = vmul.f32 %v2177, %v2177
      %v2242 = vmul.f32 %v2178, %v2178
      %v2243 = vmul.f32 %v2179, %v2179
      %v2244 = vmul.f32 %v2180, %v2180
      %v2245 = vmul.f32 %v2181, %v2181
      %v2246 = vmul.f32 %v2182, %v2182
      %v2247 = vmul.f32 %v2183, %v2183
      %v2248 = vmul.f32 %v2184, %v2184
      %v2249 = vmul.f32 %v2185, %v2185
      %v2250 = vmul.f32 %v2186, %v2186
      %v2251 = vmul.f32 %v2187, %v2187
      %v2252 = vmul.f32 %v2188, %v2188
      %v2253 = vmul.f32 %v2189, %v2189
      %v2254 = vmul.f32 %v2190, %v2190
      %v2255 = vmul.f32 %v2191, %v2191
      %v2256 = vmul.f32 %v2192, %v2192
      %v2257 = vmul.f32 %v2193, %v2193
      %v2258 = vmul.f32 %v2194, %v2194
      %v2259 = vmul.f32 %v2195, %v2195
      %v2260 = vmul.f32 %v2196, %v2196
      %v2261 = vmul.f32 %v2197, %v2197
      %v2262 = vmul.f32 %v2198, %v2198
      %v2263 = vmul.f32 %v2199, %v2199
      %v2264 = vmul.f32 %v2200, %v2200
      %v2265 = vmul.f32 %v2201, %v2201
      %v2266 = vmul.f32 %v2202, %v2202
      %v2267 = vmul.f32 %v2203, %v2203
      %v2268 = vmul.f32 %v2204, %v2204
      %v2269 = vmul.f32 %v2205, %v2205
      %v2270 = vmul.f32 %v2206, %v2206
      %v2271 = vmul.f32 %v2207, %v2207
      %v2272 = vmul.f32 %v2208, %v2208
      %v2273 = vmul.f32 %v2209, %v2209
      %v2274 = vmul.f32 %v2210, %v2210
      %v2275 = vmul.f32 %v2211, %v2211
      %v2276 = vmul.f32 %v2212, %v2212
      %v2277 = vmul.f32 %v2213, %v2213
      %v2278 = vmul.f32 %v2214, %v2214
      %v2279 = vmul.f32 %v2215, %v2215
      %v2280 = vmul.f32 %v2216, %v2216
      %v2281 = vmul.f32 %v2217, %v2217
      %v2282 = vmul.f32 %v2218, %v2218
      %v2283 = vmul.f32 %v2219, %v2219
      %v2284 = vmul.f32 %v2220, %v2220
      %v2285 = vmul.f32 %v2221, %v2221
      %v2286 = vmul.f32 %v2222, %v2222
      %v2287 = vmul.f32 %v2223, %v2223
      %v2288 = vmul.f32 %v2224, %v2224
      %v2289 = vmul.f32 %v2225, %v2225
      %v2290 = vmul.f32 %v2226, %v2226
      %v2291 = vmul.f32 %v2227, %v2227
      %v2292 = vmul.f32 %v2228, %v2228
      %v2293 = vmul.f32 %v2229, %v2229
      %v2294 = vmul.f32 %v2230, %v2230
      %v2295 = vmul.f32 %v2231, %v2231
      %v2296 = vmul.f32 %v2232, %v2232
      %v2297 = vmul.f32 %v2169, %v2233
      %v2298 = vmul.f32 %v2170, %v2234
      %v2299 = vmul.f32 %v2171, %v2235
      %v2300 = vmul.f32 %v2172, %v2236
      %v2301 = vmul.f32 %v2173, %v2237
      %v2302 = vmul.f32 %v2174, %v2238
      %v2303 = vmul.f32 %v2175, %v2239
      %v2304 = vmul.f32 %v2176, %v2240
      %v2305 = vmul.f32 %v2177, %v2241
      %v2306 = vmul.f32 %v2178, %v2242
      %v2307 = vmul.f32 %v2179, %v2243
      %v2308 = vmul.f32 %v2180, %v2244
      %v2309 = vmul.f32 %v2181, %v2245
      %v2310 = vmul.f32 %v2182, %v2246
      %v2311 = vmul.f32 %v2183, %v2247
      %v2312 = vmul.f32 %v2184, %v2248
      %v2313 = vmul.f32 %v2185, %v2249
      %v2314 = vmul.f32 %v2186, %v2250
      %v2315 = vmul.f32 %v2187, %v2251
      %v2316 = vmul.f32 %v2188, %v2252
      %v2317 = vmul.f32 %v2189, %v2253
      %v2318 = vmul.f32 %v2190, %v2254
      %v2319 = vmul.f32 %v2191, %v2255
      %v2320 = vmul.f32 %v2192, %v2256
      %v2321 = vmul.f32 %v2193, %v2257
      %v2322 = vmul.f32 %v2194, %v2258
      %v2323 = vmul.f32 %v2195, %v2259
      %v2324 = vmul.f32 %v2196, %v2260
      %v2325 = vmul.f32 %v2197, %v2261
      %v2326 = vmul.f32 %v2198, %v2262
      %v2327 = vmul.f32 %v2199, %v2263
      %v2328 = vmul.f32 %v2200, %v2264
      %v2329 = vmul.f32 %v2201, %v2265
      %v2330 = vmul.f32 %v2202, %v2266
      %v2331 = vmul.f32 %v2203, %v2267
      %v2332 = vmul.f32 %v2204, %v2268
      %v2333 = vmul.f32 %v2205, %v2269
      %v2334 = vmul.f32 %v2206, %v2270
      %v2335 = vmul.f32 %v2207, %v2271
      %v2336 = vmul.f32 %v2208, %v2272
      %v2337 = vmul.f32 %v2209, %v2273
      %v2338 = vmul.f32 %v2210, %v2274
      %v2339 = vmul.f32 %v2211, %v2275
      %v2340 = vmul.f32 %v2212, %v2276
      %v2341 = vmul.f32 %v2213, %v2277
      %v2342 = vmul.f32 %v2214, %v2278
      %v2343 = vmul.f32 %v2215, %v2279
      %v2344 = vmul.f32 %v2216, %v2280
      %v2345 = vmul.f32 %v2217, %v2281
      %v2346 = vmul.f32 %v2218, %v2282
      %v2347 = vmul.f32 %v2219, %v2283
      %v2348 = vmul.f32 %v2220, %v2284
      %v2349 = vmul.f32 %v2221, %v2285
      %v2350 = vmul.f32 %v2222, %v2286
      %v2351 = vmul.f32 %v2223, %v2287
      %v2352 = vmul.f32 %v2224, %v2288
      %v2353 = vmul.f32 %v2225, %v2289
      %v2354 = vmul.f32 %v2226, %v2290
      %v2355 = vmul.f32 %v2227, %v2291
      %v2356 = vmul.f32 %v2228, %v2292
      %v2357 = vmul.f32 %v2229, %v2293
      %v2358 = vmul.f32 %v2230, %v2294
      %v2359 = vmul.f32 %v2231, %v2295
      %v2360 = vmul.f32 %v2232, %v2296
      %v2361 = vmul.f32 %v2297, 0.044715
      %v2362 = vmul.f32 %v2298, 0.044715
      %v2363 = vmul.f32 %v2299, 0.044715
      %v2364 = vmul.f32 %v2300, 0.044715
      %v2365 = vmul.f32 %v2301, 0.044715
      %v2366 = vmul.f32 %v2302, 0.044715
      %v2367 = vmul.f32 %v2303, 0.044715
      %v2368 = vmul.f32 %v2304, 0.044715
      %v2369 = vmul.f32 %v2305, 0.044715
      %v2370 = vmul.f32 %v2306, 0.044715
      %v2371 = vmul.f32 %v2307, 0.044715
      %v2372 = vmul.f32 %v2308, 0.044715
      %v2373 = vmul.f32 %v2309, 0.044715
      %v2374 = vmul.f32 %v2310, 0.044715
      %v2375 = vmul.f32 %v2311, 0.044715
      %v2376 = vmul.f32 %v2312, 0.044715
      %v2377 = vmul.f32 %v2313, 0.044715
      %v2378 = vmul.f32 %v2314, 0.044715
      %v2379 = vmul.f32 %v2315, 0.044715
      %v2380 = vmul.f32 %v2316, 0.044715
      %v2381 = vmul.f32 %v2317, 0.044715
      %v2382 = vmul.f32 %v2318, 0.044715
      %v2383 = vmul.f32 %v2319, 0.044715
      %v2384 = vmul.f32 %v2320, 0.044715
      %v2385 = vmul.f32 %v2321, 0.044715
      %v2386 = vmul.f32 %v2322, 0.044715
      %v2387 = vmul.f32 %v2323, 0.044715
      %v2388 = vmul.f32 %v2324, 0.044715
      %v2389 = vmul.f32 %v2325, 0.044715
      %v2390 = vmul.f32 %v2326, 0.044715
      %v2391 = vmul.f32 %v2327, 0.044715
      %v2392 = vmul.f32 %v2328, 0.044715
      %v2393 = vmul.f32 %v2329, 0.044715
      %v2394 = vmul.f32 %v2330, 0.044715
      %v2395 = vmul.f32 %v2331, 0.044715
      %v2396 = vmul.f32 %v2332, 0.044715
      %v2397 = vmul.f32 %v2333, 0.044715
      %v2398 = vmul.f32 %v2334, 0.044715
      %v2399 = vmul.f32 %v2335, 0.044715
      %v2400 = vmul.f32 %v2336, 0.044715
      %v2401 = vmul.f32 %v2337, 0.044715
      %v2402 = vmul.f32 %v2338, 0.044715
      %v2403 = vmul.f32 %v2339, 0.044715
      %v2404 = vmul.f32 %v2340, 0.044715
      %v2405 = vmul.f32 %v2341, 0.044715
      %v2406 = vmul.f32 %v2342, 0.044715
      %v2407 = vmul.f32 %v2343, 0.044715
      %v2408 = vmul.f32 %v2344, 0.044715
      %v2409 = vmul.f32 %v2345, 0.044715
      %v2410 = vmul.f32 %v2346, 0.044715
      %v2411 = vmul.f32 %v2347, 0.044715
      %v2412 = vmul.f32 %v2348, 0.044715
      %v2413 = vmul.f32 %v2349, 0.044715
      %v2414 = vmul.f32 %v2350, 0.044715
      %v2415 = vmul.f32 %v2351, 0.044715
      %v2416 = vmul.f32 %v2352, 0.044715
      %v2417 = vmul.f32 %v2353, 0.044715
      %v2418 = vmul.f32 %v2354, 0.044715
      %v2419 = vmul.f32 %v2355, 0.044715
      %v2420 = vmul.f32 %v2356, 0.044715
      %v2421 = vmul.f32 %v2357, 0.044715
      %v2422 = vmul.f32 %v2358, 0.044715
      %v2423 = vmul.f32 %v2359, 0.044715
      %v2424 = vmul.f32 %v2360, 0.044715
      %v2425 = vadd.f32 %v2169, %v2361
      %v2426 = vadd.f32 %v2170, %v2362
      %v2427 = vadd.f32 %v2171, %v2363
      %v2428 = vadd.f32 %v2172, %v2364
      %v2429 = vadd.f32 %v2173, %v2365
      %v2430 = vadd.f32 %v2174, %v2366
      %v2431 = vadd.f32 %v2175, %v2367
      %v2432 = vadd.f32 %v2176, %v2368
      %v2433 = vadd.f32 %v2177, %v2369
      %v2434 = vadd.f32 %v2178, %v2370
      %v2435 = vadd.f32 %v2179, %v2371
      %v2436 = vadd.f32 %v2180, %v2372
      %v2437 = vadd.f32 %v2181, %v2373
      %v2438 = vadd.f32 %v2182, %v2374
      %v2439 = vadd.f32 %v2183, %v2375
      %v2440 = vadd.f32 %v2184, %v2376
      %v2441 = vadd.f32 %v2185, %v2377
      %v2442 = vadd.f32 %v2186, %v2378
      %v2443 = vadd.f32 %v2187, %v2379
      %v2444 = vadd.f32 %v2188, %v2380
      %v2445 = vadd.f32 %v2189, %v2381
      %v2446 = vadd.f32 %v2190, %v2382
      %v2447 = vadd.f32 %v2191, %v2383
      %v2448 = vadd.f32 %v2192, %v2384
      %v2449 = vadd.f32 %v2193, %v2385
      %v2450 = vadd.f32 %v2194, %v2386
      %v2451 = vadd.f32 %v2195, %v2387
      %v2452 = vadd.f32 %v2196, %v2388
      %v2453 = vadd.f32 %v2197, %v2389
      %v2454 = vadd.f32 %v2198, %v2390
      %v2455 = vadd.f32 %v2199, %v2391
      %v2456 = vadd.f32 %v2200, %v2392
      %v2457 = vadd.f32 %v2201, %v2393
      %v2458 = vadd.f32 %v2202, %v2394
      %v2459 = vadd.f32 %v2203, %v2395
      %v2460 = vadd.f32 %v2204, %v2396
      %v2461 = vadd.f32 %v2205, %v2397
      %v2462 = vadd.f32 %v2206, %v2398
      %v2463 = vadd.f32 %v2207, %v2399
      %v2464 = vadd.f32 %v2208, %v2400
      %v2465 = vadd.f32 %v2209, %v2401
      %v2466 = vadd.f32 %v2210, %v2402
      %v2467 = vadd.f32 %v2211, %v2403
      %v2468 = vadd.f32 %v2212, %v2404
      %v2469 = vadd.f32 %v2213, %v2405
      %v2470 = vadd.f32 %v2214, %v2406
      %v2471 = vadd.f32 %v2215, %v2407
      %v2472 = vadd.f32 %v2216, %v2408
      %v2473 = vadd.f32 %v2217, %v2409
      %v2474 = vadd.f32 %v2218, %v2410
      %v2475 = vadd.f32 %v2219, %v2411
      %v2476 = vadd.f32 %v2220, %v2412
      %v2477 = vadd.f32 %v2221, %v2413
      %v2478 = vadd.f32 %v2222, %v2414
      %v2479 = vadd.f32 %v2223, %v2415
      %v2480 = vadd.f32 %v2224, %v2416
      %v2481 = vadd.f32 %v2225, %v2417
      %v2482 = vadd.f32 %v2226, %v2418
      %v2483 = vadd.f32 %v2227, %v2419
      %v2484 = vadd.f32 %v2228, %v2420
      %v2485 = vadd.f32 %v2229, %v2421
      %v2486 = vadd.f32 %v2230, %v2422
      %v2487 = vadd.f32 %v2231, %v2423
      %v2488 = vadd.f32 %v2232, %v2424
      %v2489 = vmul.f32 %v2425, 0.7978846
      %v2490 = vmul.f32 %v2426, 0.7978846
      %v2491 = vmul.f32 %v2427, 0.7978846
      %v2492 = vmul.f32 %v2428, 0.7978846
      %v2493 = vmul.f32 %v2429, 0.7978846
      %v2494 = vmul.f32 %v2430, 0.7978846
      %v2495 = vmul.f32 %v2431, 0.7978846
      %v2496 = vmul.f32 %v2432, 0.7978846
      %v2497 = vmul.f32 %v2433, 0.7978846
      %v2498 = vmul.f32 %v2434, 0.7978846
      %v2499 = vmul.f32 %v2435, 0.7978846
      %v2500 = vmul.f32 %v2436, 0.7978846
      %v2501 = vmul.f32 %v2437, 0.7978846
      %v2502 = vmul.f32 %v2438, 0.7978846
      %v2503 = vmul.f32 %v2439, 0.7978846
      %v2504 = vmul.f32 %v2440, 0.7978846
      %v2505 = vmul.f32 %v2441, 0.7978846
      %v2506 = vmul.f32 %v2442, 0.7978846
      %v2507 = vmul.f32 %v2443, 0.7978846
      %v2508 = vmul.f32 %v2444, 0.7978846
      %v2509 = vmul.f32 %v2445, 0.7978846
      %v2510 = vmul.f32 %v2446, 0.7978846
      %v2511 = vmul.f32 %v2447, 0.7978846
      %v2512 = vmul.f32 %v2448, 0.7978846
      %v2513 = vmul.f32 %v2449, 0.7978846
      %v2514 = vmul.f32 %v2450, 0.7978846
      %v2515 = vmul.f32 %v2451, 0.7978846
      %v2516 = vmul.f32 %v2452, 0.7978846
      %v2517 = vmul.f32 %v2453, 0.7978846
      %v2518 = vmul.f32 %v2454, 0.7978846
      %v2519 = vmul.f32 %v2455, 0.7978846
      %v2520 = vmul.f32 %v2456, 0.7978846
      %v2521 = vmul.f32 %v2457, 0.7978846
      %v2522 = vmul.f32 %v2458, 0.7978846
      %v2523 = vmul.f32 %v2459, 0.7978846
      %v2524 = vmul.f32 %v2460, 0.7978846
      %v2525 = vmul.f32 %v2461, 0.7978846
      %v2526 = vmul.f32 %v2462, 0.7978846
      %v2527 = vmul.f32 %v2463, 0.7978846
      %v2528 = vmul.f32 %v2464, 0.7978846
      %v2529 = vmul.f32 %v2465, 0.7978846
      %v2530 = vmul.f32 %v2466, 0.7978846
      %v2531 = vmul.f32 %v2467, 0.7978846
      %v2532 = vmul.f32 %v2468, 0.7978846
      %v2533 = vmul.f32 %v2469, 0.7978846
      %v2534 = vmul.f32 %v2470, 0.7978846
      %v2535 = vmul.f32 %v2471, 0.7978846
      %v2536 = vmul.f32 %v2472, 0.7978846
      %v2537 = vmul.f32 %v2473, 0.7978846
      %v2538 = vmul.f32 %v2474, 0.7978846
      %v2539 = vmul.f32 %v2475, 0.7978846
      %v2540 = vmul.f32 %v2476, 0.7978846
      %v2541 = vmul.f32 %v2477, 0.7978846
      %v2542 = vmul.f32 %v2478, 0.7978846
      %v2543 = vmul.f32 %v2479, 0.7978846
      %v2544 = vmul.f32 %v2480, 0.7978846
      %v2545 = vmul.f32 %v2481, 0.7978846
      %v2546 = vmul.f32 %v2482, 0.7978846
      %v2547 = vmul.f32 %v2483, 0.7978846
      %v2548 = vmul.f32 %v2484, 0.7978846
      %v2549 = vmul.f32 %v2485, 0.7978846
      %v2550 = vmul.f32 %v2486, 0.7978846
      %v2551 = vmul.f32 %v2487, 0.7978846
      %v2552 = vmul.f32 %v2488, 0.7978846
      %v2553 = vtanh.pop %v2489
      %v2554 = vtanh.pop %v2490
      %v2555 = vtanh.pop %v2491
      %v2556 = vtanh.pop %v2492
      %v2557 = vtanh.pop %v2493
      %v2558 = vtanh.pop %v2494
      %v2559 = vtanh.pop %v2495
      %v2560 = vtanh.pop %v2496
      %v2561 = vtanh.pop %v2497
      %v2562 = vtanh.pop %v2498
      %v2563 = vtanh.pop %v2499
      %v2564 = vtanh.pop %v2500
      %v2565 = vtanh.pop %v2501
      %v2566 = vtanh.pop %v2502
      %v2567 = vtanh.pop %v2503
      %v2568 = vtanh.pop %v2504
      %v2569 = vtanh.pop %v2505
      %v2570 = vtanh.pop %v2506
      %v2571 = vtanh.pop %v2507
      %v2572 = vtanh.pop %v2508
      %v2573 = vtanh.pop %v2509
      %v2574 = vtanh.pop %v2510
      %v2575 = vtanh.pop %v2511
      %v2576 = vtanh.pop %v2512
      %v2577 = vtanh.pop %v2513
      %v2578 = vtanh.pop %v2514
      %v2579 = vtanh.pop %v2515
      %v2580 = vtanh.pop %v2516
      %v2581 = vtanh.pop %v2517
      %v2582 = vtanh.pop %v2518
      %v2583 = vtanh.pop %v2519
      %v2584 = vtanh.pop %v2520
      %v2585 = vtanh.pop %v2521
      %v2586 = vtanh.pop %v2522
      %v2587 = vtanh.pop %v2523
      %v2588 = vtanh.pop %v2524
      %v2589 = vtanh.pop %v2525
      %v2590 = vtanh.pop %v2526
      %v2591 = vtanh.pop %v2527
      %v2592 = vtanh.pop %v2528
      %v2593 = vtanh.pop %v2529
      %v2594 = vtanh.pop %v2530
      %v2595 = vtanh.pop %v2531
      %v2596 = vtanh.pop %v2532
      %v2597 = vtanh.pop %v2533
      %v2598 = vtanh.pop %v2534
      %v2599 = vtanh.pop %v2535
      %v2600 = vtanh.pop %v2536
      %v2601 = vtanh.pop %v2537
      %v2602 = vtanh.pop %v2538
      %v2603 = vtanh.pop %v2539
      %v2604 = vtanh.pop %v2540
      %v2605 = vtanh.pop %v2541
      %v2606 = vtanh.pop %v2542
      %v2607 = vtanh.pop %v2543
      %v2608 = vtanh.pop %v2544
      %v2609 = vtanh.pop %v2545
      %v2610 = vtanh.pop %v2546
      %v2611 = vtanh.pop %v2547
      %v2612 = vtanh.pop %v2548
      %v2613 = vtanh.pop %v2549
      %v2614 = vtanh.pop %v2550
      %v2615 = vtanh.pop %v2551
      %v2616 = vtanh.pop %v2552
      %v2617 = vadd.f32 %v2553, 1.0
      %v2618 = vadd.f32 %v2554, 1.0
      %v2619 = vadd.f32 %v2555, 1.0
      %v2620 = vadd.f32 %v2556, 1.0
      %v2621 = vadd.f32 %v2557, 1.0
      %v2622 = vadd.f32 %v2558, 1.0
      %v2623 = vadd.f32 %v2559, 1.0
      %v2624 = vadd.f32 %v2560, 1.0
      %v2625 = vadd.f32 %v2561, 1.0
      %v2626 = vadd.f32 %v2562, 1.0
      %v2627 = vadd.f32 %v2563, 1.0
      %v2628 = vadd.f32 %v2564, 1.0
      %v2629 = vadd.f32 %v2565, 1.0
      %v2630 = vadd.f32 %v2566, 1.0
      %v2631 = vadd.f32 %v2567, 1.0
      %v2632 = vadd.f32 %v2568, 1.0
      %v2633 = vadd.f32 %v2569, 1.0
      %v2634 = vadd.f32 %v2570, 1.0
      %v2635 = vadd.f32 %v2571, 1.0
      %v2636 = vadd.f32 %v2572, 1.0
      %v2637 = vadd.f32 %v2573, 1.0
      %v2638 = vadd.f32 %v2574, 1.0
      %v2639 = vadd.f32 %v2575, 1.0
      %v2640 = vadd.f32 %v2576, 1.0
      %v2641 = vadd.f32 %v2577, 1.0
      %v2642 = vadd.f32 %v2578, 1.0
      %v2643 = vadd.f32 %v2579, 1.0
      %v2644 = vadd.f32 %v2580, 1.0
      %v2645 = vadd.f32 %v2581, 1.0
      %v2646 = vadd.f32 %v2582, 1.0
      %v2647 = vadd.f32 %v2583, 1.0
      %v2648 = vadd.f32 %v2584, 1.0
      %v2649 = vadd.f32 %v2585, 1.0
      %v2650 = vadd.f32 %v2586, 1.0
      %v2651 = vadd.f32 %v2587, 1.0
      %v2652 = vadd.f32 %v2588, 1.0
      %v2653 = vadd.f32 %v2589, 1.0
      %v2654 = vadd.f32 %v2590, 1.0
      %v2655 = vadd.f32 %v2591, 1.0
      %v2656 = vadd.f32 %v2592, 1.0
      %v2657 = vadd.f32 %v2593, 1.0
      %v2658 = vadd.f32 %v2594, 1.0
      %v2659 = vadd.f32 %v2595, 1.0
      %v2660 = vadd.f32 %v2596, 1.0
      %v2661 = vadd.f32 %v2597, 1.0
      %v2662 = vadd.f32 %v2598, 1.0
      %v2663 = vadd.f32 %v2599, 1.0
      %v2664 = vadd.f32 %v2600, 1.0
      %v2665 = vadd.f32 %v2601, 1.0
      %v2666 = vadd.f32 %v2602, 1.0
      %v2667 = vadd.f32 %v2603, 1.0
      %v2668 = vadd.f32 %v2604, 1.0
      %v2669 = vadd.f32 %v2605, 1.0
      %v2670 = vadd.f32 %v2606, 1.0
      %v2671 = vadd.f32 %v2607, 1.0
      %v2672 = vadd.f32 %v2608, 1.0
      %v2673 = vadd.f32 %v2609, 1.0
      %v2674 = vadd.f32 %v2610, 1.0
      %v2675 = vadd.f32 %v2611, 1.0
      %v2676 = vadd.f32 %v2612, 1.0
      %v2677 = vadd.f32 %v2613, 1.0
      %v2678 = vadd.f32 %v2614, 1.0
      %v2679 = vadd.f32 %v2615, 1.0
      %v2680 = vadd.f32 %v2616, 1.0
      %v2681 = vmul.f32 %v2617, 0.5
      %v2682 = vmul.f32 %v2618, 0.5
      %v2683 = vmul.f32 %v2619, 0.5
      %v2684 = vmul.f32 %v2620, 0.5
      %v2685 = vmul.f32 %v2621, 0.5
      %v2686 = vmul.f32 %v2622, 0.5
      %v2687 = vmul.f32 %v2623, 0.5
      %v2688 = vmul.f32 %v2624, 0.5
      %v2689 = vmul.f32 %v2625, 0.5
      %v2690 = vmul.f32 %v2626, 0.5
      %v2691 = vmul.f32 %v2627, 0.5
      %v2692 = vmul.f32 %v2628, 0.5
      %v2693 = vmul.f32 %v2629, 0.5
      %v2694 = vmul.f32 %v2630, 0.5
      %v2695 = vmul.f32 %v2631, 0.5
      %v2696 = vmul.f32 %v2632, 0.5
      %v2697 = vmul.f32 %v2633, 0.5
      %v2698 = vmul.f32 %v2634, 0.5
      %v2699 = vmul.f32 %v2635, 0.5
      %v2700 = vmul.f32 %v2636, 0.5
      %v2701 = vmul.f32 %v2637, 0.5
      %v2702 = vmul.f32 %v2638, 0.5
      %v2703 = vmul.f32 %v2639, 0.5
      %v2704 = vmul.f32 %v2640, 0.5
      %v2705 = vmul.f32 %v2641, 0.5
      %v2706 = vmul.f32 %v2642, 0.5
      %v2707 = vmul.f32 %v2643, 0.5
      %v2708 = vmul.f32 %v2644, 0.5
      %v2709 = vmul.f32 %v2645, 0.5
      %v2710 = vmul.f32 %v2646, 0.5
      %v2711 = vmul.f32 %v2647, 0.5
      %v2712 = vmul.f32 %v2648, 0.5
      %v2713 = vmul.f32 %v2649, 0.5
      %v2714 = vmul.f32 %v2650, 0.5
      %v2715 = vmul.f32 %v2651, 0.5
      %v2716 = vmul.f32 %v2652, 0.5
      %v2717 = vmul.f32 %v2653, 0.5
      %v2718 = vmul.f32 %v2654, 0.5
      %v2719 = vmul.f32 %v2655, 0.5
      %v2720 = vmul.f32 %v2656, 0.5
      %v2721 = vmul.f32 %v2657, 0.5
      %v2722 = vmul.f32 %v2658, 0.5
      %v2723 = vmul.f32 %v2659, 0.5
      %v2724 = vmul.f32 %v2660, 0.5
      %v2725 = vmul.f32 %v2661, 0.5
      %v2726 = vmul.f32 %v2662, 0.5
      %v2727 = vmul.f32 %v2663, 0.5
      %v2728 = vmul.f32 %v2664, 0.5
      %v2729 = vmul.f32 %v2665, 0.5
      %v2730 = vmul.f32 %v2666, 0.5
      %v2731 = vmul.f32 %v2667, 0.5
      %v2732 = vmul.f32 %v2668, 0.5
      %v2733 = vmul.f32 %v2669, 0.5
      %v2734 = vmul.f32 %v2670, 0.5
      %v2735 = vmul.f32 %v2671, 0.5
      %v2736 = vmul.f32 %v2672, 0.5
      %v2737 = vmul.f32 %v2673, 0.5
      %v2738 = vmul.f32 %v2674, 0.5
      %v2739 = vmul.f32 %v2675, 0.5
      %v2740 = vmul.f32 %v2676, 0.5
      %v2741 = vmul.f32 %v2677, 0.5
      %v2742 = vmul.f32 %v2678, 0.5
      %v2743 = vmul.f32 %v2679, 0.5
      %v2744 = vmul.f32 %v2680, 0.5
      %v2745 = vmul.f32 %v2169, %v2681
      %v2746 = vmul.f32 %v2170, %v2682
      %v2747 = vmul.f32 %v2171, %v2683
      %v2748 = vmul.f32 %v2172, %v2684
      %v2749 = vmul.f32 %v2173, %v2685
      %v2750 = vmul.f32 %v2174, %v2686
      %v2751 = vmul.f32 %v2175, %v2687
      %v2752 = vmul.f32 %v2176, %v2688
      %v2753 = vmul.f32 %v2177, %v2689
      %v2754 = vmul.f32 %v2178, %v2690
      %v2755 = vmul.f32 %v2179, %v2691
      %v2756 = vmul.f32 %v2180, %v2692
      %v2757 = vmul.f32 %v2181, %v2693
      %v2758 = vmul.f32 %v2182, %v2694
      %v2759 = vmul.f32 %v2183, %v2695
      %v2760 = vmul.f32 %v2184, %v2696
      %v2761 = vmul.f32 %v2185, %v2697
      %v2762 = vmul.f32 %v2186, %v2698
      %v2763 = vmul.f32 %v2187, %v2699
      %v2764 = vmul.f32 %v2188, %v2700
      %v2765 = vmul.f32 %v2189, %v2701
      %v2766 = vmul.f32 %v2190, %v2702
      %v2767 = vmul.f32 %v2191, %v2703
      %v2768 = vmul.f32 %v2192, %v2704
      %v2769 = vmul.f32 %v2193, %v2705
      %v2770 = vmul.f32 %v2194, %v2706
      %v2771 = vmul.f32 %v2195, %v2707
      %v2772 = vmul.f32 %v2196, %v2708
      %v2773 = vmul.f32 %v2197, %v2709
      %v2774 = vmul.f32 %v2198, %v2710
      %v2775 = vmul.f32 %v2199, %v2711
      %v2776 = vmul.f32 %v2200, %v2712
      %v2777 = vmul.f32 %v2201, %v2713
      %v2778 = vmul.f32 %v2202, %v2714
      %v2779 = vmul.f32 %v2203, %v2715
      %v2780 = vmul.f32 %v2204, %v2716
      %v2781 = vmul.f32 %v2205, %v2717
      %v2782 = vmul.f32 %v2206, %v2718
      %v2783 = vmul.f32 %v2207, %v2719
      %v2784 = vmul.f32 %v2208, %v2720
      %v2785 = vmul.f32 %v2209, %v2721
      %v2786 = vmul.f32 %v2210, %v2722
      %v2787 = vmul.f32 %v2211, %v2723
      %v2788 = vmul.f32 %v2212, %v2724
      %v2789 = vmul.f32 %v2213, %v2725
      %v2790 = vmul.f32 %v2214, %v2726
      %v2791 = vmul.f32 %v2215, %v2727
      %v2792 = vmul.f32 %v2216, %v2728
      %v2793 = vmul.f32 %v2217, %v2729
      %v2794 = vmul.f32 %v2218, %v2730
      %v2795 = vmul.f32 %v2219, %v2731
      %v2796 = vmul.f32 %v2220, %v2732
      %v2797 = vmul.f32 %v2221, %v2733
      %v2798 = vmul.f32 %v2222, %v2734
      %v2799 = vmul.f32 %v2223, %v2735
      %v2800 = vmul.f32 %v2224, %v2736
      %v2801 = vmul.f32 %v2225, %v2737
      %v2802 = vmul.f32 %v2226, %v2738
      %v2803 = vmul.f32 %v2227, %v2739
      %v2804 = vmul.f32 %v2228, %v2740
      %v2805 = vmul.f32 %v2229, %v2741
      %v2806 = vmul.f32 %v2230, %v2742
      %v2807 = vmul.f32 %v2231, %v2743
      %v2808 = vmul.f32 %v2232, %v2744
      %v2809 = vpack.c.bf16 %v2745, %v2745
      %v2810 = vpack.c.bf16 %v2746, %v2746
      %v2811 = vpack.c.bf16 %v2747, %v2747
      %v2812 = vpack.c.bf16 %v2748, %v2748
      %v2813 = vpack.c.bf16 %v2749, %v2749
      %v2814 = vpack.c.bf16 %v2750, %v2750
      %v2815 = vpack.c.bf16 %v2751, %v2751
      %v2816 = vpack.c.bf16 %v2752, %v2752
      %v2817 = vpack.c.bf16 %v2753, %v2753
      %v2818 = vpack.c.bf16 %v2754, %v2754
      %v2819 = vpack.c.bf16 %v2755, %v2755
      %v2820 = vpack.c.bf16 %v2756, %v2756
      %v2821 = vpack.c.bf16 %v2757, %v2757
      %v2822 = vpack.c.bf16 %v2758, %v2758
      %v2823 = vpack.c.bf16 %v2759, %v2759
      %v2824 = vpack.c.bf16 %v2760, %v2760
      %v2825 = vpack.c.bf16 %v2761, %v2761
      %v2826 = vpack.c.bf16 %v2762, %v2762
      %v2827 = vpack.c.bf16 %v2763, %v2763
      %v2828 = vpack.c.bf16 %v2764, %v2764
      %v2829 = vpack.c.bf16 %v2765, %v2765
      %v2830 = vpack.c.bf16 %v2766, %v2766
      %v2831 = vpack.c.bf16 %v2767, %v2767
      %v2832 = vpack.c.bf16 %v2768, %v2768
      %v2833 = vpack.c.bf16 %v2769, %v2769
      %v2834 = vpack.c.bf16 %v2770, %v2770
      %v2835 = vpack.c.bf16 %v2771, %v2771
      %v2836 = vpack.c.bf16 %v2772, %v2772
      %v2837 = vpack.c.bf16 %v2773, %v2773
      %v2838 = vpack.c.bf16 %v2774, %v2774
      %v2839 = vpack.c.bf16 %v2775, %v2775
      %v2840 = vpack.c.bf16 %v2776, %v2776
      %v2841 = vpack.c.bf16 %v2777, %v2777
      %v2842 = vpack.c.bf16 %v2778, %v2778
      %v2843 = vpack.c.bf16 %v2779, %v2779
      %v2844 = vpack.c.bf16 %v2780, %v2780
      %v2845 = vpack.c.bf16 %v2781, %v2781
      %v2846 = vpack.c.bf16 %v2782, %v2782
      %v2847 = vpack.c.bf16 %v2783, %v2783
      %v2848 = vpack.c.bf16 %v2784, %v2784
      %v2849 = vpack.c.bf16 %v2785, %v2785
      %v2850 = vpack.c.bf16 %v2786, %v2786
      %v2851 = vpack.c.bf16 %v2787, %v2787
      %v2852 = vpack.c.bf16 %v2788, %v2788
      %v2853 = vpack.c.bf16 %v2789, %v2789
      %v2854 = vpack.c.bf16 %v2790, %v2790
      %v2855 = vpack.c.bf16 %v2791, %v2791
      %v2856 = vpack.c.bf16 %v2792, %v2792
      %v2857 = vpack.c.bf16 %v2793, %v2793
      %v2858 = vpack.c.bf16 %v2794, %v2794
      %v2859 = vpack.c.bf16 %v2795, %v2795
      %v2860 = vpack.c.bf16 %v2796, %v2796
      %v2861 = vpack.c.bf16 %v2797, %v2797
      %v2862 = vpack.c.bf16 %v2798, %v2798
      %v2863 = vpack.c.bf16 %v2799, %v2799
      %v2864 = vpack.c.bf16 %v2800, %v2800
      %v2865 = vpack.c.bf16 %v2801, %v2801
      %v2866 = vpack.c.bf16 %v2802, %v2802
      %v2867 = vpack.c.bf16 %v2803, %v2803
      %v2868 = vpack.c.bf16 %v2804, %v2804
      %v2869 = vpack.c.bf16 %v2805, %v2805
      %v2870 = vpack.c.bf16 %v2806, %v2806
      %v2871 = vpack.c.bf16 %v2807, %v2807
      %v2872 = vpack.c.bf16 %v2808, %v2808
      %2873 = vst [vmem:[%s177] sm:$0x3] %v2809
      %2874 = vst [vmem:[%s177 + $0x2] sm:$0x3] %v2810
      %2875 = vst [vmem:[%s177 + $0x4] sm:$0x3] %v2811
      %2876 = vst [vmem:[%s177 + $0x6] sm:$0x3] %v2812
      %2877 = vst [vmem:[%s177 + $0x8] sm:$0x3] %v2813
      %2878 = vst [vmem:[%s177 + $0xa] sm:$0x3] %v2814
      %2879 = vst [vmem:[%s177 + $0xc] sm:$0x3] %v2815
      %2880 = vst [vmem:[%s177 + $0xe] sm:$0x3] %v2816
      %2881 = vst [vmem:[%s177 + $0x10] sm:$0x3] %v2817
      %2882 = vst [vmem:[%s177 + $0x12] sm:$0x3] %v2818
      %2883 = vst [vmem:[%s177 + $0x14] sm:$0x3] %v2819
      %2884 = vst [vmem:[%s177 + $0x16] sm:$0x3] %v2820
      %2885 = vst [vmem:[%s177 + $0x18] sm:$0x3] %v2821
      %2886 = vst [vmem:[%s177 + $0x1a] sm:$0x3] %v2822
      %2887 = vst [vmem:[%s177 + $0x1c] sm:$0x3] %v2823
      %2888 = vst [vmem:[%s177 + $0x1e] sm:$0x3] %v2824
      %2889 = vst [vmem:[%s177 + $0x20] sm:$0x3] %v2825
      %2890 = vst [vmem:[%s177 + $0x22] sm:$0x3] %v2826
      %2891 = vst [vmem:[%s177 + $0x24] sm:$0x3] %v2827
      %2892 = vst [vmem:[%s177 + $0x26] sm:$0x3] %v2828
      %2893 = vst [vmem:[%s177 + $0x28] sm:$0x3] %v2829
      %2894 = vst [vmem:[%s177 + $0x2a] sm:$0x3] %v2830
      %2895 = vst [vmem:[%s177 + $0x2c] sm:$0x3] %v2831
      %2896 = vst [vmem:[%s177 + $0x2e] sm:$0x3] %v2832
      %2897 = vst [vmem:[%s177 + $0x30] sm:$0x3] %v2833
      %2898 = vst [vmem:[%s177 + $0x32] sm:$0x3] %v2834
      %2899 = vst [vmem:[%s177 + $0x34] sm:$0x3] %v2835
      %2900 = vst [vmem:[%s177 + $0x36] sm:$0x3] %v2836
      %2901 = vst [vmem:[%s177 + $0x38] sm:$0x3] %v2837
      %2902 = vst [vmem:[%s177 + $0x3a] sm:$0x3] %v2838
      %2903 = vst [vmem:[%s177 + $0x3c] sm:$0x3] %v2839
      %2904 = vst [vmem:[%s177 + $0x3e] sm:$0x3] %v2840
      %2905 = vst [vmem:[%s177 + $0x40] sm:$0x3] %v2841
      %2906 = vst [vmem:[%s177 + $0x42] sm:$0x3] %v2842
      %2907 = vst [vmem:[%s177 + $0x44] sm:$0x3] %v2843
      %2908 = vst [vmem:[%s177 + $0x46] sm:$0x3] %v2844
      %2909 = vst [vmem:[%s177 + $0x48] sm:$0x3] %v2845
      %2910 = vst [vmem:[%s177 + $0x4a] sm:$0x3] %v2846
      %2911 = vst [vmem:[%s177 + $0x4c] sm:$0x3] %v2847
      %2912 = vst [vmem:[%s177 + $0x4e] sm:$0x3] %v2848
      %2913 = vst [vmem:[%s177 + $0x50] sm:$0x3] %v2849
      %2914 = vst [vmem:[%s177 + $0x52] sm:$0x3] %v2850
      %2915 = vst [vmem:[%s177 + $0x54] sm:$0x3] %v2851
      %2916 = vst [vmem:[%s177 + $0x56] sm:$0x3] %v2852
      %2917 = vst [vmem:[%s177 + $0x58] sm:$0x3] %v2853
      %2918 = vst [vmem:[%s177 + $0x5a] sm:$0x3] %v2854
      %2919 = vst [vmem:[%s177 + $0x5c] sm:$0x3] %v2855
      %2920 = vst [vmem:[%s177 + $0x5e] sm:$0x3] %v2856
      %2921 = vst [vmem:[%s177 + $0x60] sm:$0x3] %v2857
      %2922 = vst [vmem:[%s177 + $0x62] sm:$0x3] %v2858
      %2923 = vst [vmem:[%s177 + $0x64] sm:$0x3] %v2859
      %2924 = vst [vmem:[%s177 + $0x66] sm:$0x3] %v2860
      %2925 = vst [vmem:[%s177 + $0x68] sm:$0x3] %v2861
      %2926 = vst [vmem:[%s177 + $0x6a] sm:$0x3] %v2862
      %2927 = vst [vmem:[%s177 + $0x6c] sm:$0x3] %v2863
      %2928 = vst [vmem:[%s177 + $0x6e] sm:$0x3] %v2864
      %2929 = vst [vmem:[%s177 + $0x70] sm:$0x3] %v2865
      %2930 = vst [vmem:[%s177 + $0x72] sm:$0x3] %v2866
      %2931 = vst [vmem:[%s177 + $0x74] sm:$0x3] %v2867
      %2932 = vst [vmem:[%s177 + $0x76] sm:$0x3] %v2868
      %2933 = vst [vmem:[%s177 + $0x78] sm:$0x3] %v2869
      %2934 = vst [vmem:[%s177 + $0x7a] sm:$0x3] %v2870
      %2935 = vst [vmem:[%s177 + $0x7c] sm:$0x3] %v2871
      %2936 = vst [vmem:[%s177 + $0x7e] sm:$0x3] %v2872
      %s2937 = smul.u32 8, %s14
      %p2938 = scmp.lt.s32.totalorder %s2937, 15
      %s2939 = scalar_select %p2938, %s2937, 15
      %s2940 = smul.addr %s2939, 8
      %s2941 = smul.addr %s2940, 2
      %s2942 = scalar_lea.vmem %s3, %s2941
      // Predicated region
      $region33: #{cross_attention_block_forward.18} parent=31 // pred_check
        %p2943 = pneg %p100
      $region34: #{cross_attention_block_forward.18} parent=31 // pred_check_branch
        %2945 = sbr.rel (%p2943) target = $region36
      $region35: #{cross_attention_block_forward.18} parent=31 // pred_region
        %s2946 = smul.u32 8, %s14
      $region36: #{cross_attention_block_forward.18} parent=31 // pred_fallthru
        _
    $region32: #{cross_attention_block_forward.18} parent=5 // pred_fallthru
      _
    %p2947 = scmp.le.s32.totalorder 2, %s9
    // Predicated region
    $region37: #{cross_attention_block_forward.18} parent=5 // pred_check
      %p2948 = pneg %p2947
    $region38: #{cross_attention_block_forward.18} parent=5 // pred_check_branch
      %2950 = sbr.rel (%p2948) target = $region40
    $region39: #{cross_attention_block_forward.18} parent=5 // pred_region
      %s2951 = ssub.s32 %s9, 2
      // Predicated region
      $region41: #{cross_attention_block_forward.18} parent=39 // pred_check
        %p2952 = pneg %p106
      $region42: #{cross_attention_block_forward.18} parent=39 // pred_check_branch
        %2954 = sbr.rel (%p2952) target = $region44
      $region43: #{cross_attention_block_forward.18} parent=39 // pred_region
        %s2955 = smul.u32 8, %s15
        %p2956 = scmp.lt.s32.totalorder %s2955, 15
        %s2957 = scalar_select %p2956, %s2955, 15
        %s2958 = smul.addr %s2957, 8
        %s2959 = smul.addr %s2958, 2
        %s2960 = scalar_lea.vmem %s3, %s2959
      $region44: #{cross_attention_block_forward.18} parent=39 // pred_fallthru
        _
    $region40: #{cross_attention_block_forward.18} parent=5 // pred_fallthru
      _
  $region6: #{cross_attention_block_forward.18} parent=0 // loop_footer
    %s13 = sadd.s32 1, %s9
  $region7: #{cross_attention_block_forward.18} parent=0 // loop_footer_branch
    %8 = sbr.rel target = $region3
  $region8: #{cross_attention_block_forward.18} parent=0 // loop_exit
    _

</llo_original>
